<compile_context>
chip_gen: v7x
topology: tpu7x:2x2x1
jax: 0.10.0
libtpu: 0.0.40
codegen_flags: <defaults>
</compile_context>

<pallas_src>
import functools

import jax
import jax.numpy as jnp
from jax import lax
from jax.experimental import pallas as pl
from jax.experimental.pallas import tpu as pltpu


def _ru(x, m):
    return ((x + m - 1) // m) * m


# ----------------------------------------------------------------------------
# Kernel
# ----------------------------------------------------------------------------
def _db_kernel(x_ref, *refs, H, W, Cin, Cout, Ch, d, bn, pad_left,
               compute_dtype, fused):
    if fused:
        (w01_ref, b01_ref, w2_ref, b2_ref, out_ref, pad_ref) = refs
    else:
        (w0_ref, b0_ref, w1_ref, b1_ref, w2_ref, b2_ref, out_ref, pad_ref) = refs

    M = bn * H * W
    PH = H + 2 * d                      # padded height
    PW = pad_left + W + d               # padded width (aligned left halo)

    x = x_ref[...].astype(compute_dtype).reshape(M, Cin)

    # --- 1x1 convs (identity branch + x1 branch) -----------------------------
    if fused:
        # Cout and Ch are multiples of 128: slicing the fused result is a free
        # lane-tile-aligned view.
        y = jnp.dot(x, w01_ref[...], preferred_element_type=jnp.float32) + b01_ref[...]
        identity = y[:, 0:Cout]                       # (M, Cout) f32
        x1 = y[:, Cout:Cout + Ch]                     # (M, Ch)   f32
    else:
        identity = (jnp.dot(x, w0_ref[...], preferred_element_type=jnp.float32)
                    + b0_ref[...])                    # (M, Cout) f32
        x1 = (jnp.dot(x, w1_ref[...], preferred_element_type=jnp.float32)
              + b1_ref[...])                          # (M, Ch)   f32

    # --- write x1 into the persistent padded slab -----------------------------
    # Zero ONLY the halo strips (cheap O(border) stores); interior is fully
    # overwritten each step, so this stays correct under megacore sharding.
    pad_ref[:, 0:d, :, :] = jnp.zeros((bn, d, PW, Ch), compute_dtype)
    pad_ref[:, d + H:PH, :, :] = jnp.zeros((bn, d, PW, Ch), compute_dtype)
    pad_ref[:, :, 0:pad_left, :] = jnp.zeros((bn, PH, pad_left, Ch), compute_dtype)
    pad_ref[:, :, pad_left + W:PW, :] = jnp.zeros((bn, PH, d, Ch), compute_dtype)
    # Sublane-aligned interior store.
    pad_ref[:, d:d + H, pad_left:pad_left + W, :] = (
        x1.astype(compute_dtype).reshape(bn, H, W, Ch))

    # --- 3x3 dilated conv as 9 accumulated dots (no im2col temporary) --------
    left0 = pad_left - d
    x2 = None
    for kh in range(3):
        for kw in range(3):
            patch = pad_ref[:, kh * d:kh * d + H,
                            left0 + kw * d:left0 + kw * d + W, :]
            contrib = jnp.dot(patch.reshape(M, Ch), w2_ref[kh * 3 + kw],
                              preferred_element_type=jnp.float32)
            x2 = contrib if x2 is None else x2 + contrib
    x2 = x2 + b2_ref[...]                             # (M, Ch) f32

    # --- concat([x1, x2], channel) + identity: one lane-dense store ----------
    out = identity + jnp.concatenate([x1, x2], axis=-1)   # (M, Cout) f32
    out_ref[...] = out.reshape(bn, H, W, Cout).astype(out_ref.dtype)


# ----------------------------------------------------------------------------
# VMEM / grid sizing helpers (generation aware)
# ----------------------------------------------------------------------------
def _vmem_capacity_bytes():
    try:
        info = pltpu.get_tpu_info()
        for attr in ("vmem_capacity_bytes", "vmem_bytes", "vmem_size_bytes"):
            v = getattr(info, attr, None)
            if v:
                return int(v)
    except Exception:
        pass
    return 64 * 1024 * 1024  # conservative fallback (v7x-sized)


def _num_tensorcores():
    try:
        info = pltpu.get_tpu_info()
        for attr in ("num_cores", "core_count", "tensorcores_per_chip"):
            v = getattr(info, attr, None)
            if v:
                return int(v)
    except Exception:
        pass
    try:
        dev = jax.devices()[0]
        for attr in ("num_cores", "core_count"):
            v = getattr(dev, attr, None)
            if v:
                return int(v)
    except Exception:
        pass
    return 1


def _pick_batch_block(N, H, W, Cin, Cout, Ch, d, pad_left, compute_dtype,
                      budget_bytes, min_grid):
    """Largest divisor of N whose per-step working set (with double-buffering
    and (8,128) tile rounding) fits the generation-specific budget, capped so
    the grid has at least `min_grid` steps."""
    csz = jnp.dtype(compute_dtype).itemsize
    sub = 8
    PH, PW = H + 2 * d, pad_left + W + d
    w_bytes = (csz * (Cin * _ru(Cout + Ch, 128) + 9 * Ch * _ru(Ch, 128))
               + 4 * _ru(Cout + 2 * Ch, 128))

    def step_bytes(bn):
        rows = bn * H * W
        in_blk = bn * H * _ru(W, sub) * _ru(Cin, 128) * 4
        out_blk = bn * H * _ru(W, sub) * _ru(Cout, 128) * 4
        pad = bn * PH * _ru(PW, sub) * _ru(Ch, 128) * csz
        temps = _ru(rows, sub) * (2 * _ru(Cout, 128) + 2 * _ru(Ch, 128)) * 4
        return 2 * in_blk + 2 * out_blk + 2 * w_bytes + pad + temps

    bn = max(1, N // max(1, min_grid))
    while bn > 1 and (N % bn != 0 or step_bytes(bn) > budget_bytes):
        bn -= 1
    return bn


# ----------------------------------------------------------------------------
# Wrappers
# ----------------------------------------------------------------------------
def db_forward_nhwc(x_nhwc, params, d=1, compute_dtype=jnp.float32,
                    batch_block=None):
    """x_nhwc: (N, H, W, Cin). Returns (N, H, W, Cout) float32."""
    w0, b0, w1, b1, w2, b2 = params
    N, H, W, Cin = x_nhwc.shape
    Cout = w0.shape[1]
    Ch = w1.shape[1]
    assert Cout == 2 * Ch, (Cout, Ch)

    csz = jnp.dtype(compute_dtype).itemsize
    sub = 8 if csz == 4 else 16
    pad_left = _ru(d, sub)          # sublane-aligned interior start in W

    # Fuse the two 1x1 convs only when slice boundaries are lane-tile aligned.
    fused = (Cout % 128 == 0) and (Ch % 128 == 0)
    if fused:
        wa = jnp.concatenate([w0, w1], axis=1).astype(compute_dtype)   # (Cin, Cout+Ch)
        ba = jnp.concatenate([b0, b1], axis=1).astype(jnp.float32)     # (1, Cout+Ch)
        weight_args = (wa, ba)
    else:
        weight_args = (w0.astype(compute_dtype), b0.astype(jnp.float32),
                       w1.astype(compute_dtype), b1.astype(jnp.float32))
    w2f = w2.reshape(9, Ch, Ch).astype(compute_dtype)                  # (9, Ch, Ch)
    b2f = b2.astype(jnp.float32)                                       # (1, Ch)

    cap = _vmem_capacity_bytes()
    budget = (cap * 3) // 4          # ~96 MiB on v5e/v6e, ~48 MiB on v7x
    ncores = _num_tensorcores()
    min_grid = ncores if (ncores > 1 and N >= ncores) else 1

    bn = batch_block if batch_block is not None else _pick_batch_block(
        N, H, W, Cin, Cout, Ch, d, pad_left, compute_dtype, budget, min_grid)
    assert N % bn == 0, (N, bn)

    kernel = functools.partial(
        _db_kernel, H=H, W=W, Cin=Cin, Cout=Cout, Ch=Ch, d=d, bn=bn,
        pad_left=pad_left, compute_dtype=compute_dtype, fused=fused)

    # Weights/biases use constant index_maps -> fetched once, never re-DMA'd.
    const = lambda a: pl.BlockSpec(a.shape, lambda n, _nd=a.ndim: (0,) * _nd)
    weight_specs = [const(w) for w in weight_args] + [const(w2f), const(b2f)]

    flops = 2 * N * H * W * (Cin * (Cout + Ch) + 9 * Ch * Ch)
    w_hbm = sum(int(w.size) * jnp.dtype(w.dtype).itemsize
                for w in (*weight_args, w2f, b2f))
    bytes_accessed = (int(x_nhwc.size) * jnp.dtype(x_nhwc.dtype).itemsize
                      + N * H * W * Cout * 4 + w_hbm)

    out_nhwc = pl.pallas_call(
        kernel,
        out_shape=jax.ShapeDtypeStruct((N, H, W, Cout), jnp.float32),
        grid_spec=pltpu.PrefetchScalarGridSpec(
            num_scalar_prefetch=0,
            grid=(N // bn,),
            in_specs=[pl.BlockSpec((bn, H, W, Cin), lambda n: (n, 0, 0, 0))]
                     + weight_specs,
            out_specs=pl.BlockSpec((bn, H, W, Cout), lambda n: (n, 0, 0, 0)),
            scratch_shapes=[
                pltpu.VMEM((bn, H + 2 * d, pad_left + W + d, Ch), compute_dtype),
            ],
        ),
        compiler_params=pltpu.CompilerParams(
            dimension_semantics=("parallel",),
            vmem_limit_bytes=int(budget),
        ),
        cost_estimate=pl.CostEstimate(
            flops=int(flops), transcendentals=0,
            bytes_accessed=int(bytes_accessed)),
    )(x_nhwc, *weight_args, w2f, b2f)
    return out_nhwc


def db_forward_pallas(x_nchw, params, d=1, compute_dtype=jnp.float32,
                      batch_block=None):
    """NCHW wrapper matching the PyTorch module. (Prefer db_forward_nhwc and
    keep the surrounding model in NHWC to avoid the two transposes.)"""
    x_nhwc = jnp.transpose(x_nchw, (0, 2, 3, 1))
    out_nhwc = db_forward_nhwc(x_nhwc, params, d=d,
                               compute_dtype=compute_dtype,
                               batch_block=batch_block)
    return jnp.transpose(out_nhwc, (0, 3, 1, 2))


def db_forward_ref(x_nchw, params, d=1):
    """Pure-JAX reference matching the PyTorch forward."""
    w0, b0, w1, b1, w2, b2 = params
    identity = jnp.einsum('nchw,co->nohw', x_nchw, w0) + b0[0][None, :, None, None]
    x1 = jnp.einsum('nchw,co->nohw', x_nchw, w1) + b1[0][None, :, None, None]
    w2_oihw = jnp.transpose(w2, (3, 2, 0, 1))  # (kh,kw,Cin,Cout) -> (O,I,kh,kw)
    x2 = lax.conv_general_dilated(
        x1, w2_oihw, window_strides=(1, 1), padding=((d, d), (d, d)),
        rhs_dilation=(d, d),
        dimension_numbers=('NCHW', 'OIHW', 'NCHW')) + b2[0][None, :, None, None]
    return jnp.concatenate([x1, x2], axis=1) + identity


def init_params(key, in_channels, out_channels=0):
    if out_channels == 0:
        out_channels = in_channels // 2
    ch = out_channels // 2
    ks = jax.random.split(key, 6)
    scale = 0.1
    w0 = scale * jax.random.normal(ks[0], (in_channels, out_channels), jnp.float32)
    b0 = scale * jax.random.normal(ks[1], (1, out_channels), jnp.float32)
    w1 = scale * jax.random.normal(ks[2], (in_channels, ch), jnp.float32)
    b1 = scale * jax.random.normal(ks[3], (1, ch), jnp.float32)
    w2 = scale * jax.random.normal(ks[4], (3, 3, ch, ch), jnp.float32)
    b2 = scale * jax.random.normal(ks[5], (1, ch), jnp.float32)
    return (w0, b0, w1, b1, w2, b2)


if __name__ == "__main__":
    key = jax.random.PRNGKey(0)
    kx, kp, kx2, kp2 = jax.random.split(key, 4)

    # Small, unaligned channel counts -> two-dot (non-fused) 1x1 path.
    N, Cin, H, W = 2, 8, 16, 16   # out_channels = Cin // 2 = 4, half = 2
    x = jax.random.normal(kx, (N, Cin, H, W), jnp.float32)
    params = init_params(kp, Cin)
    ref = db_forward_ref(x, params, d=1)

    out = jax.block_until_ready(db_forward_pallas(x, params, d=1))
    assert out.shape == ref.shape, (out.shape, ref.shape)
    assert jnp.allclose(out, ref, rtol=1e-4, atol=1e-4), \
        float(jnp.max(jnp.abs(out - ref)))

    # Dilation d=2 (exercises halo offsets / aligned interior placement).
    ref2 = db_forward_ref(x, params, d=2)
    out2 = jax.block_until_ready(db_forward_pallas(x, params, d=2))
    assert jnp.allclose(out2, ref2, rtol=1e-4, atol=1e-4), \
        float(jnp.max(jnp.abs(out2 - ref2)))

    # bf16 MXU-input path (v6e/v7x recommendation); f32 accumulation/output.
    # (x2 is computed from bf16-rounded x1; intentional mixed precision.)
    out_bf16 = jax.block_until_ready(
        db_forward_pallas(x, params, d=1, compute_dtype=jnp.bfloat16))
    assert jnp.allclose(out_bf16, ref, rtol=5e-2, atol=5e-2), \
        float(jnp.max(jnp.abs(out_bf16 - ref)))

    # Lane-aligned channel counts -> fused single 1x1 matmul path.
    Cin2, Cout2 = 64, 256   # Ch = 128, both multiples of 128
    xa = jax.random.normal(kx2, (1, Cin2, H, W), jnp.float32)
    pa = init_params(kp2, Cin2, Cout2)
    refa = db_forward_ref(xa, pa, d=1)
    outa = jax.block_until_ready(db_forward_pallas(xa, pa, d=1))
    assert jnp.allclose(outa, refa, rtol=1e-4, atol=1e-4), \
        float(jnp.max(jnp.abs(outa - refa)))

    print("KERNEL_OK")
</pallas_src>

<mosaic_0001>
module attributes {stable_mosaic.version = 11 : i64} {
  func.func @_db_kernel(%arg0: i32, %arg1: memref<2x16x16x8xf32, #tpu.memory_space<vmem>>, %arg2: memref<8x4xf32, #tpu.memory_space<vmem>>, %arg3: memref<1x4xf32, #tpu.memory_space<vmem>>, %arg4: memref<8x2xf32, #tpu.memory_space<vmem>>, %arg5: memref<1x2xf32, #tpu.memory_space<vmem>>, %arg6: memref<9x2x2xf32, #tpu.memory_space<vmem>>, %arg7: memref<1x2xf32, #tpu.memory_space<vmem>>, %arg8: memref<2x16x16x4xf32, #tpu.memory_space<vmem>>, %arg9: memref<2x18x25x2xf32, #tpu.memory_space<vmem>>) attributes {dimension_semantics = [#tpu.dimension_semantics<parallel>], iteration_bounds = array<i64: 1>, scalar_prefetch = 0 : i64, scratch_operands = 1 : i64, tpu.core_type = #tpu.core_type<tc>, window_params = [{transform_indices = @transform_0, window_bounds = array<i64: 2, 16, 16, 8>}, {pipeline_mode = #tpu.pipeline_mode<synchronous>, transform_indices = @transform_1, window_bounds = array<i64: 8, 4>}, {pipeline_mode = #tpu.pipeline_mode<synchronous>, transform_indices = @transform_2, window_bounds = array<i64: 1, 4>}, {pipeline_mode = #tpu.pipeline_mode<synchronous>, transform_indices = @transform_3, window_bounds = array<i64: 8, 2>}, {pipeline_mode = #tpu.pipeline_mode<synchronous>, transform_indices = @transform_4, window_bounds = array<i64: 1, 2>}, {pipeline_mode = #tpu.pipeline_mode<synchronous>, transform_indices = @transform_5, window_bounds = array<i64: 9, 2, 2>}, {pipeline_mode = #tpu.pipeline_mode<synchronous>, transform_indices = @transform_6, window_bounds = array<i64: 1, 2>}, {transform_indices = @transform_7, window_bounds = array<i64: 2, 16, 16, 4>}]} {
    %c0 = arith.constant 0 : index
    %c0_0 = arith.constant 0 : index
    %c0_1 = arith.constant 0 : index
    %c0_2 = arith.constant 0 : index
    %0 = vector.load %arg1[%c0, %c0_0, %c0_1, %c0_2] : memref<2x16x16x8xf32, #tpu.memory_space<vmem>>, vector<2x16x16x8xf32>
    %1 = vector.shape_cast %0 : vector<2x16x16x8xf32> to vector<512x8xf32>
    %c0_3 = arith.constant 0 : index
    %c0_4 = arith.constant 0 : index
    %2 = vector.load %arg2[%c0_3, %c0_4] : memref<8x4xf32, #tpu.memory_space<vmem>>, vector<8x4xf32>
    %cst = arith.constant dense<0.000000e+00> : vector<512x4xf32>
    %3 = tpu.matmul %1, %2, %cst {dimension_numbers = #tpu.dot_dimension_numbers<[1], [0], [0], [1], [0, 0, 1, 1], [], []>} : vector<512x8xf32>, vector<8x4xf32>, vector<512x4xf32> -> vector<512x4xf32>
    %c0_5 = arith.constant 0 : index
    %c0_6 = arith.constant 0 : index
    %4 = vector.load %arg3[%c0_5, %c0_6] : memref<1x4xf32, #tpu.memory_space<vmem>>, vector<1x4xf32>
    %5 = vector.broadcast %4 : vector<1x4xf32> to vector<512x4xf32>
    %6 = arith.addf %3, %5 : vector<512x4xf32>
    %c0_7 = arith.constant 0 : index
    %c0_8 = arith.constant 0 : index
    %7 = vector.load %arg4[%c0_7, %c0_8] : memref<8x2xf32, #tpu.memory_space<vmem>>, vector<8x2xf32>
    %cst_9 = arith.constant dense<0.000000e+00> : vector<512x2xf32>
    %8 = tpu.matmul %1, %7, %cst_9 {dimension_numbers = #tpu.dot_dimension_numbers<[1], [0], [0], [1], [0, 0, 1, 1], [], []>} : vector<512x8xf32>, vector<8x2xf32>, vector<512x2xf32> -> vector<512x2xf32>
    %c0_10 = arith.constant 0 : index
    %c0_11 = arith.constant 0 : index
    %9 = vector.load %arg5[%c0_10, %c0_11] : memref<1x2xf32, #tpu.memory_space<vmem>>, vector<1x2xf32>
    %10 = vector.broadcast %9 : vector<1x2xf32> to vector<512x2xf32>
    %11 = arith.addf %8, %10 : vector<512x2xf32>
    %cst_12 = arith.constant 0.000000e+00 : f32
    %12 = vector.broadcast %cst_12 : f32 to vector<2x1x25x2xf32>
    %c0_13 = arith.constant 0 : index
    %c0_14 = arith.constant 0 : index
    %c0_15 = arith.constant 0 : index
    %c0_16 = arith.constant 0 : index
    %13 = vector.load %arg9[%c0_13, %c0_14, %c0_15, %c0_16] : memref<2x18x25x2xf32, #tpu.memory_space<vmem>>, vector<2x1x25x2xf32>
    tpu.vector_store %arg9[%c0_13, %c0_14, %c0_15, %c0_16], %12 {strides = array<i32>} : memref<2x18x25x2xf32, #tpu.memory_space<vmem>>, vector<2x1x25x2xf32>,
    %cst_17 = arith.constant 0.000000e+00 : f32
    %14 = vector.broadcast %cst_17 : f32 to vector<2x1x25x2xf32>
    %c0_18 = arith.constant 0 : index
    %c17 = arith.constant 17 : index
    %c0_19 = arith.constant 0 : index
    %c0_20 = arith.constant 0 : index
    %15 = vector.load %arg9[%c0_18, %c17, %c0_19, %c0_20] : memref<2x18x25x2xf32, #tpu.memory_space<vmem>>, vector<2x1x25x2xf32>
    tpu.vector_store %arg9[%c0_18, %c17, %c0_19, %c0_20], %14 {strides = array<i32>} : memref<2x18x25x2xf32, #tpu.memory_space<vmem>>, vector<2x1x25x2xf32>,
    %cst_21 = arith.constant 0.000000e+00 : f32
    %16 = vector.broadcast %cst_21 : f32 to vector<2x18x8x2xf32>
    %c0_22 = arith.constant 0 : index
    %c0_23 = arith.constant 0 : index
    %c0_24 = arith.constant 0 : index
    %c0_25 = arith.constant 0 : index
    %17 = vector.load %arg9[%c0_22, %c0_23, %c0_24, %c0_25] : memref<2x18x25x2xf32, #tpu.memory_space<vmem>>, vector<2x18x8x2xf32>
    tpu.vector_store %arg9[%c0_22, %c0_23, %c0_24, %c0_25], %16 {strides = array<i32>} : memref<2x18x25x2xf32, #tpu.memory_space<vmem>>, vector<2x18x8x2xf32>,
    %cst_26 = arith.constant 0.000000e+00 : f32
    %18 = vector.broadcast %cst_26 : f32 to vector<2x18x1x2xf32>
    %c0_27 = arith.constant 0 : index
    %c0_28 = arith.constant 0 : index
    %c24 = arith.constant 24 : index
    %c0_29 = arith.constant 0 : index
    %19 = vector.load %arg9[%c0_27, %c0_28, %c24, %c0_29] : memref<2x18x25x2xf32, #tpu.memory_space<vmem>>, vector<2x18x1x2xf32>
    tpu.vector_store %arg9[%c0_27, %c0_28, %c24, %c0_29], %18 {strides = array<i32>} : memref<2x18x25x2xf32, #tpu.memory_space<vmem>>, vector<2x18x1x2xf32>,
    %20 = vector.shape_cast %11 : vector<512x2xf32> to vector<2x16x16x2xf32>
    %c0_30 = arith.constant 0 : index
    %c1 = arith.constant 1 : index
    %c8 = arith.constant 8 : index
    %c0_31 = arith.constant 0 : index
    %21 = vector.load %arg9[%c0_30, %c1, %c8, %c0_31] : memref<2x18x25x2xf32, #tpu.memory_space<vmem>>, vector<2x16x16x2xf32>
    tpu.vector_store %arg9[%c0_30, %c1, %c8, %c0_31], %20 {strides = array<i32>} : memref<2x18x25x2xf32, #tpu.memory_space<vmem>>, vector<2x16x16x2xf32>,
    %c0_32 = arith.constant 0 : index
    %c0_33 = arith.constant 0 : index
    %c7 = arith.constant 7 : index
    %c0_34 = arith.constant 0 : index
    %22 = vector.load %arg9[%c0_32, %c0_33, %c7, %c0_34] : memref<2x18x25x2xf32, #tpu.memory_space<vmem>>, vector<2x16x16x2xf32>
    %23 = vector.shape_cast %22 : vector<2x16x16x2xf32> to vector<512x2xf32>
    %c0_35 = arith.constant 0 : index
    %c0_36 = arith.constant 0 : index
    %c0_37 = arith.constant 0 : index
    %24 = vector.load %arg6[%c0_35, %c0_36, %c0_37] : memref<9x2x2xf32, #tpu.memory_space<vmem>>, vector<1x2x2xf32>
    %25 = vector.shape_cast %24 : vector<1x2x2xf32> to vector<2x2xf32>
    %cst_38 = arith.constant dense<0.000000e+00> : vector<512x2xf32>
    %26 = tpu.matmul %23, %25, %cst_38 {dimension_numbers = #tpu.dot_dimension_numbers<[1], [0], [0], [1], [0, 0, 1, 1], [], []>} : vector<512x2xf32>, vector<2x2xf32>, vector<512x2xf32> -> vector<512x2xf32>
    %c0_39 = arith.constant 0 : index
    %c0_40 = arith.constant 0 : index
    %c8_41 = arith.constant 8 : index
    %c0_42 = arith.constant 0 : index
    %27 = vector.load %arg9[%c0_39, %c0_40, %c8_41, %c0_42] : memref<2x18x25x2xf32, #tpu.memory_space<vmem>>, vector<2x16x16x2xf32>
    %28 = vector.shape_cast %27 : vector<2x16x16x2xf32> to vector<512x2xf32>
    %c1_43 = arith.constant 1 : index
    %c0_44 = arith.constant 0 : index
    %c0_45 = arith.constant 0 : index
    %29 = vector.load %arg6[%c1_43, %c0_44, %c0_45] : memref<9x2x2xf32, #tpu.memory_space<vmem>>, vector<1x2x2xf32>
    %30 = vector.shape_cast %29 : vector<1x2x2xf32> to vector<2x2xf32>
    %cst_46 = arith.constant dense<0.000000e+00> : vector<512x2xf32>
    %31 = tpu.matmul %28, %30, %cst_46 {dimension_numbers = #tpu.dot_dimension_numbers<[1], [0], [0], [1], [0, 0, 1, 1], [], []>} : vector<512x2xf32>, vector<2x2xf32>, vector<512x2xf32> -> vector<512x2xf32>
    %32 = arith.addf %26, %31 : vector<512x2xf32>
    %c0_47 = arith.constant 0 : index
    %c0_48 = arith.constant 0 : index
    %c9 = arith.constant 9 : index
    %c0_49 = arith.constant 0 : index
    %33 = vector.load %arg9[%c0_47, %c0_48, %c9, %c0_49] : memref<2x18x25x2xf32, #tpu.memory_space<vmem>>, vector<2x16x16x2xf32>
    %34 = vector.shape_cast %33 : vector<2x16x16x2xf32> to vector<512x2xf32>
    %c2 = arith.constant 2 : index
    %c0_50 = arith.constant 0 : index
    %c0_51 = arith.constant 0 : index
    %35 = vector.load %arg6[%c2, %c0_50, %c0_51] : memref<9x2x2xf32, #tpu.memory_space<vmem>>, vector<1x2x2xf32>
    %36 = vector.shape_cast %35 : vector<1x2x2xf32> to vector<2x2xf32>
    %cst_52 = arith.constant dense<0.000000e+00> : vector<512x2xf32>
    %37 = tpu.matmul %34, %36, %cst_52 {dimension_numbers = #tpu.dot_dimension_numbers<[1], [0], [0], [1], [0, 0, 1, 1], [], []>} : vector<512x2xf32>, vector<2x2xf32>, vector<512x2xf32> -> vector<512x2xf32>
    %38 = arith.addf %32, %37 : vector<512x2xf32>
    %c0_53 = arith.constant 0 : index
    %c1_54 = arith.constant 1 : index
    %c7_55 = arith.constant 7 : index
    %c0_56 = arith.constant 0 : index
    %39 = vector.load %arg9[%c0_53, %c1_54, %c7_55, %c0_56] : memref<2x18x25x2xf32, #tpu.memory_space<vmem>>, vector<2x16x16x2xf32>
    %40 = vector.shape_cast %39 : vector<2x16x16x2xf32> to vector<512x2xf32>
    %c3 = arith.constant 3 : index
    %c0_57 = arith.constant 0 : index
    %c0_58 = arith.constant 0 : index
    %41 = vector.load %arg6[%c3, %c0_57, %c0_58] : memref<9x2x2xf32, #tpu.memory_space<vmem>>, vector<1x2x2xf32>
    %42 = vector.shape_cast %41 : vector<1x2x2xf32> to vector<2x2xf32>
    %cst_59 = arith.constant dense<0.000000e+00> : vector<512x2xf32>
    %43 = tpu.matmul %40, %42, %cst_59 {dimension_numbers = #tpu.dot_dimension_numbers<[1], [0], [0], [1], [0, 0, 1, 1], [], []>} : vector<512x2xf32>, vector<2x2xf32>, vector<512x2xf32> -> vector<512x2xf32>
    %44 = arith.addf %38, %43 : vector<512x2xf32>
    %c0_60 = arith.constant 0 : index
    %c1_61 = arith.constant 1 : index
    %c8_62 = arith.constant 8 : index
    %c0_63 = arith.constant 0 : index
    %45 = vector.load %arg9[%c0_60, %c1_61, %c8_62, %c0_63] : memref<2x18x25x2xf32, #tpu.memory_space<vmem>>, vector<2x16x16x2xf32>
    %46 = vector.shape_cast %45 : vector<2x16x16x2xf32> to vector<512x2xf32>
    %c4 = arith.constant 4 : index
    %c0_64 = arith.constant 0 : index
    %c0_65 = arith.constant 0 : index
    %47 = vector.load %arg6[%c4, %c0_64, %c0_65] : memref<9x2x2xf32, #tpu.memory_space<vmem>>, vector<1x2x2xf32>
    %48 = vector.shape_cast %47 : vector<1x2x2xf32> to vector<2x2xf32>
    %cst_66 = arith.constant dense<0.000000e+00> : vector<512x2xf32>
    %49 = tpu.matmul %46, %48, %cst_66 {dimension_numbers = #tpu.dot_dimension_numbers<[1], [0], [0], [1], [0, 0, 1, 1], [], []>} : vector<512x2xf32>, vector<2x2xf32>, vector<512x2xf32> -> vector<512x2xf32>
    %50 = arith.addf %44, %49 : vector<512x2xf32>
    %c0_67 = arith.constant 0 : index
    %c1_68 = arith.constant 1 : index
    %c9_69 = arith.constant 9 : index
    %c0_70 = arith.constant 0 : index
    %51 = vector.load %arg9[%c0_67, %c1_68, %c9_69, %c0_70] : memref<2x18x25x2xf32, #tpu.memory_space<vmem>>, vector<2x16x16x2xf32>
    %52 = vector.shape_cast %51 : vector<2x16x16x2xf32> to vector<512x2xf32>
    %c5 = arith.constant 5 : index
    %c0_71 = arith.constant 0 : index
    %c0_72 = arith.constant 0 : index
    %53 = vector.load %arg6[%c5, %c0_71, %c0_72] : memref<9x2x2xf32, #tpu.memory_space<vmem>>, vector<1x2x2xf32>
    %54 = vector.shape_cast %53 : vector<1x2x2xf32> to vector<2x2xf32>
    %cst_73 = arith.constant dense<0.000000e+00> : vector<512x2xf32>
    %55 = tpu.matmul %52, %54, %cst_73 {dimension_numbers = #tpu.dot_dimension_numbers<[1], [0], [0], [1], [0, 0, 1, 1], [], []>} : vector<512x2xf32>, vector<2x2xf32>, vector<512x2xf32> -> vector<512x2xf32>
    %56 = arith.addf %50, %55 : vector<512x2xf32>
    %c0_74 = arith.constant 0 : index
    %c2_75 = arith.constant 2 : index
    %c7_76 = arith.constant 7 : index
    %c0_77 = arith.constant 0 : index
    %57 = vector.load %arg9[%c0_74, %c2_75, %c7_76, %c0_77] : memref<2x18x25x2xf32, #tpu.memory_space<vmem>>, vector<2x16x16x2xf32>
    %58 = vector.shape_cast %57 : vector<2x16x16x2xf32> to vector<512x2xf32>
    %c6 = arith.constant 6 : index
    %c0_78 = arith.constant 0 : index
    %c0_79 = arith.constant 0 : index
    %59 = vector.load %arg6[%c6, %c0_78, %c0_79] : memref<9x2x2xf32, #tpu.memory_space<vmem>>, vector<1x2x2xf32>
    %60 = vector.shape_cast %59 : vector<1x2x2xf32> to vector<2x2xf32>
    %cst_80 = arith.constant dense<0.000000e+00> : vector<512x2xf32>
    %61 = tpu.matmul %58, %60, %cst_80 {dimension_numbers = #tpu.dot_dimension_numbers<[1], [0], [0], [1], [0, 0, 1, 1], [], []>} : vector<512x2xf32>, vector<2x2xf32>, vector<512x2xf32> -> vector<512x2xf32>
    %62 = arith.addf %56, %61 : vector<512x2xf32>
    %c0_81 = arith.constant 0 : index
    %c2_82 = arith.constant 2 : index
    %c8_83 = arith.constant 8 : index
    %c0_84 = arith.constant 0 : index
    %63 = vector.load %arg9[%c0_81, %c2_82, %c8_83, %c0_84] : memref<2x18x25x2xf32, #tpu.memory_space<vmem>>, vector<2x16x16x2xf32>
    %64 = vector.shape_cast %63 : vector<2x16x16x2xf32> to vector<512x2xf32>
    %c7_85 = arith.constant 7 : index
    %c0_86 = arith.constant 0 : index
    %c0_87 = arith.constant 0 : index
    %65 = vector.load %arg6[%c7_85, %c0_86, %c0_87] : memref<9x2x2xf32, #tpu.memory_space<vmem>>, vector<1x2x2xf32>
    %66 = vector.shape_cast %65 : vector<1x2x2xf32> to vector<2x2xf32>
    %cst_88 = arith.constant dense<0.000000e+00> : vector<512x2xf32>
    %67 = tpu.matmul %64, %66, %cst_88 {dimension_numbers = #tpu.dot_dimension_numbers<[1], [0], [0], [1], [0, 0, 1, 1], [], []>} : vector<512x2xf32>, vector<2x2xf32>, vector<512x2xf32> -> vector<512x2xf32>
    %68 = arith.addf %62, %67 : vector<512x2xf32>
    %c0_89 = arith.constant 0 : index
    %c2_90 = arith.constant 2 : index
    %c9_91 = arith.constant 9 : index
    %c0_92 = arith.constant 0 : index
    %69 = vector.load %arg9[%c0_89, %c2_90, %c9_91, %c0_92] : memref<2x18x25x2xf32, #tpu.memory_space<vmem>>, vector<2x16x16x2xf32>
    %70 = vector.shape_cast %69 : vector<2x16x16x2xf32> to vector<512x2xf32>
    %c8_93 = arith.constant 8 : index
    %c0_94 = arith.constant 0 : index
    %c0_95 = arith.constant 0 : index
    %71 = vector.load %arg6[%c8_93, %c0_94, %c0_95] : memref<9x2x2xf32, #tpu.memory_space<vmem>>, vector<1x2x2xf32>
    %72 = vector.shape_cast %71 : vector<1x2x2xf32> to vector<2x2xf32>
    %cst_96 = arith.constant dense<0.000000e+00> : vector<512x2xf32>
    %73 = tpu.matmul %70, %72, %cst_96 {dimension_numbers = #tpu.dot_dimension_numbers<[1], [0], [0], [1], [0, 0, 1, 1], [], []>} : vector<512x2xf32>, vector<2x2xf32>, vector<512x2xf32> -> vector<512x2xf32>
    %74 = arith.addf %68, %73 : vector<512x2xf32>
    %c0_97 = arith.constant 0 : index
    %c0_98 = arith.constant 0 : index
    %75 = vector.load %arg7[%c0_97, %c0_98] : memref<1x2xf32, #tpu.memory_space<vmem>>, vector<1x2xf32>
    %76 = vector.broadcast %75 : vector<1x2xf32> to vector<512x2xf32>
    %77 = arith.addf %74, %76 : vector<512x2xf32>
    %78 = tpu.concatenate %11, %77 in 1 : vector<512x2xf32>, vector<512x2xf32> -> vector<512x4xf32>
    %79 = arith.addf %6, %78 : vector<512x4xf32>
    %80 = vector.shape_cast %79 : vector<512x4xf32> to vector<2x16x16x4xf32>
    %c0_99 = arith.constant 0 : index
    %c0_100 = arith.constant 0 : index
    %c0_101 = arith.constant 0 : index
    %c0_102 = arith.constant 0 : index
    %81 = vector.load %arg8[%c0_99, %c0_100, %c0_101, %c0_102] : memref<2x16x16x4xf32, #tpu.memory_space<vmem>>, vector<2x16x16x4xf32>
    tpu.vector_store %arg8[%c0_99, %c0_100, %c0_101, %c0_102], %80 {strides = array<i32>} : memref<2x16x16x4xf32, #tpu.memory_space<vmem>>, vector<2x16x16x4xf32>,
    return
  }
  func.func @transform_0(%arg0: i32) -> (i32, i32, i32, i32) {
    %c0_i32 = arith.constant 0 : i32
    %c0_i32_0 = arith.constant 0 : i32
    %c0_i32_1 = arith.constant 0 : i32
    %c0_i32_2 = arith.constant 0 : i32
    return %arg0, %c0_i32, %c0_i32_0, %c0_i32_1 : i32, i32, i32, i32
  }
  func.func @transform_1(%arg0: i32) -> (i32, i32) {
    %c0_i32 = arith.constant 0 : i32
    %c0_i32_0 = arith.constant 0 : i32
    %c0_i32_1 = arith.constant 0 : i32
    return %c0_i32, %c0_i32_0 : i32, i32
  }
  func.func @transform_2(%arg0: i32) -> (i32, i32) {
    %c0_i32 = arith.constant 0 : i32
    %c0_i32_0 = arith.constant 0 : i32
    %c0_i32_1 = arith.constant 0 : i32
    return %c0_i32, %c0_i32_0 : i32, i32
  }
  func.func @transform_3(%arg0: i32) -> (i32, i32) {
    %c0_i32 = arith.constant 0 : i32
    %c0_i32_0 = arith.constant 0 : i32
    %c0_i32_1 = arith.constant 0 : i32
    return %c0_i32, %c0_i32_0 : i32, i32
  }
  func.func @transform_4(%arg0: i32) -> (i32, i32) {
    %c0_i32 = arith.constant 0 : i32
    %c0_i32_0 = arith.constant 0 : i32
    %c0_i32_1 = arith.constant 0 : i32
    return %c0_i32, %c0_i32_0 : i32, i32
  }
  func.func @transform_5(%arg0: i32) -> (i32, i32, i32) {
    %c0_i32 = arith.constant 0 : i32
    %c0_i32_0 = arith.constant 0 : i32
    %c0_i32_1 = arith.constant 0 : i32
    %c0_i32_2 = arith.constant 0 : i32
    return %c0_i32, %c0_i32_0, %c0_i32_1 : i32, i32, i32
  }
  func.func @transform_6(%arg0: i32) -> (i32, i32) {
    %c0_i32 = arith.constant 0 : i32
    %c0_i32_0 = arith.constant 0 : i32
    %c0_i32_1 = arith.constant 0 : i32
    return %c0_i32, %c0_i32_0 : i32, i32
  }
  func.func @transform_7(%arg0: i32) -> (i32, i32, i32, i32) {
    %c0_i32 = arith.constant 0 : i32
    %c0_i32_0 = arith.constant 0 : i32
    %c0_i32_1 = arith.constant 0 : i32
    %c0_i32_2 = arith.constant 0 : i32
    return %arg0, %c0_i32, %c0_i32_0, %c0_i32_1 : i32, i32, i32, i32
  }
}

</mosaic_0001>

<llo_original>
// kernel: tpu_custom_call.1
$region0: #{tpu_custom_call.1}
  #allocation0 [shape = 'u32[]', space=smem, size = 0x4, offset = 0x4, fixed_abs, tag = 'smem constant byte address 0x4 - core index']
  #allocation1 [shape = 'u32[144,128]{1,0:T(1,128)}', space=vmem, size = 0x12000, scoped, tag = 'internal scratch']
  #allocation2 [shape = 'f32[2,18,25,2]{3,2,1,0:T(8,128)}', space=vmem, size = 0x90000, scoped, tag = 'scratch operand']
  %s0 = inlined_call_operand.vmem [shape: f32[2,16,16,8], index: 0, kind: input, shape index: {}]
  %s1 = inlined_call_operand.vmem [shape: f32[8,4], index: 1, kind: input, shape index: {}]
  %s2 = inlined_call_operand.vmem [shape: f32[1,4], index: 2, kind: input, shape index: {}]
  %s3 = inlined_call_operand.vmem [shape: f32[8,2], index: 3, kind: input, shape index: {}]
  %s4 = inlined_call_operand.vmem [shape: f32[1,2], index: 4, kind: input, shape index: {}]
  %s5 = inlined_call_operand.vmem [shape: f32[9,2,2], index: 5, kind: input, shape index: {}]
  %s6 = inlined_call_operand.vmem [shape: f32[1,2], index: 6, kind: input, shape index: {}]
  %s7 = inlined_call_operand.vmem [shape: f32[2,16,16,4], index: 7, kind: output, shape index: {}]
  %s8 = sld [smem:[#allocation0]]
  $region38: #{tpu_custom_call.1} parent=0
    _
  %s10 = ssub.s32 1, %s8
  %s11 = scalar_select 0, %s10, %s8
  // Predicated region
  $region2: #{tpu_custom_call.1} parent=0 // pred_check
    _
  $region3: #{tpu_custom_call.1} parent=0 // pred_check_branch
    %13 = sbr.rel (0) target = $region5
  $region4: #{tpu_custom_call.1} parent=0 // pred_region
    _
  $region5: #{tpu_custom_call.1} parent=0 // pred_fallthru
    _
  // Predicated region
  $region6: #{tpu_custom_call.1} parent=0 // pred_check
    _
  $region7: #{tpu_custom_call.1} parent=0 // pred_check_branch
    %15 = sbr.rel (0) target = $region9
  $region8: #{tpu_custom_call.1} parent=0 // pred_region
    _
  $region9: #{tpu_custom_call.1} parent=0 // pred_fallthru
    _
  // Predicated region
  $region10: #{tpu_custom_call.1} parent=0 // pred_check
    _
  $region11: #{tpu_custom_call.1} parent=0 // pred_check_branch
    %17 = sbr.rel (0) target = $region13
  $region12: #{tpu_custom_call.1} parent=0 // pred_region
    _
  $region13: #{tpu_custom_call.1} parent=0 // pred_fallthru
    _
  // Predicated region
  $region14: #{tpu_custom_call.1} parent=0 // pred_check
    _
  $region15: #{tpu_custom_call.1} parent=0 // pred_check_branch
    %19 = sbr.rel (0) target = $region17
  $region16: #{tpu_custom_call.1} parent=0 // pred_region
    _
  $region17: #{tpu_custom_call.1} parent=0 // pred_fallthru
    _
  // Predicated region
  $region18: #{tpu_custom_call.1} parent=0 // pred_check
    _
  $region19: #{tpu_custom_call.1} parent=0 // pred_check_branch
    %21 = sbr.rel (0) target = $region21
  $region20: #{tpu_custom_call.1} parent=0 // pred_region
    _
  $region21: #{tpu_custom_call.1} parent=0 // pred_fallthru
    _
  // Predicated region
  $region22: #{tpu_custom_call.1} parent=0 // pred_check
    _
  $region23: #{tpu_custom_call.1} parent=0 // pred_check_branch
    %23 = sbr.rel (0) target = $region25
  $region24: #{tpu_custom_call.1} parent=0 // pred_region
    _
  $region25: #{tpu_custom_call.1} parent=0 // pred_fallthru
    _
  // Predicated region
  $region26: #{tpu_custom_call.1} parent=0 // pred_check
    _
  $region27: #{tpu_custom_call.1} parent=0 // pred_check_branch
    %25 = sbr.rel (0) target = $region29
  $region28: #{tpu_custom_call.1} parent=0 // pred_region
    _
  $region29: #{tpu_custom_call.1} parent=0 // pred_fallthru
    _
  %v26 = vld [vmem:[%s0] sm:$0xff]
  %v27 = vld [vmem:[%s0 + $0x8] sm:$0xff]
  %v28 = vld [vmem:[%s0 + $0x10] sm:$0xff]
  %v29 = vld [vmem:[%s0 + $0x18] sm:$0xff]
  %v30 = vld [vmem:[%s0 + $0x20] sm:$0xff]
  %v31 = vld [vmem:[%s0 + $0x28] sm:$0xff]
  %v32 = vld [vmem:[%s0 + $0x30] sm:$0xff]
  %v33 = vld [vmem:[%s0 + $0x38] sm:$0xff]
  %v34 = vld [vmem:[%s0 + $0x40] sm:$0xff]
  %v35 = vld [vmem:[%s0 + $0x48] sm:$0xff]
  %v36 = vld [vmem:[%s0 + $0x50] sm:$0xff]
  %v37 = vld [vmem:[%s0 + $0x58] sm:$0xff]
  %v38 = vld [vmem:[%s0 + $0x60] sm:$0xff]
  %v39 = vld [vmem:[%s0 + $0x68] sm:$0xff]
  %v40 = vld [vmem:[%s0 + $0x70] sm:$0xff]
  %v41 = vld [vmem:[%s0 + $0x78] sm:$0xff]
  %v42 = vld [vmem:[%s0 + $0x80] sm:$0xff]
  %v43 = vld [vmem:[%s0 + $0x88] sm:$0xff]
  %v44 = vld [vmem:[%s0 + $0x90] sm:$0xff]
  %v45 = vld [vmem:[%s0 + $0x98] sm:$0xff]
  %v46 = vld [vmem:[%s0 + $0xa0] sm:$0xff]
  %v47 = vld [vmem:[%s0 + $0xa8] sm:$0xff]
  %v48 = vld [vmem:[%s0 + $0xb0] sm:$0xff]
  %v49 = vld [vmem:[%s0 + $0xb8] sm:$0xff]
  %v50 = vld [vmem:[%s0 + $0xc0] sm:$0xff]
  %v51 = vld [vmem:[%s0 + $0xc8] sm:$0xff]
  %v52 = vld [vmem:[%s0 + $0xd0] sm:$0xff]
  %v53 = vld [vmem:[%s0 + $0xd8] sm:$0xff]
  %v54 = vld [vmem:[%s0 + $0xe0] sm:$0xff]
  %v55 = vld [vmem:[%s0 + $0xe8] sm:$0xff]
  %v56 = vld [vmem:[%s0 + $0xf0] sm:$0xff]
  %v57 = vld [vmem:[%s0 + $0xf8] sm:$0xff]
  %v58 = vld [vmem:[%s0 + $0x100] sm:$0xff]
  %v59 = vld [vmem:[%s0 + $0x108] sm:$0xff]
  %v60 = vld [vmem:[%s0 + $0x110] sm:$0xff]
  %v61 = vld [vmem:[%s0 + $0x118] sm:$0xff]
  %v62 = vld [vmem:[%s0 + $0x120] sm:$0xff]
  %v63 = vld [vmem:[%s0 + $0x128] sm:$0xff]
  %v64 = vld [vmem:[%s0 + $0x130] sm:$0xff]
  %v65 = vld [vmem:[%s0 + $0x138] sm:$0xff]
  %v66 = vld [vmem:[%s0 + $0x140] sm:$0xff]
  %v67 = vld [vmem:[%s0 + $0x148] sm:$0xff]
  %v68 = vld [vmem:[%s0 + $0x150] sm:$0xff]
  %v69 = vld [vmem:[%s0 + $0x158] sm:$0xff]
  %v70 = vld [vmem:[%s0 + $0x160] sm:$0xff]
  %v71 = vld [vmem:[%s0 + $0x168] sm:$0xff]
  %v72 = vld [vmem:[%s0 + $0x170] sm:$0xff]
  %v73 = vld [vmem:[%s0 + $0x178] sm:$0xff]
  %v74 = vld [vmem:[%s0 + $0x180] sm:$0xff]
  %v75 = vld [vmem:[%s0 + $0x188] sm:$0xff]
  %v76 = vld [vmem:[%s0 + $0x190] sm:$0xff]
  %v77 = vld [vmem:[%s0 + $0x198] sm:$0xff]
  %v78 = vld [vmem:[%s0 + $0x1a0] sm:$0xff]
  %v79 = vld [vmem:[%s0 + $0x1a8] sm:$0xff]
  %v80 = vld [vmem:[%s0 + $0x1b0] sm:$0xff]
  %v81 = vld [vmem:[%s0 + $0x1b8] sm:$0xff]
  %v82 = vld [vmem:[%s0 + $0x1c0] sm:$0xff]
  %v83 = vld [vmem:[%s0 + $0x1c8] sm:$0xff]
  %v84 = vld [vmem:[%s0 + $0x1d0] sm:$0xff]
  %v85 = vld [vmem:[%s0 + $0x1d8] sm:$0xff]
  %v86 = vld [vmem:[%s0 + $0x1e0] sm:$0xff]
  %v87 = vld [vmem:[%s0 + $0x1e8] sm:$0xff]
  %v88 = vld [vmem:[%s0 + $0x1f0] sm:$0xff]
  %v89 = vld [vmem:[%s0 + $0x1f8] sm:$0xff]
  %v90 = vld [vmem:[%s1] sm:$0xff]
  %v91 = vld [vmem:[%s2] sm:$0x1]
  %v93 = vlaneseq
  %v94 = vshrl.u32 %v93, 7
  %v95 = vsub.s32 0, %v94
  %v96 = vrot.slane %v91, %v95
  %vm98 = vcmask 64512
  %v100 = vsel %vm98, %v26, 0
  %v103 = vsel %vm98, %v27, 0
  %v106 = vsel %vm98, %v28, 0
  %v109 = vsel %vm98, %v29, 0
  %v112 = vsel %vm98, %v30, 0
  %v115 = vsel %vm98, %v31, 0
  %v118 = vsel %vm98, %v32, 0
  %v121 = vsel %vm98, %v33, 0
  %v124 = vsel %vm98, %v34, 0
  %v127 = vsel %vm98, %v35, 0
  %v130 = vsel %vm98, %v36, 0
  %v133 = vsel %vm98, %v37, 0
  %v136 = vsel %vm98, %v38, 0
  %v139 = vsel %vm98, %v39, 0
  %v142 = vsel %vm98, %v40, 0
  %v145 = vsel %vm98, %v41, 0
  %v148 = vsel %vm98, %v42, 0
  %v151 = vsel %vm98, %v43, 0
  %v154 = vsel %vm98, %v44, 0
  %v157 = vsel %vm98, %v45, 0
  %v160 = vsel %vm98, %v46, 0
  %v163 = vsel %vm98, %v47, 0
  %v166 = vsel %vm98, %v48, 0
  %v169 = vsel %vm98, %v49, 0
  %v172 = vsel %vm98, %v50, 0
  %v175 = vsel %vm98, %v51, 0
  %v178 = vsel %vm98, %v52, 0
  %v181 = vsel %vm98, %v53, 0
  %v184 = vsel %vm98, %v54, 0
  %v187 = vsel %vm98, %v55, 0
  %v190 = vsel %vm98, %v56, 0
  %v193 = vsel %vm98, %v57, 0
  %v196 = vsel %vm98, %v58, 0
  %v199 = vsel %vm98, %v59, 0
  %v202 = vsel %vm98, %v60, 0
  %v205 = vsel %vm98, %v61, 0
  %v208 = vsel %vm98, %v62, 0
  %v211 = vsel %vm98, %v63, 0
  %v214 = vsel %vm98, %v64, 0
  %v217 = vsel %vm98, %v65, 0
  %v220 = vsel %vm98, %v66, 0
  %v223 = vsel %vm98, %v67, 0
  %v226 = vsel %vm98, %v68, 0
  %v229 = vsel %vm98, %v69, 0
  %v232 = vsel %vm98, %v70, 0
  %v235 = vsel %vm98, %v71, 0
  %v238 = vsel %vm98, %v72, 0
  %v241 = vsel %vm98, %v73, 0
  %v244 = vsel %vm98, %v74, 0
  %v247 = vsel %vm98, %v75, 0
  %v250 = vsel %vm98, %v76, 0
  %v253 = vsel %vm98, %v77, 0
  %v256 = vsel %vm98, %v78, 0
  %v259 = vsel %vm98, %v79, 0
  %v262 = vsel %vm98, %v80, 0
  %v265 = vsel %vm98, %v81, 0
  %v268 = vsel %vm98, %v82, 0
  %v271 = vsel %vm98, %v83, 0
  %v274 = vsel %vm98, %v84, 0
  %v277 = vsel %vm98, %v85, 0
  %v280 = vsel %vm98, %v86, 0
  %v283 = vsel %vm98, %v87, 0
  %v286 = vsel %vm98, %v88, 0
  %v289 = vsel %vm98, %v89, 0
  %291 = vmatprep.subr.mxu0 0.0
  %292 = vmatpush1.msra.mxu0 %v90
  %293 = vmatprep.subr.mxu0 0.0
  %294 = vmatpush1.msra.mxu0 0.0
  %295 = vmatprep.subr.mxu0 0.0
  %296 = vmatpush1.msra.mxu0 0.0
  %297 = vmatprep.subr.mxu0 0.0
  %298 = vmatpush1.msra.mxu0 0.0
  %299 = vmatprep.subr.mxu0 0.0
  %300 = vmatpush1.msra.mxu0 0.0
  %301 = vmatprep.subr.mxu0 0.0
  %302 = vmatpush1.msra.mxu0 0.0
  %303 = vmatprep.subr.mxu0 0.0
  %304 = vmatpush1.msra.mxu0 0.0
  %305 = vmatprep.subr.mxu0 0.0
  %306 = vmatpush1.msra.mxu0 0.0
  %307 = vmatprep.subr.mxu0 0.0
  %308 = vmatpush1.msra.mxu0 0.0
  %309 = vmatprep.subr.mxu0 0.0
  %310 = vmatpush1.msra.mxu0 0.0
  %311 = vmatprep.subr.mxu0 0.0
  %312 = vmatpush1.msra.mxu0 0.0
  %313 = vmatprep.subr.mxu0 0.0
  %314 = vmatpush1.msra.mxu0 0.0
  %315 = vmatprep.subr.mxu0 0.0
  %316 = vmatpush1.msra.mxu0 0.0
  %317 = vmatprep.subr.mxu0 0.0
  %318 = vmatpush1.msra.mxu0 0.0
  %319 = vmatprep.subr.mxu0 0.0
  %320 = vmatpush1.msra.mxu0 0.0
  %321 = vmatprep.subr.mxu0 0.0
  %322 = vmatpush1.msra.mxu0 0.0
  %323 = vmatprep.subr.mxu0 0.0
  %324 = vmatpush1.msra.mxu0 0.0
  %325 = vmatprep.subr.mxu0 0.0
  %326 = vmatpush1.msra.mxu0 0.0
  %327 = vmatprep.subr.mxu0 0.0
  %328 = vmatpush1.msra.mxu0 0.0
  %329 = vmatprep.subr.mxu0 0.0
  %330 = vmatpush1.msra.mxu0 0.0
  %331 = vmatprep.subr.mxu0 0.0
  %332 = vmatpush1.msra.mxu0 0.0
  %333 = vmatprep.subr.mxu0 0.0
  %334 = vmatpush1.msra.mxu0 0.0
  %335 = vmatprep.subr.mxu0 0.0
  %336 = vmatpush1.msra.mxu0 0.0
  %337 = vmatprep.subr.mxu0 0.0
  %338 = vmatpush1.msra.mxu0 0.0
  %339 = vmatprep.subr.mxu0 0.0
  %340 = vmatpush1.msra.mxu0 0.0
  %341 = vmatprep.subr.mxu0 0.0
  %342 = vmatpush1.msra.mxu0 0.0
  %343 = vmatprep.subr.mxu0 0.0
  %344 = vmatpush1.msra.mxu0 0.0
  %345 = vmatprep.subr.mxu0 0.0
  %346 = vmatpush1.msra.mxu0 0.0
  %347 = vmatprep.subr.mxu0 0.0
  %348 = vmatpush1.msra.mxu0 0.0
  %349 = vmatprep.subr.mxu0 0.0
  %350 = vmatpush1.msra.mxu0 0.0
  %351 = vmatprep.subr.mxu0 0.0
  %352 = vmatpush1.msra.mxu0 0.0
  %353 = vmatprep.subr.mxu0 0.0
  %354 = vmatpush1.msra.mxu0 0.0
  %355 = vmatprep.mubr.f32.mxu0 0.0
  %356 = vmatmul.mubr.f32.gmra.mrb[0].mxu0 %v100
  %v357 = vpop.f32.mrb[0].mxu0
  %v358 = vadd.f32 %v96, %v357
  %v359 = vpop.f32.mrb[0].mxu0
  %360 = vmatprep.mubr.f32.mxu0 0.0
  %361 = vmatmul.mubr.f32.gmra.mrb[0].mxu0 %v103
  %v362 = vpop.f32.mrb[0].mxu0
  %v363 = vadd.f32 %v96, %v362
  %v364 = vpop.f32.mrb[0].mxu0
  %365 = vmatprep.mubr.f32.mxu0 0.0
  %366 = vmatmul.mubr.f32.gmra.mrb[0].mxu0 %v106
  %v367 = vpop.f32.mrb[0].mxu0
  %v368 = vadd.f32 %v96, %v367
  %v369 = vpop.f32.mrb[0].mxu0
  %370 = vmatprep.mubr.f32.mxu0 0.0
  %371 = vmatmul.mubr.f32.gmra.mrb[0].mxu0 %v109
  %v372 = vpop.f32.mrb[0].mxu0
  %v373 = vadd.f32 %v96, %v372
  %v374 = vpop.f32.mrb[0].mxu0
  %375 = vmatprep.mubr.f32.mxu0 0.0
  %376 = vmatmul.mubr.f32.gmra.mrb[0].mxu0 %v112
  %v377 = vpop.f32.mrb[0].mxu0
  %v378 = vadd.f32 %v96, %v377
  %v379 = vpop.f32.mrb[0].mxu0
  %380 = vmatprep.mubr.f32.mxu0 0.0
  %381 = vmatmul.mubr.f32.gmra.mrb[0].mxu0 %v115
  %v382 = vpop.f32.mrb[0].mxu0
  %v383 = vadd.f32 %v96, %v382
  %v384 = vpop.f32.mrb[0].mxu0
  %385 = vmatprep.mubr.f32.mxu0 0.0
  %386 = vmatmul.mubr.f32.gmra.mrb[0].mxu0 %v118
  %v387 = vpop.f32.mrb[0].mxu0
  %v388 = vadd.f32 %v96, %v387
  %v389 = vpop.f32.mrb[0].mxu0
  %390 = vmatprep.mubr.f32.mxu0 0.0
  %391 = vmatmul.mubr.f32.gmra.mrb[0].mxu0 %v121
  %v392 = vpop.f32.mrb[0].mxu0
  %v393 = vadd.f32 %v96, %v392
  %v394 = vpop.f32.mrb[0].mxu0
  %395 = vmatprep.mubr.f32.mxu0 0.0
  %396 = vmatmul.mubr.f32.gmra.mrb[0].mxu0 %v124
  %v397 = vpop.f32.mrb[0].mxu0
  %v398 = vadd.f32 %v96, %v397
  %v399 = vpop.f32.mrb[0].mxu0
  %400 = vmatprep.mubr.f32.mxu0 0.0
  %401 = vmatmul.mubr.f32.gmra.mrb[0].mxu0 %v127
  %v402 = vpop.f32.mrb[0].mxu0
  %v403 = vadd.f32 %v96, %v402
  %v404 = vpop.f32.mrb[0].mxu0
  %405 = vmatprep.mubr.f32.mxu0 0.0
  %406 = vmatmul.mubr.f32.gmra.mrb[0].mxu0 %v130
  %v407 = vpop.f32.mrb[0].mxu0
  %v408 = vadd.f32 %v96, %v407
  %v409 = vpop.f32.mrb[0].mxu0
  %410 = vmatprep.mubr.f32.mxu0 0.0
  %411 = vmatmul.mubr.f32.gmra.mrb[0].mxu0 %v133
  %v412 = vpop.f32.mrb[0].mxu0
  %v413 = vadd.f32 %v96, %v412
  %v414 = vpop.f32.mrb[0].mxu0
  %415 = vmatprep.mubr.f32.mxu0 0.0
  %416 = vmatmul.mubr.f32.gmra.mrb[0].mxu0 %v136
  %v417 = vpop.f32.mrb[0].mxu0
  %v418 = vadd.f32 %v96, %v417
  %v419 = vpop.f32.mrb[0].mxu0
  %420 = vmatprep.mubr.f32.mxu0 0.0
  %421 = vmatmul.mubr.f32.gmra.mrb[0].mxu0 %v139
  %v422 = vpop.f32.mrb[0].mxu0
  %v423 = vadd.f32 %v96, %v422
  %v424 = vpop.f32.mrb[0].mxu0
  %425 = vmatprep.mubr.f32.mxu0 0.0
  %426 = vmatmul.mubr.f32.gmra.mrb[0].mxu0 %v142
  %v427 = vpop.f32.mrb[0].mxu0
  %v428 = vadd.f32 %v96, %v427
  %v429 = vpop.f32.mrb[0].mxu0
  %430 = vmatprep.mubr.f32.mxu0 0.0
  %431 = vmatmul.mubr.f32.gmra.mrb[0].mxu0 %v145
  %v432 = vpop.f32.mrb[0].mxu0
  %v433 = vadd.f32 %v96, %v432
  %v434 = vpop.f32.mrb[0].mxu0
  %435 = vmatprep.mubr.f32.mxu0 0.0
  %436 = vmatmul.mubr.f32.gmra.mrb[0].mxu0 %v148
  %v437 = vpop.f32.mrb[0].mxu0
  %v438 = vadd.f32 %v96, %v437
  %v439 = vpop.f32.mrb[0].mxu0
  %440 = vmatprep.mubr.f32.mxu0 0.0
  %441 = vmatmul.mubr.f32.gmra.mrb[0].mxu0 %v151
  %v442 = vpop.f32.mrb[0].mxu0
  %v443 = vadd.f32 %v96, %v442
  %v444 = vpop.f32.mrb[0].mxu0
  %445 = vmatprep.mubr.f32.mxu0 0.0
  %446 = vmatmul.mubr.f32.gmra.mrb[0].mxu0 %v154
  %v447 = vpop.f32.mrb[0].mxu0
  %v448 = vadd.f32 %v96, %v447
  %v449 = vpop.f32.mrb[0].mxu0
  %450 = vmatprep.mubr.f32.mxu0 0.0
  %451 = vmatmul.mubr.f32.gmra.mrb[0].mxu0 %v157
  %v452 = vpop.f32.mrb[0].mxu0
  %v453 = vadd.f32 %v96, %v452
  %v454 = vpop.f32.mrb[0].mxu0
  %455 = vmatprep.mubr.f32.mxu0 0.0
  %456 = vmatmul.mubr.f32.gmra.mrb[0].mxu0 %v160
  %v457 = vpop.f32.mrb[0].mxu0
  %v458 = vadd.f32 %v96, %v457
  %v459 = vpop.f32.mrb[0].mxu0
  %460 = vmatprep.mubr.f32.mxu0 0.0
  %461 = vmatmul.mubr.f32.gmra.mrb[0].mxu0 %v163
  %v462 = vpop.f32.mrb[0].mxu0
  %v463 = vadd.f32 %v96, %v462
  %v464 = vpop.f32.mrb[0].mxu0
  %465 = vmatprep.mubr.f32.mxu0 0.0
  %466 = vmatmul.mubr.f32.gmra.mrb[0].mxu0 %v166
  %v467 = vpop.f32.mrb[0].mxu0
  %v468 = vadd.f32 %v96, %v467
  %v469 = vpop.f32.mrb[0].mxu0
  %470 = vmatprep.mubr.f32.mxu0 0.0
  %471 = vmatmul.mubr.f32.gmra.mrb[0].mxu0 %v169
  %v472 = vpop.f32.mrb[0].mxu0
  %v473 = vadd.f32 %v96, %v472
  %v474 = vpop.f32.mrb[0].mxu0
  %475 = vmatprep.mubr.f32.mxu0 0.0
  %476 = vmatmul.mubr.f32.gmra.mrb[0].mxu0 %v172
  %v477 = vpop.f32.mrb[0].mxu0
  %v478 = vadd.f32 %v96, %v477
  %v479 = vpop.f32.mrb[0].mxu0
  %480 = vmatprep.mubr.f32.mxu0 0.0
  %481 = vmatmul.mubr.f32.gmra.mrb[0].mxu0 %v175
  %v482 = vpop.f32.mrb[0].mxu0
  %v483 = vadd.f32 %v96, %v482
  %v484 = vpop.f32.mrb[0].mxu0
  %485 = vmatprep.mubr.f32.mxu0 0.0
  %486 = vmatmul.mubr.f32.gmra.mrb[0].mxu0 %v178
  %v487 = vpop.f32.mrb[0].mxu0
  %v488 = vadd.f32 %v96, %v487
  %v489 = vpop.f32.mrb[0].mxu0
  %490 = vmatprep.mubr.f32.mxu0 0.0
  %491 = vmatmul.mubr.f32.gmra.mrb[0].mxu0 %v181
  %v492 = vpop.f32.mrb[0].mxu0
  %v493 = vadd.f32 %v96, %v492
  %v494 = vpop.f32.mrb[0].mxu0
  %495 = vmatprep.mubr.f32.mxu0 0.0
  %496 = vmatmul.mubr.f32.gmra.mrb[0].mxu0 %v184
  %v497 = vpop.f32.mrb[0].mxu0
  %v498 = vadd.f32 %v96, %v497
  %v499 = vpop.f32.mrb[0].mxu0
  %500 = vmatprep.mubr.f32.mxu0 0.0
  %501 = vmatmul.mubr.f32.gmra.mrb[0].mxu0 %v187
  %v502 = vpop.f32.mrb[0].mxu0
  %v503 = vadd.f32 %v96, %v502
  %v504 = vpop.f32.mrb[0].mxu0
  %505 = vmatprep.mubr.f32.mxu0 0.0
  %506 = vmatmul.mubr.f32.gmra.mrb[0].mxu0 %v190
  %v507 = vpop.f32.mrb[0].mxu0
  %v508 = vadd.f32 %v96, %v507
  %v509 = vpop.f32.mrb[0].mxu0
  %510 = vmatprep.mubr.f32.mxu0 0.0
  %511 = vmatmul.mubr.f32.gmra.mrb[0].mxu0 %v193
  %v512 = vpop.f32.mrb[0].mxu0
  %v513 = vadd.f32 %v96, %v512
  %v514 = vpop.f32.mrb[0].mxu0
  %515 = vmatprep.mubr.f32.mxu0 0.0
  %516 = vmatmul.mubr.f32.gmra.mrb[0].mxu0 %v196
  %v517 = vpop.f32.mrb[0].mxu0
  %v518 = vadd.f32 %v96, %v517
  %v519 = vpop.f32.mrb[0].mxu0
  %520 = vmatprep.mubr.f32.mxu0 0.0
  %521 = vmatmul.mubr.f32.gmra.mrb[0].mxu0 %v199
  %v522 = vpop.f32.mrb[0].mxu0
  %v523 = vadd.f32 %v96, %v522
  %v524 = vpop.f32.mrb[0].mxu0
  %525 = vmatprep.mubr.f32.mxu0 0.0
  %526 = vmatmul.mubr.f32.gmra.mrb[0].mxu0 %v202
  %v527 = vpop.f32.mrb[0].mxu0
  %v528 = vadd.f32 %v96, %v527
  %v529 = vpop.f32.mrb[0].mxu0
  %530 = vmatprep.mubr.f32.mxu0 0.0
  %531 = vmatmul.mubr.f32.gmra.mrb[0].mxu0 %v205
  %v532 = vpop.f32.mrb[0].mxu0
  %v533 = vadd.f32 %v96, %v532
  %v534 = vpop.f32.mrb[0].mxu0
  %535 = vmatprep.mubr.f32.mxu0 0.0
  %536 = vmatmul.mubr.f32.gmra.mrb[0].mxu0 %v208
  %v537 = vpop.f32.mrb[0].mxu0
  %v538 = vadd.f32 %v96, %v537
  %v539 = vpop.f32.mrb[0].mxu0
  %540 = vmatprep.mubr.f32.mxu0 0.0
  %541 = vmatmul.mubr.f32.gmra.mrb[0].mxu0 %v211
  %v542 = vpop.f32.mrb[0].mxu0
  %v543 = vadd.f32 %v96, %v542
  %v544 = vpop.f32.mrb[0].mxu0
  %545 = vmatprep.mubr.f32.mxu0 0.0
  %546 = vmatmul.mubr.f32.gmra.mrb[0].mxu0 %v214
  %v547 = vpop.f32.mrb[0].mxu0
  %v548 = vadd.f32 %v96, %v547
  %v549 = vpop.f32.mrb[0].mxu0
  %550 = vmatprep.mubr.f32.mxu0 0.0
  %551 = vmatmul.mubr.f32.gmra.mrb[0].mxu0 %v217
  %v552 = vpop.f32.mrb[0].mxu0
  %v553 = vadd.f32 %v96, %v552
  %v554 = vpop.f32.mrb[0].mxu0
  %555 = vmatprep.mubr.f32.mxu0 0.0
  %556 = vmatmul.mubr.f32.gmra.mrb[0].mxu0 %v220
  %v557 = vpop.f32.mrb[0].mxu0
  %v558 = vadd.f32 %v96, %v557
  %v559 = vpop.f32.mrb[0].mxu0
  %560 = vmatprep.mubr.f32.mxu0 0.0
  %561 = vmatmul.mubr.f32.gmra.mrb[0].mxu0 %v223
  %v562 = vpop.f32.mrb[0].mxu0
  %v563 = vadd.f32 %v96, %v562
  %v564 = vpop.f32.mrb[0].mxu0
  %565 = vmatprep.mubr.f32.mxu0 0.0
  %566 = vmatmul.mubr.f32.gmra.mrb[0].mxu0 %v226
  %v567 = vpop.f32.mrb[0].mxu0
  %v568 = vadd.f32 %v96, %v567
  %v569 = vpop.f32.mrb[0].mxu0
  %570 = vmatprep.mubr.f32.mxu0 0.0
  %571 = vmatmul.mubr.f32.gmra.mrb[0].mxu0 %v229
  %v572 = vpop.f32.mrb[0].mxu0
  %v573 = vadd.f32 %v96, %v572
  %v574 = vpop.f32.mrb[0].mxu0
  %575 = vmatprep.mubr.f32.mxu0 0.0
  %576 = vmatmul.mubr.f32.gmra.mrb[0].mxu0 %v232
  %v577 = vpop.f32.mrb[0].mxu0
  %v578 = vadd.f32 %v96, %v577
  %v579 = vpop.f32.mrb[0].mxu0
  %580 = vmatprep.mubr.f32.mxu0 0.0
  %581 = vmatmul.mubr.f32.gmra.mrb[0].mxu0 %v235
  %v582 = vpop.f32.mrb[0].mxu0
  %v583 = vadd.f32 %v96, %v582
  %v584 = vpop.f32.mrb[0].mxu0
  %585 = vmatprep.mubr.f32.mxu0 0.0
  %586 = vmatmul.mubr.f32.gmra.mrb[0].mxu0 %v238
  %v587 = vpop.f32.mrb[0].mxu0
  %v588 = vadd.f32 %v96, %v587
  %v589 = vpop.f32.mrb[0].mxu0
  %590 = vmatprep.mubr.f32.mxu0 0.0
  %591 = vmatmul.mubr.f32.gmra.mrb[0].mxu0 %v241
  %v592 = vpop.f32.mrb[0].mxu0
  %v593 = vadd.f32 %v96, %v592
  %v594 = vpop.f32.mrb[0].mxu0
  %595 = vmatprep.mubr.f32.mxu0 0.0
  %596 = vmatmul.mubr.f32.gmra.mrb[0].mxu0 %v244
  %v597 = vpop.f32.mrb[0].mxu0
  %v598 = vadd.f32 %v96, %v597
  %v599 = vpop.f32.mrb[0].mxu0
  %600 = vmatprep.mubr.f32.mxu0 0.0
  %601 = vmatmul.mubr.f32.gmra.mrb[0].mxu0 %v247
  %v602 = vpop.f32.mrb[0].mxu0
  %v603 = vadd.f32 %v96, %v602
  %v604 = vpop.f32.mrb[0].mxu0
  %605 = vmatprep.mubr.f32.mxu0 0.0
  %606 = vmatmul.mubr.f32.gmra.mrb[0].mxu0 %v250
  %v607 = vpop.f32.mrb[0].mxu0
  %v608 = vadd.f32 %v96, %v607
  %v609 = vpop.f32.mrb[0].mxu0
  %610 = vmatprep.mubr.f32.mxu0 0.0
  %611 = vmatmul.mubr.f32.gmra.mrb[0].mxu0 %v253
  %v612 = vpop.f32.mrb[0].mxu0
  %v613 = vadd.f32 %v96, %v612
  %v614 = vpop.f32.mrb[0].mxu0
  %615 = vmatprep.mubr.f32.mxu0 0.0
  %616 = vmatmul.mubr.f32.gmra.mrb[0].mxu0 %v256
  %v617 = vpop.f32.mrb[0].mxu0
  %v618 = vadd.f32 %v96, %v617
  %v619 = vpop.f32.mrb[0].mxu0
  %620 = vmatprep.mubr.f32.mxu0 0.0
  %621 = vmatmul.mubr.f32.gmra.mrb[0].mxu0 %v259
  %v622 = vpop.f32.mrb[0].mxu0
  %v623 = vadd.f32 %v96, %v622
  %v624 = vpop.f32.mrb[0].mxu0
  %625 = vmatprep.mubr.f32.mxu0 0.0
  %626 = vmatmul.mubr.f32.gmra.mrb[0].mxu0 %v262
  %v627 = vpop.f32.mrb[0].mxu0
  %v628 = vadd.f32 %v96, %v627
  %v629 = vpop.f32.mrb[0].mxu0
  %630 = vmatprep.mubr.f32.mxu0 0.0
  %631 = vmatmul.mubr.f32.gmra.mrb[0].mxu0 %v265
  %v632 = vpop.f32.mrb[0].mxu0
  %v633 = vadd.f32 %v96, %v632
  %v634 = vpop.f32.mrb[0].mxu0
  %635 = vmatprep.mubr.f32.mxu0 0.0
  %636 = vmatmul.mubr.f32.gmra.mrb[0].mxu0 %v268
  %v637 = vpop.f32.mrb[0].mxu0
  %v638 = vadd.f32 %v96, %v637
  %v639 = vpop.f32.mrb[0].mxu0
  %640 = vmatprep.mubr.f32.mxu0 0.0
  %641 = vmatmul.mubr.f32.gmra.mrb[0].mxu0 %v271
  %v642 = vpop.f32.mrb[0].mxu0
  %v643 = vadd.f32 %v96, %v642
  %v644 = vpop.f32.mrb[0].mxu0
  %645 = vmatprep.mubr.f32.mxu0 0.0
  %646 = vmatmul.mubr.f32.gmra.mrb[0].mxu0 %v274
  %v647 = vpop.f32.mrb[0].mxu0
  %v648 = vadd.f32 %v96, %v647
  %v649 = vpop.f32.mrb[0].mxu0
  %650 = vmatprep.mubr.f32.mxu0 0.0
  %651 = vmatmul.mubr.f32.gmra.mrb[0].mxu0 %v277
  %v652 = vpop.f32.mrb[0].mxu0
  %v653 = vadd.f32 %v96, %v652
  %v654 = vpop.f32.mrb[0].mxu0
  %655 = vmatprep.mubr.f32.mxu0 0.0
  %656 = vmatmul.mubr.f32.gmra.mrb[0].mxu0 %v280
  %v657 = vpop.f32.mrb[0].mxu0
  %v658 = vadd.f32 %v96, %v657
  %v659 = vpop.f32.mrb[0].mxu0
  %660 = vmatprep.mubr.f32.mxu0 0.0
  %661 = vmatmul.mubr.f32.gmra.mrb[0].mxu0 %v283
  %v662 = vpop.f32.mrb[0].mxu0
  %v663 = vadd.f32 %v96, %v662
  %v664 = vpop.f32.mrb[0].mxu0
  %665 = vmatprep.mubr.f32.mxu0 0.0
  %666 = vmatmul.mubr.f32.gmra.mrb[0].mxu0 %v286
  %v667 = vpop.f32.mrb[0].mxu0
  %v668 = vadd.f32 %v96, %v667
  %v669 = vpop.f32.mrb[0].mxu0
  %670 = vmatprep.mubr.f32.mxu0 0.0
  %671 = vmatmul.mubr.f32.gmra.mrb[0].mxu0 %v289
  %v672 = vpop.f32.mrb[0].mxu0
  %v673 = vadd.f32 %v96, %v672
  %v674 = vpop.f32.mrb[0].mxu0
  %675 = vdwg.mxu0
  %v676 = vld [vmem:[%s3] sm:$0xff]
  %v677 = vld [vmem:[%s4] sm:$0x1]
  %v679 = vlaneseq
  %v680 = vshrl.u32 %v679, 7
  %v681 = vsub.s32 0, %v680
  %v682 = vrot.slane %v677, %v681
  %684 = vmatprep.subr.mxu0 0.0
  %685 = vmatpush1.msra.mxu0 %v676
  %686 = vmatprep.subr.mxu0 0.0
  %687 = vmatpush1.msra.mxu0 0.0
  %688 = vmatprep.subr.mxu0 0.0
  %689 = vmatpush1.msra.mxu0 0.0
  %690 = vmatprep.subr.mxu0 0.0
  %691 = vmatpush1.msra.mxu0 0.0
  %692 = vmatprep.subr.mxu0 0.0
  %693 = vmatpush1.msra.mxu0 0.0
  %694 = vmatprep.subr.mxu0 0.0
  %695 = vmatpush1.msra.mxu0 0.0
  %696 = vmatprep.subr.mxu0 0.0
  %697 = vmatpush1.msra.mxu0 0.0
  %698 = vmatprep.subr.mxu0 0.0
  %699 = vmatpush1.msra.mxu0 0.0
  %700 = vmatprep.subr.mxu0 0.0
  %701 = vmatpush1.msra.mxu0 0.0
  %702 = vmatprep.subr.mxu0 0.0
  %703 = vmatpush1.msra.mxu0 0.0
  %704 = vmatprep.subr.mxu0 0.0
  %705 = vmatpush1.msra.mxu0 0.0
  %706 = vmatprep.subr.mxu0 0.0
  %707 = vmatpush1.msra.mxu0 0.0
  %708 = vmatprep.subr.mxu0 0.0
  %709 = vmatpush1.msra.mxu0 0.0
  %710 = vmatprep.subr.mxu0 0.0
  %711 = vmatpush1.msra.mxu0 0.0
  %712 = vmatprep.subr.mxu0 0.0
  %713 = vmatpush1.msra.mxu0 0.0
  %714 = vmatprep.subr.mxu0 0.0
  %715 = vmatpush1.msra.mxu0 0.0
  %716 = vmatprep.subr.mxu0 0.0
  %717 = vmatpush1.msra.mxu0 0.0
  %718 = vmatprep.subr.mxu0 0.0
  %719 = vmatpush1.msra.mxu0 0.0
  %720 = vmatprep.subr.mxu0 0.0
  %721 = vmatpush1.msra.mxu0 0.0
  %722 = vmatprep.subr.mxu0 0.0
  %723 = vmatpush1.msra.mxu0 0.0
  %724 = vmatprep.subr.mxu0 0.0
  %725 = vmatpush1.msra.mxu0 0.0
  %726 = vmatprep.subr.mxu0 0.0
  %727 = vmatpush1.msra.mxu0 0.0
  %728 = vmatprep.subr.mxu0 0.0
  %729 = vmatpush1.msra.mxu0 0.0
  %730 = vmatprep.subr.mxu0 0.0
  %731 = vmatpush1.msra.mxu0 0.0
  %732 = vmatprep.subr.mxu0 0.0
  %733 = vmatpush1.msra.mxu0 0.0
  %734 = vmatprep.subr.mxu0 0.0
  %735 = vmatpush1.msra.mxu0 0.0
  %736 = vmatprep.subr.mxu0 0.0
  %737 = vmatpush1.msra.mxu0 0.0
  %738 = vmatprep.subr.mxu0 0.0
  %739 = vmatpush1.msra.mxu0 0.0
  %740 = vmatprep.subr.mxu0 0.0
  %741 = vmatpush1.msra.mxu0 0.0
  %742 = vmatprep.subr.mxu0 0.0
  %743 = vmatpush1.msra.mxu0 0.0
  %744 = vmatprep.subr.mxu0 0.0
  %745 = vmatpush1.msra.mxu0 0.0
  %746 = vmatprep.subr.mxu0 0.0
  %747 = vmatpush1.msra.mxu0 0.0
  %748 = vmatprep.mubr.f32.mxu0 0.0
  %749 = vmatmul.mubr.f32.gmra.mrb[0].mxu0 %v100
  %v750 = vpop.f32.mrb[0].mxu0
  %v751 = vadd.f32 %v682, %v750
  %v752 = vpop.f32.mrb[0].mxu0
  %753 = vmatprep.mubr.f32.mxu0 0.0
  %754 = vmatmul.mubr.f32.gmra.mrb[0].mxu0 %v103
  %v755 = vpop.f32.mrb[0].mxu0
  %v756 = vadd.f32 %v682, %v755
  %v757 = vpop.f32.mrb[0].mxu0
  %758 = vmatprep.mubr.f32.mxu0 0.0
  %759 = vmatmul.mubr.f32.gmra.mrb[0].mxu0 %v106
  %v760 = vpop.f32.mrb[0].mxu0
  %v761 = vadd.f32 %v682, %v760
  %v762 = vpop.f32.mrb[0].mxu0
  %763 = vmatprep.mubr.f32.mxu0 0.0
  %764 = vmatmul.mubr.f32.gmra.mrb[0].mxu0 %v109
  %v765 = vpop.f32.mrb[0].mxu0
  %v766 = vadd.f32 %v682, %v765
  %v767 = vpop.f32.mrb[0].mxu0
  %768 = vmatprep.mubr.f32.mxu0 0.0
  %769 = vmatmul.mubr.f32.gmra.mrb[0].mxu0 %v112
  %v770 = vpop.f32.mrb[0].mxu0
  %v771 = vadd.f32 %v682, %v770
  %v772 = vpop.f32.mrb[0].mxu0
  %773 = vmatprep.mubr.f32.mxu0 0.0
  %774 = vmatmul.mubr.f32.gmra.mrb[0].mxu0 %v115
  %v775 = vpop.f32.mrb[0].mxu0
  %v776 = vadd.f32 %v682, %v775
  %v777 = vpop.f32.mrb[0].mxu0
  %778 = vmatprep.mubr.f32.mxu0 0.0
  %779 = vmatmul.mubr.f32.gmra.mrb[0].mxu0 %v118
  %v780 = vpop.f32.mrb[0].mxu0
  %v781 = vadd.f32 %v682, %v780
  %v782 = vpop.f32.mrb[0].mxu0
  %783 = vmatprep.mubr.f32.mxu0 0.0
  %784 = vmatmul.mubr.f32.gmra.mrb[0].mxu0 %v121
  %v785 = vpop.f32.mrb[0].mxu0
  %v786 = vadd.f32 %v682, %v785
  %v787 = vpop.f32.mrb[0].mxu0
  %788 = vmatprep.mubr.f32.mxu0 0.0
  %789 = vmatmul.mubr.f32.gmra.mrb[0].mxu0 %v124
  %v790 = vpop.f32.mrb[0].mxu0
  %v791 = vadd.f32 %v682, %v790
  %v792 = vpop.f32.mrb[0].mxu0
  %793 = vmatprep.mubr.f32.mxu0 0.0
  %794 = vmatmul.mubr.f32.gmra.mrb[0].mxu0 %v127
  %v795 = vpop.f32.mrb[0].mxu0
  %v796 = vadd.f32 %v682, %v795
  %v797 = vpop.f32.mrb[0].mxu0
  %798 = vmatprep.mubr.f32.mxu0 0.0
  %799 = vmatmul.mubr.f32.gmra.mrb[0].mxu0 %v130
  %v800 = vpop.f32.mrb[0].mxu0
  %v801 = vadd.f32 %v682, %v800
  %v802 = vpop.f32.mrb[0].mxu0
  %803 = vmatprep.mubr.f32.mxu0 0.0
  %804 = vmatmul.mubr.f32.gmra.mrb[0].mxu0 %v133
  %v805 = vpop.f32.mrb[0].mxu0
  %v806 = vadd.f32 %v682, %v805
  %v807 = vpop.f32.mrb[0].mxu0
  %808 = vmatprep.mubr.f32.mxu0 0.0
  %809 = vmatmul.mubr.f32.gmra.mrb[0].mxu0 %v136
  %v810 = vpop.f32.mrb[0].mxu0
  %v811 = vadd.f32 %v682, %v810
  %v812 = vpop.f32.mrb[0].mxu0
  %813 = vmatprep.mubr.f32.mxu0 0.0
  %814 = vmatmul.mubr.f32.gmra.mrb[0].mxu0 %v139
  %v815 = vpop.f32.mrb[0].mxu0
  %v816 = vadd.f32 %v682, %v815
  %v817 = vpop.f32.mrb[0].mxu0
  %818 = vmatprep.mubr.f32.mxu0 0.0
  %819 = vmatmul.mubr.f32.gmra.mrb[0].mxu0 %v142
  %v820 = vpop.f32.mrb[0].mxu0
  %v821 = vadd.f32 %v682, %v820
  %v822 = vpop.f32.mrb[0].mxu0
  %823 = vmatprep.mubr.f32.mxu0 0.0
  %824 = vmatmul.mubr.f32.gmra.mrb[0].mxu0 %v145
  %v825 = vpop.f32.mrb[0].mxu0
  %v826 = vadd.f32 %v682, %v825
  %v827 = vpop.f32.mrb[0].mxu0
  %828 = vmatprep.mubr.f32.mxu0 0.0
  %829 = vmatmul.mubr.f32.gmra.mrb[0].mxu0 %v148
  %v830 = vpop.f32.mrb[0].mxu0
  %v831 = vadd.f32 %v682, %v830
  %v832 = vpop.f32.mrb[0].mxu0
  %833 = vmatprep.mubr.f32.mxu0 0.0
  %834 = vmatmul.mubr.f32.gmra.mrb[0].mxu0 %v151
  %v835 = vpop.f32.mrb[0].mxu0
  %v836 = vadd.f32 %v682, %v835
  %v837 = vpop.f32.mrb[0].mxu0
  %838 = vmatprep.mubr.f32.mxu0 0.0
  %839 = vmatmul.mubr.f32.gmra.mrb[0].mxu0 %v154
  %v840 = vpop.f32.mrb[0].mxu0
  %v841 = vadd.f32 %v682, %v840
  %v842 = vpop.f32.mrb[0].mxu0
  %843 = vmatprep.mubr.f32.mxu0 0.0
  %844 = vmatmul.mubr.f32.gmra.mrb[0].mxu0 %v157
  %v845 = vpop.f32.mrb[0].mxu0
  %v846 = vadd.f32 %v682, %v845
  %v847 = vpop.f32.mrb[0].mxu0
  %848 = vmatprep.mubr.f32.mxu0 0.0
  %849 = vmatmul.mubr.f32.gmra.mrb[0].mxu0 %v160
  %v850 = vpop.f32.mrb[0].mxu0
  %v851 = vadd.f32 %v682, %v850
  %v852 = vpop.f32.mrb[0].mxu0
  %853 = vmatprep.mubr.f32.mxu0 0.0
  %854 = vmatmul.mubr.f32.gmra.mrb[0].mxu0 %v163
  %v855 = vpop.f32.mrb[0].mxu0
  %v856 = vadd.f32 %v682, %v855
  %v857 = vpop.f32.mrb[0].mxu0
  %858 = vmatprep.mubr.f32.mxu0 0.0
  %859 = vmatmul.mubr.f32.gmra.mrb[0].mxu0 %v166
  %v860 = vpop.f32.mrb[0].mxu0
  %v861 = vadd.f32 %v682, %v860
  %v862 = vpop.f32.mrb[0].mxu0
  %863 = vmatprep.mubr.f32.mxu0 0.0
  %864 = vmatmul.mubr.f32.gmra.mrb[0].mxu0 %v169
  %v865 = vpop.f32.mrb[0].mxu0
  %v866 = vadd.f32 %v682, %v865
  %v867 = vpop.f32.mrb[0].mxu0
  %868 = vmatprep.mubr.f32.mxu0 0.0
  %869 = vmatmul.mubr.f32.gmra.mrb[0].mxu0 %v172
  %v870 = vpop.f32.mrb[0].mxu0
  %v871 = vadd.f32 %v682, %v870
  %v872 = vpop.f32.mrb[0].mxu0
  %873 = vmatprep.mubr.f32.mxu0 0.0
  %874 = vmatmul.mubr.f32.gmra.mrb[0].mxu0 %v175
  %v875 = vpop.f32.mrb[0].mxu0
  %v876 = vadd.f32 %v682, %v875
  %v877 = vpop.f32.mrb[0].mxu0
  %878 = vmatprep.mubr.f32.mxu0 0.0
  %879 = vmatmul.mubr.f32.gmra.mrb[0].mxu0 %v178
  %v880 = vpop.f32.mrb[0].mxu0
  %v881 = vadd.f32 %v682, %v880
  %v882 = vpop.f32.mrb[0].mxu0
  %883 = vmatprep.mubr.f32.mxu0 0.0
  %884 = vmatmul.mubr.f32.gmra.mrb[0].mxu0 %v181
  %v885 = vpop.f32.mrb[0].mxu0
  %v886 = vadd.f32 %v682, %v885
  %v887 = vpop.f32.mrb[0].mxu0
  %888 = vmatprep.mubr.f32.mxu0 0.0
  %889 = vmatmul.mubr.f32.gmra.mrb[0].mxu0 %v184
  %v890 = vpop.f32.mrb[0].mxu0
  %v891 = vadd.f32 %v682, %v890
  %v892 = vpop.f32.mrb[0].mxu0
  %893 = vmatprep.mubr.f32.mxu0 0.0
  %894 = vmatmul.mubr.f32.gmra.mrb[0].mxu0 %v187
  %v895 = vpop.f32.mrb[0].mxu0
  %v896 = vadd.f32 %v682, %v895
  %v897 = vpop.f32.mrb[0].mxu0
  %898 = vmatprep.mubr.f32.mxu0 0.0
  %899 = vmatmul.mubr.f32.gmra.mrb[0].mxu0 %v190
  %v900 = vpop.f32.mrb[0].mxu0
  %v901 = vadd.f32 %v682, %v900
  %v902 = vpop.f32.mrb[0].mxu0
  %903 = vmatprep.mubr.f32.mxu0 0.0
  %904 = vmatmul.mubr.f32.gmra.mrb[0].mxu0 %v193
  %v905 = vpop.f32.mrb[0].mxu0
  %v906 = vadd.f32 %v682, %v905
  %v907 = vpop.f32.mrb[0].mxu0
  %908 = vmatprep.mubr.f32.mxu0 0.0
  %909 = vmatmul.mubr.f32.gmra.mrb[0].mxu0 %v196
  %v910 = vpop.f32.mrb[0].mxu0
  %v911 = vadd.f32 %v682, %v910
  %v912 = vpop.f32.mrb[0].mxu0
  %913 = vmatprep.mubr.f32.mxu0 0.0
  %914 = vmatmul.mubr.f32.gmra.mrb[0].mxu0 %v199
  %v915 = vpop.f32.mrb[0].mxu0
  %v916 = vadd.f32 %v682, %v915
  %v917 = vpop.f32.mrb[0].mxu0
  %918 = vmatprep.mubr.f32.mxu0 0.0
  %919 = vmatmul.mubr.f32.gmra.mrb[0].mxu0 %v202
  %v920 = vpop.f32.mrb[0].mxu0
  %v921 = vadd.f32 %v682, %v920
  %v922 = vpop.f32.mrb[0].mxu0
  %923 = vmatprep.mubr.f32.mxu0 0.0
  %924 = vmatmul.mubr.f32.gmra.mrb[0].mxu0 %v205
  %v925 = vpop.f32.mrb[0].mxu0
  %v926 = vadd.f32 %v682, %v925
  %v927 = vpop.f32.mrb[0].mxu0
  %928 = vmatprep.mubr.f32.mxu0 0.0
  %929 = vmatmul.mubr.f32.gmra.mrb[0].mxu0 %v208
  %v930 = vpop.f32.mrb[0].mxu0
  %v931 = vadd.f32 %v682, %v930
  %v932 = vpop.f32.mrb[0].mxu0
  %933 = vmatprep.mubr.f32.mxu0 0.0
  %934 = vmatmul.mubr.f32.gmra.mrb[0].mxu0 %v211
  %v935 = vpop.f32.mrb[0].mxu0
  %v936 = vadd.f32 %v682, %v935
  %v937 = vpop.f32.mrb[0].mxu0
  %938 = vmatprep.mubr.f32.mxu0 0.0
  %939 = vmatmul.mubr.f32.gmra.mrb[0].mxu0 %v214
  %v940 = vpop.f32.mrb[0].mxu0
  %v941 = vadd.f32 %v682, %v940
  %v942 = vpop.f32.mrb[0].mxu0
  %943 = vmatprep.mubr.f32.mxu0 0.0
  %944 = vmatmul.mubr.f32.gmra.mrb[0].mxu0 %v217
  %v945 = vpop.f32.mrb[0].mxu0
  %v946 = vadd.f32 %v682, %v945
  %v947 = vpop.f32.mrb[0].mxu0
  %948 = vmatprep.mubr.f32.mxu0 0.0
  %949 = vmatmul.mubr.f32.gmra.mrb[0].mxu0 %v220
  %v950 = vpop.f32.mrb[0].mxu0
  %v951 = vadd.f32 %v682, %v950
  %v952 = vpop.f32.mrb[0].mxu0
  %953 = vmatprep.mubr.f32.mxu0 0.0
  %954 = vmatmul.mubr.f32.gmra.mrb[0].mxu0 %v223
  %v955 = vpop.f32.mrb[0].mxu0
  %v956 = vadd.f32 %v682, %v955
  %v957 = vpop.f32.mrb[0].mxu0
  %958 = vmatprep.mubr.f32.mxu0 0.0
  %959 = vmatmul.mubr.f32.gmra.mrb[0].mxu0 %v226
  %v960 = vpop.f32.mrb[0].mxu0
  %v961 = vadd.f32 %v682, %v960
  %v962 = vpop.f32.mrb[0].mxu0
  %963 = vmatprep.mubr.f32.mxu0 0.0
  %964 = vmatmul.mubr.f32.gmra.mrb[0].mxu0 %v229
  %v965 = vpop.f32.mrb[0].mxu0
  %v966 = vadd.f32 %v682, %v965
  %v967 = vpop.f32.mrb[0].mxu0
  %968 = vmatprep.mubr.f32.mxu0 0.0
  %969 = vmatmul.mubr.f32.gmra.mrb[0].mxu0 %v232
  %v970 = vpop.f32.mrb[0].mxu0
  %v971 = vadd.f32 %v682, %v970
  %v972 = vpop.f32.mrb[0].mxu0
  %973 = vmatprep.mubr.f32.mxu0 0.0
  %974 = vmatmul.mubr.f32.gmra.mrb[0].mxu0 %v235
  %v975 = vpop.f32.mrb[0].mxu0
  %v976 = vadd.f32 %v682, %v975
  %v977 = vpop.f32.mrb[0].mxu0
  %978 = vmatprep.mubr.f32.mxu0 0.0
  %979 = vmatmul.mubr.f32.gmra.mrb[0].mxu0 %v238
  %v980 = vpop.f32.mrb[0].mxu0
  %v981 = vadd.f32 %v682, %v980
  %v982 = vpop.f32.mrb[0].mxu0
  %983 = vmatprep.mubr.f32.mxu0 0.0
  %984 = vmatmul.mubr.f32.gmra.mrb[0].mxu0 %v241
  %v985 = vpop.f32.mrb[0].mxu0
  %v986 = vadd.f32 %v682, %v985
  %v987 = vpop.f32.mrb[0].mxu0
  %988 = vmatprep.mubr.f32.mxu0 0.0
  %989 = vmatmul.mubr.f32.gmra.mrb[0].mxu0 %v244
  %v990 = vpop.f32.mrb[0].mxu0
  %v991 = vadd.f32 %v682, %v990
  %v992 = vpop.f32.mrb[0].mxu0
  %993 = vmatprep.mubr.f32.mxu0 0.0
  %994 = vmatmul.mubr.f32.gmra.mrb[0].mxu0 %v247
  %v995 = vpop.f32.mrb[0].mxu0
  %v996 = vadd.f32 %v682, %v995
  %v997 = vpop.f32.mrb[0].mxu0
  %998 = vmatprep.mubr.f32.mxu0 0.0
  %999 = vmatmul.mubr.f32.gmra.mrb[0].mxu0 %v250
  %v1000 = vpop.f32.mrb[0].mxu0
  %v1001 = vadd.f32 %v682, %v1000
  %v1002 = vpop.f32.mrb[0].mxu0
  %1003 = vmatprep.mubr.f32.mxu0 0.0
  %1004 = vmatmul.mubr.f32.gmra.mrb[0].mxu0 %v253
  %v1005 = vpop.f32.mrb[0].mxu0
  %v1006 = vadd.f32 %v682, %v1005
  %v1007 = vpop.f32.mrb[0].mxu0
  %1008 = vmatprep.mubr.f32.mxu0 0.0
  %1009 = vmatmul.mubr.f32.gmra.mrb[0].mxu0 %v256
  %v1010 = vpop.f32.mrb[0].mxu0
  %v1011 = vadd.f32 %v682, %v1010
  %v1012 = vpop.f32.mrb[0].mxu0
  %1013 = vmatprep.mubr.f32.mxu0 0.0
  %1014 = vmatmul.mubr.f32.gmra.mrb[0].mxu0 %v259
  %v1015 = vpop.f32.mrb[0].mxu0
  %v1016 = vadd.f32 %v682, %v1015
  %v1017 = vpop.f32.mrb[0].mxu0
  %1018 = vmatprep.mubr.f32.mxu0 0.0
  %1019 = vmatmul.mubr.f32.gmra.mrb[0].mxu0 %v262
  %v1020 = vpop.f32.mrb[0].mxu0
  %v1021 = vadd.f32 %v682, %v1020
  %v1022 = vpop.f32.mrb[0].mxu0
  %1023 = vmatprep.mubr.f32.mxu0 0.0
  %1024 = vmatmul.mubr.f32.gmra.mrb[0].mxu0 %v265
  %v1025 = vpop.f32.mrb[0].mxu0
  %v1026 = vadd.f32 %v682, %v1025
  %v1027 = vpop.f32.mrb[0].mxu0
  %1028 = vmatprep.mubr.f32.mxu0 0.0
  %1029 = vmatmul.mubr.f32.gmra.mrb[0].mxu0 %v268
  %v1030 = vpop.f32.mrb[0].mxu0
  %v1031 = vadd.f32 %v682, %v1030
  %v1032 = vpop.f32.mrb[0].mxu0
  %1033 = vmatprep.mubr.f32.mxu0 0.0
  %1034 = vmatmul.mubr.f32.gmra.mrb[0].mxu0 %v271
  %v1035 = vpop.f32.mrb[0].mxu0
  %v1036 = vadd.f32 %v682, %v1035
  %v1037 = vpop.f32.mrb[0].mxu0
  %1038 = vmatprep.mubr.f32.mxu0 0.0
  %1039 = vmatmul.mubr.f32.gmra.mrb[0].mxu0 %v274
  %v1040 = vpop.f32.mrb[0].mxu0
  %v1041 = vadd.f32 %v682, %v1040
  %v1042 = vpop.f32.mrb[0].mxu0
  %1043 = vmatprep.mubr.f32.mxu0 0.0
  %1044 = vmatmul.mubr.f32.gmra.mrb[0].mxu0 %v277
  %v1045 = vpop.f32.mrb[0].mxu0
  %v1046 = vadd.f32 %v682, %v1045
  %v1047 = vpop.f32.mrb[0].mxu0
  %1048 = vmatprep.mubr.f32.mxu0 0.0
  %1049 = vmatmul.mubr.f32.gmra.mrb[0].mxu0 %v280
  %v1050 = vpop.f32.mrb[0].mxu0
  %v1051 = vadd.f32 %v682, %v1050
  %v1052 = vpop.f32.mrb[0].mxu0
  %1053 = vmatprep.mubr.f32.mxu0 0.0
  %1054 = vmatmul.mubr.f32.gmra.mrb[0].mxu0 %v283
  %v1055 = vpop.f32.mrb[0].mxu0
  %v1056 = vadd.f32 %v682, %v1055
  %v1057 = vpop.f32.mrb[0].mxu0
  %1058 = vmatprep.mubr.f32.mxu0 0.0
  %1059 = vmatmul.mubr.f32.gmra.mrb[0].mxu0 %v286
  %v1060 = vpop.f32.mrb[0].mxu0
  %v1061 = vadd.f32 %v682, %v1060
  %v1062 = vpop.f32.mrb[0].mxu0
  %1063 = vmatprep.mubr.f32.mxu0 0.0
  %1064 = vmatmul.mubr.f32.gmra.mrb[0].mxu0 %v289
  %v1065 = vpop.f32.mrb[0].mxu0
  %v1066 = vadd.f32 %v682, %v1065
  %v1067 = vpop.f32.mrb[0].mxu0
  %1068 = vdwg.mxu0
  %vm1069 = vcmask 15360
  %1070 = vst.msk [vmem:[#allocation2] sm:$0xff] %vm1069, 0.0
  %1071 = vst.msk [vmem:[#allocation2 + $0x8] sm:$0xff] %vm1069, 0.0
  %1072 = vst.msk [vmem:[#allocation2 + $0x10] sm:$0xff] %vm1069, 0.0
  %vm1073 = vcmask 8192
  %1074 = vst.msk [vmem:[#allocation2 + $0x18] sm:$0x1] %vm1073, 0.0
  %1075 = vst.msk [vmem:[#allocation2 + $0x240] sm:$0xff] %vm1069, 0.0
  %1076 = vst.msk [vmem:[#allocation2 + $0x248] sm:$0xff] %vm1069, 0.0
  %1077 = vst.msk [vmem:[#allocation2 + $0x250] sm:$0xff] %vm1069, 0.0
  %1078 = vst.msk [vmem:[#allocation2 + $0x258] sm:$0x1] %vm1073, 0.0
  %s1079 = scalar_lea.vmem [#allocation2], 544
  %1080 = vst.msk [vmem:[%s1079] sm:$0xff] %vm1069, 0.0
  %1081 = vst.msk [vmem:[%s1079 + $0x8] sm:$0xff] %vm1069, 0.0
  %1082 = vst.msk [vmem:[%s1079 + $0x10] sm:$0xff] %vm1069, 0.0
  %1083 = vst.msk [vmem:[%s1079 + $0x18] sm:$0x1] %vm1073, 0.0
  %1084 = vst.msk [vmem:[%s1079 + $0x240] sm:$0xff] %vm1069, 0.0
  %1085 = vst.msk [vmem:[%s1079 + $0x248] sm:$0xff] %vm1069, 0.0
  %1086 = vst.msk [vmem:[%s1079 + $0x250] sm:$0xff] %vm1069, 0.0
  %1087 = vst.msk [vmem:[%s1079 + $0x258] sm:$0x1] %vm1073, 0.0
  %1088 = vst.msk [vmem:[#allocation2] sm:$0xff] %vm1069, 0.0
  %1089 = vst.msk [vmem:[#allocation2 + $0x20] sm:$0xff] %vm1069, 0.0
  %1090 = vst.msk [vmem:[#allocation2 + $0x40] sm:$0xff] %vm1069, 0.0
  %1091 = vst.msk [vmem:[#allocation2 + $0x60] sm:$0xff] %vm1069, 0.0
  %1092 = vst.msk [vmem:[#allocation2 + $0x80] sm:$0xff] %vm1069, 0.0
  %1093 = vst.msk [vmem:[#allocation2 + $0xa0] sm:$0xff] %vm1069, 0.0
  %1094 = vst.msk [vmem:[#allocation2 + $0xc0] sm:$0xff] %vm1069, 0.0
  %1095 = vst.msk [vmem:[#allocation2 + $0xe0] sm:$0xff] %vm1069, 0.0
  %1096 = vst.msk [vmem:[#allocation2 + $0x100] sm:$0xff] %vm1069, 0.0
  %1097 = vst.msk [vmem:[#allocation2 + $0x120] sm:$0xff] %vm1069, 0.0
  %1098 = vst.msk [vmem:[#allocation2 + $0x140] sm:$0xff] %vm1069, 0.0
  %1099 = vst.msk [vmem:[#allocation2 + $0x160] sm:$0xff] %vm1069, 0.0
  %1100 = vst.msk [vmem:[#allocation2 + $0x180] sm:$0xff] %vm1069, 0.0
  %1101 = vst.msk [vmem:[#allocation2 + $0x1a0] sm:$0xff] %vm1069, 0.0
  %1102 = vst.msk [vmem:[#allocation2 + $0x1c0] sm:$0xff] %vm1069, 0.0
  %1103 = vst.msk [vmem:[#allocation2 + $0x1e0] sm:$0xff] %vm1069, 0.0
  %1104 = vst.msk [vmem:[#allocation2 + $0x200] sm:$0xff] %vm1069, 0.0
  %1105 = vst.msk [vmem:[#allocation2 + $0x220] sm:$0xff] %vm1069, 0.0
  %1106 = vst.msk [vmem:[#allocation2 + $0x240] sm:$0xff] %vm1069, 0.0
  %1107 = vst.msk [vmem:[#allocation2 + $0x260] sm:$0xff] %vm1069, 0.0
  %1108 = vst.msk [vmem:[#allocation2 + $0x280] sm:$0xff] %vm1069, 0.0
  %1109 = vst.msk [vmem:[#allocation2 + $0x2a0] sm:$0xff] %vm1069, 0.0
  %1110 = vst.msk [vmem:[#allocation2 + $0x2c0] sm:$0xff] %vm1069, 0.0
  %1111 = vst.msk [vmem:[#allocation2 + $0x2e0] sm:$0xff] %vm1069, 0.0
  %1112 = vst.msk [vmem:[#allocation2 + $0x300] sm:$0xff] %vm1069, 0.0
  %1113 = vst.msk [vmem:[#allocation2 + $0x320] sm:$0xff] %vm1069, 0.0
  %1114 = vst.msk [vmem:[#allocation2 + $0x340] sm:$0xff] %vm1069, 0.0
  %1115 = vst.msk [vmem:[#allocation2 + $0x360] sm:$0xff] %vm1069, 0.0
  %1116 = vst.msk [vmem:[#allocation2 + $0x380] sm:$0xff] %vm1069, 0.0
  %1117 = vst.msk [vmem:[#allocation2 + $0x3a0] sm:$0xff] %vm1069, 0.0
  %1118 = vst.msk [vmem:[#allocation2 + $0x3c0] sm:$0xff] %vm1069, 0.0
  %1119 = vst.msk [vmem:[#allocation2 + $0x3e0] sm:$0xff] %vm1069, 0.0
  %1120 = vst.msk [vmem:[#allocation2 + $0x400] sm:$0xff] %vm1069, 0.0
  %1121 = vst.msk [vmem:[#allocation2 + $0x420] sm:$0xff] %vm1069, 0.0
  %1122 = vst.msk [vmem:[#allocation2 + $0x440] sm:$0xff] %vm1069, 0.0
  %1123 = vst.msk [vmem:[#allocation2 + $0x460] sm:$0xff] %vm1069, 0.0
  %1124 = vst.msk [vmem:[#allocation2 + $0x18] sm:$0x1] %vm1073, 0.0
  %1125 = vst.msk [vmem:[#allocation2 + $0x38] sm:$0x1] %vm1073, 0.0
  %1126 = vst.msk [vmem:[#allocation2 + $0x58] sm:$0x1] %vm1073, 0.0
  %1127 = vst.msk [vmem:[#allocation2 + $0x78] sm:$0x1] %vm1073, 0.0
  %1128 = vst.msk [vmem:[#allocation2 + $0x98] sm:$0x1] %vm1073, 0.0
  %1129 = vst.msk [vmem:[#allocation2 + $0xb8] sm:$0x1] %vm1073, 0.0
  %1130 = vst.msk [vmem:[#allocation2 + $0xd8] sm:$0x1] %vm1073, 0.0
  %1131 = vst.msk [vmem:[#allocation2 + $0xf8] sm:$0x1] %vm1073, 0.0
  %1132 = vst.msk [vmem:[#allocation2 + $0x118] sm:$0x1] %vm1073, 0.0
  %1133 = vst.msk [vmem:[#allocation2 + $0x138] sm:$0x1] %vm1073, 0.0
  %1134 = vst.msk [vmem:[#allocation2 + $0x158] sm:$0x1] %vm1073, 0.0
  %1135 = vst.msk [vmem:[#allocation2 + $0x178] sm:$0x1] %vm1073, 0.0
  %1136 = vst.msk [vmem:[#allocation2 + $0x198] sm:$0x1] %vm1073, 0.0
  %1137 = vst.msk [vmem:[#allocation2 + $0x1b8] sm:$0x1] %vm1073, 0.0
  %1138 = vst.msk [vmem:[#allocation2 + $0x1d8] sm:$0x1] %vm1073, 0.0
  %1139 = vst.msk [vmem:[#allocation2 + $0x1f8] sm:$0x1] %vm1073, 0.0
  %1140 = vst.msk [vmem:[#allocation2 + $0x218] sm:$0x1] %vm1073, 0.0
  %1141 = vst.msk [vmem:[#allocation2 + $0x238] sm:$0x1] %vm1073, 0.0
  %1142 = vst.msk [vmem:[#allocation2 + $0x258] sm:$0x1] %vm1073, 0.0
  %1143 = vst.msk [vmem:[#allocation2 + $0x278] sm:$0x1] %vm1073, 0.0
  %1144 = vst.msk [vmem:[#allocation2 + $0x298] sm:$0x1] %vm1073, 0.0
  %1145 = vst.msk [vmem:[#allocation2 + $0x2b8] sm:$0x1] %vm1073, 0.0
  %1146 = vst.msk [vmem:[#allocation2 + $0x2d8] sm:$0x1] %vm1073, 0.0
  %1147 = vst.msk [vmem:[#allocation2 + $0x2f8] sm:$0x1] %vm1073, 0.0
  %1148 = vst.msk [vmem:[#allocation2 + $0x318] sm:$0x1] %vm1073, 0.0
  %1149 = vst.msk [vmem:[#allocation2 + $0x338] sm:$0x1] %vm1073, 0.0
  %1150 = vst.msk [vmem:[#allocation2 + $0x358] sm:$0x1] %vm1073, 0.0
  %1151 = vst.msk [vmem:[#allocation2 + $0x378] sm:$0x1] %vm1073, 0.0
  %1152 = vst.msk [vmem:[#allocation2 + $0x398] sm:$0x1] %vm1073, 0.0
  %1153 = vst.msk [vmem:[#allocation2 + $0x3b8] sm:$0x1] %vm1073, 0.0
  %1154 = vst.msk [vmem:[#allocation2 + $0x3d8] sm:$0x1] %vm1073, 0.0
  %1155 = vst.msk [vmem:[#allocation2 + $0x3f8] sm:$0x1] %vm1073, 0.0
  %1156 = vst.msk [vmem:[#allocation2 + $0x418] sm:$0x1] %vm1073, 0.0
  %1157 = vst.msk [vmem:[#allocation2 + $0x438] sm:$0x1] %vm1073, 0.0
  %1158 = vst.msk [vmem:[#allocation2 + $0x458] sm:$0x1] %vm1073, 0.0
  %1159 = vst.msk [vmem:[#allocation2 + $0x478] sm:$0x1] %vm1073, 0.0
  %s1160 = scalar_lea.vmem [#allocation2], 32
  %1161 = vst.msk [vmem:[%s1160 + $0x8] sm:$0xff] %vm1069, %v751
  %1162 = vst.msk [vmem:[%s1160 + $0x10] sm:$0xff] %vm1069, %v756
  %1163 = vst.msk [vmem:[%s1160 + $0x28] sm:$0xff] %vm1069, %v761
  %1164 = vst.msk [vmem:[%s1160 + $0x30] sm:$0xff] %vm1069, %v766
  %1165 = vst.msk [vmem:[%s1160 + $0x48] sm:$0xff] %vm1069, %v771
  %1166 = vst.msk [vmem:[%s1160 + $0x50] sm:$0xff] %vm1069, %v776
  %1167 = vst.msk [vmem:[%s1160 + $0x68] sm:$0xff] %vm1069, %v781
  %1168 = vst.msk [vmem:[%s1160 + $0x70] sm:$0xff] %vm1069, %v786
  %1169 = vst.msk [vmem:[%s1160 + $0x88] sm:$0xff] %vm1069, %v791
  %1170 = vst.msk [vmem:[%s1160 + $0x90] sm:$0xff] %vm1069, %v796
  %1171 = vst.msk [vmem:[%s1160 + $0xa8] sm:$0xff] %vm1069, %v801
  %1172 = vst.msk [vmem:[%s1160 + $0xb0] sm:$0xff] %vm1069, %v806
  %1173 = vst.msk [vmem:[%s1160 + $0xc8] sm:$0xff] %vm1069, %v811
  %1174 = vst.msk [vmem:[%s1160 + $0xd0] sm:$0xff] %vm1069, %v816
  %1175 = vst.msk [vmem:[%s1160 + $0xe8] sm:$0xff] %vm1069, %v821
  %1176 = vst.msk [vmem:[%s1160 + $0xf0] sm:$0xff] %vm1069, %v826
  %1177 = vst.msk [vmem:[%s1160 + $0x108] sm:$0xff] %vm1069, %v831
  %1178 = vst.msk [vmem:[%s1160 + $0x110] sm:$0xff] %vm1069, %v836
  %1179 = vst.msk [vmem:[%s1160 + $0x128] sm:$0xff] %vm1069, %v841
  %1180 = vst.msk [vmem:[%s1160 + $0x130] sm:$0xff] %vm1069, %v846
  %1181 = vst.msk [vmem:[%s1160 + $0x148] sm:$0xff] %vm1069, %v851
  %1182 = vst.msk [vmem:[%s1160 + $0x150] sm:$0xff] %vm1069, %v856
  %1183 = vst.msk [vmem:[%s1160 + $0x168] sm:$0xff] %vm1069, %v861
  %1184 = vst.msk [vmem:[%s1160 + $0x170] sm:$0xff] %vm1069, %v866
  %1185 = vst.msk [vmem:[%s1160 + $0x188] sm:$0xff] %vm1069, %v871
  %1186 = vst.msk [vmem:[%s1160 + $0x190] sm:$0xff] %vm1069, %v876
  %1187 = vst.msk [vmem:[%s1160 + $0x1a8] sm:$0xff] %vm1069, %v881
  %1188 = vst.msk [vmem:[%s1160 + $0x1b0] sm:$0xff] %vm1069, %v886
  %1189 = vst.msk [vmem:[%s1160 + $0x1c8] sm:$0xff] %vm1069, %v891
  %1190 = vst.msk [vmem:[%s1160 + $0x1d0] sm:$0xff] %vm1069, %v896
  %1191 = vst.msk [vmem:[%s1160 + $0x1e8] sm:$0xff] %vm1069, %v901
  %1192 = vst.msk [vmem:[%s1160 + $0x1f0] sm:$0xff] %vm1069, %v906
  %1193 = vst.msk [vmem:[%s1160 + $0x248] sm:$0xff] %vm1069, %v911
  %1194 = vst.msk [vmem:[%s1160 + $0x250] sm:$0xff] %vm1069, %v916
  %1195 = vst.msk [vmem:[%s1160 + $0x268] sm:$0xff] %vm1069, %v921
  %1196 = vst.msk [vmem:[%s1160 + $0x270] sm:$0xff] %vm1069, %v926
  %1197 = vst.msk [vmem:[%s1160 + $0x288] sm:$0xff] %vm1069, %v931
  %1198 = vst.msk [vmem:[%s1160 + $0x290] sm:$0xff] %vm1069, %v936
  %1199 = vst.msk [vmem:[%s1160 + $0x2a8] sm:$0xff] %vm1069, %v941
  %1200 = vst.msk [vmem:[%s1160 + $0x2b0] sm:$0xff] %vm1069, %v946
  %1201 = vst.msk [vmem:[%s1160 + $0x2c8] sm:$0xff] %vm1069, %v951
  %1202 = vst.msk [vmem:[%s1160 + $0x2d0] sm:$0xff] %vm1069, %v956
  %1203 = vst.msk [vmem:[%s1160 + $0x2e8] sm:$0xff] %vm1069, %v961
  %1204 = vst.msk [vmem:[%s1160 + $0x2f0] sm:$0xff] %vm1069, %v966
  %1205 = vst.msk [vmem:[%s1160 + $0x308] sm:$0xff] %vm1069, %v971
  %1206 = vst.msk [vmem:[%s1160 + $0x310] sm:$0xff] %vm1069, %v976
  %1207 = vst.msk [vmem:[%s1160 + $0x328] sm:$0xff] %vm1069, %v981
  %1208 = vst.msk [vmem:[%s1160 + $0x330] sm:$0xff] %vm1069, %v986
  %1209 = vst.msk [vmem:[%s1160 + $0x348] sm:$0xff] %vm1069, %v991
  %1210 = vst.msk [vmem:[%s1160 + $0x350] sm:$0xff] %vm1069, %v996
  %1211 = vst.msk [vmem:[%s1160 + $0x368] sm:$0xff] %vm1069, %v1001
  %1212 = vst.msk [vmem:[%s1160 + $0x370] sm:$0xff] %vm1069, %v1006
  %1213 = vst.msk [vmem:[%s1160 + $0x388] sm:$0xff] %vm1069, %v1011
  %1214 = vst.msk [vmem:[%s1160 + $0x390] sm:$0xff] %vm1069, %v1016
  %1215 = vst.msk [vmem:[%s1160 + $0x3a8] sm:$0xff] %vm1069, %v1021
  %1216 = vst.msk [vmem:[%s1160 + $0x3b0] sm:$0xff] %vm1069, %v1026
  %1217 = vst.msk [vmem:[%s1160 + $0x3c8] sm:$0xff] %vm1069, %v1031
  %1218 = vst.msk [vmem:[%s1160 + $0x3d0] sm:$0xff] %vm1069, %v1036
  %1219 = vst.msk [vmem:[%s1160 + $0x3e8] sm:$0xff] %vm1069, %v1041
  %1220 = vst.msk [vmem:[%s1160 + $0x3f0] sm:$0xff] %vm1069, %v1046
  %1221 = vst.msk [vmem:[%s1160 + $0x408] sm:$0xff] %vm1069, %v1051
  %1222 = vst.msk [vmem:[%s1160 + $0x410] sm:$0xff] %vm1069, %v1056
  %1223 = vst.msk [vmem:[%s1160 + $0x428] sm:$0xff] %vm1069, %v1061
  %1224 = vst.msk [vmem:[%s1160 + $0x430] sm:$0xff] %vm1069, %v1066
  %v1225 = vld [vmem:[#allocation2 + $0x7] sm:$0xff]
  %v1226 = vld [vmem:[#allocation2 + $0xf] sm:$0xff]
  %v1227 = vld [vmem:[#allocation2 + $0x27] sm:$0xff]
  %v1228 = vld [vmem:[#allocation2 + $0x2f] sm:$0xff]
  %v1229 = vld [vmem:[#allocation2 + $0x47] sm:$0xff]
  %v1230 = vld [vmem:[#allocation2 + $0x4f] sm:$0xff]
  %v1231 = vld [vmem:[#allocation2 + $0x67] sm:$0xff]
  %v1232 = vld [vmem:[#allocation2 + $0x6f] sm:$0xff]
  %v1233 = vld [vmem:[#allocation2 + $0x87] sm:$0xff]
  %v1234 = vld [vmem:[#allocation2 + $0x8f] sm:$0xff]
  %v1235 = vld [vmem:[#allocation2 + $0xa7] sm:$0xff]
  %v1236 = vld [vmem:[#allocation2 + $0xaf] sm:$0xff]
  %v1237 = vld [vmem:[#allocation2 + $0xc7] sm:$0xff]
  %v1238 = vld [vmem:[#allocation2 + $0xcf] sm:$0xff]
  %v1239 = vld [vmem:[#allocation2 + $0xe7] sm:$0xff]
  %v1240 = vld [vmem:[#allocation2 + $0xef] sm:$0xff]
  %v1241 = vld [vmem:[#allocation2 + $0x107] sm:$0xff]
  %v1242 = vld [vmem:[#allocation2 + $0x10f] sm:$0xff]
  %v1243 = vld [vmem:[#allocation2 + $0x127] sm:$0xff]
  %v1244 = vld [vmem:[#allocation2 + $0x12f] sm:$0xff]
  %v1245 = vld [vmem:[#allocation2 + $0x147] sm:$0xff]
  %v1246 = vld [vmem:[#allocation2 + $0x14f] sm:$0xff]
  %v1247 = vld [vmem:[#allocation2 + $0x167] sm:$0xff]
  %v1248 = vld [vmem:[#allocation2 + $0x16f] sm:$0xff]
  %v1249 = vld [vmem:[#allocation2 + $0x187] sm:$0xff]
  %v1250 = vld [vmem:[#allocation2 + $0x18f] sm:$0xff]
  %v1251 = vld [vmem:[#allocation2 + $0x1a7] sm:$0xff]
  %v1252 = vld [vmem:[#allocation2 + $0x1af] sm:$0xff]
  %v1253 = vld [vmem:[#allocation2 + $0x1c7] sm:$0xff]
  %v1254 = vld [vmem:[#allocation2 + $0x1cf] sm:$0xff]
  %v1255 = vld [vmem:[#allocation2 + $0x1e7] sm:$0xff]
  %v1256 = vld [vmem:[#allocation2 + $0x1ef] sm:$0xff]
  %v1257 = vld [vmem:[#allocation2 + $0x247] sm:$0xff]
  %v1258 = vld [vmem:[#allocation2 + $0x24f] sm:$0xff]
  %v1259 = vld [vmem:[#allocation2 + $0x267] sm:$0xff]
  %v1260 = vld [vmem:[#allocation2 + $0x26f] sm:$0xff]
  %v1261 = vld [vmem:[#allocation2 + $0x287] sm:$0xff]
  %v1262 = vld [vmem:[#allocation2 + $0x28f] sm:$0xff]
  %v1263 = vld [vmem:[#allocation2 + $0x2a7] sm:$0xff]
  %v1264 = vld [vmem:[#allocation2 + $0x2af] sm:$0xff]
  %v1265 = vld [vmem:[#allocation2 + $0x2c7] sm:$0xff]
  %v1266 = vld [vmem:[#allocation2 + $0x2cf] sm:$0xff]
  %v1267 = vld [vmem:[#allocation2 + $0x2e7] sm:$0xff]
  %v1268 = vld [vmem:[#allocation2 + $0x2ef] sm:$0xff]
  %v1269 = vld [vmem:[#allocation2 + $0x307] sm:$0xff]
  %v1270 = vld [vmem:[#allocation2 + $0x30f] sm:$0xff]
  %v1271 = vld [vmem:[#allocation2 + $0x327] sm:$0xff]
  %v1272 = vld [vmem:[#allocation2 + $0x32f] sm:$0xff]
  %v1273 = vld [vmem:[#allocation2 + $0x347] sm:$0xff]
  %v1274 = vld [vmem:[#allocation2 + $0x34f] sm:$0xff]
  %v1275 = vld [vmem:[#allocation2 + $0x367] sm:$0xff]
  %v1276 = vld [vmem:[#allocation2 + $0x36f] sm:$0xff]
  %v1277 = vld [vmem:[#allocation2 + $0x387] sm:$0xff]
  %v1278 = vld [vmem:[#allocation2 + $0x38f] sm:$0xff]
  %v1279 = vld [vmem:[#allocation2 + $0x3a7] sm:$0xff]
  %v1280 = vld [vmem:[#allocation2 + $0x3af] sm:$0xff]
  %v1281 = vld [vmem:[#allocation2 + $0x3c7] sm:$0xff]
  %v1282 = vld [vmem:[#allocation2 + $0x3cf] sm:$0xff]
  %v1283 = vld [vmem:[#allocation2 + $0x3e7] sm:$0xff]
  %v1284 = vld [vmem:[#allocation2 + $0x3ef] sm:$0xff]
  %v1285 = vld [vmem:[#allocation2 + $0x407] sm:$0xff]
  %v1286 = vld [vmem:[#allocation2 + $0x40f] sm:$0xff]
  %v1287 = vld [vmem:[#allocation2 + $0x427] sm:$0xff]
  %v1288 = vld [vmem:[#allocation2 + $0x42f] sm:$0xff]
  %v1289 = vld [vmem:[%s5] sm:$0x3]
  %v1290 = vld [vmem:[#allocation2 + $0x8] sm:$0xff]
  %v1291 = vld [vmem:[#allocation2 + $0x10] sm:$0xff]
  %v1292 = vld [vmem:[#allocation2 + $0x28] sm:$0xff]
  %v1293 = vld [vmem:[#allocation2 + $0x30] sm:$0xff]
  %v1294 = vld [vmem:[#allocation2 + $0x48] sm:$0xff]
  %v1295 = vld [vmem:[#allocation2 + $0x50] sm:$0xff]
  %v1296 = vld [vmem:[#allocation2 + $0x68] sm:$0xff]
  %v1297 = vld [vmem:[#allocation2 + $0x70] sm:$0xff]
  %v1298 = vld [vmem:[#allocation2 + $0x88] sm:$0xff]
  %v1299 = vld [vmem:[#allocation2 + $0x90] sm:$0xff]
  %v1300 = vld [vmem:[#allocation2 + $0xa8] sm:$0xff]
  %v1301 = vld [vmem:[#allocation2 + $0xb0] sm:$0xff]
  %v1302 = vld [vmem:[#allocation2 + $0xc8] sm:$0xff]
  %v1303 = vld [vmem:[#allocation2 + $0xd0] sm:$0xff]
  %v1304 = vld [vmem:[#allocation2 + $0xe8] sm:$0xff]
  %v1305 = vld [vmem:[#allocation2 + $0xf0] sm:$0xff]
  %v1306 = vld [vmem:[#allocation2 + $0x108] sm:$0xff]
  %v1307 = vld [vmem:[#allocation2 + $0x110] sm:$0xff]
  %v1308 = vld [vmem:[#allocation2 + $0x128] sm:$0xff]
  %v1309 = vld [vmem:[#allocation2 + $0x130] sm:$0xff]
  %v1310 = vld [vmem:[#allocation2 + $0x148] sm:$0xff]
  %v1311 = vld [vmem:[#allocation2 + $0x150] sm:$0xff]
  %v1312 = vld [vmem:[#allocation2 + $0x168] sm:$0xff]
  %v1313 = vld [vmem:[#allocation2 + $0x170] sm:$0xff]
  %v1314 = vld [vmem:[#allocation2 + $0x188] sm:$0xff]
  %v1315 = vld [vmem:[#allocation2 + $0x190] sm:$0xff]
  %v1316 = vld [vmem:[#allocation2 + $0x1a8] sm:$0xff]
  %v1317 = vld [vmem:[#allocation2 + $0x1b0] sm:$0xff]
  %v1318 = vld [vmem:[#allocation2 + $0x1c8] sm:$0xff]
  %v1319 = vld [vmem:[#allocation2 + $0x1d0] sm:$0xff]
  %v1320 = vld [vmem:[#allocation2 + $0x1e8] sm:$0xff]
  %v1321 = vld [vmem:[#allocation2 + $0x1f0] sm:$0xff]
  %v1322 = vld [vmem:[#allocation2 + $0x248] sm:$0xff]
  %v1323 = vld [vmem:[#allocation2 + $0x250] sm:$0xff]
  %v1324 = vld [vmem:[#allocation2 + $0x268] sm:$0xff]
  %v1325 = vld [vmem:[#allocation2 + $0x270] sm:$0xff]
  %v1326 = vld [vmem:[#allocation2 + $0x288] sm:$0xff]
  %v1327 = vld [vmem:[#allocation2 + $0x290] sm:$0xff]
  %v1328 = vld [vmem:[#allocation2 + $0x2a8] sm:$0xff]
  %v1329 = vld [vmem:[#allocation2 + $0x2b0] sm:$0xff]
  %v1330 = vld [vmem:[#allocation2 + $0x2c8] sm:$0xff]
  %v1331 = vld [vmem:[#allocation2 + $0x2d0] sm:$0xff]
  %v1332 = vld [vmem:[#allocation2 + $0x2e8] sm:$0xff]
  %v1333 = vld [vmem:[#allocation2 + $0x2f0] sm:$0xff]
  %v1334 = vld [vmem:[#allocation2 + $0x308] sm:$0xff]
  %v1335 = vld [vmem:[#allocation2 + $0x310] sm:$0xff]
  %v1336 = vld [vmem:[#allocation2 + $0x328] sm:$0xff]
  %v1337 = vld [vmem:[#allocation2 + $0x330] sm:$0xff]
  %v1338 = vld [vmem:[#allocation2 + $0x348] sm:$0xff]
  %v1339 = vld [vmem:[#allocation2 + $0x350] sm:$0xff]
  %v1340 = vld [vmem:[#allocation2 + $0x368] sm:$0xff]
  %v1341 = vld [vmem:[#allocation2 + $0x370] sm:$0xff]
  %v1342 = vld [vmem:[#allocation2 + $0x388] sm:$0xff]
  %v1343 = vld [vmem:[#allocation2 + $0x390] sm:$0xff]
  %v1344 = vld [vmem:[#allocation2 + $0x3a8] sm:$0xff]
  %v1345 = vld [vmem:[#allocation2 + $0x3b0] sm:$0xff]
  %v1346 = vld [vmem:[#allocation2 + $0x3c8] sm:$0xff]
  %v1347 = vld [vmem:[#allocation2 + $0x3d0] sm:$0xff]
  %v1348 = vld [vmem:[#allocation2 + $0x3e8] sm:$0xff]
  %v1349 = vld [vmem:[#allocation2 + $0x3f0] sm:$0xff]
  %v1350 = vld [vmem:[#allocation2 + $0x408] sm:$0xff]
  %v1351 = vld [vmem:[#allocation2 + $0x410] sm:$0xff]
  %v1352 = vld [vmem:[#allocation2 + $0x428] sm:$0xff]
  %v1353 = vld [vmem:[#allocation2 + $0x430] sm:$0xff]
  %s1354 = scalar_lea.vmem %s5, 2
  %v1355 = vld [vmem:[%s1354] sm:$0x3]
  %v1357 = vsel %vm1069, %v1290, 0
  %v1360 = vsel %vm1069, %v1291, 0
  %v1363 = vsel %vm1069, %v1292, 0
  %v1366 = vsel %vm1069, %v1293, 0
  %v1369 = vsel %vm1069, %v1294, 0
  %v1372 = vsel %vm1069, %v1295, 0
  %v1375 = vsel %vm1069, %v1296, 0
  %v1378 = vsel %vm1069, %v1297, 0
  %v1381 = vsel %vm1069, %v1298, 0
  %v1384 = vsel %vm1069, %v1299, 0
  %v1387 = vsel %vm1069, %v1300, 0
  %v1390 = vsel %vm1069, %v1301, 0
  %v1393 = vsel %vm1069, %v1302, 0
  %v1396 = vsel %vm1069, %v1303, 0
  %v1399 = vsel %vm1069, %v1304, 0
  %v1402 = vsel %vm1069, %v1305, 0
  %v1405 = vsel %vm1069, %v1306, 0
  %v1408 = vsel %vm1069, %v1307, 0
  %v1411 = vsel %vm1069, %v1308, 0
  %v1414 = vsel %vm1069, %v1309, 0
  %v1417 = vsel %vm1069, %v1310, 0
  %v1420 = vsel %vm1069, %v1311, 0
  %v1423 = vsel %vm1069, %v1312, 0
  %v1426 = vsel %vm1069, %v1313, 0
  %v1429 = vsel %vm1069, %v1314, 0
  %v1432 = vsel %vm1069, %v1315, 0
  %v1435 = vsel %vm1069, %v1316, 0
  %v1438 = vsel %vm1069, %v1317, 0
  %v1441 = vsel %vm1069, %v1318, 0
  %v1444 = vsel %vm1069, %v1319, 0
  %v1447 = vsel %vm1069, %v1320, 0
  %v1450 = vsel %vm1069, %v1321, 0
  %v1453 = vsel %vm1069, %v1322, 0
  %v1456 = vsel %vm1069, %v1323, 0
  %v1459 = vsel %vm1069, %v1324, 0
  %v1462 = vsel %vm1069, %v1325, 0
  %v1465 = vsel %vm1069, %v1326, 0
  %v1468 = vsel %vm1069, %v1327, 0
  %v1471 = vsel %vm1069, %v1328, 0
  %v1474 = vsel %vm1069, %v1329, 0
  %v1477 = vsel %vm1069, %v1330, 0
  %v1480 = vsel %vm1069, %v1331, 0
  %v1483 = vsel %vm1069, %v1332, 0
  %v1486 = vsel %vm1069, %v1333, 0
  %v1489 = vsel %vm1069, %v1334, 0
  %v1492 = vsel %vm1069, %v1335, 0
  %v1495 = vsel %vm1069, %v1336, 0
  %v1498 = vsel %vm1069, %v1337, 0
  %v1501 = vsel %vm1069, %v1338, 0
  %v1504 = vsel %vm1069, %v1339, 0
  %v1507 = vsel %vm1069, %v1340, 0
  %v1510 = vsel %vm1069, %v1341, 0
  %v1513 = vsel %vm1069, %v1342, 0
  %v1516 = vsel %vm1069, %v1343, 0
  %v1519 = vsel %vm1069, %v1344, 0
  %v1522 = vsel %vm1069, %v1345, 0
  %v1525 = vsel %vm1069, %v1346, 0
  %v1528 = vsel %vm1069, %v1347, 0
  %v1531 = vsel %vm1069, %v1348, 0
  %v1534 = vsel %vm1069, %v1349, 0
  %v1537 = vsel %vm1069, %v1350, 0
  %v1540 = vsel %vm1069, %v1351, 0
  %v1543 = vsel %vm1069, %v1352, 0
  %v1546 = vsel %vm1069, %v1353, 0
  %vm1548 = vcmask 1041408
  %v1550 = vsel %vm1548, %v1355, 0
  %1552 = vmatprep.subr.mxu0 0.0
  %1553 = vmatpush1.msra.mxu0 %v1550
  %1554 = vmatprep.subr.mxu0 0.0
  %1555 = vmatpush1.msra.mxu0 0.0
  %1556 = vmatprep.subr.mxu0 0.0
  %1557 = vmatpush1.msra.mxu0 0.0
  %1558 = vmatprep.subr.mxu0 0.0
  %1559 = vmatpush1.msra.mxu0 0.0
  %1560 = vmatprep.subr.mxu0 0.0
  %1561 = vmatpush1.msra.mxu0 0.0
  %1562 = vmatprep.subr.mxu0 0.0
  %1563 = vmatpush1.msra.mxu0 0.0
  %1564 = vmatprep.subr.mxu0 0.0
  %1565 = vmatpush1.msra.mxu0 0.0
  %1566 = vmatprep.subr.mxu0 0.0
  %1567 = vmatpush1.msra.mxu0 0.0
  %1568 = vmatprep.subr.mxu0 0.0
  %1569 = vmatpush1.msra.mxu0 0.0
  %1570 = vmatprep.subr.mxu0 0.0
  %1571 = vmatpush1.msra.mxu0 0.0
  %1572 = vmatprep.subr.mxu0 0.0
  %1573 = vmatpush1.msra.mxu0 0.0
  %1574 = vmatprep.subr.mxu0 0.0
  %1575 = vmatpush1.msra.mxu0 0.0
  %1576 = vmatprep.subr.mxu0 0.0
  %1577 = vmatpush1.msra.mxu0 0.0
  %1578 = vmatprep.subr.mxu0 0.0
  %1579 = vmatpush1.msra.mxu0 0.0
  %1580 = vmatprep.subr.mxu0 0.0
  %1581 = vmatpush1.msra.mxu0 0.0
  %1582 = vmatprep.subr.mxu0 0.0
  %1583 = vmatpush1.msra.mxu0 0.0
  %1584 = vmatprep.subr.mxu0 0.0
  %1585 = vmatpush1.msra.mxu0 0.0
  %1586 = vmatprep.subr.mxu0 0.0
  %1587 = vmatpush1.msra.mxu0 0.0
  %1588 = vmatprep.subr.mxu0 0.0
  %1589 = vmatpush1.msra.mxu0 0.0
  %1590 = vmatprep.subr.mxu0 0.0
  %1591 = vmatpush1.msra.mxu0 0.0
  %1592 = vmatprep.subr.mxu0 0.0
  %1593 = vmatpush1.msra.mxu0 0.0
  %1594 = vmatprep.subr.mxu0 0.0
  %1595 = vmatpush1.msra.mxu0 0.0
  %1596 = vmatprep.subr.mxu0 0.0
  %1597 = vmatpush1.msra.mxu0 0.0
  %1598 = vmatprep.subr.mxu0 0.0
  %1599 = vmatpush1.msra.mxu0 0.0
  %1600 = vmatprep.subr.mxu0 0.0
  %1601 = vmatpush1.msra.mxu0 0.0
  %1602 = vmatprep.subr.mxu0 0.0
  %1603 = vmatpush1.msra.mxu0 0.0
  %1604 = vmatprep.subr.mxu0 0.0
  %1605 = vmatpush1.msra.mxu0 0.0
  %1606 = vmatprep.subr.mxu0 0.0
  %1607 = vmatpush1.msra.mxu0 0.0
  %1608 = vmatprep.subr.mxu0 0.0
  %1609 = vmatpush1.msra.mxu0 0.0
  %1610 = vmatprep.subr.mxu0 0.0
  %1611 = vmatpush1.msra.mxu0 0.0
  %1612 = vmatprep.subr.mxu0 0.0
  %1613 = vmatpush1.msra.mxu0 0.0
  %1614 = vmatprep.subr.mxu0 0.0
  %1615 = vmatpush1.msra.mxu0 0.0
  %1616 = vmatprep.mubr.f32.mxu0 0.0
  %1617 = vmatmul.mubr.f32.gmra.mrb[0].mxu0 %v1357
  %v1618 = vpop.f32.mrb[0].mxu0
  %v1619 = vadd.f32 0.0, %v1618
  %v1620 = vpop.f32.mrb[0].mxu0
  %1621 = vmatprep.mubr.f32.mxu0 0.0
  %1622 = vmatmul.mubr.f32.gmra.mrb[0].mxu0 %v1360
  %v1623 = vpop.f32.mrb[0].mxu0
  %v1624 = vadd.f32 0.0, %v1623
  %v1625 = vpop.f32.mrb[0].mxu0
  %1626 = vmatprep.mubr.f32.mxu0 0.0
  %1627 = vmatmul.mubr.f32.gmra.mrb[0].mxu0 %v1363
  %v1628 = vpop.f32.mrb[0].mxu0
  %v1629 = vadd.f32 0.0, %v1628
  %v1630 = vpop.f32.mrb[0].mxu0
  %1631 = vmatprep.mubr.f32.mxu0 0.0
  %1632 = vmatmul.mubr.f32.gmra.mrb[0].mxu0 %v1366
  %v1633 = vpop.f32.mrb[0].mxu0
  %v1634 = vadd.f32 0.0, %v1633
  %v1635 = vpop.f32.mrb[0].mxu0
  %1636 = vmatprep.mubr.f32.mxu0 0.0
  %1637 = vmatmul.mubr.f32.gmra.mrb[0].mxu0 %v1369
  %v1638 = vpop.f32.mrb[0].mxu0
  %v1639 = vadd.f32 0.0, %v1638
  %v1640 = vpop.f32.mrb[0].mxu0
  %1641 = vmatprep.mubr.f32.mxu0 0.0
  %1642 = vmatmul.mubr.f32.gmra.mrb[0].mxu0 %v1372
  %v1643 = vpop.f32.mrb[0].mxu0
  %v1644 = vadd.f32 0.0, %v1643
  %v1645 = vpop.f32.mrb[0].mxu0
  %1646 = vmatprep.mubr.f32.mxu0 0.0
  %1647 = vmatmul.mubr.f32.gmra.mrb[0].mxu0 %v1375
  %v1648 = vpop.f32.mrb[0].mxu0
  %v1649 = vadd.f32 0.0, %v1648
  %v1650 = vpop.f32.mrb[0].mxu0
  %1651 = vmatprep.mubr.f32.mxu0 0.0
  %1652 = vmatmul.mubr.f32.gmra.mrb[0].mxu0 %v1378
  %v1653 = vpop.f32.mrb[0].mxu0
  %v1654 = vadd.f32 0.0, %v1653
  %v1655 = vpop.f32.mrb[0].mxu0
  %1656 = vmatprep.mubr.f32.mxu0 0.0
  %1657 = vmatmul.mubr.f32.gmra.mrb[0].mxu0 %v1381
  %v1658 = vpop.f32.mrb[0].mxu0
  %v1659 = vadd.f32 0.0, %v1658
  %v1660 = vpop.f32.mrb[0].mxu0
  %1661 = vmatprep.mubr.f32.mxu0 0.0
  %1662 = vmatmul.mubr.f32.gmra.mrb[0].mxu0 %v1384
  %v1663 = vpop.f32.mrb[0].mxu0
  %v1664 = vadd.f32 0.0, %v1663
  %v1665 = vpop.f32.mrb[0].mxu0
  %1666 = vmatprep.mubr.f32.mxu0 0.0
  %1667 = vmatmul.mubr.f32.gmra.mrb[0].mxu0 %v1387
  %v1668 = vpop.f32.mrb[0].mxu0
  %v1669 = vadd.f32 0.0, %v1668
  %v1670 = vpop.f32.mrb[0].mxu0
  %1671 = vmatprep.mubr.f32.mxu0 0.0
  %1672 = vmatmul.mubr.f32.gmra.mrb[0].mxu0 %v1390
  %v1673 = vpop.f32.mrb[0].mxu0
  %v1674 = vadd.f32 0.0, %v1673
  %v1675 = vpop.f32.mrb[0].mxu0
  %1676 = vmatprep.mubr.f32.mxu0 0.0
  %1677 = vmatmul.mubr.f32.gmra.mrb[0].mxu0 %v1393
  %v1678 = vpop.f32.mrb[0].mxu0
  %v1679 = vadd.f32 0.0, %v1678
  %v1680 = vpop.f32.mrb[0].mxu0
  %1681 = vmatprep.mubr.f32.mxu0 0.0
  %1682 = vmatmul.mubr.f32.gmra.mrb[0].mxu0 %v1396
  %v1683 = vpop.f32.mrb[0].mxu0
  %v1684 = vadd.f32 0.0, %v1683
  %v1685 = vpop.f32.mrb[0].mxu0
  %1686 = vmatprep.mubr.f32.mxu0 0.0
  %1687 = vmatmul.mubr.f32.gmra.mrb[0].mxu0 %v1399
  %v1688 = vpop.f32.mrb[0].mxu0
  %v1689 = vadd.f32 0.0, %v1688
  %v1690 = vpop.f32.mrb[0].mxu0
  %1691 = vmatprep.mubr.f32.mxu0 0.0
  %1692 = vmatmul.mubr.f32.gmra.mrb[0].mxu0 %v1402
  %v1693 = vpop.f32.mrb[0].mxu0
  %v1694 = vadd.f32 0.0, %v1693
  %v1695 = vpop.f32.mrb[0].mxu0
  %1696 = vmatprep.mubr.f32.mxu0 0.0
  %1697 = vmatmul.mubr.f32.gmra.mrb[0].mxu0 %v1405
  %v1698 = vpop.f32.mrb[0].mxu0
  %v1699 = vadd.f32 0.0, %v1698
  %v1700 = vpop.f32.mrb[0].mxu0
  %1701 = vmatprep.mubr.f32.mxu0 0.0
  %1702 = vmatmul.mubr.f32.gmra.mrb[0].mxu0 %v1408
  %v1703 = vpop.f32.mrb[0].mxu0
  %v1704 = vadd.f32 0.0, %v1703
  %v1705 = vpop.f32.mrb[0].mxu0
  %1706 = vmatprep.mubr.f32.mxu0 0.0
  %1707 = vmatmul.mubr.f32.gmra.mrb[0].mxu0 %v1411
  %v1708 = vpop.f32.mrb[0].mxu0
  %v1709 = vadd.f32 0.0, %v1708
  %v1710 = vpop.f32.mrb[0].mxu0
  %1711 = vmatprep.mubr.f32.mxu0 0.0
  %1712 = vmatmul.mubr.f32.gmra.mrb[0].mxu0 %v1414
  %v1713 = vpop.f32.mrb[0].mxu0
  %v1714 = vadd.f32 0.0, %v1713
  %v1715 = vpop.f32.mrb[0].mxu0
  %1716 = vmatprep.mubr.f32.mxu0 0.0
  %1717 = vmatmul.mubr.f32.gmra.mrb[0].mxu0 %v1417
  %v1718 = vpop.f32.mrb[0].mxu0
  %v1719 = vadd.f32 0.0, %v1718
  %v1720 = vpop.f32.mrb[0].mxu0
  %1721 = vmatprep.mubr.f32.mxu0 0.0
  %1722 = vmatmul.mubr.f32.gmra.mrb[0].mxu0 %v1420
  %v1723 = vpop.f32.mrb[0].mxu0
  %v1724 = vadd.f32 0.0, %v1723
  %v1725 = vpop.f32.mrb[0].mxu0
  %1726 = vmatprep.mubr.f32.mxu0 0.0
  %1727 = vmatmul.mubr.f32.gmra.mrb[0].mxu0 %v1423
  %v1728 = vpop.f32.mrb[0].mxu0
  %v1729 = vadd.f32 0.0, %v1728
  %v1730 = vpop.f32.mrb[0].mxu0
  %1731 = vmatprep.mubr.f32.mxu0 0.0
  %1732 = vmatmul.mubr.f32.gmra.mrb[0].mxu0 %v1426
  %v1733 = vpop.f32.mrb[0].mxu0
  %v1734 = vadd.f32 0.0, %v1733
  %v1735 = vpop.f32.mrb[0].mxu0
  %1736 = vmatprep.mubr.f32.mxu0 0.0
  %1737 = vmatmul.mubr.f32.gmra.mrb[0].mxu0 %v1429
  %v1738 = vpop.f32.mrb[0].mxu0
  %v1739 = vadd.f32 0.0, %v1738
  %v1740 = vpop.f32.mrb[0].mxu0
  %1741 = vmatprep.mubr.f32.mxu0 0.0
  %1742 = vmatmul.mubr.f32.gmra.mrb[0].mxu0 %v1432
  %v1743 = vpop.f32.mrb[0].mxu0
  %v1744 = vadd.f32 0.0, %v1743
  %v1745 = vpop.f32.mrb[0].mxu0
  %1746 = vmatprep.mubr.f32.mxu0 0.0
  %1747 = vmatmul.mubr.f32.gmra.mrb[0].mxu0 %v1435
  %v1748 = vpop.f32.mrb[0].mxu0
  %v1749 = vadd.f32 0.0, %v1748
  %v1750 = vpop.f32.mrb[0].mxu0
  %1751 = vmatprep.mubr.f32.mxu0 0.0
  %1752 = vmatmul.mubr.f32.gmra.mrb[0].mxu0 %v1438
  %v1753 = vpop.f32.mrb[0].mxu0
  %v1754 = vadd.f32 0.0, %v1753
  %v1755 = vpop.f32.mrb[0].mxu0
  %1756 = vmatprep.mubr.f32.mxu0 0.0
  %1757 = vmatmul.mubr.f32.gmra.mrb[0].mxu0 %v1441
  %v1758 = vpop.f32.mrb[0].mxu0
  %v1759 = vadd.f32 0.0, %v1758
  %v1760 = vpop.f32.mrb[0].mxu0
  %1761 = vmatprep.mubr.f32.mxu0 0.0
  %1762 = vmatmul.mubr.f32.gmra.mrb[0].mxu0 %v1444
  %v1763 = vpop.f32.mrb[0].mxu0
  %v1764 = vadd.f32 0.0, %v1763
  %v1765 = vpop.f32.mrb[0].mxu0
  %1766 = vmatprep.mubr.f32.mxu0 0.0
  %1767 = vmatmul.mubr.f32.gmra.mrb[0].mxu0 %v1447
  %v1768 = vpop.f32.mrb[0].mxu0
  %v1769 = vadd.f32 0.0, %v1768
  %v1770 = vpop.f32.mrb[0].mxu0
  %1771 = vmatprep.mubr.f32.mxu0 0.0
  %1772 = vmatmul.mubr.f32.gmra.mrb[0].mxu0 %v1450
  %v1773 = vpop.f32.mrb[0].mxu0
  %v1774 = vadd.f32 0.0, %v1773
  %v1775 = vpop.f32.mrb[0].mxu0
  %1776 = vmatprep.mubr.f32.mxu0 0.0
  %1777 = vmatmul.mubr.f32.gmra.mrb[0].mxu0 %v1453
  %v1778 = vpop.f32.mrb[0].mxu0
  %v1779 = vadd.f32 0.0, %v1778
  %v1780 = vpop.f32.mrb[0].mxu0
  %1781 = vmatprep.mubr.f32.mxu0 0.0
  %1782 = vmatmul.mubr.f32.gmra.mrb[0].mxu0 %v1456
  %v1783 = vpop.f32.mrb[0].mxu0
  %v1784 = vadd.f32 0.0, %v1783
  %v1785 = vpop.f32.mrb[0].mxu0
  %1786 = vmatprep.mubr.f32.mxu0 0.0
  %1787 = vmatmul.mubr.f32.gmra.mrb[0].mxu0 %v1459
  %v1788 = vpop.f32.mrb[0].mxu0
  %v1789 = vadd.f32 0.0, %v1788
  %v1790 = vpop.f32.mrb[0].mxu0
  %1791 = vmatprep.mubr.f32.mxu0 0.0
  %1792 = vmatmul.mubr.f32.gmra.mrb[0].mxu0 %v1462
  %v1793 = vpop.f32.mrb[0].mxu0
  %v1794 = vadd.f32 0.0, %v1793
  %v1795 = vpop.f32.mrb[0].mxu0
  %1796 = vmatprep.mubr.f32.mxu0 0.0
  %1797 = vmatmul.mubr.f32.gmra.mrb[0].mxu0 %v1465
  %v1798 = vpop.f32.mrb[0].mxu0
  %v1799 = vadd.f32 0.0, %v1798
  %v1800 = vpop.f32.mrb[0].mxu0
  %1801 = vmatprep.mubr.f32.mxu0 0.0
  %1802 = vmatmul.mubr.f32.gmra.mrb[0].mxu0 %v1468
  %v1803 = vpop.f32.mrb[0].mxu0
  %v1804 = vadd.f32 0.0, %v1803
  %v1805 = vpop.f32.mrb[0].mxu0
  %1806 = vmatprep.mubr.f32.mxu0 0.0
  %1807 = vmatmul.mubr.f32.gmra.mrb[0].mxu0 %v1471
  %v1808 = vpop.f32.mrb[0].mxu0
  %v1809 = vadd.f32 0.0, %v1808
  %v1810 = vpop.f32.mrb[0].mxu0
  %1811 = vmatprep.mubr.f32.mxu0 0.0
  %1812 = vmatmul.mubr.f32.gmra.mrb[0].mxu0 %v1474
  %v1813 = vpop.f32.mrb[0].mxu0
  %v1814 = vadd.f32 0.0, %v1813
  %v1815 = vpop.f32.mrb[0].mxu0
  %1816 = vmatprep.mubr.f32.mxu0 0.0
  %1817 = vmatmul.mubr.f32.gmra.mrb[0].mxu0 %v1477
  %v1818 = vpop.f32.mrb[0].mxu0
  %v1819 = vadd.f32 0.0, %v1818
  %v1820 = vpop.f32.mrb[0].mxu0
  %1821 = vmatprep.mubr.f32.mxu0 0.0
  %1822 = vmatmul.mubr.f32.gmra.mrb[0].mxu0 %v1480
  %v1823 = vpop.f32.mrb[0].mxu0
  %v1824 = vadd.f32 0.0, %v1823
  %v1825 = vpop.f32.mrb[0].mxu0
  %1826 = vmatprep.mubr.f32.mxu0 0.0
  %1827 = vmatmul.mubr.f32.gmra.mrb[0].mxu0 %v1483
  %v1828 = vpop.f32.mrb[0].mxu0
  %v1829 = vadd.f32 0.0, %v1828
  %v1830 = vpop.f32.mrb[0].mxu0
  %1831 = vmatprep.mubr.f32.mxu0 0.0
  %1832 = vmatmul.mubr.f32.gmra.mrb[0].mxu0 %v1486
  %v1833 = vpop.f32.mrb[0].mxu0
  %v1834 = vadd.f32 0.0, %v1833
  %v1835 = vpop.f32.mrb[0].mxu0
  %1836 = vmatprep.mubr.f32.mxu0 0.0
  %1837 = vmatmul.mubr.f32.gmra.mrb[0].mxu0 %v1489
  %v1838 = vpop.f32.mrb[0].mxu0
  %v1839 = vadd.f32 0.0, %v1838
  %v1840 = vpop.f32.mrb[0].mxu0
  %1841 = vmatprep.mubr.f32.mxu0 0.0
  %1842 = vmatmul.mubr.f32.gmra.mrb[0].mxu0 %v1492
  %v1843 = vpop.f32.mrb[0].mxu0
  %v1844 = vadd.f32 0.0, %v1843
  %v1845 = vpop.f32.mrb[0].mxu0
  %1846 = vmatprep.mubr.f32.mxu0 0.0
  %1847 = vmatmul.mubr.f32.gmra.mrb[0].mxu0 %v1495
  %v1848 = vpop.f32.mrb[0].mxu0
  %v1849 = vadd.f32 0.0, %v1848
  %v1850 = vpop.f32.mrb[0].mxu0
  %1851 = vmatprep.mubr.f32.mxu0 0.0
  %1852 = vmatmul.mubr.f32.gmra.mrb[0].mxu0 %v1498
  %v1853 = vpop.f32.mrb[0].mxu0
  %v1854 = vadd.f32 0.0, %v1853
  %v1855 = vpop.f32.mrb[0].mxu0
  %1856 = vmatprep.mubr.f32.mxu0 0.0
  %1857 = vmatmul.mubr.f32.gmra.mrb[0].mxu0 %v1501
  %v1858 = vpop.f32.mrb[0].mxu0
  %v1859 = vadd.f32 0.0, %v1858
  %v1860 = vpop.f32.mrb[0].mxu0
  %1861 = vmatprep.mubr.f32.mxu0 0.0
  %1862 = vmatmul.mubr.f32.gmra.mrb[0].mxu0 %v1504
  %v1863 = vpop.f32.mrb[0].mxu0
  %v1864 = vadd.f32 0.0, %v1863
  %v1865 = vpop.f32.mrb[0].mxu0
  %1866 = vmatprep.mubr.f32.mxu0 0.0
  %1867 = vmatmul.mubr.f32.gmra.mrb[0].mxu0 %v1507
  %v1868 = vpop.f32.mrb[0].mxu0
  %v1869 = vadd.f32 0.0, %v1868
  %v1870 = vpop.f32.mrb[0].mxu0
  %1871 = vmatprep.mubr.f32.mxu0 0.0
  %1872 = vmatmul.mubr.f32.gmra.mrb[0].mxu0 %v1510
  %v1873 = vpop.f32.mrb[0].mxu0
  %v1874 = vadd.f32 0.0, %v1873
  %v1875 = vpop.f32.mrb[0].mxu0
  %1876 = vmatprep.mubr.f32.mxu0 0.0
  %1877 = vmatmul.mubr.f32.gmra.mrb[0].mxu0 %v1513
  %v1878 = vpop.f32.mrb[0].mxu0
  %v1879 = vadd.f32 0.0, %v1878
  %v1880 = vpop.f32.mrb[0].mxu0
  %1881 = vmatprep.mubr.f32.mxu0 0.0
  %1882 = vmatmul.mubr.f32.gmra.mrb[0].mxu0 %v1516
  %v1883 = vpop.f32.mrb[0].mxu0
  %v1884 = vadd.f32 0.0, %v1883
  %v1885 = vpop.f32.mrb[0].mxu0
  %1886 = vmatprep.mubr.f32.mxu0 0.0
  %1887 = vmatmul.mubr.f32.gmra.mrb[0].mxu0 %v1519
  %v1888 = vpop.f32.mrb[0].mxu0
  %v1889 = vadd.f32 0.0, %v1888
  %v1890 = vpop.f32.mrb[0].mxu0
  %1891 = vmatprep.mubr.f32.mxu0 0.0
  %1892 = vmatmul.mubr.f32.gmra.mrb[0].mxu0 %v1522
  %v1893 = vpop.f32.mrb[0].mxu0
  %v1894 = vadd.f32 0.0, %v1893
  %v1895 = vpop.f32.mrb[0].mxu0
  %1896 = vmatprep.mubr.f32.mxu0 0.0
  %1897 = vmatmul.mubr.f32.gmra.mrb[0].mxu0 %v1525
  %v1898 = vpop.f32.mrb[0].mxu0
  %v1899 = vadd.f32 0.0, %v1898
  %v1900 = vpop.f32.mrb[0].mxu0
  %1901 = vmatprep.mubr.f32.mxu0 0.0
  %1902 = vmatmul.mubr.f32.gmra.mrb[0].mxu0 %v1528
  %v1903 = vpop.f32.mrb[0].mxu0
  %v1904 = vadd.f32 0.0, %v1903
  %v1905 = vpop.f32.mrb[0].mxu0
  %1906 = vmatprep.mubr.f32.mxu0 0.0
  %1907 = vmatmul.mubr.f32.gmra.mrb[0].mxu0 %v1531
  %v1908 = vpop.f32.mrb[0].mxu0
  %v1909 = vadd.f32 0.0, %v1908
  %v1910 = vpop.f32.mrb[0].mxu0
  %1911 = vmatprep.mubr.f32.mxu0 0.0
  %1912 = vmatmul.mubr.f32.gmra.mrb[0].mxu0 %v1534
  %v1913 = vpop.f32.mrb[0].mxu0
  %v1914 = vadd.f32 0.0, %v1913
  %v1915 = vpop.f32.mrb[0].mxu0
  %1916 = vmatprep.mubr.f32.mxu0 0.0
  %1917 = vmatmul.mubr.f32.gmra.mrb[0].mxu0 %v1537
  %v1918 = vpop.f32.mrb[0].mxu0
  %v1919 = vadd.f32 0.0, %v1918
  %v1920 = vpop.f32.mrb[0].mxu0
  %1921 = vmatprep.mubr.f32.mxu0 0.0
  %1922 = vmatmul.mubr.f32.gmra.mrb[0].mxu0 %v1540
  %v1923 = vpop.f32.mrb[0].mxu0
  %v1924 = vadd.f32 0.0, %v1923
  %v1925 = vpop.f32.mrb[0].mxu0
  %1926 = vmatprep.mubr.f32.mxu0 0.0
  %1927 = vmatmul.mubr.f32.gmra.mrb[0].mxu0 %v1543
  %v1928 = vpop.f32.mrb[0].mxu0
  %v1929 = vadd.f32 0.0, %v1928
  %v1930 = vpop.f32.mrb[0].mxu0
  %1931 = vmatprep.mubr.f32.mxu0 0.0
  %1932 = vmatmul.mubr.f32.gmra.mrb[0].mxu0 %v1546
  %v1933 = vpop.f32.mrb[0].mxu0
  %v1934 = vadd.f32 0.0, %v1933
  %v1935 = vpop.f32.mrb[0].mxu0
  %1936 = vdwg.mxu0
  %v1938 = vsel %vm1069, %v1225, 0
  %v1941 = vsel %vm1069, %v1226, 0
  %v1944 = vsel %vm1069, %v1227, 0
  %v1947 = vsel %vm1069, %v1228, 0
  %v1950 = vsel %vm1069, %v1229, 0
  %v1953 = vsel %vm1069, %v1230, 0
  %v1956 = vsel %vm1069, %v1231, 0
  %v1959 = vsel %vm1069, %v1232, 0
  %v1962 = vsel %vm1069, %v1233, 0
  %v1965 = vsel %vm1069, %v1234, 0
  %v1968 = vsel %vm1069, %v1235, 0
  %v1971 = vsel %vm1069, %v1236, 0
  %v1974 = vsel %vm1069, %v1237, 0
  %v1977 = vsel %vm1069, %v1238, 0
  %v1980 = vsel %vm1069, %v1239, 0
  %v1983 = vsel %vm1069, %v1240, 0
  %v1986 = vsel %vm1069, %v1241, 0
  %v1989 = vsel %vm1069, %v1242, 0
  %v1992 = vsel %vm1069, %v1243, 0
  %v1995 = vsel %vm1069, %v1244, 0
  %v1998 = vsel %vm1069, %v1245, 0
  %v2001 = vsel %vm1069, %v1246, 0
  %v2004 = vsel %vm1069, %v1247, 0
  %v2007 = vsel %vm1069, %v1248, 0
  %v2010 = vsel %vm1069, %v1249, 0
  %v2013 = vsel %vm1069, %v1250, 0
  %v2016 = vsel %vm1069, %v1251, 0
  %v2019 = vsel %vm1069, %v1252, 0
  %v2022 = vsel %vm1069, %v1253, 0
  %v2025 = vsel %vm1069, %v1254, 0
  %v2028 = vsel %vm1069, %v1255, 0
  %v2031 = vsel %vm1069, %v1256, 0
  %v2034 = vsel %vm1069, %v1257, 0
  %v2037 = vsel %vm1069, %v1258, 0
  %v2040 = vsel %vm1069, %v1259, 0
  %v2043 = vsel %vm1069, %v1260, 0
  %v2046 = vsel %vm1069, %v1261, 0
  %v2049 = vsel %vm1069, %v1262, 0
  %v2052 = vsel %vm1069, %v1263, 0
  %v2055 = vsel %vm1069, %v1264, 0
  %v2058 = vsel %vm1069, %v1265, 0
  %v2061 = vsel %vm1069, %v1266, 0
  %v2064 = vsel %vm1069, %v1267, 0
  %v2067 = vsel %vm1069, %v1268, 0
  %v2070 = vsel %vm1069, %v1269, 0
  %v2073 = vsel %vm1069, %v1270, 0
  %v2076 = vsel %vm1069, %v1271, 0
  %v2079 = vsel %vm1069, %v1272, 0
  %v2082 = vsel %vm1069, %v1273, 0
  %v2085 = vsel %vm1069, %v1274, 0
  %v2088 = vsel %vm1069, %v1275, 0
  %v2091 = vsel %vm1069, %v1276, 0
  %v2094 = vsel %vm1069, %v1277, 0
  %v2097 = vsel %vm1069, %v1278, 0
  %v2100 = vsel %vm1069, %v1279, 0
  %v2103 = vsel %vm1069, %v1280, 0
  %v2106 = vsel %vm1069, %v1281, 0
  %v2109 = vsel %vm1069, %v1282, 0
  %v2112 = vsel %vm1069, %v1283, 0
  %v2115 = vsel %vm1069, %v1284, 0
  %v2118 = vsel %vm1069, %v1285, 0
  %v2121 = vsel %vm1069, %v1286, 0
  %v2124 = vsel %vm1069, %v1287, 0
  %v2127 = vsel %vm1069, %v1288, 0
  %v2130 = vsel %vm1548, %v1289, 0
  %2132 = vmatprep.subr.mxu0 0.0
  %2133 = vmatpush1.msra.mxu0 %v2130
  %2134 = vmatprep.subr.mxu0 0.0
  %2135 = vmatpush1.msra.mxu0 0.0
  %2136 = vmatprep.subr.mxu0 0.0
  %2137 = vmatpush1.msra.mxu0 0.0
  %2138 = vmatprep.subr.mxu0 0.0
  %2139 = vmatpush1.msra.mxu0 0.0
  %2140 = vmatprep.subr.mxu0 0.0
  %2141 = vmatpush1.msra.mxu0 0.0
  %2142 = vmatprep.subr.mxu0 0.0
  %2143 = vmatpush1.msra.mxu0 0.0
  %2144 = vmatprep.subr.mxu0 0.0
  %2145 = vmatpush1.msra.mxu0 0.0
  %2146 = vmatprep.subr.mxu0 0.0
  %2147 = vmatpush1.msra.mxu0 0.0
  %2148 = vmatprep.subr.mxu0 0.0
  %2149 = vmatpush1.msra.mxu0 0.0
  %2150 = vmatprep.subr.mxu0 0.0
  %2151 = vmatpush1.msra.mxu0 0.0
  %2152 = vmatprep.subr.mxu0 0.0
  %2153 = vmatpush1.msra.mxu0 0.0
  %2154 = vmatprep.subr.mxu0 0.0
  %2155 = vmatpush1.msra.mxu0 0.0
  %2156 = vmatprep.subr.mxu0 0.0
  %2157 = vmatpush1.msra.mxu0 0.0
  %2158 = vmatprep.subr.mxu0 0.0
  %2159 = vmatpush1.msra.mxu0 0.0
  %2160 = vmatprep.subr.mxu0 0.0
  %2161 = vmatpush1.msra.mxu0 0.0
  %2162 = vmatprep.subr.mxu0 0.0
  %2163 = vmatpush1.msra.mxu0 0.0
  %2164 = vmatprep.subr.mxu0 0.0
  %2165 = vmatpush1.msra.mxu0 0.0
  %2166 = vmatprep.subr.mxu0 0.0
  %2167 = vmatpush1.msra.mxu0 0.0
  %2168 = vmatprep.subr.mxu0 0.0
  %2169 = vmatpush1.msra.mxu0 0.0
  %2170 = vmatprep.subr.mxu0 0.0
  %2171 = vmatpush1.msra.mxu0 0.0
  %2172 = vmatprep.subr.mxu0 0.0
  %2173 = vmatpush1.msra.mxu0 0.0
  %2174 = vmatprep.subr.mxu0 0.0
  %2175 = vmatpush1.msra.mxu0 0.0
  %2176 = vmatprep.subr.mxu0 0.0
  %2177 = vmatpush1.msra.mxu0 0.0
  %2178 = vmatprep.subr.mxu0 0.0
  %2179 = vmatpush1.msra.mxu0 0.0
  %2180 = vmatprep.subr.mxu0 0.0
  %2181 = vmatpush1.msra.mxu0 0.0
  %2182 = vmatprep.subr.mxu0 0.0
  %2183 = vmatpush1.msra.mxu0 0.0
  %2184 = vmatprep.subr.mxu0 0.0
  %2185 = vmatpush1.msra.mxu0 0.0
  %2186 = vmatprep.subr.mxu0 0.0
  %2187 = vmatpush1.msra.mxu0 0.0
  %2188 = vmatprep.subr.mxu0 0.0
  %2189 = vmatpush1.msra.mxu0 0.0
  %2190 = vmatprep.subr.mxu0 0.0
  %2191 = vmatpush1.msra.mxu0 0.0
  %2192 = vmatprep.subr.mxu0 0.0
  %2193 = vmatpush1.msra.mxu0 0.0
  %2194 = vmatprep.subr.mxu0 0.0
  %2195 = vmatpush1.msra.mxu0 0.0
  %2196 = vmatprep.mubr.f32.mxu0 0.0
  %2197 = vmatmul.mubr.f32.gmra.mrb[0].mxu0 %v1938
  %v2198 = vpop.f32.mrb[0].mxu0
  %v2199 = vadd.f32 %v1619, %v2198
  %v2200 = vpop.f32.mrb[0].mxu0
  %2201 = vmatprep.mubr.f32.mxu0 0.0
  %2202 = vmatmul.mubr.f32.gmra.mrb[0].mxu0 %v1941
  %v2203 = vpop.f32.mrb[0].mxu0
  %v2204 = vadd.f32 %v1624, %v2203
  %v2205 = vpop.f32.mrb[0].mxu0
  %2206 = vmatprep.mubr.f32.mxu0 0.0
  %2207 = vmatmul.mubr.f32.gmra.mrb[0].mxu0 %v1944
  %v2208 = vpop.f32.mrb[0].mxu0
  %v2209 = vadd.f32 %v1629, %v2208
  %v2210 = vpop.f32.mrb[0].mxu0
  %2211 = vmatprep.mubr.f32.mxu0 0.0
  %2212 = vmatmul.mubr.f32.gmra.mrb[0].mxu0 %v1947
  %v2213 = vpop.f32.mrb[0].mxu0
  %v2214 = vadd.f32 %v1634, %v2213
  %v2215 = vpop.f32.mrb[0].mxu0
  %2216 = vmatprep.mubr.f32.mxu0 0.0
  %2217 = vmatmul.mubr.f32.gmra.mrb[0].mxu0 %v1950
  %v2218 = vpop.f32.mrb[0].mxu0
  %v2219 = vadd.f32 %v1639, %v2218
  %v2220 = vpop.f32.mrb[0].mxu0
  %2221 = vmatprep.mubr.f32.mxu0 0.0
  %2222 = vmatmul.mubr.f32.gmra.mrb[0].mxu0 %v1953
  %v2223 = vpop.f32.mrb[0].mxu0
  %v2224 = vadd.f32 %v1644, %v2223
  %v2225 = vpop.f32.mrb[0].mxu0
  %2226 = vmatprep.mubr.f32.mxu0 0.0
  %2227 = vmatmul.mubr.f32.gmra.mrb[0].mxu0 %v1956
  %v2228 = vpop.f32.mrb[0].mxu0
  %v2229 = vadd.f32 %v1649, %v2228
  %v2230 = vpop.f32.mrb[0].mxu0
  %2231 = vmatprep.mubr.f32.mxu0 0.0
  %2232 = vmatmul.mubr.f32.gmra.mrb[0].mxu0 %v1959
  %v2233 = vpop.f32.mrb[0].mxu0
  %v2234 = vadd.f32 %v1654, %v2233
  %v2235 = vpop.f32.mrb[0].mxu0
  %2236 = vmatprep.mubr.f32.mxu0 0.0
  %2237 = vmatmul.mubr.f32.gmra.mrb[0].mxu0 %v1962
  %v2238 = vpop.f32.mrb[0].mxu0
  %v2239 = vadd.f32 %v1659, %v2238
  %v2240 = vpop.f32.mrb[0].mxu0
  %2241 = vmatprep.mubr.f32.mxu0 0.0
  %2242 = vmatmul.mubr.f32.gmra.mrb[0].mxu0 %v1965
  %v2243 = vpop.f32.mrb[0].mxu0
  %v2244 = vadd.f32 %v1664, %v2243
  %v2245 = vpop.f32.mrb[0].mxu0
  %2246 = vmatprep.mubr.f32.mxu0 0.0
  %2247 = vmatmul.mubr.f32.gmra.mrb[0].mxu0 %v1968
  %v2248 = vpop.f32.mrb[0].mxu0
  %v2249 = vadd.f32 %v1669, %v2248
  %v2250 = vpop.f32.mrb[0].mxu0
  %2251 = vmatprep.mubr.f32.mxu0 0.0
  %2252 = vmatmul.mubr.f32.gmra.mrb[0].mxu0 %v1971
  %v2253 = vpop.f32.mrb[0].mxu0
  %v2254 = vadd.f32 %v1674, %v2253
  %v2255 = vpop.f32.mrb[0].mxu0
  %2256 = vmatprep.mubr.f32.mxu0 0.0
  %2257 = vmatmul.mubr.f32.gmra.mrb[0].mxu0 %v1974
  %v2258 = vpop.f32.mrb[0].mxu0
  %v2259 = vadd.f32 %v1679, %v2258
  %v2260 = vpop.f32.mrb[0].mxu0
  %2261 = vmatprep.mubr.f32.mxu0 0.0
  %2262 = vmatmul.mubr.f32.gmra.mrb[0].mxu0 %v1977
  %v2263 = vpop.f32.mrb[0].mxu0
  %v2264 = vadd.f32 %v1684, %v2263
  %v2265 = vpop.f32.mrb[0].mxu0
  %2266 = vmatprep.mubr.f32.mxu0 0.0
  %2267 = vmatmul.mubr.f32.gmra.mrb[0].mxu0 %v1980
  %v2268 = vpop.f32.mrb[0].mxu0
  %v2269 = vadd.f32 %v1689, %v2268
  %v2270 = vpop.f32.mrb[0].mxu0
  %2271 = vmatprep.mubr.f32.mxu0 0.0
  %2272 = vmatmul.mubr.f32.gmra.mrb[0].mxu0 %v1983
  %v2273 = vpop.f32.mrb[0].mxu0
  %v2274 = vadd.f32 %v1694, %v2273
  %v2275 = vpop.f32.mrb[0].mxu0
  %2276 = vmatprep.mubr.f32.mxu0 0.0
  %2277 = vmatmul.mubr.f32.gmra.mrb[0].mxu0 %v1986
  %v2278 = vpop.f32.mrb[0].mxu0
  %v2279 = vadd.f32 %v1699, %v2278
  %v2280 = vpop.f32.mrb[0].mxu0
  %2281 = vmatprep.mubr.f32.mxu0 0.0
  %2282 = vmatmul.mubr.f32.gmra.mrb[0].mxu0 %v1989
  %v2283 = vpop.f32.mrb[0].mxu0
  %v2284 = vadd.f32 %v1704, %v2283
  %v2285 = vpop.f32.mrb[0].mxu0
  %2286 = vmatprep.mubr.f32.mxu0 0.0
  %2287 = vmatmul.mubr.f32.gmra.mrb[0].mxu0 %v1992
  %v2288 = vpop.f32.mrb[0].mxu0
  %v2289 = vadd.f32 %v1709, %v2288
  %v2290 = vpop.f32.mrb[0].mxu0
  %2291 = vmatprep.mubr.f32.mxu0 0.0
  %2292 = vmatmul.mubr.f32.gmra.mrb[0].mxu0 %v1995
  %v2293 = vpop.f32.mrb[0].mxu0
  %v2294 = vadd.f32 %v1714, %v2293
  %v2295 = vpop.f32.mrb[0].mxu0
  %2296 = vmatprep.mubr.f32.mxu0 0.0
  %2297 = vmatmul.mubr.f32.gmra.mrb[0].mxu0 %v1998
  %v2298 = vpop.f32.mrb[0].mxu0
  %v2299 = vadd.f32 %v1719, %v2298
  %v2300 = vpop.f32.mrb[0].mxu0
  %2301 = vmatprep.mubr.f32.mxu0 0.0
  %2302 = vmatmul.mubr.f32.gmra.mrb[0].mxu0 %v2001
  %v2303 = vpop.f32.mrb[0].mxu0
  %v2304 = vadd.f32 %v1724, %v2303
  %v2305 = vpop.f32.mrb[0].mxu0
  %2306 = vmatprep.mubr.f32.mxu0 0.0
  %2307 = vmatmul.mubr.f32.gmra.mrb[0].mxu0 %v2004
  %v2308 = vpop.f32.mrb[0].mxu0
  %v2309 = vadd.f32 %v1729, %v2308
  %v2310 = vpop.f32.mrb[0].mxu0
  %2311 = vmatprep.mubr.f32.mxu0 0.0
  %2312 = vmatmul.mubr.f32.gmra.mrb[0].mxu0 %v2007
  %v2313 = vpop.f32.mrb[0].mxu0
  %v2314 = vadd.f32 %v1734, %v2313
  %v2315 = vpop.f32.mrb[0].mxu0
  %2316 = vmatprep.mubr.f32.mxu0 0.0
  %2317 = vmatmul.mubr.f32.gmra.mrb[0].mxu0 %v2010
  %v2318 = vpop.f32.mrb[0].mxu0
  %v2319 = vadd.f32 %v1739, %v2318
  %v2320 = vpop.f32.mrb[0].mxu0
  %2321 = vmatprep.mubr.f32.mxu0 0.0
  %2322 = vmatmul.mubr.f32.gmra.mrb[0].mxu0 %v2013
  %v2323 = vpop.f32.mrb[0].mxu0
  %v2324 = vadd.f32 %v1744, %v2323
  %v2325 = vpop.f32.mrb[0].mxu0
  %2326 = vmatprep.mubr.f32.mxu0 0.0
  %2327 = vmatmul.mubr.f32.gmra.mrb[0].mxu0 %v2016
  %v2328 = vpop.f32.mrb[0].mxu0
  %v2329 = vadd.f32 %v1749, %v2328
  %v2330 = vpop.f32.mrb[0].mxu0
  %2331 = vmatprep.mubr.f32.mxu0 0.0
  %2332 = vmatmul.mubr.f32.gmra.mrb[0].mxu0 %v2019
  %v2333 = vpop.f32.mrb[0].mxu0
  %v2334 = vadd.f32 %v1754, %v2333
  %v2335 = vpop.f32.mrb[0].mxu0
  %2336 = vmatprep.mubr.f32.mxu0 0.0
  %2337 = vmatmul.mubr.f32.gmra.mrb[0].mxu0 %v2022
  %v2338 = vpop.f32.mrb[0].mxu0
  %v2339 = vadd.f32 %v1759, %v2338
  %v2340 = vpop.f32.mrb[0].mxu0
  %2341 = vmatprep.mubr.f32.mxu0 0.0
  %2342 = vmatmul.mubr.f32.gmra.mrb[0].mxu0 %v2025
  %v2343 = vpop.f32.mrb[0].mxu0
  %v2344 = vadd.f32 %v1764, %v2343
  %v2345 = vpop.f32.mrb[0].mxu0
  %2346 = vmatprep.mubr.f32.mxu0 0.0
  %2347 = vmatmul.mubr.f32.gmra.mrb[0].mxu0 %v2028
  %v2348 = vpop.f32.mrb[0].mxu0
  %v2349 = vadd.f32 %v1769, %v2348
  %v2350 = vpop.f32.mrb[0].mxu0
  %2351 = vmatprep.mubr.f32.mxu0 0.0
  %2352 = vmatmul.mubr.f32.gmra.mrb[0].mxu0 %v2031
  %v2353 = vpop.f32.mrb[0].mxu0
  %v2354 = vadd.f32 %v1774, %v2353
  %v2355 = vpop.f32.mrb[0].mxu0
  %2356 = vmatprep.mubr.f32.mxu0 0.0
  %2357 = vmatmul.mubr.f32.gmra.mrb[0].mxu0 %v2034
  %v2358 = vpop.f32.mrb[0].mxu0
  %v2359 = vadd.f32 %v1779, %v2358
  %v2360 = vpop.f32.mrb[0].mxu0
  %2361 = vmatprep.mubr.f32.mxu0 0.0
  %2362 = vmatmul.mubr.f32.gmra.mrb[0].mxu0 %v2037
  %v2363 = vpop.f32.mrb[0].mxu0
  %v2364 = vadd.f32 %v1784, %v2363
  %v2365 = vpop.f32.mrb[0].mxu0
  %2366 = vmatprep.mubr.f32.mxu0 0.0
  %2367 = vmatmul.mubr.f32.gmra.mrb[0].mxu0 %v2040
  %v2368 = vpop.f32.mrb[0].mxu0
  %v2369 = vadd.f32 %v1789, %v2368
  %v2370 = vpop.f32.mrb[0].mxu0
  %2371 = vmatprep.mubr.f32.mxu0 0.0
  %2372 = vmatmul.mubr.f32.gmra.mrb[0].mxu0 %v2043
  %v2373 = vpop.f32.mrb[0].mxu0
  %v2374 = vadd.f32 %v1794, %v2373
  %v2375 = vpop.f32.mrb[0].mxu0
  %2376 = vmatprep.mubr.f32.mxu0 0.0
  %2377 = vmatmul.mubr.f32.gmra.mrb[0].mxu0 %v2046
  %v2378 = vpop.f32.mrb[0].mxu0
  %v2379 = vadd.f32 %v1799, %v2378
  %v2380 = vpop.f32.mrb[0].mxu0
  %2381 = vmatprep.mubr.f32.mxu0 0.0
  %2382 = vmatmul.mubr.f32.gmra.mrb[0].mxu0 %v2049
  %v2383 = vpop.f32.mrb[0].mxu0
  %v2384 = vadd.f32 %v1804, %v2383
  %v2385 = vpop.f32.mrb[0].mxu0
  %2386 = vmatprep.mubr.f32.mxu0 0.0
  %2387 = vmatmul.mubr.f32.gmra.mrb[0].mxu0 %v2052
  %v2388 = vpop.f32.mrb[0].mxu0
  %v2389 = vadd.f32 %v1809, %v2388
  %v2390 = vpop.f32.mrb[0].mxu0
  %2391 = vmatprep.mubr.f32.mxu0 0.0
  %2392 = vmatmul.mubr.f32.gmra.mrb[0].mxu0 %v2055
  %v2393 = vpop.f32.mrb[0].mxu0
  %v2394 = vadd.f32 %v1814, %v2393
  %v2395 = vpop.f32.mrb[0].mxu0
  %2396 = vmatprep.mubr.f32.mxu0 0.0
  %2397 = vmatmul.mubr.f32.gmra.mrb[0].mxu0 %v2058
  %v2398 = vpop.f32.mrb[0].mxu0
  %v2399 = vadd.f32 %v1819, %v2398
  %v2400 = vpop.f32.mrb[0].mxu0
  %2401 = vmatprep.mubr.f32.mxu0 0.0
  %2402 = vmatmul.mubr.f32.gmra.mrb[0].mxu0 %v2061
  %v2403 = vpop.f32.mrb[0].mxu0
  %v2404 = vadd.f32 %v1824, %v2403
  %v2405 = vpop.f32.mrb[0].mxu0
  %2406 = vmatprep.mubr.f32.mxu0 0.0
  %2407 = vmatmul.mubr.f32.gmra.mrb[0].mxu0 %v2064
  %v2408 = vpop.f32.mrb[0].mxu0
  %v2409 = vadd.f32 %v1829, %v2408
  %v2410 = vpop.f32.mrb[0].mxu0
  %2411 = vmatprep.mubr.f32.mxu0 0.0
  %2412 = vmatmul.mubr.f32.gmra.mrb[0].mxu0 %v2067
  %v2413 = vpop.f32.mrb[0].mxu0
  %v2414 = vadd.f32 %v1834, %v2413
  %v2415 = vpop.f32.mrb[0].mxu0
  %2416 = vmatprep.mubr.f32.mxu0 0.0
  %2417 = vmatmul.mubr.f32.gmra.mrb[0].mxu0 %v2070
  %v2418 = vpop.f32.mrb[0].mxu0
  %v2419 = vadd.f32 %v1839, %v2418
  %v2420 = vpop.f32.mrb[0].mxu0
  %2421 = vmatprep.mubr.f32.mxu0 0.0
  %2422 = vmatmul.mubr.f32.gmra.mrb[0].mxu0 %v2073
  %v2423 = vpop.f32.mrb[0].mxu0
  %v2424 = vadd.f32 %v1844, %v2423
  %v2425 = vpop.f32.mrb[0].mxu0
  %2426 = vmatprep.mubr.f32.mxu0 0.0
  %2427 = vmatmul.mubr.f32.gmra.mrb[0].mxu0 %v2076
  %v2428 = vpop.f32.mrb[0].mxu0
  %v2429 = vadd.f32 %v1849, %v2428
  %v2430 = vpop.f32.mrb[0].mxu0
  %2431 = vmatprep.mubr.f32.mxu0 0.0
  %2432 = vmatmul.mubr.f32.gmra.mrb[0].mxu0 %v2079
  %v2433 = vpop.f32.mrb[0].mxu0
  %v2434 = vadd.f32 %v1854, %v2433
  %v2435 = vpop.f32.mrb[0].mxu0
  %2436 = vmatprep.mubr.f32.mxu0 0.0
  %2437 = vmatmul.mubr.f32.gmra.mrb[0].mxu0 %v2082
  %v2438 = vpop.f32.mrb[0].mxu0
  %v2439 = vadd.f32 %v1859, %v2438
  %v2440 = vpop.f32.mrb[0].mxu0
  %2441 = vmatprep.mubr.f32.mxu0 0.0
  %2442 = vmatmul.mubr.f32.gmra.mrb[0].mxu0 %v2085
  %v2443 = vpop.f32.mrb[0].mxu0
  %v2444 = vadd.f32 %v1864, %v2443
  %v2445 = vpop.f32.mrb[0].mxu0
  %2446 = vmatprep.mubr.f32.mxu0 0.0
  %2447 = vmatmul.mubr.f32.gmra.mrb[0].mxu0 %v2088
  %v2448 = vpop.f32.mrb[0].mxu0
  %v2449 = vadd.f32 %v1869, %v2448
  %v2450 = vpop.f32.mrb[0].mxu0
  %2451 = vmatprep.mubr.f32.mxu0 0.0
  %2452 = vmatmul.mubr.f32.gmra.mrb[0].mxu0 %v2091
  %v2453 = vpop.f32.mrb[0].mxu0
  %v2454 = vadd.f32 %v1874, %v2453
  %v2455 = vpop.f32.mrb[0].mxu0
  %2456 = vmatprep.mubr.f32.mxu0 0.0
  %2457 = vmatmul.mubr.f32.gmra.mrb[0].mxu0 %v2094
  %v2458 = vpop.f32.mrb[0].mxu0
  %v2459 = vadd.f32 %v1879, %v2458
  %v2460 = vpop.f32.mrb[0].mxu0
  %2461 = vmatprep.mubr.f32.mxu0 0.0
  %2462 = vmatmul.mubr.f32.gmra.mrb[0].mxu0 %v2097
  %v2463 = vpop.f32.mrb[0].mxu0
  %v2464 = vadd.f32 %v1884, %v2463
  %v2465 = vpop.f32.mrb[0].mxu0
  %2466 = vmatprep.mubr.f32.mxu0 0.0
  %2467 = vmatmul.mubr.f32.gmra.mrb[0].mxu0 %v2100
  %v2468 = vpop.f32.mrb[0].mxu0
  %v2469 = vadd.f32 %v1889, %v2468
  %v2470 = vpop.f32.mrb[0].mxu0
  %2471 = vmatprep.mubr.f32.mxu0 0.0
  %2472 = vmatmul.mubr.f32.gmra.mrb[0].mxu0 %v2103
  %v2473 = vpop.f32.mrb[0].mxu0
  %v2474 = vadd.f32 %v1894, %v2473
  %v2475 = vpop.f32.mrb[0].mxu0
  %2476 = vmatprep.mubr.f32.mxu0 0.0
  %2477 = vmatmul.mubr.f32.gmra.mrb[0].mxu0 %v2106
  %v2478 = vpop.f32.mrb[0].mxu0
  %v2479 = vadd.f32 %v1899, %v2478
  %v2480 = vpop.f32.mrb[0].mxu0
  %2481 = vmatprep.mubr.f32.mxu0 0.0
  %2482 = vmatmul.mubr.f32.gmra.mrb[0].mxu0 %v2109
  %v2483 = vpop.f32.mrb[0].mxu0
  %v2484 = vadd.f32 %v1904, %v2483
  %v2485 = vpop.f32.mrb[0].mxu0
  %2486 = vmatprep.mubr.f32.mxu0 0.0
  %2487 = vmatmul.mubr.f32.gmra.mrb[0].mxu0 %v2112
  %v2488 = vpop.f32.mrb[0].mxu0
  %v2489 = vadd.f32 %v1909, %v2488
  %v2490 = vpop.f32.mrb[0].mxu0
  %2491 = vmatprep.mubr.f32.mxu0 0.0
  %2492 = vmatmul.mubr.f32.gmra.mrb[0].mxu0 %v2115
  %v2493 = vpop.f32.mrb[0].mxu0
  %v2494 = vadd.f32 %v1914, %v2493
  %v2495 = vpop.f32.mrb[0].mxu0
  %2496 = vmatprep.mubr.f32.mxu0 0.0
  %2497 = vmatmul.mubr.f32.gmra.mrb[0].mxu0 %v2118
  %v2498 = vpop.f32.mrb[0].mxu0
  %v2499 = vadd.f32 %v1919, %v2498
  %v2500 = vpop.f32.mrb[0].mxu0
  %2501 = vmatprep.mubr.f32.mxu0 0.0
  %2502 = vmatmul.mubr.f32.gmra.mrb[0].mxu0 %v2121
  %v2503 = vpop.f32.mrb[0].mxu0
  %v2504 = vadd.f32 %v1924, %v2503
  %v2505 = vpop.f32.mrb[0].mxu0
  %2506 = vmatprep.mubr.f32.mxu0 0.0
  %2507 = vmatmul.mubr.f32.gmra.mrb[0].mxu0 %v2124
  %v2508 = vpop.f32.mrb[0].mxu0
  %v2509 = vadd.f32 %v1929, %v2508
  %v2510 = vpop.f32.mrb[0].mxu0
  %2511 = vmatprep.mubr.f32.mxu0 0.0
  %2512 = vmatmul.mubr.f32.gmra.mrb[0].mxu0 %v2127
  %v2513 = vpop.f32.mrb[0].mxu0
  %v2514 = vadd.f32 %v1934, %v2513
  %v2515 = vpop.f32.mrb[0].mxu0
  %2516 = vdwg.mxu0
  %v2517 = vld [vmem:[#allocation2 + $0x9] sm:$0xff]
  %v2518 = vld [vmem:[#allocation2 + $0x11] sm:$0xff]
  %v2519 = vld [vmem:[#allocation2 + $0x29] sm:$0xff]
  %v2520 = vld [vmem:[#allocation2 + $0x31] sm:$0xff]
  %v2521 = vld [vmem:[#allocation2 + $0x49] sm:$0xff]
  %v2522 = vld [vmem:[#allocation2 + $0x51] sm:$0xff]
  %v2523 = vld [vmem:[#allocation2 + $0x69] sm:$0xff]
  %v2524 = vld [vmem:[#allocation2 + $0x71] sm:$0xff]
  %v2525 = vld [vmem:[#allocation2 + $0x89] sm:$0xff]
  %v2526 = vld [vmem:[#allocation2 + $0x91] sm:$0xff]
  %v2527 = vld [vmem:[#allocation2 + $0xa9] sm:$0xff]
  %v2528 = vld [vmem:[#allocation2 + $0xb1] sm:$0xff]
  %v2529 = vld [vmem:[#allocation2 + $0xc9] sm:$0xff]
  %v2530 = vld [vmem:[#allocation2 + $0xd1] sm:$0xff]
  %v2531 = vld [vmem:[#allocation2 + $0xe9] sm:$0xff]
  %v2532 = vld [vmem:[#allocation2 + $0xf1] sm:$0xff]
  %v2533 = vld [vmem:[#allocation2 + $0x109] sm:$0xff]
  %v2534 = vld [vmem:[#allocation2 + $0x111] sm:$0xff]
  %v2535 = vld [vmem:[#allocation2 + $0x129] sm:$0xff]
  %v2536 = vld [vmem:[#allocation2 + $0x131] sm:$0xff]
  %v2537 = vld [vmem:[#allocation2 + $0x149] sm:$0xff]
  %v2538 = vld [vmem:[#allocation2 + $0x151] sm:$0xff]
  %v2539 = vld [vmem:[#allocation2 + $0x169] sm:$0xff]
  %v2540 = vld [vmem:[#allocation2 + $0x171] sm:$0xff]
  %v2541 = vld [vmem:[#allocation2 + $0x189] sm:$0xff]
  %v2542 = vld [vmem:[#allocation2 + $0x191] sm:$0xff]
  %v2543 = vld [vmem:[#allocation2 + $0x1a9] sm:$0xff]
  %v2544 = vld [vmem:[#allocation2 + $0x1b1] sm:$0xff]
  %v2545 = vld [vmem:[#allocation2 + $0x1c9] sm:$0xff]
  %v2546 = vld [vmem:[#allocation2 + $0x1d1] sm:$0xff]
  %v2547 = vld [vmem:[#allocation2 + $0x1e9] sm:$0xff]
  %v2548 = vld [vmem:[#allocation2 + $0x1f1] sm:$0xff]
  %v2549 = vld [vmem:[#allocation2 + $0x249] sm:$0xff]
  %v2550 = vld [vmem:[#allocation2 + $0x251] sm:$0xff]
  %v2551 = vld [vmem:[#allocation2 + $0x269] sm:$0xff]
  %v2552 = vld [vmem:[#allocation2 + $0x271] sm:$0xff]
  %v2553 = vld [vmem:[#allocation2 + $0x289] sm:$0xff]
  %v2554 = vld [vmem:[#allocation2 + $0x291] sm:$0xff]
  %v2555 = vld [vmem:[#allocation2 + $0x2a9] sm:$0xff]
  %v2556 = vld [vmem:[#allocation2 + $0x2b1] sm:$0xff]
  %v2557 = vld [vmem:[#allocation2 + $0x2c9] sm:$0xff]
  %v2558 = vld [vmem:[#allocation2 + $0x2d1] sm:$0xff]
  %v2559 = vld [vmem:[#allocation2 + $0x2e9] sm:$0xff]
  %v2560 = vld [vmem:[#allocation2 + $0x2f1] sm:$0xff]
  %v2561 = vld [vmem:[#allocation2 + $0x309] sm:$0xff]
  %v2562 = vld [vmem:[#allocation2 + $0x311] sm:$0xff]
  %v2563 = vld [vmem:[#allocation2 + $0x329] sm:$0xff]
  %v2564 = vld [vmem:[#allocation2 + $0x331] sm:$0xff]
  %v2565 = vld [vmem:[#allocation2 + $0x349] sm:$0xff]
  %v2566 = vld [vmem:[#allocation2 + $0x351] sm:$0xff]
  %v2567 = vld [vmem:[#allocation2 + $0x369] sm:$0xff]
  %v2568 = vld [vmem:[#allocation2 + $0x371] sm:$0xff]
  %v2569 = vld [vmem:[#allocation2 + $0x389] sm:$0xff]
  %v2570 = vld [vmem:[#allocation2 + $0x391] sm:$0xff]
  %v2571 = vld [vmem:[#allocation2 + $0x3a9] sm:$0xff]
  %v2572 = vld [vmem:[#allocation2 + $0x3b1] sm:$0xff]
  %v2573 = vld [vmem:[#allocation2 + $0x3c9] sm:$0xff]
  %v2574 = vld [vmem:[#allocation2 + $0x3d1] sm:$0xff]
  %v2575 = vld [vmem:[#allocation2 + $0x3e9] sm:$0xff]
  %v2576 = vld [vmem:[#allocation2 + $0x3f1] sm:$0xff]
  %v2577 = vld [vmem:[#allocation2 + $0x409] sm:$0xff]
  %v2578 = vld [vmem:[#allocation2 + $0x411] sm:$0xff]
  %v2579 = vld [vmem:[#allocation2 + $0x429] sm:$0xff]
  %v2580 = vld [vmem:[#allocation2 + $0x431] sm:$0xff]
  %s2581 = scalar_lea.vmem %s5, 4
  %v2582 = vld [vmem:[%s2581] sm:$0x3]
  %v2584 = vsel %vm1069, %v2517, 0
  %v2587 = vsel %vm1069, %v2518, 0
  %v2590 = vsel %vm1069, %v2519, 0
  %v2593 = vsel %vm1069, %v2520, 0
  %v2596 = vsel %vm1069, %v2521, 0
  %v2599 = vsel %vm1069, %v2522, 0
  %v2602 = vsel %vm1069, %v2523, 0
  %v2605 = vsel %vm1069, %v2524, 0
  %v2608 = vsel %vm1069, %v2525, 0
  %v2611 = vsel %vm1069, %v2526, 0
  %v2614 = vsel %vm1069, %v2527, 0
  %v2617 = vsel %vm1069, %v2528, 0
  %v2620 = vsel %vm1069, %v2529, 0
  %v2623 = vsel %vm1069, %v2530, 0
  %v2626 = vsel %vm1069, %v2531, 0
  %v2629 = vsel %vm1069, %v2532, 0
  %v2632 = vsel %vm1069, %v2533, 0
  %v2635 = vsel %vm1069, %v2534, 0
  %v2638 = vsel %vm1069, %v2535, 0
  %v2641 = vsel %vm1069, %v2536, 0
  %v2644 = vsel %vm1069, %v2537, 0
  %v2647 = vsel %vm1069, %v2538, 0
  %v2650 = vsel %vm1069, %v2539, 0
  %v2653 = vsel %vm1069, %v2540, 0
  %v2656 = vsel %vm1069, %v2541, 0
  %v2659 = vsel %vm1069, %v2542, 0
  %v2662 = vsel %vm1069, %v2543, 0
  %v2665 = vsel %vm1069, %v2544, 0
  %v2668 = vsel %vm1069, %v2545, 0
  %v2671 = vsel %vm1069, %v2546, 0
  %v2674 = vsel %vm1069, %v2547, 0
  %v2677 = vsel %vm1069, %v2548, 0
  %v2680 = vsel %vm1069, %v2549, 0
  %v2683 = vsel %vm1069, %v2550, 0
  %v2686 = vsel %vm1069, %v2551, 0
  %v2689 = vsel %vm1069, %v2552, 0
  %v2692 = vsel %vm1069, %v2553, 0
  %v2695 = vsel %vm1069, %v2554, 0
  %v2698 = vsel %vm1069, %v2555, 0
  %v2701 = vsel %vm1069, %v2556, 0
  %v2704 = vsel %vm1069, %v2557, 0
  %v2707 = vsel %vm1069, %v2558, 0
  %v2710 = vsel %vm1069, %v2559, 0
  %v2713 = vsel %vm1069, %v2560, 0
  %v2716 = vsel %vm1069, %v2561, 0
  %v2719 = vsel %vm1069, %v2562, 0
  %v2722 = vsel %vm1069, %v2563, 0
  %v2725 = vsel %vm1069, %v2564, 0
  %v2728 = vsel %vm1069, %v2565, 0
  %v2731 = vsel %vm1069, %v2566, 0
  %v2734 = vsel %vm1069, %v2567, 0
  %v2737 = vsel %vm1069, %v2568, 0
  %v2740 = vsel %vm1069, %v2569, 0
  %v2743 = vsel %vm1069, %v2570, 0
  %v2746 = vsel %vm1069, %v2571, 0
  %v2749 = vsel %vm1069, %v2572, 0
  %v2752 = vsel %vm1069, %v2573, 0
  %v2755 = vsel %vm1069, %v2574, 0
  %v2758 = vsel %vm1069, %v2575, 0
  %v2761 = vsel %vm1069, %v2576, 0
  %v2764 = vsel %vm1069, %v2577, 0
  %v2767 = vsel %vm1069, %v2578, 0
  %v2770 = vsel %vm1069, %v2579, 0
  %v2773 = vsel %vm1069, %v2580, 0
  %v2776 = vsel %vm1548, %v2582, 0
  %2778 = vmatprep.subr.mxu0 0.0
  %2779 = vmatpush1.msra.mxu0 %v2776
  %2780 = vmatprep.subr.mxu0 0.0
  %2781 = vmatpush1.msra.mxu0 0.0
  %2782 = vmatprep.subr.mxu0 0.0
  %2783 = vmatpush1.msra.mxu0 0.0
  %2784 = vmatprep.subr.mxu0 0.0
  %2785 = vmatpush1.msra.mxu0 0.0
  %2786 = vmatprep.subr.mxu0 0.0
  %2787 = vmatpush1.msra.mxu0 0.0
  %2788 = vmatprep.subr.mxu0 0.0
  %2789 = vmatpush1.msra.mxu0 0.0
  %2790 = vmatprep.subr.mxu0 0.0
  %2791 = vmatpush1.msra.mxu0 0.0
  %2792 = vmatprep.subr.mxu0 0.0
  %2793 = vmatpush1.msra.mxu0 0.0
  %2794 = vmatprep.subr.mxu0 0.0
  %2795 = vmatpush1.msra.mxu0 0.0
  %2796 = vmatprep.subr.mxu0 0.0
  %2797 = vmatpush1.msra.mxu0 0.0
  %2798 = vmatprep.subr.mxu0 0.0
  %2799 = vmatpush1.msra.mxu0 0.0
  %2800 = vmatprep.subr.mxu0 0.0
  %2801 = vmatpush1.msra.mxu0 0.0
  %2802 = vmatprep.subr.mxu0 0.0
  %2803 = vmatpush1.msra.mxu0 0.0
  %2804 = vmatprep.subr.mxu0 0.0
  %2805 = vmatpush1.msra.mxu0 0.0
  %2806 = vmatprep.subr.mxu0 0.0
  %2807 = vmatpush1.msra.mxu0 0.0
  %2808 = vmatprep.subr.mxu0 0.0
  %2809 = vmatpush1.msra.mxu0 0.0
  %2810 = vmatprep.subr.mxu0 0.0
  %2811 = vmatpush1.msra.mxu0 0.0
  %2812 = vmatprep.subr.mxu0 0.0
  %2813 = vmatpush1.msra.mxu0 0.0
  %2814 = vmatprep.subr.mxu0 0.0
  %2815 = vmatpush1.msra.mxu0 0.0
  %2816 = vmatprep.subr.mxu0 0.0
  %2817 = vmatpush1.msra.mxu0 0.0
  %2818 = vmatprep.subr.mxu0 0.0
  %2819 = vmatpush1.msra.mxu0 0.0
  %2820 = vmatprep.subr.mxu0 0.0
  %2821 = vmatpush1.msra.mxu0 0.0
  %2822 = vmatprep.subr.mxu0 0.0
  %2823 = vmatpush1.msra.mxu0 0.0
  %2824 = vmatprep.subr.mxu0 0.0
  %2825 = vmatpush1.msra.mxu0 0.0
  %2826 = vmatprep.subr.mxu0 0.0
  %2827 = vmatpush1.msra.mxu0 0.0
  %2828 = vmatprep.subr.mxu0 0.0
  %2829 = vmatpush1.msra.mxu0 0.0
  %2830 = vmatprep.subr.mxu0 0.0
  %2831 = vmatpush1.msra.mxu0 0.0
  %2832 = vmatprep.subr.mxu0 0.0
  %2833 = vmatpush1.msra.mxu0 0.0
  %2834 = vmatprep.subr.mxu0 0.0
  %2835 = vmatpush1.msra.mxu0 0.0
  %2836 = vmatprep.subr.mxu0 0.0
  %2837 = vmatpush1.msra.mxu0 0.0
  %2838 = vmatprep.subr.mxu0 0.0
  %2839 = vmatpush1.msra.mxu0 0.0
  %2840 = vmatprep.subr.mxu0 0.0
  %2841 = vmatpush1.msra.mxu0 0.0
  %2842 = vmatprep.mubr.f32.mxu0 0.0
  %2843 = vmatmul.mubr.f32.gmra.mrb[0].mxu0 %v2584
  %v2844 = vpop.f32.mrb[0].mxu0
  %v2845 = vadd.f32 0.0, %v2844
  %v2846 = vpop.f32.mrb[0].mxu0
  %2847 = vmatprep.mubr.f32.mxu0 0.0
  %2848 = vmatmul.mubr.f32.gmra.mrb[0].mxu0 %v2587
  %v2849 = vpop.f32.mrb[0].mxu0
  %v2850 = vadd.f32 0.0, %v2849
  %v2851 = vpop.f32.mrb[0].mxu0
  %2852 = vmatprep.mubr.f32.mxu0 0.0
  %2853 = vmatmul.mubr.f32.gmra.mrb[0].mxu0 %v2590
  %v2854 = vpop.f32.mrb[0].mxu0
  %v2855 = vadd.f32 0.0, %v2854
  %v2856 = vpop.f32.mrb[0].mxu0
  %2857 = vmatprep.mubr.f32.mxu0 0.0
  %2858 = vmatmul.mubr.f32.gmra.mrb[0].mxu0 %v2593
  %v2859 = vpop.f32.mrb[0].mxu0
  %v2860 = vadd.f32 0.0, %v2859
  %v2861 = vpop.f32.mrb[0].mxu0
  %2862 = vmatprep.mubr.f32.mxu0 0.0
  %2863 = vmatmul.mubr.f32.gmra.mrb[0].mxu0 %v2596
  %v2864 = vpop.f32.mrb[0].mxu0
  %v2865 = vadd.f32 0.0, %v2864
  %v2866 = vpop.f32.mrb[0].mxu0
  %2867 = vmatprep.mubr.f32.mxu0 0.0
  %2868 = vmatmul.mubr.f32.gmra.mrb[0].mxu0 %v2599
  %v2869 = vpop.f32.mrb[0].mxu0
  %v2870 = vadd.f32 0.0, %v2869
  %v2871 = vpop.f32.mrb[0].mxu0
  %2872 = vmatprep.mubr.f32.mxu0 0.0
  %2873 = vmatmul.mubr.f32.gmra.mrb[0].mxu0 %v2602
  %v2874 = vpop.f32.mrb[0].mxu0
  %v2875 = vadd.f32 0.0, %v2874
  %v2876 = vpop.f32.mrb[0].mxu0
  %2877 = vmatprep.mubr.f32.mxu0 0.0
  %2878 = vmatmul.mubr.f32.gmra.mrb[0].mxu0 %v2605
  %v2879 = vpop.f32.mrb[0].mxu0
  %v2880 = vadd.f32 0.0, %v2879
  %v2881 = vpop.f32.mrb[0].mxu0
  %2882 = vmatprep.mubr.f32.mxu0 0.0
  %2883 = vmatmul.mubr.f32.gmra.mrb[0].mxu0 %v2608
  %v2884 = vpop.f32.mrb[0].mxu0
  %v2885 = vadd.f32 0.0, %v2884
  %v2886 = vpop.f32.mrb[0].mxu0
  %2887 = vmatprep.mubr.f32.mxu0 0.0
  %2888 = vmatmul.mubr.f32.gmra.mrb[0].mxu0 %v2611
  %v2889 = vpop.f32.mrb[0].mxu0
  %v2890 = vadd.f32 0.0, %v2889
  %v2891 = vpop.f32.mrb[0].mxu0
  %2892 = vmatprep.mubr.f32.mxu0 0.0
  %2893 = vmatmul.mubr.f32.gmra.mrb[0].mxu0 %v2614
  %v2894 = vpop.f32.mrb[0].mxu0
  %v2895 = vadd.f32 0.0, %v2894
  %v2896 = vpop.f32.mrb[0].mxu0
  %2897 = vmatprep.mubr.f32.mxu0 0.0
  %2898 = vmatmul.mubr.f32.gmra.mrb[0].mxu0 %v2617
  %v2899 = vpop.f32.mrb[0].mxu0
  %v2900 = vadd.f32 0.0, %v2899
  %v2901 = vpop.f32.mrb[0].mxu0
  %2902 = vmatprep.mubr.f32.mxu0 0.0
  %2903 = vmatmul.mubr.f32.gmra.mrb[0].mxu0 %v2620
  %v2904 = vpop.f32.mrb[0].mxu0
  %v2905 = vadd.f32 0.0, %v2904
  %v2906 = vpop.f32.mrb[0].mxu0
  %2907 = vmatprep.mubr.f32.mxu0 0.0
  %2908 = vmatmul.mubr.f32.gmra.mrb[0].mxu0 %v2623
  %v2909 = vpop.f32.mrb[0].mxu0
  %v2910 = vadd.f32 0.0, %v2909
  %v2911 = vpop.f32.mrb[0].mxu0
  %2912 = vmatprep.mubr.f32.mxu0 0.0
  %2913 = vmatmul.mubr.f32.gmra.mrb[0].mxu0 %v2626
  %v2914 = vpop.f32.mrb[0].mxu0
  %v2915 = vadd.f32 0.0, %v2914
  %v2916 = vpop.f32.mrb[0].mxu0
  %2917 = vmatprep.mubr.f32.mxu0 0.0
  %2918 = vmatmul.mubr.f32.gmra.mrb[0].mxu0 %v2629
  %v2919 = vpop.f32.mrb[0].mxu0
  %v2920 = vadd.f32 0.0, %v2919
  %v2921 = vpop.f32.mrb[0].mxu0
  %2922 = vmatprep.mubr.f32.mxu0 0.0
  %2923 = vmatmul.mubr.f32.gmra.mrb[0].mxu0 %v2632
  %v2924 = vpop.f32.mrb[0].mxu0
  %v2925 = vadd.f32 0.0, %v2924
  %v2926 = vpop.f32.mrb[0].mxu0
  %2927 = vmatprep.mubr.f32.mxu0 0.0
  %2928 = vmatmul.mubr.f32.gmra.mrb[0].mxu0 %v2635
  %v2929 = vpop.f32.mrb[0].mxu0
  %v2930 = vadd.f32 0.0, %v2929
  %v2931 = vpop.f32.mrb[0].mxu0
  %2932 = vmatprep.mubr.f32.mxu0 0.0
  %2933 = vmatmul.mubr.f32.gmra.mrb[0].mxu0 %v2638
  %v2934 = vpop.f32.mrb[0].mxu0
  %v2935 = vadd.f32 0.0, %v2934
  %v2936 = vpop.f32.mrb[0].mxu0
  %2937 = vmatprep.mubr.f32.mxu0 0.0
  %2938 = vmatmul.mubr.f32.gmra.mrb[0].mxu0 %v2641
  %v2939 = vpop.f32.mrb[0].mxu0
  %v2940 = vadd.f32 0.0, %v2939
  %v2941 = vpop.f32.mrb[0].mxu0
  %2942 = vmatprep.mubr.f32.mxu0 0.0
  %2943 = vmatmul.mubr.f32.gmra.mrb[0].mxu0 %v2644
  %v2944 = vpop.f32.mrb[0].mxu0
  %v2945 = vadd.f32 0.0, %v2944
  %v2946 = vpop.f32.mrb[0].mxu0
  %2947 = vmatprep.mubr.f32.mxu0 0.0
  %2948 = vmatmul.mubr.f32.gmra.mrb[0].mxu0 %v2647
  %v2949 = vpop.f32.mrb[0].mxu0
  %v2950 = vadd.f32 0.0, %v2949
  %v2951 = vpop.f32.mrb[0].mxu0
  %2952 = vmatprep.mubr.f32.mxu0 0.0
  %2953 = vmatmul.mubr.f32.gmra.mrb[0].mxu0 %v2650
  %v2954 = vpop.f32.mrb[0].mxu0
  %v2955 = vadd.f32 0.0, %v2954
  %v2956 = vpop.f32.mrb[0].mxu0
  %2957 = vmatprep.mubr.f32.mxu0 0.0
  %2958 = vmatmul.mubr.f32.gmra.mrb[0].mxu0 %v2653
  %v2959 = vpop.f32.mrb[0].mxu0
  %v2960 = vadd.f32 0.0, %v2959
  %v2961 = vpop.f32.mrb[0].mxu0
  %2962 = vmatprep.mubr.f32.mxu0 0.0
  %2963 = vmatmul.mubr.f32.gmra.mrb[0].mxu0 %v2656
  %v2964 = vpop.f32.mrb[0].mxu0
  %v2965 = vadd.f32 0.0, %v2964
  %v2966 = vpop.f32.mrb[0].mxu0
  %2967 = vmatprep.mubr.f32.mxu0 0.0
  %2968 = vmatmul.mubr.f32.gmra.mrb[0].mxu0 %v2659
  %v2969 = vpop.f32.mrb[0].mxu0
  %v2970 = vadd.f32 0.0, %v2969
  %v2971 = vpop.f32.mrb[0].mxu0
  %2972 = vmatprep.mubr.f32.mxu0 0.0
  %2973 = vmatmul.mubr.f32.gmra.mrb[0].mxu0 %v2662
  %v2974 = vpop.f32.mrb[0].mxu0
  %v2975 = vadd.f32 0.0, %v2974
  %v2976 = vpop.f32.mrb[0].mxu0
  %2977 = vmatprep.mubr.f32.mxu0 0.0
  %2978 = vmatmul.mubr.f32.gmra.mrb[0].mxu0 %v2665
  %v2979 = vpop.f32.mrb[0].mxu0
  %v2980 = vadd.f32 0.0, %v2979
  %v2981 = vpop.f32.mrb[0].mxu0
  %2982 = vmatprep.mubr.f32.mxu0 0.0
  %2983 = vmatmul.mubr.f32.gmra.mrb[0].mxu0 %v2668
  %v2984 = vpop.f32.mrb[0].mxu0
  %v2985 = vadd.f32 0.0, %v2984
  %v2986 = vpop.f32.mrb[0].mxu0
  %2987 = vmatprep.mubr.f32.mxu0 0.0
  %2988 = vmatmul.mubr.f32.gmra.mrb[0].mxu0 %v2671
  %v2989 = vpop.f32.mrb[0].mxu0
  %v2990 = vadd.f32 0.0, %v2989
  %v2991 = vpop.f32.mrb[0].mxu0
  %2992 = vmatprep.mubr.f32.mxu0 0.0
  %2993 = vmatmul.mubr.f32.gmra.mrb[0].mxu0 %v2674
  %v2994 = vpop.f32.mrb[0].mxu0
  %v2995 = vadd.f32 0.0, %v2994
  %v2996 = vpop.f32.mrb[0].mxu0
  %2997 = vmatprep.mubr.f32.mxu0 0.0
  %2998 = vmatmul.mubr.f32.gmra.mrb[0].mxu0 %v2677
  %v2999 = vpop.f32.mrb[0].mxu0
  %v3000 = vadd.f32 0.0, %v2999
  %v3001 = vpop.f32.mrb[0].mxu0
  %3002 = vmatprep.mubr.f32.mxu0 0.0
  %3003 = vmatmul.mubr.f32.gmra.mrb[0].mxu0 %v2680
  %v3004 = vpop.f32.mrb[0].mxu0
  %v3005 = vadd.f32 0.0, %v3004
  %v3006 = vpop.f32.mrb[0].mxu0
  %3007 = vmatprep.mubr.f32.mxu0 0.0
  %3008 = vmatmul.mubr.f32.gmra.mrb[0].mxu0 %v2683
  %v3009 = vpop.f32.mrb[0].mxu0
  %v3010 = vadd.f32 0.0, %v3009
  %v3011 = vpop.f32.mrb[0].mxu0
  %3012 = vmatprep.mubr.f32.mxu0 0.0
  %3013 = vmatmul.mubr.f32.gmra.mrb[0].mxu0 %v2686
  %v3014 = vpop.f32.mrb[0].mxu0
  %v3015 = vadd.f32 0.0, %v3014
  %v3016 = vpop.f32.mrb[0].mxu0
  %3017 = vmatprep.mubr.f32.mxu0 0.0
  %3018 = vmatmul.mubr.f32.gmra.mrb[0].mxu0 %v2689
  %v3019 = vpop.f32.mrb[0].mxu0
  %v3020 = vadd.f32 0.0, %v3019
  %v3021 = vpop.f32.mrb[0].mxu0
  %3022 = vmatprep.mubr.f32.mxu0 0.0
  %3023 = vmatmul.mubr.f32.gmra.mrb[0].mxu0 %v2692
  %v3024 = vpop.f32.mrb[0].mxu0
  %v3025 = vadd.f32 0.0, %v3024
  %v3026 = vpop.f32.mrb[0].mxu0
  %3027 = vmatprep.mubr.f32.mxu0 0.0
  %3028 = vmatmul.mubr.f32.gmra.mrb[0].mxu0 %v2695
  %v3029 = vpop.f32.mrb[0].mxu0
  %v3030 = vadd.f32 0.0, %v3029
  %v3031 = vpop.f32.mrb[0].mxu0
  %3032 = vmatprep.mubr.f32.mxu0 0.0
  %3033 = vmatmul.mubr.f32.gmra.mrb[0].mxu0 %v2698
  %v3034 = vpop.f32.mrb[0].mxu0
  %v3035 = vadd.f32 0.0, %v3034
  %v3036 = vpop.f32.mrb[0].mxu0
  %3037 = vmatprep.mubr.f32.mxu0 0.0
  %3038 = vmatmul.mubr.f32.gmra.mrb[0].mxu0 %v2701
  %v3039 = vpop.f32.mrb[0].mxu0
  %v3040 = vadd.f32 0.0, %v3039
  %v3041 = vpop.f32.mrb[0].mxu0
  %3042 = vmatprep.mubr.f32.mxu0 0.0
  %3043 = vmatmul.mubr.f32.gmra.mrb[0].mxu0 %v2704
  %v3044 = vpop.f32.mrb[0].mxu0
  %v3045 = vadd.f32 0.0, %v3044
  %v3046 = vpop.f32.mrb[0].mxu0
  %3047 = vmatprep.mubr.f32.mxu0 0.0
  %3048 = vmatmul.mubr.f32.gmra.mrb[0].mxu0 %v2707
  %v3049 = vpop.f32.mrb[0].mxu0
  %v3050 = vadd.f32 0.0, %v3049
  %v3051 = vpop.f32.mrb[0].mxu0
  %3052 = vmatprep.mubr.f32.mxu0 0.0
  %3053 = vmatmul.mubr.f32.gmra.mrb[0].mxu0 %v2710
  %v3054 = vpop.f32.mrb[0].mxu0
  %v3055 = vadd.f32 0.0, %v3054
  %v3056 = vpop.f32.mrb[0].mxu0
  %3057 = vmatprep.mubr.f32.mxu0 0.0
  %3058 = vmatmul.mubr.f32.gmra.mrb[0].mxu0 %v2713
  %v3059 = vpop.f32.mrb[0].mxu0
  %v3060 = vadd.f32 0.0, %v3059
  %v3061 = vpop.f32.mrb[0].mxu0
  %3062 = vmatprep.mubr.f32.mxu0 0.0
  %3063 = vmatmul.mubr.f32.gmra.mrb[0].mxu0 %v2716
  %v3064 = vpop.f32.mrb[0].mxu0
  %v3065 = vadd.f32 0.0, %v3064
  %v3066 = vpop.f32.mrb[0].mxu0
  %3067 = vmatprep.mubr.f32.mxu0 0.0
  %3068 = vmatmul.mubr.f32.gmra.mrb[0].mxu0 %v2719
  %v3069 = vpop.f32.mrb[0].mxu0
  %v3070 = vadd.f32 0.0, %v3069
  %v3071 = vpop.f32.mrb[0].mxu0
  %3072 = vmatprep.mubr.f32.mxu0 0.0
  %3073 = vmatmul.mubr.f32.gmra.mrb[0].mxu0 %v2722
  %v3074 = vpop.f32.mrb[0].mxu0
  %v3075 = vadd.f32 0.0, %v3074
  %v3076 = vpop.f32.mrb[0].mxu0
  %3077 = vmatprep.mubr.f32.mxu0 0.0
  %3078 = vmatmul.mubr.f32.gmra.mrb[0].mxu0 %v2725
  %v3079 = vpop.f32.mrb[0].mxu0
  %v3080 = vadd.f32 0.0, %v3079
  %v3081 = vpop.f32.mrb[0].mxu0
  %3082 = vmatprep.mubr.f32.mxu0 0.0
  %3083 = vmatmul.mubr.f32.gmra.mrb[0].mxu0 %v2728
  %v3084 = vpop.f32.mrb[0].mxu0
  %v3085 = vadd.f32 0.0, %v3084
  %v3086 = vpop.f32.mrb[0].mxu0
  %3087 = vmatprep.mubr.f32.mxu0 0.0
  %3088 = vmatmul.mubr.f32.gmra.mrb[0].mxu0 %v2731
  %v3089 = vpop.f32.mrb[0].mxu0
  %v3090 = vadd.f32 0.0, %v3089
  %v3091 = vpop.f32.mrb[0].mxu0
  %3092 = vmatprep.mubr.f32.mxu0 0.0
  %3093 = vmatmul.mubr.f32.gmra.mrb[0].mxu0 %v2734
  %v3094 = vpop.f32.mrb[0].mxu0
  %v3095 = vadd.f32 0.0, %v3094
  %v3096 = vpop.f32.mrb[0].mxu0
  %3097 = vmatprep.mubr.f32.mxu0 0.0
  %3098 = vmatmul.mubr.f32.gmra.mrb[0].mxu0 %v2737
  %v3099 = vpop.f32.mrb[0].mxu0
  %v3100 = vadd.f32 0.0, %v3099
  %v3101 = vpop.f32.mrb[0].mxu0
  %3102 = vmatprep.mubr.f32.mxu0 0.0
  %3103 = vmatmul.mubr.f32.gmra.mrb[0].mxu0 %v2740
  %v3104 = vpop.f32.mrb[0].mxu0
  %v3105 = vadd.f32 0.0, %v3104
  %v3106 = vpop.f32.mrb[0].mxu0
  %3107 = vmatprep.mubr.f32.mxu0 0.0
  %3108 = vmatmul.mubr.f32.gmra.mrb[0].mxu0 %v2743
  %v3109 = vpop.f32.mrb[0].mxu0
  %v3110 = vadd.f32 0.0, %v3109
  %v3111 = vpop.f32.mrb[0].mxu0
  %3112 = vmatprep.mubr.f32.mxu0 0.0
  %3113 = vmatmul.mubr.f32.gmra.mrb[0].mxu0 %v2746
  %v3114 = vpop.f32.mrb[0].mxu0
  %v3115 = vadd.f32 0.0, %v3114
  %v3116 = vpop.f32.mrb[0].mxu0
  %3117 = vmatprep.mubr.f32.mxu0 0.0
  %3118 = vmatmul.mubr.f32.gmra.mrb[0].mxu0 %v2749
  %v3119 = vpop.f32.mrb[0].mxu0
  %v3120 = vadd.f32 0.0, %v3119
  %v3121 = vpop.f32.mrb[0].mxu0
  %3122 = vmatprep.mubr.f32.mxu0 0.0
  %3123 = vmatmul.mubr.f32.gmra.mrb[0].mxu0 %v2752
  %v3124 = vpop.f32.mrb[0].mxu0
  %v3125 = vadd.f32 0.0, %v3124
  %v3126 = vpop.f32.mrb[0].mxu0
  %3127 = vmatprep.mubr.f32.mxu0 0.0
  %3128 = vmatmul.mubr.f32.gmra.mrb[0].mxu0 %v2755
  %v3129 = vpop.f32.mrb[0].mxu0
  %v3130 = vadd.f32 0.0, %v3129
  %v3131 = vpop.f32.mrb[0].mxu0
  %3132 = vmatprep.mubr.f32.mxu0 0.0
  %3133 = vmatmul.mubr.f32.gmra.mrb[0].mxu0 %v2758
  %v3134 = vpop.f32.mrb[0].mxu0
  %v3135 = vadd.f32 0.0, %v3134
  %v3136 = vpop.f32.mrb[0].mxu0
  %3137 = vmatprep.mubr.f32.mxu0 0.0
  %3138 = vmatmul.mubr.f32.gmra.mrb[0].mxu0 %v2761
  %v3139 = vpop.f32.mrb[0].mxu0
  %v3140 = vadd.f32 0.0, %v3139
  %v3141 = vpop.f32.mrb[0].mxu0
  %3142 = vmatprep.mubr.f32.mxu0 0.0
  %3143 = vmatmul.mubr.f32.gmra.mrb[0].mxu0 %v2764
  %v3144 = vpop.f32.mrb[0].mxu0
  %v3145 = vadd.f32 0.0, %v3144
  %v3146 = vpop.f32.mrb[0].mxu0
  %3147 = vmatprep.mubr.f32.mxu0 0.0
  %3148 = vmatmul.mubr.f32.gmra.mrb[0].mxu0 %v2767
  %v3149 = vpop.f32.mrb[0].mxu0
  %v3150 = vadd.f32 0.0, %v3149
  %v3151 = vpop.f32.mrb[0].mxu0
  %3152 = vmatprep.mubr.f32.mxu0 0.0
  %3153 = vmatmul.mubr.f32.gmra.mrb[0].mxu0 %v2770
  %v3154 = vpop.f32.mrb[0].mxu0
  %v3155 = vadd.f32 0.0, %v3154
  %v3156 = vpop.f32.mrb[0].mxu0
  %3157 = vmatprep.mubr.f32.mxu0 0.0
  %3158 = vmatmul.mubr.f32.gmra.mrb[0].mxu0 %v2773
  %v3159 = vpop.f32.mrb[0].mxu0
  %v3160 = vadd.f32 0.0, %v3159
  %v3161 = vpop.f32.mrb[0].mxu0
  %3162 = vdwg.mxu0
  %v3163 = vadd.f32 %v2199, %v2845
  %v3164 = vadd.f32 %v2204, %v2850
  %v3165 = vadd.f32 %v2209, %v2855
  %v3166 = vadd.f32 %v2214, %v2860
  %v3167 = vadd.f32 %v2219, %v2865
  %v3168 = vadd.f32 %v2224, %v2870
  %v3169 = vadd.f32 %v2229, %v2875
  %v3170 = vadd.f32 %v2234, %v2880
  %v3171 = vadd.f32 %v2239, %v2885
  %v3172 = vadd.f32 %v2244, %v2890
  %v3173 = vadd.f32 %v2249, %v2895
  %v3174 = vadd.f32 %v2254, %v2900
  %v3175 = vadd.f32 %v2259, %v2905
  %v3176 = vadd.f32 %v2264, %v2910
  %v3177 = vadd.f32 %v2269, %v2915
  %v3178 = vadd.f32 %v2274, %v2920
  %v3179 = vadd.f32 %v2279, %v2925
  %v3180 = vadd.f32 %v2284, %v2930
  %v3181 = vadd.f32 %v2289, %v2935
  %v3182 = vadd.f32 %v2294, %v2940
  %v3183 = vadd.f32 %v2299, %v2945
  %v3184 = vadd.f32 %v2304, %v2950
  %v3185 = vadd.f32 %v2309, %v2955
  %v3186 = vadd.f32 %v2314, %v2960
  %v3187 = vadd.f32 %v2319, %v2965
  %v3188 = vadd.f32 %v2324, %v2970
  %v3189 = vadd.f32 %v2329, %v2975
  %v3190 = vadd.f32 %v2334, %v2980
  %v3191 = vadd.f32 %v2339, %v2985
  %v3192 = vadd.f32 %v2344, %v2990
  %v3193 = vadd.f32 %v2349, %v2995
  %v3194 = vadd.f32 %v2354, %v3000
  %v3195 = vadd.f32 %v2359, %v3005
  %v3196 = vadd.f32 %v2364, %v3010
  %v3197 = vadd.f32 %v2369, %v3015
  %v3198 = vadd.f32 %v2374, %v3020
  %v3199 = vadd.f32 %v2379, %v3025
  %v3200 = vadd.f32 %v2384, %v3030
  %v3201 = vadd.f32 %v2389, %v3035
  %v3202 = vadd.f32 %v2394, %v3040
  %v3203 = vadd.f32 %v2399, %v3045
  %v3204 = vadd.f32 %v2404, %v3050
  %v3205 = vadd.f32 %v2409, %v3055
  %v3206 = vadd.f32 %v2414, %v3060
  %v3207 = vadd.f32 %v2419, %v3065
  %v3208 = vadd.f32 %v2424, %v3070
  %v3209 = vadd.f32 %v2429, %v3075
  %v3210 = vadd.f32 %v2434, %v3080
  %v3211 = vadd.f32 %v2439, %v3085
  %v3212 = vadd.f32 %v2444, %v3090
  %v3213 = vadd.f32 %v2449, %v3095
  %v3214 = vadd.f32 %v2454, %v3100
  %v3215 = vadd.f32 %v2459, %v3105
  %v3216 = vadd.f32 %v2464, %v3110
  %v3217 = vadd.f32 %v2469, %v3115
  %v3218 = vadd.f32 %v2474, %v3120
  %v3219 = vadd.f32 %v2479, %v3125
  %v3220 = vadd.f32 %v2484, %v3130
  %v3221 = vadd.f32 %v2489, %v3135
  %v3222 = vadd.f32 %v2494, %v3140
  %v3223 = vadd.f32 %v2499, %v3145
  %v3224 = vadd.f32 %v2504, %v3150
  %v3225 = vadd.f32 %v2509, %v3155
  %v3226 = vadd.f32 %v2514, %v3160
  %v3227 = vld [vmem:[%s1160 + $0x7] sm:$0xff]
  %v3228 = vld [vmem:[%s1160 + $0xf] sm:$0xff]
  %v3229 = vld [vmem:[%s1160 + $0x27] sm:$0xff]
  %v3230 = vld [vmem:[%s1160 + $0x2f] sm:$0xff]
  %v3231 = vld [vmem:[%s1160 + $0x47] sm:$0xff]
  %v3232 = vld [vmem:[%s1160 + $0x4f] sm:$0xff]
  %v3233 = vld [vmem:[%s1160 + $0x67] sm:$0xff]
  %v3234 = vld [vmem:[%s1160 + $0x6f] sm:$0xff]
  %v3235 = vld [vmem:[%s1160 + $0x87] sm:$0xff]
  %v3236 = vld [vmem:[%s1160 + $0x8f] sm:$0xff]
  %v3237 = vld [vmem:[%s1160 + $0xa7] sm:$0xff]
  %v3238 = vld [vmem:[%s1160 + $0xaf] sm:$0xff]
  %v3239 = vld [vmem:[%s1160 + $0xc7] sm:$0xff]
  %v3240 = vld [vmem:[%s1160 + $0xcf] sm:$0xff]
  %v3241 = vld [vmem:[%s1160 + $0xe7] sm:$0xff]
  %v3242 = vld [vmem:[%s1160 + $0xef] sm:$0xff]
  %v3243 = vld [vmem:[%s1160 + $0x107] sm:$0xff]
  %v3244 = vld [vmem:[%s1160 + $0x10f] sm:$0xff]
  %v3245 = vld [vmem:[%s1160 + $0x127] sm:$0xff]
  %v3246 = vld [vmem:[%s1160 + $0x12f] sm:$0xff]
  %v3247 = vld [vmem:[%s1160 + $0x147] sm:$0xff]
  %v3248 = vld [vmem:[%s1160 + $0x14f] sm:$0xff]
  %v3249 = vld [vmem:[%s1160 + $0x167] sm:$0xff]
  %v3250 = vld [vmem:[%s1160 + $0x16f] sm:$0xff]
  %v3251 = vld [vmem:[%s1160 + $0x187] sm:$0xff]
  %v3252 = vld [vmem:[%s1160 + $0x18f] sm:$0xff]
  %v3253 = vld [vmem:[%s1160 + $0x1a7] sm:$0xff]
  %v3254 = vld [vmem:[%s1160 + $0x1af] sm:$0xff]
  %v3255 = vld [vmem:[%s1160 + $0x1c7] sm:$0xff]
  %v3256 = vld [vmem:[%s1160 + $0x1cf] sm:$0xff]
  %v3257 = vld [vmem:[%s1160 + $0x1e7] sm:$0xff]
  %v3258 = vld [vmem:[%s1160 + $0x1ef] sm:$0xff]
  %v3259 = vld [vmem:[%s1160 + $0x247] sm:$0xff]
  %v3260 = vld [vmem:[%s1160 + $0x24f] sm:$0xff]
  %v3261 = vld [vmem:[%s1160 + $0x267] sm:$0xff]
  %v3262 = vld [vmem:[%s1160 + $0x26f] sm:$0xff]
  %v3263 = vld [vmem:[%s1160 + $0x287] sm:$0xff]
  %v3264 = vld [vmem:[%s1160 + $0x28f] sm:$0xff]
  %v3265 = vld [vmem:[%s1160 + $0x2a7] sm:$0xff]
  %v3266 = vld [vmem:[%s1160 + $0x2af] sm:$0xff]
  %v3267 = vld [vmem:[%s1160 + $0x2c7] sm:$0xff]
  %v3268 = vld [vmem:[%s1160 + $0x2cf] sm:$0xff]
  %v3269 = vld [vmem:[%s1160 + $0x2e7] sm:$0xff]
  %v3270 = vld [vmem:[%s1160 + $0x2ef] sm:$0xff]
  %v3271 = vld [vmem:[%s1160 + $0x307] sm:$0xff]
  %v3272 = vld [vmem:[%s1160 + $0x30f] sm:$0xff]
  %v3273 = vld [vmem:[%s1160 + $0x327] sm:$0xff]
  %v3274 = vld [vmem:[%s1160 + $0x32f] sm:$0xff]
  %v3275 = vld [vmem:[%s1160 + $0x347] sm:$0xff]
  %v3276 = vld [vmem:[%s1160 + $0x34f] sm:$0xff]
  %v3277 = vld [vmem:[%s1160 + $0x367] sm:$0xff]
  %v3278 = vld [vmem:[%s1160 + $0x36f] sm:$0xff]
  %v3279 = vld [vmem:[%s1160 + $0x387] sm:$0xff]
  %v3280 = vld [vmem:[%s1160 + $0x38f] sm:$0xff]
  %v3281 = vld [vmem:[%s1160 + $0x3a7] sm:$0xff]
  %v3282 = vld [vmem:[%s1160 + $0x3af] sm:$0xff]
  %v3283 = vld [vmem:[%s1160 + $0x3c7] sm:$0xff]
  %v3284 = vld [vmem:[%s1160 + $0x3cf] sm:$0xff]
  %v3285 = vld [vmem:[%s1160 + $0x3e7] sm:$0xff]
  %v3286 = vld [vmem:[%s1160 + $0x3ef] sm:$0xff]
  %v3287 = vld [vmem:[%s1160 + $0x407] sm:$0xff]
  %v3288 = vld [vmem:[%s1160 + $0x40f] sm:$0xff]
  %v3289 = vld [vmem:[%s1160 + $0x427] sm:$0xff]
  %v3290 = vld [vmem:[%s1160 + $0x42f] sm:$0xff]
  %s3291 = scalar_lea.vmem %s5, 6
  %v3292 = vld [vmem:[%s3291] sm:$0x3]
  %v3294 = vsel %vm1069, %v3227, 0
  %v3297 = vsel %vm1069, %v3228, 0
  %v3300 = vsel %vm1069, %v3229, 0
  %v3303 = vsel %vm1069, %v3230, 0
  %v3306 = vsel %vm1069, %v3231, 0
  %v3309 = vsel %vm1069, %v3232, 0
  %v3312 = vsel %vm1069, %v3233, 0
  %v3315 = vsel %vm1069, %v3234, 0
  %v3318 = vsel %vm1069, %v3235, 0
  %v3321 = vsel %vm1069, %v3236, 0
  %v3324 = vsel %vm1069, %v3237, 0
  %v3327 = vsel %vm1069, %v3238, 0
  %v3330 = vsel %vm1069, %v3239, 0
  %v3333 = vsel %vm1069, %v3240, 0
  %v3336 = vsel %vm1069, %v3241, 0
  %v3339 = vsel %vm1069, %v3242, 0
  %v3342 = vsel %vm1069, %v3243, 0
  %v3345 = vsel %vm1069, %v3244, 0
  %v3348 = vsel %vm1069, %v3245, 0
  %v3351 = vsel %vm1069, %v3246, 0
  %v3354 = vsel %vm1069, %v3247, 0
  %v3357 = vsel %vm1069, %v3248, 0
  %v3360 = vsel %vm1069, %v3249, 0
  %v3363 = vsel %vm1069, %v3250, 0
  %v3366 = vsel %vm1069, %v3251, 0
  %v3369 = vsel %vm1069, %v3252, 0
  %v3372 = vsel %vm1069, %v3253, 0
  %v3375 = vsel %vm1069, %v3254, 0
  %v3378 = vsel %vm1069, %v3255, 0
  %v3381 = vsel %vm1069, %v3256, 0
  %v3384 = vsel %vm1069, %v3257, 0
  %v3387 = vsel %vm1069, %v3258, 0
  %v3390 = vsel %vm1069, %v3259, 0
  %v3393 = vsel %vm1069, %v3260, 0
  %v3396 = vsel %vm1069, %v3261, 0
  %v3399 = vsel %vm1069, %v3262, 0
  %v3402 = vsel %vm1069, %v3263, 0
  %v3405 = vsel %vm1069, %v3264, 0
  %v3408 = vsel %vm1069, %v3265, 0
  %v3411 = vsel %vm1069, %v3266, 0
  %v3414 = vsel %vm1069, %v3267, 0
  %v3417 = vsel %vm1069, %v3268, 0
  %v3420 = vsel %vm1069, %v3269, 0
  %v3423 = vsel %vm1069, %v3270, 0
  %v3426 = vsel %vm1069, %v3271, 0
  %v3429 = vsel %vm1069, %v3272, 0
  %v3432 = vsel %vm1069, %v3273, 0
  %v3435 = vsel %vm1069, %v3274, 0
  %v3438 = vsel %vm1069, %v3275, 0
  %v3441 = vsel %vm1069, %v3276, 0
  %v3444 = vsel %vm1069, %v3277, 0
  %v3447 = vsel %vm1069, %v3278, 0
  %v3450 = vsel %vm1069, %v3279, 0
  %v3453 = vsel %vm1069, %v3280, 0
  %v3456 = vsel %vm1069, %v3281, 0
  %v3459 = vsel %vm1069, %v3282, 0
  %v3462 = vsel %vm1069, %v3283, 0
  %v3465 = vsel %vm1069, %v3284, 0
  %v3468 = vsel %vm1069, %v3285, 0
  %v3471 = vsel %vm1069, %v3286, 0
  %v3474 = vsel %vm1069, %v3287, 0
  %v3477 = vsel %vm1069, %v3288, 0
  %v3480 = vsel %vm1069, %v3289, 0
  %v3483 = vsel %vm1069, %v3290, 0
  %v3486 = vsel %vm1548, %v3292, 0
  %3488 = vmatprep.subr.mxu0 0.0
  %3489 = vmatpush1.msra.mxu0 %v3486
  %3490 = vmatprep.subr.mxu0 0.0
  %3491 = vmatpush1.msra.mxu0 0.0
  %3492 = vmatprep.subr.mxu0 0.0
  %3493 = vmatpush1.msra.mxu0 0.0
  %3494 = vmatprep.subr.mxu0 0.0
  %3495 = vmatpush1.msra.mxu0 0.0
  %3496 = vmatprep.subr.mxu0 0.0
  %3497 = vmatpush1.msra.mxu0 0.0
  %3498 = vmatprep.subr.mxu0 0.0
  %3499 = vmatpush1.msra.mxu0 0.0
  %3500 = vmatprep.subr.mxu0 0.0
  %3501 = vmatpush1.msra.mxu0 0.0
  %3502 = vmatprep.subr.mxu0 0.0
  %3503 = vmatpush1.msra.mxu0 0.0
  %3504 = vmatprep.subr.mxu0 0.0
  %3505 = vmatpush1.msra.mxu0 0.0
  %3506 = vmatprep.subr.mxu0 0.0
  %3507 = vmatpush1.msra.mxu0 0.0
  %3508 = vmatprep.subr.mxu0 0.0
  %3509 = vmatpush1.msra.mxu0 0.0
  %3510 = vmatprep.subr.mxu0 0.0
  %3511 = vmatpush1.msra.mxu0 0.0
  %3512 = vmatprep.subr.mxu0 0.0
  %3513 = vmatpush1.msra.mxu0 0.0
  %3514 = vmatprep.subr.mxu0 0.0
  %3515 = vmatpush1.msra.mxu0 0.0
  %3516 = vmatprep.subr.mxu0 0.0
  %3517 = vmatpush1.msra.mxu0 0.0
  %3518 = vmatprep.subr.mxu0 0.0
  %3519 = vmatpush1.msra.mxu0 0.0
  %3520 = vmatprep.subr.mxu0 0.0
  %3521 = vmatpush1.msra.mxu0 0.0
  %3522 = vmatprep.subr.mxu0 0.0
  %3523 = vmatpush1.msra.mxu0 0.0
  %3524 = vmatprep.subr.mxu0 0.0
  %3525 = vmatpush1.msra.mxu0 0.0
  %3526 = vmatprep.subr.mxu0 0.0
  %3527 = vmatpush1.msra.mxu0 0.0
  %3528 = vmatprep.subr.mxu0 0.0
  %3529 = vmatpush1.msra.mxu0 0.0
  %3530 = vmatprep.subr.mxu0 0.0
  %3531 = vmatpush1.msra.mxu0 0.0
  %3532 = vmatprep.subr.mxu0 0.0
  %3533 = vmatpush1.msra.mxu0 0.0
  %3534 = vmatprep.subr.mxu0 0.0
  %3535 = vmatpush1.msra.mxu0 0.0
  %3536 = vmatprep.subr.mxu0 0.0
  %3537 = vmatpush1.msra.mxu0 0.0
  %3538 = vmatprep.subr.mxu0 0.0
  %3539 = vmatpush1.msra.mxu0 0.0
  %3540 = vmatprep.subr.mxu0 0.0
  %3541 = vmatpush1.msra.mxu0 0.0
  %3542 = vmatprep.subr.mxu0 0.0
  %3543 = vmatpush1.msra.mxu0 0.0
  %3544 = vmatprep.subr.mxu0 0.0
  %3545 = vmatpush1.msra.mxu0 0.0
  %3546 = vmatprep.subr.mxu0 0.0
  %3547 = vmatpush1.msra.mxu0 0.0
  %3548 = vmatprep.subr.mxu0 0.0
  %3549 = vmatpush1.msra.mxu0 0.0
  %3550 = vmatprep.subr.mxu0 0.0
  %3551 = vmatpush1.msra.mxu0 0.0
  %3552 = vmatprep.mubr.f32.mxu0 0.0
  %3553 = vmatmul.mubr.f32.gmra.mrb[0].mxu0 %v3294
  %v3554 = vpop.f32.mrb[0].mxu0
  %v3555 = vadd.f32 0.0, %v3554
  %v3556 = vpop.f32.mrb[0].mxu0
  %3557 = vmatprep.mubr.f32.mxu0 0.0
  %3558 = vmatmul.mubr.f32.gmra.mrb[0].mxu0 %v3297
  %v3559 = vpop.f32.mrb[0].mxu0
  %v3560 = vadd.f32 0.0, %v3559
  %v3561 = vpop.f32.mrb[0].mxu0
  %3562 = vmatprep.mubr.f32.mxu0 0.0
  %3563 = vmatmul.mubr.f32.gmra.mrb[0].mxu0 %v3300
  %v3564 = vpop.f32.mrb[0].mxu0
  %v3565 = vadd.f32 0.0, %v3564
  %v3566 = vpop.f32.mrb[0].mxu0
  %3567 = vmatprep.mubr.f32.mxu0 0.0
  %3568 = vmatmul.mubr.f32.gmra.mrb[0].mxu0 %v3303
  %v3569 = vpop.f32.mrb[0].mxu0
  %v3570 = vadd.f32 0.0, %v3569
  %v3571 = vpop.f32.mrb[0].mxu0
  %3572 = vmatprep.mubr.f32.mxu0 0.0
  %3573 = vmatmul.mubr.f32.gmra.mrb[0].mxu0 %v3306
  %v3574 = vpop.f32.mrb[0].mxu0
  %v3575 = vadd.f32 0.0, %v3574
  %v3576 = vpop.f32.mrb[0].mxu0
  %3577 = vmatprep.mubr.f32.mxu0 0.0
  %3578 = vmatmul.mubr.f32.gmra.mrb[0].mxu0 %v3309
  %v3579 = vpop.f32.mrb[0].mxu0
  %v3580 = vadd.f32 0.0, %v3579
  %v3581 = vpop.f32.mrb[0].mxu0
  %3582 = vmatprep.mubr.f32.mxu0 0.0
  %3583 = vmatmul.mubr.f32.gmra.mrb[0].mxu0 %v3312
  %v3584 = vpop.f32.mrb[0].mxu0
  %v3585 = vadd.f32 0.0, %v3584
  %v3586 = vpop.f32.mrb[0].mxu0
  %3587 = vmatprep.mubr.f32.mxu0 0.0
  %3588 = vmatmul.mubr.f32.gmra.mrb[0].mxu0 %v3315
  %v3589 = vpop.f32.mrb[0].mxu0
  %v3590 = vadd.f32 0.0, %v3589
  %v3591 = vpop.f32.mrb[0].mxu0
  %3592 = vmatprep.mubr.f32.mxu0 0.0
  %3593 = vmatmul.mubr.f32.gmra.mrb[0].mxu0 %v3318
  %v3594 = vpop.f32.mrb[0].mxu0
  %v3595 = vadd.f32 0.0, %v3594
  %v3596 = vpop.f32.mrb[0].mxu0
  %3597 = vmatprep.mubr.f32.mxu0 0.0
  %3598 = vmatmul.mubr.f32.gmra.mrb[0].mxu0 %v3321
  %v3599 = vpop.f32.mrb[0].mxu0
  %v3600 = vadd.f32 0.0, %v3599
  %v3601 = vpop.f32.mrb[0].mxu0
  %3602 = vmatprep.mubr.f32.mxu0 0.0
  %3603 = vmatmul.mubr.f32.gmra.mrb[0].mxu0 %v3324
  %v3604 = vpop.f32.mrb[0].mxu0
  %v3605 = vadd.f32 0.0, %v3604
  %v3606 = vpop.f32.mrb[0].mxu0
  %3607 = vmatprep.mubr.f32.mxu0 0.0
  %3608 = vmatmul.mubr.f32.gmra.mrb[0].mxu0 %v3327
  %v3609 = vpop.f32.mrb[0].mxu0
  %v3610 = vadd.f32 0.0, %v3609
  %v3611 = vpop.f32.mrb[0].mxu0
  %3612 = vmatprep.mubr.f32.mxu0 0.0
  %3613 = vmatmul.mubr.f32.gmra.mrb[0].mxu0 %v3330
  %v3614 = vpop.f32.mrb[0].mxu0
  %v3615 = vadd.f32 0.0, %v3614
  %v3616 = vpop.f32.mrb[0].mxu0
  %3617 = vmatprep.mubr.f32.mxu0 0.0
  %3618 = vmatmul.mubr.f32.gmra.mrb[0].mxu0 %v3333
  %v3619 = vpop.f32.mrb[0].mxu0
  %v3620 = vadd.f32 0.0, %v3619
  %v3621 = vpop.f32.mrb[0].mxu0
  %3622 = vmatprep.mubr.f32.mxu0 0.0
  %3623 = vmatmul.mubr.f32.gmra.mrb[0].mxu0 %v3336
  %v3624 = vpop.f32.mrb[0].mxu0
  %v3625 = vadd.f32 0.0, %v3624
  %v3626 = vpop.f32.mrb[0].mxu0
  %3627 = vmatprep.mubr.f32.mxu0 0.0
  %3628 = vmatmul.mubr.f32.gmra.mrb[0].mxu0 %v3339
  %v3629 = vpop.f32.mrb[0].mxu0
  %v3630 = vadd.f32 0.0, %v3629
  %v3631 = vpop.f32.mrb[0].mxu0
  %3632 = vmatprep.mubr.f32.mxu0 0.0
  %3633 = vmatmul.mubr.f32.gmra.mrb[0].mxu0 %v3342
  %v3634 = vpop.f32.mrb[0].mxu0
  %v3635 = vadd.f32 0.0, %v3634
  %v3636 = vpop.f32.mrb[0].mxu0
  %3637 = vmatprep.mubr.f32.mxu0 0.0
  %3638 = vmatmul.mubr.f32.gmra.mrb[0].mxu0 %v3345
  %v3639 = vpop.f32.mrb[0].mxu0
  %v3640 = vadd.f32 0.0, %v3639
  %v3641 = vpop.f32.mrb[0].mxu0
  %3642 = vmatprep.mubr.f32.mxu0 0.0
  %3643 = vmatmul.mubr.f32.gmra.mrb[0].mxu0 %v3348
  %v3644 = vpop.f32.mrb[0].mxu0
  %v3645 = vadd.f32 0.0, %v3644
  %v3646 = vpop.f32.mrb[0].mxu0
  %3647 = vmatprep.mubr.f32.mxu0 0.0
  %3648 = vmatmul.mubr.f32.gmra.mrb[0].mxu0 %v3351
  %v3649 = vpop.f32.mrb[0].mxu0
  %v3650 = vadd.f32 0.0, %v3649
  %v3651 = vpop.f32.mrb[0].mxu0
  %3652 = vmatprep.mubr.f32.mxu0 0.0
  %3653 = vmatmul.mubr.f32.gmra.mrb[0].mxu0 %v3354
  %v3654 = vpop.f32.mrb[0].mxu0
  %v3655 = vadd.f32 0.0, %v3654
  %v3656 = vpop.f32.mrb[0].mxu0
  %3657 = vmatprep.mubr.f32.mxu0 0.0
  %3658 = vmatmul.mubr.f32.gmra.mrb[0].mxu0 %v3357
  %v3659 = vpop.f32.mrb[0].mxu0
  %v3660 = vadd.f32 0.0, %v3659
  %v3661 = vpop.f32.mrb[0].mxu0
  %3662 = vmatprep.mubr.f32.mxu0 0.0
  %3663 = vmatmul.mubr.f32.gmra.mrb[0].mxu0 %v3360
  %v3664 = vpop.f32.mrb[0].mxu0
  %v3665 = vadd.f32 0.0, %v3664
  %v3666 = vpop.f32.mrb[0].mxu0
  %3667 = vmatprep.mubr.f32.mxu0 0.0
  %3668 = vmatmul.mubr.f32.gmra.mrb[0].mxu0 %v3363
  %v3669 = vpop.f32.mrb[0].mxu0
  %v3670 = vadd.f32 0.0, %v3669
  %v3671 = vpop.f32.mrb[0].mxu0
  %3672 = vmatprep.mubr.f32.mxu0 0.0
  %3673 = vmatmul.mubr.f32.gmra.mrb[0].mxu0 %v3366
  %v3674 = vpop.f32.mrb[0].mxu0
  %v3675 = vadd.f32 0.0, %v3674
  %v3676 = vpop.f32.mrb[0].mxu0
  %3677 = vmatprep.mubr.f32.mxu0 0.0
  %3678 = vmatmul.mubr.f32.gmra.mrb[0].mxu0 %v3369
  %v3679 = vpop.f32.mrb[0].mxu0
  %v3680 = vadd.f32 0.0, %v3679
  %v3681 = vpop.f32.mrb[0].mxu0
  %3682 = vmatprep.mubr.f32.mxu0 0.0
  %3683 = vmatmul.mubr.f32.gmra.mrb[0].mxu0 %v3372
  %v3684 = vpop.f32.mrb[0].mxu0
  %v3685 = vadd.f32 0.0, %v3684
  %v3686 = vpop.f32.mrb[0].mxu0
  %3687 = vmatprep.mubr.f32.mxu0 0.0
  %3688 = vmatmul.mubr.f32.gmra.mrb[0].mxu0 %v3375
  %v3689 = vpop.f32.mrb[0].mxu0
  %v3690 = vadd.f32 0.0, %v3689
  %v3691 = vpop.f32.mrb[0].mxu0
  %3692 = vmatprep.mubr.f32.mxu0 0.0
  %3693 = vmatmul.mubr.f32.gmra.mrb[0].mxu0 %v3378
  %v3694 = vpop.f32.mrb[0].mxu0
  %v3695 = vadd.f32 0.0, %v3694
  %v3696 = vpop.f32.mrb[0].mxu0
  %3697 = vmatprep.mubr.f32.mxu0 0.0
  %3698 = vmatmul.mubr.f32.gmra.mrb[0].mxu0 %v3381
  %v3699 = vpop.f32.mrb[0].mxu0
  %v3700 = vadd.f32 0.0, %v3699
  %v3701 = vpop.f32.mrb[0].mxu0
  %3702 = vmatprep.mubr.f32.mxu0 0.0
  %3703 = vmatmul.mubr.f32.gmra.mrb[0].mxu0 %v3384
  %v3704 = vpop.f32.mrb[0].mxu0
  %v3705 = vadd.f32 0.0, %v3704
  %v3706 = vpop.f32.mrb[0].mxu0
  %3707 = vmatprep.mubr.f32.mxu0 0.0
  %3708 = vmatmul.mubr.f32.gmra.mrb[0].mxu0 %v3387
  %v3709 = vpop.f32.mrb[0].mxu0
  %v3710 = vadd.f32 0.0, %v3709
  %v3711 = vpop.f32.mrb[0].mxu0
  %3712 = vmatprep.mubr.f32.mxu0 0.0
  %3713 = vmatmul.mubr.f32.gmra.mrb[0].mxu0 %v3390
  %v3714 = vpop.f32.mrb[0].mxu0
  %v3715 = vadd.f32 0.0, %v3714
  %v3716 = vpop.f32.mrb[0].mxu0
  %3717 = vmatprep.mubr.f32.mxu0 0.0
  %3718 = vmatmul.mubr.f32.gmra.mrb[0].mxu0 %v3393
  %v3719 = vpop.f32.mrb[0].mxu0
  %v3720 = vadd.f32 0.0, %v3719
  %v3721 = vpop.f32.mrb[0].mxu0
  %3722 = vmatprep.mubr.f32.mxu0 0.0
  %3723 = vmatmul.mubr.f32.gmra.mrb[0].mxu0 %v3396
  %v3724 = vpop.f32.mrb[0].mxu0
  %v3725 = vadd.f32 0.0, %v3724
  %v3726 = vpop.f32.mrb[0].mxu0
  %3727 = vmatprep.mubr.f32.mxu0 0.0
  %3728 = vmatmul.mubr.f32.gmra.mrb[0].mxu0 %v3399
  %v3729 = vpop.f32.mrb[0].mxu0
  %v3730 = vadd.f32 0.0, %v3729
  %v3731 = vpop.f32.mrb[0].mxu0
  %3732 = vmatprep.mubr.f32.mxu0 0.0
  %3733 = vmatmul.mubr.f32.gmra.mrb[0].mxu0 %v3402
  %v3734 = vpop.f32.mrb[0].mxu0
  %v3735 = vadd.f32 0.0, %v3734
  %v3736 = vpop.f32.mrb[0].mxu0
  %3737 = vmatprep.mubr.f32.mxu0 0.0
  %3738 = vmatmul.mubr.f32.gmra.mrb[0].mxu0 %v3405
  %v3739 = vpop.f32.mrb[0].mxu0
  %v3740 = vadd.f32 0.0, %v3739
  %v3741 = vpop.f32.mrb[0].mxu0
  %3742 = vmatprep.mubr.f32.mxu0 0.0
  %3743 = vmatmul.mubr.f32.gmra.mrb[0].mxu0 %v3408
  %v3744 = vpop.f32.mrb[0].mxu0
  %v3745 = vadd.f32 0.0, %v3744
  %v3746 = vpop.f32.mrb[0].mxu0
  %3747 = vmatprep.mubr.f32.mxu0 0.0
  %3748 = vmatmul.mubr.f32.gmra.mrb[0].mxu0 %v3411
  %v3749 = vpop.f32.mrb[0].mxu0
  %v3750 = vadd.f32 0.0, %v3749
  %v3751 = vpop.f32.mrb[0].mxu0
  %3752 = vmatprep.mubr.f32.mxu0 0.0
  %3753 = vmatmul.mubr.f32.gmra.mrb[0].mxu0 %v3414
  %v3754 = vpop.f32.mrb[0].mxu0
  %v3755 = vadd.f32 0.0, %v3754
  %v3756 = vpop.f32.mrb[0].mxu0
  %3757 = vmatprep.mubr.f32.mxu0 0.0
  %3758 = vmatmul.mubr.f32.gmra.mrb[0].mxu0 %v3417
  %v3759 = vpop.f32.mrb[0].mxu0
  %v3760 = vadd.f32 0.0, %v3759
  %v3761 = vpop.f32.mrb[0].mxu0
  %3762 = vmatprep.mubr.f32.mxu0 0.0
  %3763 = vmatmul.mubr.f32.gmra.mrb[0].mxu0 %v3420
  %v3764 = vpop.f32.mrb[0].mxu0
  %v3765 = vadd.f32 0.0, %v3764
  %v3766 = vpop.f32.mrb[0].mxu0
  %3767 = vmatprep.mubr.f32.mxu0 0.0
  %3768 = vmatmul.mubr.f32.gmra.mrb[0].mxu0 %v3423
  %v3769 = vpop.f32.mrb[0].mxu0
  %v3770 = vadd.f32 0.0, %v3769
  %v3771 = vpop.f32.mrb[0].mxu0
  %3772 = vmatprep.mubr.f32.mxu0 0.0
  %3773 = vmatmul.mubr.f32.gmra.mrb[0].mxu0 %v3426
  %v3774 = vpop.f32.mrb[0].mxu0
  %v3775 = vadd.f32 0.0, %v3774
  %v3776 = vpop.f32.mrb[0].mxu0
  %3777 = vmatprep.mubr.f32.mxu0 0.0
  %3778 = vmatmul.mubr.f32.gmra.mrb[0].mxu0 %v3429
  %v3779 = vpop.f32.mrb[0].mxu0
  %v3780 = vadd.f32 0.0, %v3779
  %v3781 = vpop.f32.mrb[0].mxu0
  %3782 = vmatprep.mubr.f32.mxu0 0.0
  %3783 = vmatmul.mubr.f32.gmra.mrb[0].mxu0 %v3432
  %v3784 = vpop.f32.mrb[0].mxu0
  %v3785 = vadd.f32 0.0, %v3784
  %v3786 = vpop.f32.mrb[0].mxu0
  %3787 = vmatprep.mubr.f32.mxu0 0.0
  %3788 = vmatmul.mubr.f32.gmra.mrb[0].mxu0 %v3435
  %v3789 = vpop.f32.mrb[0].mxu0
  %v3790 = vadd.f32 0.0, %v3789
  %v3791 = vpop.f32.mrb[0].mxu0
  %3792 = vmatprep.mubr.f32.mxu0 0.0
  %3793 = vmatmul.mubr.f32.gmra.mrb[0].mxu0 %v3438
  %v3794 = vpop.f32.mrb[0].mxu0
  %v3795 = vadd.f32 0.0, %v3794
  %v3796 = vpop.f32.mrb[0].mxu0
  %3797 = vmatprep.mubr.f32.mxu0 0.0
  %3798 = vmatmul.mubr.f32.gmra.mrb[0].mxu0 %v3441
  %v3799 = vpop.f32.mrb[0].mxu0
  %v3800 = vadd.f32 0.0, %v3799
  %v3801 = vpop.f32.mrb[0].mxu0
  %3802 = vmatprep.mubr.f32.mxu0 0.0
  %3803 = vmatmul.mubr.f32.gmra.mrb[0].mxu0 %v3444
  %v3804 = vpop.f32.mrb[0].mxu0
  %v3805 = vadd.f32 0.0, %v3804
  %v3806 = vpop.f32.mrb[0].mxu0
  %3807 = vmatprep.mubr.f32.mxu0 0.0
  %3808 = vmatmul.mubr.f32.gmra.mrb[0].mxu0 %v3447
  %v3809 = vpop.f32.mrb[0].mxu0
  %v3810 = vadd.f32 0.0, %v3809
  %v3811 = vpop.f32.mrb[0].mxu0
  %3812 = vmatprep.mubr.f32.mxu0 0.0
  %3813 = vmatmul.mubr.f32.gmra.mrb[0].mxu0 %v3450
  %v3814 = vpop.f32.mrb[0].mxu0
  %v3815 = vadd.f32 0.0, %v3814
  %v3816 = vpop.f32.mrb[0].mxu0
  %3817 = vmatprep.mubr.f32.mxu0 0.0
  %3818 = vmatmul.mubr.f32.gmra.mrb[0].mxu0 %v3453
  %v3819 = vpop.f32.mrb[0].mxu0
  %v3820 = vadd.f32 0.0, %v3819
  %v3821 = vpop.f32.mrb[0].mxu0
  %3822 = vmatprep.mubr.f32.mxu0 0.0
  %3823 = vmatmul.mubr.f32.gmra.mrb[0].mxu0 %v3456
  %v3824 = vpop.f32.mrb[0].mxu0
  %v3825 = vadd.f32 0.0, %v3824
  %v3826 = vpop.f32.mrb[0].mxu0
  %3827 = vmatprep.mubr.f32.mxu0 0.0
  %3828 = vmatmul.mubr.f32.gmra.mrb[0].mxu0 %v3459
  %v3829 = vpop.f32.mrb[0].mxu0
  %v3830 = vadd.f32 0.0, %v3829
  %v3831 = vpop.f32.mrb[0].mxu0
  %3832 = vmatprep.mubr.f32.mxu0 0.0
  %3833 = vmatmul.mubr.f32.gmra.mrb[0].mxu0 %v3462
  %v3834 = vpop.f32.mrb[0].mxu0
  %v3835 = vadd.f32 0.0, %v3834
  %v3836 = vpop.f32.mrb[0].mxu0
  %3837 = vmatprep.mubr.f32.mxu0 0.0
  %3838 = vmatmul.mubr.f32.gmra.mrb[0].mxu0 %v3465
  %v3839 = vpop.f32.mrb[0].mxu0
  %v3840 = vadd.f32 0.0, %v3839
  %v3841 = vpop.f32.mrb[0].mxu0
  %3842 = vmatprep.mubr.f32.mxu0 0.0
  %3843 = vmatmul.mubr.f32.gmra.mrb[0].mxu0 %v3468
  %v3844 = vpop.f32.mrb[0].mxu0
  %v3845 = vadd.f32 0.0, %v3844
  %v3846 = vpop.f32.mrb[0].mxu0
  %3847 = vmatprep.mubr.f32.mxu0 0.0
  %3848 = vmatmul.mubr.f32.gmra.mrb[0].mxu0 %v3471
  %v3849 = vpop.f32.mrb[0].mxu0
  %v3850 = vadd.f32 0.0, %v3849
  %v3851 = vpop.f32.mrb[0].mxu0
  %3852 = vmatprep.mubr.f32.mxu0 0.0
  %3853 = vmatmul.mubr.f32.gmra.mrb[0].mxu0 %v3474
  %v3854 = vpop.f32.mrb[0].mxu0
  %v3855 = vadd.f32 0.0, %v3854
  %v3856 = vpop.f32.mrb[0].mxu0
  %3857 = vmatprep.mubr.f32.mxu0 0.0
  %3858 = vmatmul.mubr.f32.gmra.mrb[0].mxu0 %v3477
  %v3859 = vpop.f32.mrb[0].mxu0
  %v3860 = vadd.f32 0.0, %v3859
  %v3861 = vpop.f32.mrb[0].mxu0
  %3862 = vmatprep.mubr.f32.mxu0 0.0
  %3863 = vmatmul.mubr.f32.gmra.mrb[0].mxu0 %v3480
  %v3864 = vpop.f32.mrb[0].mxu0
  %v3865 = vadd.f32 0.0, %v3864
  %v3866 = vpop.f32.mrb[0].mxu0
  %3867 = vmatprep.mubr.f32.mxu0 0.0
  %3868 = vmatmul.mubr.f32.gmra.mrb[0].mxu0 %v3483
  %v3869 = vpop.f32.mrb[0].mxu0
  %v3870 = vadd.f32 0.0, %v3869
  %v3871 = vpop.f32.mrb[0].mxu0
  %3872 = vdwg.mxu0
  %v3873 = vadd.f32 %v3163, %v3555
  %v3874 = vadd.f32 %v3164, %v3560
  %v3875 = vadd.f32 %v3165, %v3565
  %v3876 = vadd.f32 %v3166, %v3570
  %v3877 = vadd.f32 %v3167, %v3575
  %v3878 = vadd.f32 %v3168, %v3580
  %v3879 = vadd.f32 %v3169, %v3585
  %v3880 = vadd.f32 %v3170, %v3590
  %v3881 = vadd.f32 %v3171, %v3595
  %v3882 = vadd.f32 %v3172, %v3600
  %v3883 = vadd.f32 %v3173, %v3605
  %v3884 = vadd.f32 %v3174, %v3610
  %v3885 = vadd.f32 %v3175, %v3615
  %v3886 = vadd.f32 %v3176, %v3620
  %v3887 = vadd.f32 %v3177, %v3625
  %v3888 = vadd.f32 %v3178, %v3630
  %v3889 = vadd.f32 %v3179, %v3635
  %v3890 = vadd.f32 %v3180, %v3640
  %v3891 = vadd.f32 %v3181, %v3645
  %v3892 = vadd.f32 %v3182, %v3650
  %v3893 = vadd.f32 %v3183, %v3655
  %v3894 = vadd.f32 %v3184, %v3660
  %v3895 = vadd.f32 %v3185, %v3665
  %v3896 = vadd.f32 %v3186, %v3670
  %v3897 = vadd.f32 %v3187, %v3675
  %v3898 = vadd.f32 %v3188, %v3680
  %v3899 = vadd.f32 %v3189, %v3685
  %v3900 = vadd.f32 %v3190, %v3690
  %v3901 = vadd.f32 %v3191, %v3695
  %v3902 = vadd.f32 %v3192, %v3700
  %v3903 = vadd.f32 %v3193, %v3705
  %v3904 = vadd.f32 %v3194, %v3710
  %v3905 = vadd.f32 %v3195, %v3715
  %v3906 = vadd.f32 %v3196, %v3720
  %v3907 = vadd.f32 %v3197, %v3725
  %v3908 = vadd.f32 %v3198, %v3730
  %v3909 = vadd.f32 %v3199, %v3735
  %v3910 = vadd.f32 %v3200, %v3740
  %v3911 = vadd.f32 %v3201, %v3745
  %v3912 = vadd.f32 %v3202, %v3750
  %v3913 = vadd.f32 %v3203, %v3755
  %v3914 = vadd.f32 %v3204, %v3760
  %v3915 = vadd.f32 %v3205, %v3765
  %v3916 = vadd.f32 %v3206, %v3770
  %v3917 = vadd.f32 %v3207, %v3775
  %v3918 = vadd.f32 %v3208, %v3780
  %v3919 = vadd.f32 %v3209, %v3785
  %v3920 = vadd.f32 %v3210, %v3790
  %v3921 = vadd.f32 %v3211, %v3795
  %v3922 = vadd.f32 %v3212, %v3800
  %v3923 = vadd.f32 %v3213, %v3805
  %v3924 = vadd.f32 %v3214, %v3810
  %v3925 = vadd.f32 %v3215, %v3815
  %v3926 = vadd.f32 %v3216, %v3820
  %v3927 = vadd.f32 %v3217, %v3825
  %v3928 = vadd.f32 %v3218, %v3830
  %v3929 = vadd.f32 %v3219, %v3835
  %v3930 = vadd.f32 %v3220, %v3840
  %v3931 = vadd.f32 %v3221, %v3845
  %v3932 = vadd.f32 %v3222, %v3850
  %v3933 = vadd.f32 %v3223, %v3855
  %v3934 = vadd.f32 %v3224, %v3860
  %v3935 = vadd.f32 %v3225, %v3865
  %v3936 = vadd.f32 %v3226, %v3870
  %v3937 = vld [vmem:[%s1160 + $0x8] sm:$0xff]
  %v3938 = vld [vmem:[%s1160 + $0x10] sm:$0xff]
  %v3939 = vld [vmem:[%s1160 + $0x28] sm:$0xff]
  %v3940 = vld [vmem:[%s1160 + $0x30] sm:$0xff]
  %v3941 = vld [vmem:[%s1160 + $0x48] sm:$0xff]
  %v3942 = vld [vmem:[%s1160 + $0x50] sm:$0xff]
  %v3943 = vld [vmem:[%s1160 + $0x68] sm:$0xff]
  %v3944 = vld [vmem:[%s1160 + $0x70] sm:$0xff]
  %v3945 = vld [vmem:[%s1160 + $0x88] sm:$0xff]
  %v3946 = vld [vmem:[%s1160 + $0x90] sm:$0xff]
  %v3947 = vld [vmem:[%s1160 + $0xa8] sm:$0xff]
  %v3948 = vld [vmem:[%s1160 + $0xb0] sm:$0xff]
  %v3949 = vld [vmem:[%s1160 + $0xc8] sm:$0xff]
  %v3950 = vld [vmem:[%s1160 + $0xd0] sm:$0xff]
  %v3951 = vld [vmem:[%s1160 + $0xe8] sm:$0xff]
  %v3952 = vld [vmem:[%s1160 + $0xf0] sm:$0xff]
  %v3953 = vld [vmem:[%s1160 + $0x108] sm:$0xff]
  %v3954 = vld [vmem:[%s1160 + $0x110] sm:$0xff]
  %v3955 = vld [vmem:[%s1160 + $0x128] sm:$0xff]
  %v3956 = vld [vmem:[%s1160 + $0x130] sm:$0xff]
  %v3957 = vld [vmem:[%s1160 + $0x148] sm:$0xff]
  %v3958 = vld [vmem:[%s1160 + $0x150] sm:$0xff]
  %v3959 = vld [vmem:[%s1160 + $0x168] sm:$0xff]
  %v3960 = vld [vmem:[%s1160 + $0x170] sm:$0xff]
  %v3961 = vld [vmem:[%s1160 + $0x188] sm:$0xff]
  %v3962 = vld [vmem:[%s1160 + $0x190] sm:$0xff]
  %v3963 = vld [vmem:[%s1160 + $0x1a8] sm:$0xff]
  %v3964 = vld [vmem:[%s1160 + $0x1b0] sm:$0xff]
  %v3965 = vld [vmem:[%s1160 + $0x1c8] sm:$0xff]
  %v3966 = vld [vmem:[%s1160 + $0x1d0] sm:$0xff]
  %v3967 = vld [vmem:[%s1160 + $0x1e8] sm:$0xff]
  %v3968 = vld [vmem:[%s1160 + $0x1f0] sm:$0xff]
  %v3969 = vld [vmem:[%s1160 + $0x248] sm:$0xff]
  %v3970 = vld [vmem:[%s1160 + $0x250] sm:$0xff]
  %v3971 = vld [vmem:[%s1160 + $0x268] sm:$0xff]
  %v3972 = vld [vmem:[%s1160 + $0x270] sm:$0xff]
  %v3973 = vld [vmem:[%s1160 + $0x288] sm:$0xff]
  %v3974 = vld [vmem:[%s1160 + $0x290] sm:$0xff]
  %v3975 = vld [vmem:[%s1160 + $0x2a8] sm:$0xff]
  %v3976 = vld [vmem:[%s1160 + $0x2b0] sm:$0xff]
  %v3977 = vld [vmem:[%s1160 + $0x2c8] sm:$0xff]
  %v3978 = vld [vmem:[%s1160 + $0x2d0] sm:$0xff]
  %v3979 = vld [vmem:[%s1160 + $0x2e8] sm:$0xff]
  %v3980 = vld [vmem:[%s1160 + $0x2f0] sm:$0xff]
  %v3981 = vld [vmem:[%s1160 + $0x308] sm:$0xff]
  %v3982 = vld [vmem:[%s1160 + $0x310] sm:$0xff]
  %v3983 = vld [vmem:[%s1160 + $0x328] sm:$0xff]
  %v3984 = vld [vmem:[%s1160 + $0x330] sm:$0xff]
  %v3985 = vld [vmem:[%s1160 + $0x348] sm:$0xff]
  %v3986 = vld [vmem:[%s1160 + $0x350] sm:$0xff]
  %v3987 = vld [vmem:[%s1160 + $0x368] sm:$0xff]
  %v3988 = vld [vmem:[%s1160 + $0x370] sm:$0xff]
  %v3989 = vld [vmem:[%s1160 + $0x388] sm:$0xff]
  %v3990 = vld [vmem:[%s1160 + $0x390] sm:$0xff]
  %v3991 = vld [vmem:[%s1160 + $0x3a8] sm:$0xff]
  %v3992 = vld [vmem:[%s1160 + $0x3b0] sm:$0xff]
  %v3993 = vld [vmem:[%s1160 + $0x3c8] sm:$0xff]
  %v3994 = vld [vmem:[%s1160 + $0x3d0] sm:$0xff]
  %v3995 = vld [vmem:[%s1160 + $0x3e8] sm:$0xff]
  %v3996 = vld [vmem:[%s1160 + $0x3f0] sm:$0xff]
  %v3997 = vld [vmem:[%s1160 + $0x408] sm:$0xff]
  %v3998 = vld [vmem:[%s1160 + $0x410] sm:$0xff]
  %v3999 = vld [vmem:[%s1160 + $0x428] sm:$0xff]
  %v4000 = vld [vmem:[%s1160 + $0x430] sm:$0xff]
  %s4001 = scalar_lea.vmem %s5, 8
  %v4002 = vld [vmem:[%s4001] sm:$0x3]
  %v4004 = vsel %vm1069, %v3937, 0
  %v4007 = vsel %vm1069, %v3938, 0
  %v4010 = vsel %vm1069, %v3939, 0
  %v4013 = vsel %vm1069, %v3940, 0
  %v4016 = vsel %vm1069, %v3941, 0
  %v4019 = vsel %vm1069, %v3942, 0
  %v4022 = vsel %vm1069, %v3943, 0
  %v4025 = vsel %vm1069, %v3944, 0
  %v4028 = vsel %vm1069, %v3945, 0
  %v4031 = vsel %vm1069, %v3946, 0
  %v4034 = vsel %vm1069, %v3947, 0
  %v4037 = vsel %vm1069, %v3948, 0
  %v4040 = vsel %vm1069, %v3949, 0
  %v4043 = vsel %vm1069, %v3950, 0
  %v4046 = vsel %vm1069, %v3951, 0
  %v4049 = vsel %vm1069, %v3952, 0
  %v4052 = vsel %vm1069, %v3953, 0
  %v4055 = vsel %vm1069, %v3954, 0
  %v4058 = vsel %vm1069, %v3955, 0
  %v4061 = vsel %vm1069, %v3956, 0
  %v4064 = vsel %vm1069, %v3957, 0
  %v4067 = vsel %vm1069, %v3958, 0
  %v4070 = vsel %vm1069, %v3959, 0
  %v4073 = vsel %vm1069, %v3960, 0
  %v4076 = vsel %vm1069, %v3961, 0
  %v4079 = vsel %vm1069, %v3962, 0
  %v4082 = vsel %vm1069, %v3963, 0
  %v4085 = vsel %vm1069, %v3964, 0
  %v4088 = vsel %vm1069, %v3965, 0
  %v4091 = vsel %vm1069, %v3966, 0
  %v4094 = vsel %vm1069, %v3967, 0
  %v4097 = vsel %vm1069, %v3968, 0
  %v4100 = vsel %vm1069, %v3969, 0
  %v4103 = vsel %vm1069, %v3970, 0
  %v4106 = vsel %vm1069, %v3971, 0
  %v4109 = vsel %vm1069, %v3972, 0
  %v4112 = vsel %vm1069, %v3973, 0
  %v4115 = vsel %vm1069, %v3974, 0
  %v4118 = vsel %vm1069, %v3975, 0
  %v4121 = vsel %vm1069, %v3976, 0
  %v4124 = vsel %vm1069, %v3977, 0
  %v4127 = vsel %vm1069, %v3978, 0
  %v4130 = vsel %vm1069, %v3979, 0
  %v4133 = vsel %vm1069, %v3980, 0
  %v4136 = vsel %vm1069, %v3981, 0
  %v4139 = vsel %vm1069, %v3982, 0
  %v4142 = vsel %vm1069, %v3983, 0
  %v4145 = vsel %vm1069, %v3984, 0
  %v4148 = vsel %vm1069, %v3985, 0
  %v4151 = vsel %vm1069, %v3986, 0
  %v4154 = vsel %vm1069, %v3987, 0
  %v4157 = vsel %vm1069, %v3988, 0
  %v4160 = vsel %vm1069, %v3989, 0
  %v4163 = vsel %vm1069, %v3990, 0
  %v4166 = vsel %vm1069, %v3991, 0
  %v4169 = vsel %vm1069, %v3992, 0
  %v4172 = vsel %vm1069, %v3993, 0
  %v4175 = vsel %vm1069, %v3994, 0
  %v4178 = vsel %vm1069, %v3995, 0
  %v4181 = vsel %vm1069, %v3996, 0
  %v4184 = vsel %vm1069, %v3997, 0
  %v4187 = vsel %vm1069, %v3998, 0
  %v4190 = vsel %vm1069, %v3999, 0
  %v4193 = vsel %vm1069, %v4000, 0
  %v4196 = vsel %vm1548, %v4002, 0
  %4198 = vmatprep.subr.mxu0 0.0
  %4199 = vmatpush1.msra.mxu0 %v4196
  %4200 = vmatprep.subr.mxu0 0.0
  %4201 = vmatpush1.msra.mxu0 0.0
  %4202 = vmatprep.subr.mxu0 0.0
  %4203 = vmatpush1.msra.mxu0 0.0
  %4204 = vmatprep.subr.mxu0 0.0
  %4205 = vmatpush1.msra.mxu0 0.0
  %4206 = vmatprep.subr.mxu0 0.0
  %4207 = vmatpush1.msra.mxu0 0.0
  %4208 = vmatprep.subr.mxu0 0.0
  %4209 = vmatpush1.msra.mxu0 0.0
  %4210 = vmatprep.subr.mxu0 0.0
  %4211 = vmatpush1.msra.mxu0 0.0
  %4212 = vmatprep.subr.mxu0 0.0
  %4213 = vmatpush1.msra.mxu0 0.0
  %4214 = vmatprep.subr.mxu0 0.0
  %4215 = vmatpush1.msra.mxu0 0.0
  %4216 = vmatprep.subr.mxu0 0.0
  %4217 = vmatpush1.msra.mxu0 0.0
  %4218 = vmatprep.subr.mxu0 0.0
  %4219 = vmatpush1.msra.mxu0 0.0
  %4220 = vmatprep.subr.mxu0 0.0
  %4221 = vmatpush1.msra.mxu0 0.0
  %4222 = vmatprep.subr.mxu0 0.0
  %4223 = vmatpush1.msra.mxu0 0.0
  %4224 = vmatprep.subr.mxu0 0.0
  %4225 = vmatpush1.msra.mxu0 0.0
  %4226 = vmatprep.subr.mxu0 0.0
  %4227 = vmatpush1.msra.mxu0 0.0
  %4228 = vmatprep.subr.mxu0 0.0
  %4229 = vmatpush1.msra.mxu0 0.0
  %4230 = vmatprep.subr.mxu0 0.0
  %4231 = vmatpush1.msra.mxu0 0.0
  %4232 = vmatprep.subr.mxu0 0.0
  %4233 = vmatpush1.msra.mxu0 0.0
  %4234 = vmatprep.subr.mxu0 0.0
  %4235 = vmatpush1.msra.mxu0 0.0
  %4236 = vmatprep.subr.mxu0 0.0
  %4237 = vmatpush1.msra.mxu0 0.0
  %4238 = vmatprep.subr.mxu0 0.0
  %4239 = vmatpush1.msra.mxu0 0.0
  %4240 = vmatprep.subr.mxu0 0.0
  %4241 = vmatpush1.msra.mxu0 0.0
  %4242 = vmatprep.subr.mxu0 0.0
  %4243 = vmatpush1.msra.mxu0 0.0
  %4244 = vmatprep.subr.mxu0 0.0
  %4245 = vmatpush1.msra.mxu0 0.0
  %4246 = vmatprep.subr.mxu0 0.0
  %4247 = vmatpush1.msra.mxu0 0.0
  %4248 = vmatprep.subr.mxu0 0.0
  %4249 = vmatpush1.msra.mxu0 0.0
  %4250 = vmatprep.subr.mxu0 0.0
  %4251 = vmatpush1.msra.mxu0 0.0
  %4252 = vmatprep.subr.mxu0 0.0
  %4253 = vmatpush1.msra.mxu0 0.0
  %4254 = vmatprep.subr.mxu0 0.0
  %4255 = vmatpush1.msra.mxu0 0.0
  %4256 = vmatprep.subr.mxu0 0.0
  %4257 = vmatpush1.msra.mxu0 0.0
  %4258 = vmatprep.subr.mxu0 0.0
  %4259 = vmatpush1.msra.mxu0 0.0
  %4260 = vmatprep.subr.mxu0 0.0
  %4261 = vmatpush1.msra.mxu0 0.0
  %4262 = vmatprep.mubr.f32.mxu0 0.0
  %4263 = vmatmul.mubr.f32.gmra.mrb[0].mxu0 %v4004
  %v4264 = vpop.f32.mrb[0].mxu0
  %v4265 = vadd.f32 0.0, %v4264
  %v4266 = vpop.f32.mrb[0].mxu0
  %4267 = vmatprep.mubr.f32.mxu0 0.0
  %4268 = vmatmul.mubr.f32.gmra.mrb[0].mxu0 %v4007
  %v4269 = vpop.f32.mrb[0].mxu0
  %v4270 = vadd.f32 0.0, %v4269
  %v4271 = vpop.f32.mrb[0].mxu0
  %4272 = vmatprep.mubr.f32.mxu0 0.0
  %4273 = vmatmul.mubr.f32.gmra.mrb[0].mxu0 %v4010
  %v4274 = vpop.f32.mrb[0].mxu0
  %v4275 = vadd.f32 0.0, %v4274
  %v4276 = vpop.f32.mrb[0].mxu0
  %4277 = vmatprep.mubr.f32.mxu0 0.0
  %4278 = vmatmul.mubr.f32.gmra.mrb[0].mxu0 %v4013
  %v4279 = vpop.f32.mrb[0].mxu0
  %v4280 = vadd.f32 0.0, %v4279
  %v4281 = vpop.f32.mrb[0].mxu0
  %4282 = vmatprep.mubr.f32.mxu0 0.0
  %4283 = vmatmul.mubr.f32.gmra.mrb[0].mxu0 %v4016
  %v4284 = vpop.f32.mrb[0].mxu0
  %v4285 = vadd.f32 0.0, %v4284
  %v4286 = vpop.f32.mrb[0].mxu0
  %4287 = vmatprep.mubr.f32.mxu0 0.0
  %4288 = vmatmul.mubr.f32.gmra.mrb[0].mxu0 %v4019
  %v4289 = vpop.f32.mrb[0].mxu0
  %v4290 = vadd.f32 0.0, %v4289
  %v4291 = vpop.f32.mrb[0].mxu0
  %4292 = vmatprep.mubr.f32.mxu0 0.0
  %4293 = vmatmul.mubr.f32.gmra.mrb[0].mxu0 %v4022
  %v4294 = vpop.f32.mrb[0].mxu0
  %v4295 = vadd.f32 0.0, %v4294
  %v4296 = vpop.f32.mrb[0].mxu0
  %4297 = vmatprep.mubr.f32.mxu0 0.0
  %4298 = vmatmul.mubr.f32.gmra.mrb[0].mxu0 %v4025
  %v4299 = vpop.f32.mrb[0].mxu0
  %v4300 = vadd.f32 0.0, %v4299
  %v4301 = vpop.f32.mrb[0].mxu0
  %4302 = vmatprep.mubr.f32.mxu0 0.0
  %4303 = vmatmul.mubr.f32.gmra.mrb[0].mxu0 %v4028
  %v4304 = vpop.f32.mrb[0].mxu0
  %v4305 = vadd.f32 0.0, %v4304
  %v4306 = vpop.f32.mrb[0].mxu0
  %4307 = vmatprep.mubr.f32.mxu0 0.0
  %4308 = vmatmul.mubr.f32.gmra.mrb[0].mxu0 %v4031
  %v4309 = vpop.f32.mrb[0].mxu0
  %v4310 = vadd.f32 0.0, %v4309
  %v4311 = vpop.f32.mrb[0].mxu0
  %4312 = vmatprep.mubr.f32.mxu0 0.0
  %4313 = vmatmul.mubr.f32.gmra.mrb[0].mxu0 %v4034
  %v4314 = vpop.f32.mrb[0].mxu0
  %v4315 = vadd.f32 0.0, %v4314
  %v4316 = vpop.f32.mrb[0].mxu0
  %4317 = vmatprep.mubr.f32.mxu0 0.0
  %4318 = vmatmul.mubr.f32.gmra.mrb[0].mxu0 %v4037
  %v4319 = vpop.f32.mrb[0].mxu0
  %v4320 = vadd.f32 0.0, %v4319
  %v4321 = vpop.f32.mrb[0].mxu0
  %4322 = vmatprep.mubr.f32.mxu0 0.0
  %4323 = vmatmul.mubr.f32.gmra.mrb[0].mxu0 %v4040
  %v4324 = vpop.f32.mrb[0].mxu0
  %v4325 = vadd.f32 0.0, %v4324
  %v4326 = vpop.f32.mrb[0].mxu0
  %4327 = vmatprep.mubr.f32.mxu0 0.0
  %4328 = vmatmul.mubr.f32.gmra.mrb[0].mxu0 %v4043
  %v4329 = vpop.f32.mrb[0].mxu0
  %v4330 = vadd.f32 0.0, %v4329
  %v4331 = vpop.f32.mrb[0].mxu0
  %4332 = vmatprep.mubr.f32.mxu0 0.0
  %4333 = vmatmul.mubr.f32.gmra.mrb[0].mxu0 %v4046
  %v4334 = vpop.f32.mrb[0].mxu0
  %v4335 = vadd.f32 0.0, %v4334
  %v4336 = vpop.f32.mrb[0].mxu0
  %4337 = vmatprep.mubr.f32.mxu0 0.0
  %4338 = vmatmul.mubr.f32.gmra.mrb[0].mxu0 %v4049
  %v4339 = vpop.f32.mrb[0].mxu0
  %v4340 = vadd.f32 0.0, %v4339
  %v4341 = vpop.f32.mrb[0].mxu0
  %4342 = vmatprep.mubr.f32.mxu0 0.0
  %4343 = vmatmul.mubr.f32.gmra.mrb[0].mxu0 %v4052
  %v4344 = vpop.f32.mrb[0].mxu0
  %v4345 = vadd.f32 0.0, %v4344
  %v4346 = vpop.f32.mrb[0].mxu0
  %4347 = vmatprep.mubr.f32.mxu0 0.0
  %4348 = vmatmul.mubr.f32.gmra.mrb[0].mxu0 %v4055
  %v4349 = vpop.f32.mrb[0].mxu0
  %v4350 = vadd.f32 0.0, %v4349
  %v4351 = vpop.f32.mrb[0].mxu0
  %4352 = vmatprep.mubr.f32.mxu0 0.0
  %4353 = vmatmul.mubr.f32.gmra.mrb[0].mxu0 %v4058
  %v4354 = vpop.f32.mrb[0].mxu0
  %v4355 = vadd.f32 0.0, %v4354
  %v4356 = vpop.f32.mrb[0].mxu0
  %4357 = vmatprep.mubr.f32.mxu0 0.0
  %4358 = vmatmul.mubr.f32.gmra.mrb[0].mxu0 %v4061
  %v4359 = vpop.f32.mrb[0].mxu0
  %v4360 = vadd.f32 0.0, %v4359
  %v4361 = vpop.f32.mrb[0].mxu0
  %4362 = vmatprep.mubr.f32.mxu0 0.0
  %4363 = vmatmul.mubr.f32.gmra.mrb[0].mxu0 %v4064
  %v4364 = vpop.f32.mrb[0].mxu0
  %v4365 = vadd.f32 0.0, %v4364
  %v4366 = vpop.f32.mrb[0].mxu0
  %4367 = vmatprep.mubr.f32.mxu0 0.0
  %4368 = vmatmul.mubr.f32.gmra.mrb[0].mxu0 %v4067
  %v4369 = vpop.f32.mrb[0].mxu0
  %v4370 = vadd.f32 0.0, %v4369
  %v4371 = vpop.f32.mrb[0].mxu0
  %4372 = vmatprep.mubr.f32.mxu0 0.0
  %4373 = vmatmul.mubr.f32.gmra.mrb[0].mxu0 %v4070
  %v4374 = vpop.f32.mrb[0].mxu0
  %v4375 = vadd.f32 0.0, %v4374
  %v4376 = vpop.f32.mrb[0].mxu0
  %4377 = vmatprep.mubr.f32.mxu0 0.0
  %4378 = vmatmul.mubr.f32.gmra.mrb[0].mxu0 %v4073
  %v4379 = vpop.f32.mrb[0].mxu0
  %v4380 = vadd.f32 0.0, %v4379
  %v4381 = vpop.f32.mrb[0].mxu0
  %4382 = vmatprep.mubr.f32.mxu0 0.0
  %4383 = vmatmul.mubr.f32.gmra.mrb[0].mxu0 %v4076
  %v4384 = vpop.f32.mrb[0].mxu0
  %v4385 = vadd.f32 0.0, %v4384
  %v4386 = vpop.f32.mrb[0].mxu0
  %4387 = vmatprep.mubr.f32.mxu0 0.0
  %4388 = vmatmul.mubr.f32.gmra.mrb[0].mxu0 %v4079
  %v4389 = vpop.f32.mrb[0].mxu0
  %v4390 = vadd.f32 0.0, %v4389
  %v4391 = vpop.f32.mrb[0].mxu0
  %4392 = vmatprep.mubr.f32.mxu0 0.0
  %4393 = vmatmul.mubr.f32.gmra.mrb[0].mxu0 %v4082
  %v4394 = vpop.f32.mrb[0].mxu0
  %v4395 = vadd.f32 0.0, %v4394
  %v4396 = vpop.f32.mrb[0].mxu0
  %4397 = vmatprep.mubr.f32.mxu0 0.0
  %4398 = vmatmul.mubr.f32.gmra.mrb[0].mxu0 %v4085
  %v4399 = vpop.f32.mrb[0].mxu0
  %v4400 = vadd.f32 0.0, %v4399
  %v4401 = vpop.f32.mrb[0].mxu0
  %4402 = vmatprep.mubr.f32.mxu0 0.0
  %4403 = vmatmul.mubr.f32.gmra.mrb[0].mxu0 %v4088
  %v4404 = vpop.f32.mrb[0].mxu0
  %v4405 = vadd.f32 0.0, %v4404
  %v4406 = vpop.f32.mrb[0].mxu0
  %4407 = vmatprep.mubr.f32.mxu0 0.0
  %4408 = vmatmul.mubr.f32.gmra.mrb[0].mxu0 %v4091
  %v4409 = vpop.f32.mrb[0].mxu0
  %v4410 = vadd.f32 0.0, %v4409
  %v4411 = vpop.f32.mrb[0].mxu0
  %4412 = vmatprep.mubr.f32.mxu0 0.0
  %4413 = vmatmul.mubr.f32.gmra.mrb[0].mxu0 %v4094
  %v4414 = vpop.f32.mrb[0].mxu0
  %v4415 = vadd.f32 0.0, %v4414
  %v4416 = vpop.f32.mrb[0].mxu0
  %4417 = vmatprep.mubr.f32.mxu0 0.0
  %4418 = vmatmul.mubr.f32.gmra.mrb[0].mxu0 %v4097
  %v4419 = vpop.f32.mrb[0].mxu0
  %v4420 = vadd.f32 0.0, %v4419
  %v4421 = vpop.f32.mrb[0].mxu0
  %4422 = vmatprep.mubr.f32.mxu0 0.0
  %4423 = vmatmul.mubr.f32.gmra.mrb[0].mxu0 %v4100
  %v4424 = vpop.f32.mrb[0].mxu0
  %v4425 = vadd.f32 0.0, %v4424
  %v4426 = vpop.f32.mrb[0].mxu0
  %4427 = vmatprep.mubr.f32.mxu0 0.0
  %4428 = vmatmul.mubr.f32.gmra.mrb[0].mxu0 %v4103
  %v4429 = vpop.f32.mrb[0].mxu0
  %v4430 = vadd.f32 0.0, %v4429
  %v4431 = vpop.f32.mrb[0].mxu0
  %4432 = vmatprep.mubr.f32.mxu0 0.0
  %4433 = vmatmul.mubr.f32.gmra.mrb[0].mxu0 %v4106
  %v4434 = vpop.f32.mrb[0].mxu0
  %v4435 = vadd.f32 0.0, %v4434
  %v4436 = vpop.f32.mrb[0].mxu0
  %4437 = vmatprep.mubr.f32.mxu0 0.0
  %4438 = vmatmul.mubr.f32.gmra.mrb[0].mxu0 %v4109
  %v4439 = vpop.f32.mrb[0].mxu0
  %v4440 = vadd.f32 0.0, %v4439
  %v4441 = vpop.f32.mrb[0].mxu0
  %4442 = vmatprep.mubr.f32.mxu0 0.0
  %4443 = vmatmul.mubr.f32.gmra.mrb[0].mxu0 %v4112
  %v4444 = vpop.f32.mrb[0].mxu0
  %v4445 = vadd.f32 0.0, %v4444
  %v4446 = vpop.f32.mrb[0].mxu0
  %4447 = vmatprep.mubr.f32.mxu0 0.0
  %4448 = vmatmul.mubr.f32.gmra.mrb[0].mxu0 %v4115
  %v4449 = vpop.f32.mrb[0].mxu0
  %v4450 = vadd.f32 0.0, %v4449
  %v4451 = vpop.f32.mrb[0].mxu0
  %4452 = vmatprep.mubr.f32.mxu0 0.0
  %4453 = vmatmul.mubr.f32.gmra.mrb[0].mxu0 %v4118
  %v4454 = vpop.f32.mrb[0].mxu0
  %v4455 = vadd.f32 0.0, %v4454
  %v4456 = vpop.f32.mrb[0].mxu0
  %4457 = vmatprep.mubr.f32.mxu0 0.0
  %4458 = vmatmul.mubr.f32.gmra.mrb[0].mxu0 %v4121
  %v4459 = vpop.f32.mrb[0].mxu0
  %v4460 = vadd.f32 0.0, %v4459
  %v4461 = vpop.f32.mrb[0].mxu0
  %4462 = vmatprep.mubr.f32.mxu0 0.0
  %4463 = vmatmul.mubr.f32.gmra.mrb[0].mxu0 %v4124
  %v4464 = vpop.f32.mrb[0].mxu0
  %v4465 = vadd.f32 0.0, %v4464
  %v4466 = vpop.f32.mrb[0].mxu0
  %4467 = vmatprep.mubr.f32.mxu0 0.0
  %4468 = vmatmul.mubr.f32.gmra.mrb[0].mxu0 %v4127
  %v4469 = vpop.f32.mrb[0].mxu0
  %v4470 = vadd.f32 0.0, %v4469
  %v4471 = vpop.f32.mrb[0].mxu0
  %4472 = vmatprep.mubr.f32.mxu0 0.0
  %4473 = vmatmul.mubr.f32.gmra.mrb[0].mxu0 %v4130
  %v4474 = vpop.f32.mrb[0].mxu0
  %v4475 = vadd.f32 0.0, %v4474
  %v4476 = vpop.f32.mrb[0].mxu0
  %4477 = vmatprep.mubr.f32.mxu0 0.0
  %4478 = vmatmul.mubr.f32.gmra.mrb[0].mxu0 %v4133
  %v4479 = vpop.f32.mrb[0].mxu0
  %v4480 = vadd.f32 0.0, %v4479
  %v4481 = vpop.f32.mrb[0].mxu0
  %4482 = vmatprep.mubr.f32.mxu0 0.0
  %4483 = vmatmul.mubr.f32.gmra.mrb[0].mxu0 %v4136
  %v4484 = vpop.f32.mrb[0].mxu0
  %v4485 = vadd.f32 0.0, %v4484
  %v4486 = vpop.f32.mrb[0].mxu0
  %4487 = vmatprep.mubr.f32.mxu0 0.0
  %4488 = vmatmul.mubr.f32.gmra.mrb[0].mxu0 %v4139
  %v4489 = vpop.f32.mrb[0].mxu0
  %v4490 = vadd.f32 0.0, %v4489
  %v4491 = vpop.f32.mrb[0].mxu0
  %4492 = vmatprep.mubr.f32.mxu0 0.0
  %4493 = vmatmul.mubr.f32.gmra.mrb[0].mxu0 %v4142
  %v4494 = vpop.f32.mrb[0].mxu0
  %v4495 = vadd.f32 0.0, %v4494
  %v4496 = vpop.f32.mrb[0].mxu0
  %4497 = vmatprep.mubr.f32.mxu0 0.0
  %4498 = vmatmul.mubr.f32.gmra.mrb[0].mxu0 %v4145
  %v4499 = vpop.f32.mrb[0].mxu0
  %v4500 = vadd.f32 0.0, %v4499
  %v4501 = vpop.f32.mrb[0].mxu0
  %4502 = vmatprep.mubr.f32.mxu0 0.0
  %4503 = vmatmul.mubr.f32.gmra.mrb[0].mxu0 %v4148
  %v4504 = vpop.f32.mrb[0].mxu0
  %v4505 = vadd.f32 0.0, %v4504
  %v4506 = vpop.f32.mrb[0].mxu0
  %4507 = vmatprep.mubr.f32.mxu0 0.0
  %4508 = vmatmul.mubr.f32.gmra.mrb[0].mxu0 %v4151
  %v4509 = vpop.f32.mrb[0].mxu0
  %v4510 = vadd.f32 0.0, %v4509
  %v4511 = vpop.f32.mrb[0].mxu0
  %4512 = vmatprep.mubr.f32.mxu0 0.0
  %4513 = vmatmul.mubr.f32.gmra.mrb[0].mxu0 %v4154
  %v4514 = vpop.f32.mrb[0].mxu0
  %v4515 = vadd.f32 0.0, %v4514
  %v4516 = vpop.f32.mrb[0].mxu0
  %4517 = vmatprep.mubr.f32.mxu0 0.0
  %4518 = vmatmul.mubr.f32.gmra.mrb[0].mxu0 %v4157
  %v4519 = vpop.f32.mrb[0].mxu0
  %v4520 = vadd.f32 0.0, %v4519
  %v4521 = vpop.f32.mrb[0].mxu0
  %4522 = vmatprep.mubr.f32.mxu0 0.0
  %4523 = vmatmul.mubr.f32.gmra.mrb[0].mxu0 %v4160
  %v4524 = vpop.f32.mrb[0].mxu0
  %v4525 = vadd.f32 0.0, %v4524
  %v4526 = vpop.f32.mrb[0].mxu0
  %4527 = vmatprep.mubr.f32.mxu0 0.0
  %4528 = vmatmul.mubr.f32.gmra.mrb[0].mxu0 %v4163
  %v4529 = vpop.f32.mrb[0].mxu0
  %v4530 = vadd.f32 0.0, %v4529
  %v4531 = vpop.f32.mrb[0].mxu0
  %4532 = vmatprep.mubr.f32.mxu0 0.0
  %4533 = vmatmul.mubr.f32.gmra.mrb[0].mxu0 %v4166
  %v4534 = vpop.f32.mrb[0].mxu0
  %v4535 = vadd.f32 0.0, %v4534
  %v4536 = vpop.f32.mrb[0].mxu0
  %4537 = vmatprep.mubr.f32.mxu0 0.0
  %4538 = vmatmul.mubr.f32.gmra.mrb[0].mxu0 %v4169
  %v4539 = vpop.f32.mrb[0].mxu0
  %v4540 = vadd.f32 0.0, %v4539
  %v4541 = vpop.f32.mrb[0].mxu0
  %4542 = vmatprep.mubr.f32.mxu0 0.0
  %4543 = vmatmul.mubr.f32.gmra.mrb[0].mxu0 %v4172
  %v4544 = vpop.f32.mrb[0].mxu0
  %v4545 = vadd.f32 0.0, %v4544
  %v4546 = vpop.f32.mrb[0].mxu0
  %4547 = vmatprep.mubr.f32.mxu0 0.0
  %4548 = vmatmul.mubr.f32.gmra.mrb[0].mxu0 %v4175
  %v4549 = vpop.f32.mrb[0].mxu0
  %v4550 = vadd.f32 0.0, %v4549
  %v4551 = vpop.f32.mrb[0].mxu0
  %4552 = vmatprep.mubr.f32.mxu0 0.0
  %4553 = vmatmul.mubr.f32.gmra.mrb[0].mxu0 %v4178
  %v4554 = vpop.f32.mrb[0].mxu0
  %v4555 = vadd.f32 0.0, %v4554
  %v4556 = vpop.f32.mrb[0].mxu0
  %4557 = vmatprep.mubr.f32.mxu0 0.0
  %4558 = vmatmul.mubr.f32.gmra.mrb[0].mxu0 %v4181
  %v4559 = vpop.f32.mrb[0].mxu0
  %v4560 = vadd.f32 0.0, %v4559
  %v4561 = vpop.f32.mrb[0].mxu0
  %4562 = vmatprep.mubr.f32.mxu0 0.0
  %4563 = vmatmul.mubr.f32.gmra.mrb[0].mxu0 %v4184
  %v4564 = vpop.f32.mrb[0].mxu0
  %v4565 = vadd.f32 0.0, %v4564
  %v4566 = vpop.f32.mrb[0].mxu0
  %4567 = vmatprep.mubr.f32.mxu0 0.0
  %4568 = vmatmul.mubr.f32.gmra.mrb[0].mxu0 %v4187
  %v4569 = vpop.f32.mrb[0].mxu0
  %v4570 = vadd.f32 0.0, %v4569
  %v4571 = vpop.f32.mrb[0].mxu0
  %4572 = vmatprep.mubr.f32.mxu0 0.0
  %4573 = vmatmul.mubr.f32.gmra.mrb[0].mxu0 %v4190
  %v4574 = vpop.f32.mrb[0].mxu0
  %v4575 = vadd.f32 0.0, %v4574
  %v4576 = vpop.f32.mrb[0].mxu0
  %4577 = vmatprep.mubr.f32.mxu0 0.0
  %4578 = vmatmul.mubr.f32.gmra.mrb[0].mxu0 %v4193
  %v4579 = vpop.f32.mrb[0].mxu0
  %v4580 = vadd.f32 0.0, %v4579
  %v4581 = vpop.f32.mrb[0].mxu0
  %4582 = vdwg.mxu0
  %v4583 = vadd.f32 %v3873, %v4265
  %v4584 = vadd.f32 %v3874, %v4270
  %v4585 = vadd.f32 %v3875, %v4275
  %v4586 = vadd.f32 %v3876, %v4280
  %v4587 = vadd.f32 %v3877, %v4285
  %v4588 = vadd.f32 %v3878, %v4290
  %v4589 = vadd.f32 %v3879, %v4295
  %v4590 = vadd.f32 %v3880, %v4300
  %v4591 = vadd.f32 %v3881, %v4305
  %v4592 = vadd.f32 %v3882, %v4310
  %v4593 = vadd.f32 %v3883, %v4315
  %v4594 = vadd.f32 %v3884, %v4320
  %v4595 = vadd.f32 %v3885, %v4325
  %v4596 = vadd.f32 %v3886, %v4330
  %v4597 = vadd.f32 %v3887, %v4335
  %v4598 = vadd.f32 %v3888, %v4340
  %v4599 = vadd.f32 %v3889, %v4345
  %v4600 = vadd.f32 %v3890, %v4350
  %v4601 = vadd.f32 %v3891, %v4355
  %v4602 = vadd.f32 %v3892, %v4360
  %v4603 = vadd.f32 %v3893, %v4365
  %v4604 = vadd.f32 %v3894, %v4370
  %v4605 = vadd.f32 %v3895, %v4375
  %v4606 = vadd.f32 %v3896, %v4380
  %v4607 = vadd.f32 %v3897, %v4385
  %v4608 = vadd.f32 %v3898, %v4390
  %v4609 = vadd.f32 %v3899, %v4395
  %v4610 = vadd.f32 %v3900, %v4400
  %v4611 = vadd.f32 %v3901, %v4405
  %v4612 = vadd.f32 %v3902, %v4410
  %v4613 = vadd.f32 %v3903, %v4415
  %v4614 = vadd.f32 %v3904, %v4420
  %v4615 = vadd.f32 %v3905, %v4425
  %v4616 = vadd.f32 %v3906, %v4430
  %v4617 = vadd.f32 %v3907, %v4435
  %v4618 = vadd.f32 %v3908, %v4440
  %v4619 = vadd.f32 %v3909, %v4445
  %v4620 = vadd.f32 %v3910, %v4450
  %v4621 = vadd.f32 %v3911, %v4455
  %v4622 = vadd.f32 %v3912, %v4460
  %v4623 = vadd.f32 %v3913, %v4465
  %v4624 = vadd.f32 %v3914, %v4470
  %v4625 = vadd.f32 %v3915, %v4475
  %v4626 = vadd.f32 %v3916, %v4480
  %v4627 = vadd.f32 %v3917, %v4485
  %v4628 = vadd.f32 %v3918, %v4490
  %v4629 = vadd.f32 %v3919, %v4495
  %v4630 = vadd.f32 %v3920, %v4500
  %v4631 = vadd.f32 %v3921, %v4505
  %v4632 = vadd.f32 %v3922, %v4510
  %v4633 = vadd.f32 %v3923, %v4515
  %v4634 = vadd.f32 %v3924, %v4520
  %v4635 = vadd.f32 %v3925, %v4525
  %v4636 = vadd.f32 %v3926, %v4530
  %v4637 = vadd.f32 %v3927, %v4535
  %v4638 = vadd.f32 %v3928, %v4540
  %v4639 = vadd.f32 %v3929, %v4545
  %v4640 = vadd.f32 %v3930, %v4550
  %v4641 = vadd.f32 %v3931, %v4555
  %v4642 = vadd.f32 %v3932, %v4560
  %v4643 = vadd.f32 %v3933, %v4565
  %v4644 = vadd.f32 %v3934, %v4570
  %v4645 = vadd.f32 %v3935, %v4575
  %v4646 = vadd.f32 %v3936, %v4580
  %v4647 = vld [vmem:[%s1160 + $0x9] sm:$0xff]
  %v4648 = vld [vmem:[%s1160 + $0x11] sm:$0xff]
  %v4649 = vld [vmem:[%s1160 + $0x29] sm:$0xff]
  %v4650 = vld [vmem:[%s1160 + $0x31] sm:$0xff]
  %v4651 = vld [vmem:[%s1160 + $0x49] sm:$0xff]
  %v4652 = vld [vmem:[%s1160 + $0x51] sm:$0xff]
  %v4653 = vld [vmem:[%s1160 + $0x69] sm:$0xff]
  %v4654 = vld [vmem:[%s1160 + $0x71] sm:$0xff]
  %v4655 = vld [vmem:[%s1160 + $0x89] sm:$0xff]
  %v4656 = vld [vmem:[%s1160 + $0x91] sm:$0xff]
  %v4657 = vld [vmem:[%s1160 + $0xa9] sm:$0xff]
  %v4658 = vld [vmem:[%s1160 + $0xb1] sm:$0xff]
  %v4659 = vld [vmem:[%s1160 + $0xc9] sm:$0xff]
  %v4660 = vld [vmem:[%s1160 + $0xd1] sm:$0xff]
  %v4661 = vld [vmem:[%s1160 + $0xe9] sm:$0xff]
  %v4662 = vld [vmem:[%s1160 + $0xf1] sm:$0xff]
  %v4663 = vld [vmem:[%s1160 + $0x109] sm:$0xff]
  %v4664 = vld [vmem:[%s1160 + $0x111] sm:$0xff]
  %v4665 = vld [vmem:[%s1160 + $0x129] sm:$0xff]
  %v4666 = vld [vmem:[%s1160 + $0x131] sm:$0xff]
  %v4667 = vld [vmem:[%s1160 + $0x149] sm:$0xff]
  %v4668 = vld [vmem:[%s1160 + $0x151] sm:$0xff]
  %v4669 = vld [vmem:[%s1160 + $0x169] sm:$0xff]
  %v4670 = vld [vmem:[%s1160 + $0x171] sm:$0xff]
  %v4671 = vld [vmem:[%s1160 + $0x189] sm:$0xff]
  %v4672 = vld [vmem:[%s1160 + $0x191] sm:$0xff]
  %v4673 = vld [vmem:[%s1160 + $0x1a9] sm:$0xff]
  %v4674 = vld [vmem:[%s1160 + $0x1b1] sm:$0xff]
  %v4675 = vld [vmem:[%s1160 + $0x1c9] sm:$0xff]
  %v4676 = vld [vmem:[%s1160 + $0x1d1] sm:$0xff]
  %v4677 = vld [vmem:[%s1160 + $0x1e9] sm:$0xff]
  %v4678 = vld [vmem:[%s1160 + $0x1f1] sm:$0xff]
  %v4679 = vld [vmem:[%s1160 + $0x249] sm:$0xff]
  %v4680 = vld [vmem:[%s1160 + $0x251] sm:$0xff]
  %v4681 = vld [vmem:[%s1160 + $0x269] sm:$0xff]
  %v4682 = vld [vmem:[%s1160 + $0x271] sm:$0xff]
  %v4683 = vld [vmem:[%s1160 + $0x289] sm:$0xff]
  %v4684 = vld [vmem:[%s1160 + $0x291] sm:$0xff]
  %v4685 = vld [vmem:[%s1160 + $0x2a9] sm:$0xff]
  %v4686 = vld [vmem:[%s1160 + $0x2b1] sm:$0xff]
  %v4687 = vld [vmem:[%s1160 + $0x2c9] sm:$0xff]
  %v4688 = vld [vmem:[%s1160 + $0x2d1] sm:$0xff]
  %v4689 = vld [vmem:[%s1160 + $0x2e9] sm:$0xff]
  %v4690 = vld [vmem:[%s1160 + $0x2f1] sm:$0xff]
  %v4691 = vld [vmem:[%s1160 + $0x309] sm:$0xff]
  %v4692 = vld [vmem:[%s1160 + $0x311] sm:$0xff]
  %v4693 = vld [vmem:[%s1160 + $0x329] sm:$0xff]
  %v4694 = vld [vmem:[%s1160 + $0x331] sm:$0xff]
  %v4695 = vld [vmem:[%s1160 + $0x349] sm:$0xff]
  %v4696 = vld [vmem:[%s1160 + $0x351] sm:$0xff]
  %v4697 = vld [vmem:[%s1160 + $0x369] sm:$0xff]
  %v4698 = vld [vmem:[%s1160 + $0x371] sm:$0xff]
  %v4699 = vld [vmem:[%s1160 + $0x389] sm:$0xff]
  %v4700 = vld [vmem:[%s1160 + $0x391] sm:$0xff]
  %v4701 = vld [vmem:[%s1160 + $0x3a9] sm:$0xff]
  %v4702 = vld [vmem:[%s1160 + $0x3b1] sm:$0xff]
  %v4703 = vld [vmem:[%s1160 + $0x3c9] sm:$0xff]
  %v4704 = vld [vmem:[%s1160 + $0x3d1] sm:$0xff]
  %v4705 = vld [vmem:[%s1160 + $0x3e9] sm:$0xff]
  %v4706 = vld [vmem:[%s1160 + $0x3f1] sm:$0xff]
  %v4707 = vld [vmem:[%s1160 + $0x409] sm:$0xff]
  %v4708 = vld [vmem:[%s1160 + $0x411] sm:$0xff]
  %v4709 = vld [vmem:[%s1160 + $0x429] sm:$0xff]
  %v4710 = vld [vmem:[%s1160 + $0x431] sm:$0xff]
  %s4711 = scalar_lea.vmem %s5, 10
  %v4712 = vld [vmem:[%s4711] sm:$0x3]
  %v4714 = vsel %vm1069, %v4647, 0
  %v4717 = vsel %vm1069, %v4648, 0
  %v4720 = vsel %vm1069, %v4649, 0
  %v4723 = vsel %vm1069, %v4650, 0
  %v4726 = vsel %vm1069, %v4651, 0
  %v4729 = vsel %vm1069, %v4652, 0
  %v4732 = vsel %vm1069, %v4653, 0
  %v4735 = vsel %vm1069, %v4654, 0
  %v4738 = vsel %vm1069, %v4655, 0
  %v4741 = vsel %vm1069, %v4656, 0
  %v4744 = vsel %vm1069, %v4657, 0
  %v4747 = vsel %vm1069, %v4658, 0
  %v4750 = vsel %vm1069, %v4659, 0
  %v4753 = vsel %vm1069, %v4660, 0
  %v4756 = vsel %vm1069, %v4661, 0
  %v4759 = vsel %vm1069, %v4662, 0
  %v4762 = vsel %vm1069, %v4663, 0
  %v4765 = vsel %vm1069, %v4664, 0
  %v4768 = vsel %vm1069, %v4665, 0
  %v4771 = vsel %vm1069, %v4666, 0
  %v4774 = vsel %vm1069, %v4667, 0
  %v4777 = vsel %vm1069, %v4668, 0
  %v4780 = vsel %vm1069, %v4669, 0
  %v4783 = vsel %vm1069, %v4670, 0
  %v4786 = vsel %vm1069, %v4671, 0
  %v4789 = vsel %vm1069, %v4672, 0
  %v4792 = vsel %vm1069, %v4673, 0
  %v4795 = vsel %vm1069, %v4674, 0
  %v4798 = vsel %vm1069, %v4675, 0
  %v4801 = vsel %vm1069, %v4676, 0
  %v4804 = vsel %vm1069, %v4677, 0
  %v4807 = vsel %vm1069, %v4678, 0
  %v4810 = vsel %vm1069, %v4679, 0
  %v4813 = vsel %vm1069, %v4680, 0
  %v4816 = vsel %vm1069, %v4681, 0
  %v4819 = vsel %vm1069, %v4682, 0
  %v4822 = vsel %vm1069, %v4683, 0
  %v4825 = vsel %vm1069, %v4684, 0
  %v4828 = vsel %vm1069, %v4685, 0
  %v4831 = vsel %vm1069, %v4686, 0
  %v4834 = vsel %vm1069, %v4687, 0
  %v4837 = vsel %vm1069, %v4688, 0
  %v4840 = vsel %vm1069, %v4689, 0
  %v4843 = vsel %vm1069, %v4690, 0
  %v4846 = vsel %vm1069, %v4691, 0
  %v4849 = vsel %vm1069, %v4692, 0
  %v4852 = vsel %vm1069, %v4693, 0
  %v4855 = vsel %vm1069, %v4694, 0
  %v4858 = vsel %vm1069, %v4695, 0
  %v4861 = vsel %vm1069, %v4696, 0
  %v4864 = vsel %vm1069, %v4697, 0
  %v4867 = vsel %vm1069, %v4698, 0
  %v4870 = vsel %vm1069, %v4699, 0
  %v4873 = vsel %vm1069, %v4700, 0
  %v4876 = vsel %vm1069, %v4701, 0
  %v4879 = vsel %vm1069, %v4702, 0
  %v4882 = vsel %vm1069, %v4703, 0
  %v4885 = vsel %vm1069, %v4704, 0
  %v4888 = vsel %vm1069, %v4705, 0
  %v4891 = vsel %vm1069, %v4706, 0
  %v4894 = vsel %vm1069, %v4707, 0
  %v4897 = vsel %vm1069, %v4708, 0
  %v4900 = vsel %vm1069, %v4709, 0
  %v4903 = vsel %vm1069, %v4710, 0
  %v4906 = vsel %vm1548, %v4712, 0
  %4908 = vmatprep.subr.mxu0 0.0
  %4909 = vmatpush1.msra.mxu0 %v4906
  %4910 = vmatprep.subr.mxu0 0.0
  %4911 = vmatpush1.msra.mxu0 0.0
  %4912 = vmatprep.subr.mxu0 0.0
  %4913 = vmatpush1.msra.mxu0 0.0
  %4914 = vmatprep.subr.mxu0 0.0
  %4915 = vmatpush1.msra.mxu0 0.0
  %4916 = vmatprep.subr.mxu0 0.0
  %4917 = vmatpush1.msra.mxu0 0.0
  %4918 = vmatprep.subr.mxu0 0.0
  %4919 = vmatpush1.msra.mxu0 0.0
  %4920 = vmatprep.subr.mxu0 0.0
  %4921 = vmatpush1.msra.mxu0 0.0
  %4922 = vmatprep.subr.mxu0 0.0
  %4923 = vmatpush1.msra.mxu0 0.0
  %4924 = vmatprep.subr.mxu0 0.0
  %4925 = vmatpush1.msra.mxu0 0.0
  %4926 = vmatprep.subr.mxu0 0.0
  %4927 = vmatpush1.msra.mxu0 0.0
  %4928 = vmatprep.subr.mxu0 0.0
  %4929 = vmatpush1.msra.mxu0 0.0
  %4930 = vmatprep.subr.mxu0 0.0
  %4931 = vmatpush1.msra.mxu0 0.0
  %4932 = vmatprep.subr.mxu0 0.0
  %4933 = vmatpush1.msra.mxu0 0.0
  %4934 = vmatprep.subr.mxu0 0.0
  %4935 = vmatpush1.msra.mxu0 0.0
  %4936 = vmatprep.subr.mxu0 0.0
  %4937 = vmatpush1.msra.mxu0 0.0
  %4938 = vmatprep.subr.mxu0 0.0
  %4939 = vmatpush1.msra.mxu0 0.0
  %4940 = vmatprep.subr.mxu0 0.0
  %4941 = vmatpush1.msra.mxu0 0.0
  %4942 = vmatprep.subr.mxu0 0.0
  %4943 = vmatpush1.msra.mxu0 0.0
  %4944 = vmatprep.subr.mxu0 0.0
  %4945 = vmatpush1.msra.mxu0 0.0
  %4946 = vmatprep.subr.mxu0 0.0
  %4947 = vmatpush1.msra.mxu0 0.0
  %4948 = vmatprep.subr.mxu0 0.0
  %4949 = vmatpush1.msra.mxu0 0.0
  %4950 = vmatprep.subr.mxu0 0.0
  %4951 = vmatpush1.msra.mxu0 0.0
  %4952 = vmatprep.subr.mxu0 0.0
  %4953 = vmatpush1.msra.mxu0 0.0
  %4954 = vmatprep.subr.mxu0 0.0
  %4955 = vmatpush1.msra.mxu0 0.0
  %4956 = vmatprep.subr.mxu0 0.0
  %4957 = vmatpush1.msra.mxu0 0.0
  %4958 = vmatprep.subr.mxu0 0.0
  %4959 = vmatpush1.msra.mxu0 0.0
  %4960 = vmatprep.subr.mxu0 0.0
  %4961 = vmatpush1.msra.mxu0 0.0
  %4962 = vmatprep.subr.mxu0 0.0
  %4963 = vmatpush1.msra.mxu0 0.0
  %4964 = vmatprep.subr.mxu0 0.0
  %4965 = vmatpush1.msra.mxu0 0.0
  %4966 = vmatprep.subr.mxu0 0.0
  %4967 = vmatpush1.msra.mxu0 0.0
  %4968 = vmatprep.subr.mxu0 0.0
  %4969 = vmatpush1.msra.mxu0 0.0
  %4970 = vmatprep.subr.mxu0 0.0
  %4971 = vmatpush1.msra.mxu0 0.0
  %4972 = vmatprep.mubr.f32.mxu0 0.0
  %4973 = vmatmul.mubr.f32.gmra.mrb[0].mxu0 %v4714
  %v4974 = vpop.f32.mrb[0].mxu0
  %v4975 = vadd.f32 0.0, %v4974
  %v4976 = vpop.f32.mrb[0].mxu0
  %4977 = vmatprep.mubr.f32.mxu0 0.0
  %4978 = vmatmul.mubr.f32.gmra.mrb[0].mxu0 %v4717
  %v4979 = vpop.f32.mrb[0].mxu0
  %v4980 = vadd.f32 0.0, %v4979
  %v4981 = vpop.f32.mrb[0].mxu0
  %4982 = vmatprep.mubr.f32.mxu0 0.0
  %4983 = vmatmul.mubr.f32.gmra.mrb[0].mxu0 %v4720
  %v4984 = vpop.f32.mrb[0].mxu0
  %v4985 = vadd.f32 0.0, %v4984
  %v4986 = vpop.f32.mrb[0].mxu0
  %4987 = vmatprep.mubr.f32.mxu0 0.0
  %4988 = vmatmul.mubr.f32.gmra.mrb[0].mxu0 %v4723
  %v4989 = vpop.f32.mrb[0].mxu0
  %v4990 = vadd.f32 0.0, %v4989
  %v4991 = vpop.f32.mrb[0].mxu0
  %4992 = vmatprep.mubr.f32.mxu0 0.0
  %4993 = vmatmul.mubr.f32.gmra.mrb[0].mxu0 %v4726
  %v4994 = vpop.f32.mrb[0].mxu0
  %v4995 = vadd.f32 0.0, %v4994
  %v4996 = vpop.f32.mrb[0].mxu0
  %4997 = vmatprep.mubr.f32.mxu0 0.0
  %4998 = vmatmul.mubr.f32.gmra.mrb[0].mxu0 %v4729
  %v4999 = vpop.f32.mrb[0].mxu0
  %v5000 = vadd.f32 0.0, %v4999
  %v5001 = vpop.f32.mrb[0].mxu0
  %5002 = vmatprep.mubr.f32.mxu0 0.0
  %5003 = vmatmul.mubr.f32.gmra.mrb[0].mxu0 %v4732
  %v5004 = vpop.f32.mrb[0].mxu0
  %v5005 = vadd.f32 0.0, %v5004
  %v5006 = vpop.f32.mrb[0].mxu0
  %5007 = vmatprep.mubr.f32.mxu0 0.0
  %5008 = vmatmul.mubr.f32.gmra.mrb[0].mxu0 %v4735
  %v5009 = vpop.f32.mrb[0].mxu0
  %v5010 = vadd.f32 0.0, %v5009
  %v5011 = vpop.f32.mrb[0].mxu0
  %5012 = vmatprep.mubr.f32.mxu0 0.0
  %5013 = vmatmul.mubr.f32.gmra.mrb[0].mxu0 %v4738
  %v5014 = vpop.f32.mrb[0].mxu0
  %v5015 = vadd.f32 0.0, %v5014
  %v5016 = vpop.f32.mrb[0].mxu0
  %5017 = vmatprep.mubr.f32.mxu0 0.0
  %5018 = vmatmul.mubr.f32.gmra.mrb[0].mxu0 %v4741
  %v5019 = vpop.f32.mrb[0].mxu0
  %v5020 = vadd.f32 0.0, %v5019
  %v5021 = vpop.f32.mrb[0].mxu0
  %5022 = vmatprep.mubr.f32.mxu0 0.0
  %5023 = vmatmul.mubr.f32.gmra.mrb[0].mxu0 %v4744
  %v5024 = vpop.f32.mrb[0].mxu0
  %v5025 = vadd.f32 0.0, %v5024
  %v5026 = vpop.f32.mrb[0].mxu0
  %5027 = vmatprep.mubr.f32.mxu0 0.0
  %5028 = vmatmul.mubr.f32.gmra.mrb[0].mxu0 %v4747
  %v5029 = vpop.f32.mrb[0].mxu0
  %v5030 = vadd.f32 0.0, %v5029
  %v5031 = vpop.f32.mrb[0].mxu0
  %5032 = vmatprep.mubr.f32.mxu0 0.0
  %5033 = vmatmul.mubr.f32.gmra.mrb[0].mxu0 %v4750
  %v5034 = vpop.f32.mrb[0].mxu0
  %v5035 = vadd.f32 0.0, %v5034
  %v5036 = vpop.f32.mrb[0].mxu0
  %5037 = vmatprep.mubr.f32.mxu0 0.0
  %5038 = vmatmul.mubr.f32.gmra.mrb[0].mxu0 %v4753
  %v5039 = vpop.f32.mrb[0].mxu0
  %v5040 = vadd.f32 0.0, %v5039
  %v5041 = vpop.f32.mrb[0].mxu0
  %5042 = vmatprep.mubr.f32.mxu0 0.0
  %5043 = vmatmul.mubr.f32.gmra.mrb[0].mxu0 %v4756
  %v5044 = vpop.f32.mrb[0].mxu0
  %v5045 = vadd.f32 0.0, %v5044
  %v5046 = vpop.f32.mrb[0].mxu0
  %5047 = vmatprep.mubr.f32.mxu0 0.0
  %5048 = vmatmul.mubr.f32.gmra.mrb[0].mxu0 %v4759
  %v5049 = vpop.f32.mrb[0].mxu0
  %v5050 = vadd.f32 0.0, %v5049
  %v5051 = vpop.f32.mrb[0].mxu0
  %5052 = vmatprep.mubr.f32.mxu0 0.0
  %5053 = vmatmul.mubr.f32.gmra.mrb[0].mxu0 %v4762
  %v5054 = vpop.f32.mrb[0].mxu0
  %v5055 = vadd.f32 0.0, %v5054
  %v5056 = vpop.f32.mrb[0].mxu0
  %5057 = vmatprep.mubr.f32.mxu0 0.0
  %5058 = vmatmul.mubr.f32.gmra.mrb[0].mxu0 %v4765
  %v5059 = vpop.f32.mrb[0].mxu0
  %v5060 = vadd.f32 0.0, %v5059
  %v5061 = vpop.f32.mrb[0].mxu0
  %5062 = vmatprep.mubr.f32.mxu0 0.0
  %5063 = vmatmul.mubr.f32.gmra.mrb[0].mxu0 %v4768
  %v5064 = vpop.f32.mrb[0].mxu0
  %v5065 = vadd.f32 0.0, %v5064
  %v5066 = vpop.f32.mrb[0].mxu0
  %5067 = vmatprep.mubr.f32.mxu0 0.0
  %5068 = vmatmul.mubr.f32.gmra.mrb[0].mxu0 %v4771
  %v5069 = vpop.f32.mrb[0].mxu0
  %v5070 = vadd.f32 0.0, %v5069
  %v5071 = vpop.f32.mrb[0].mxu0
  %5072 = vmatprep.mubr.f32.mxu0 0.0
  %5073 = vmatmul.mubr.f32.gmra.mrb[0].mxu0 %v4774
  %v5074 = vpop.f32.mrb[0].mxu0
  %v5075 = vadd.f32 0.0, %v5074
  %v5076 = vpop.f32.mrb[0].mxu0
  %5077 = vmatprep.mubr.f32.mxu0 0.0
  %5078 = vmatmul.mubr.f32.gmra.mrb[0].mxu0 %v4777
  %v5079 = vpop.f32.mrb[0].mxu0
  %v5080 = vadd.f32 0.0, %v5079
  %v5081 = vpop.f32.mrb[0].mxu0
  %5082 = vmatprep.mubr.f32.mxu0 0.0
  %5083 = vmatmul.mubr.f32.gmra.mrb[0].mxu0 %v4780
  %v5084 = vpop.f32.mrb[0].mxu0
  %v5085 = vadd.f32 0.0, %v5084
  %v5086 = vpop.f32.mrb[0].mxu0
  %5087 = vmatprep.mubr.f32.mxu0 0.0
  %5088 = vmatmul.mubr.f32.gmra.mrb[0].mxu0 %v4783
  %v5089 = vpop.f32.mrb[0].mxu0
  %v5090 = vadd.f32 0.0, %v5089
  %v5091 = vpop.f32.mrb[0].mxu0
  %5092 = vmatprep.mubr.f32.mxu0 0.0
  %5093 = vmatmul.mubr.f32.gmra.mrb[0].mxu0 %v4786
  %v5094 = vpop.f32.mrb[0].mxu0
  %v5095 = vadd.f32 0.0, %v5094
  %v5096 = vpop.f32.mrb[0].mxu0
  %5097 = vmatprep.mubr.f32.mxu0 0.0
  %5098 = vmatmul.mubr.f32.gmra.mrb[0].mxu0 %v4789
  %v5099 = vpop.f32.mrb[0].mxu0
  %v5100 = vadd.f32 0.0, %v5099
  %v5101 = vpop.f32.mrb[0].mxu0
  %5102 = vmatprep.mubr.f32.mxu0 0.0
  %5103 = vmatmul.mubr.f32.gmra.mrb[0].mxu0 %v4792
  %v5104 = vpop.f32.mrb[0].mxu0
  %v5105 = vadd.f32 0.0, %v5104
  %v5106 = vpop.f32.mrb[0].mxu0
  %5107 = vmatprep.mubr.f32.mxu0 0.0
  %5108 = vmatmul.mubr.f32.gmra.mrb[0].mxu0 %v4795
  %v5109 = vpop.f32.mrb[0].mxu0
  %v5110 = vadd.f32 0.0, %v5109
  %v5111 = vpop.f32.mrb[0].mxu0
  %5112 = vmatprep.mubr.f32.mxu0 0.0
  %5113 = vmatmul.mubr.f32.gmra.mrb[0].mxu0 %v4798
  %v5114 = vpop.f32.mrb[0].mxu0
  %v5115 = vadd.f32 0.0, %v5114
  %v5116 = vpop.f32.mrb[0].mxu0
  %5117 = vmatprep.mubr.f32.mxu0 0.0
  %5118 = vmatmul.mubr.f32.gmra.mrb[0].mxu0 %v4801
  %v5119 = vpop.f32.mrb[0].mxu0
  %v5120 = vadd.f32 0.0, %v5119
  %v5121 = vpop.f32.mrb[0].mxu0
  %5122 = vmatprep.mubr.f32.mxu0 0.0
  %5123 = vmatmul.mubr.f32.gmra.mrb[0].mxu0 %v4804
  %v5124 = vpop.f32.mrb[0].mxu0
  %v5125 = vadd.f32 0.0, %v5124
  %v5126 = vpop.f32.mrb[0].mxu0
  %5127 = vmatprep.mubr.f32.mxu0 0.0
  %5128 = vmatmul.mubr.f32.gmra.mrb[0].mxu0 %v4807
  %v5129 = vpop.f32.mrb[0].mxu0
  %v5130 = vadd.f32 0.0, %v5129
  %v5131 = vpop.f32.mrb[0].mxu0
  %5132 = vmatprep.mubr.f32.mxu0 0.0
  %5133 = vmatmul.mubr.f32.gmra.mrb[0].mxu0 %v4810
  %v5134 = vpop.f32.mrb[0].mxu0
  %v5135 = vadd.f32 0.0, %v5134
  %v5136 = vpop.f32.mrb[0].mxu0
  %5137 = vmatprep.mubr.f32.mxu0 0.0
  %5138 = vmatmul.mubr.f32.gmra.mrb[0].mxu0 %v4813
  %v5139 = vpop.f32.mrb[0].mxu0
  %v5140 = vadd.f32 0.0, %v5139
  %v5141 = vpop.f32.mrb[0].mxu0
  %5142 = vmatprep.mubr.f32.mxu0 0.0
  %5143 = vmatmul.mubr.f32.gmra.mrb[0].mxu0 %v4816
  %v5144 = vpop.f32.mrb[0].mxu0
  %v5145 = vadd.f32 0.0, %v5144
  %v5146 = vpop.f32.mrb[0].mxu0
  %5147 = vmatprep.mubr.f32.mxu0 0.0
  %5148 = vmatmul.mubr.f32.gmra.mrb[0].mxu0 %v4819
  %v5149 = vpop.f32.mrb[0].mxu0
  %v5150 = vadd.f32 0.0, %v5149
  %v5151 = vpop.f32.mrb[0].mxu0
  %5152 = vmatprep.mubr.f32.mxu0 0.0
  %5153 = vmatmul.mubr.f32.gmra.mrb[0].mxu0 %v4822
  %v5154 = vpop.f32.mrb[0].mxu0
  %v5155 = vadd.f32 0.0, %v5154
  %v5156 = vpop.f32.mrb[0].mxu0
  %5157 = vmatprep.mubr.f32.mxu0 0.0
  %5158 = vmatmul.mubr.f32.gmra.mrb[0].mxu0 %v4825
  %v5159 = vpop.f32.mrb[0].mxu0
  %v5160 = vadd.f32 0.0, %v5159
  %v5161 = vpop.f32.mrb[0].mxu0
  %5162 = vmatprep.mubr.f32.mxu0 0.0
  %5163 = vmatmul.mubr.f32.gmra.mrb[0].mxu0 %v4828
  %v5164 = vpop.f32.mrb[0].mxu0
  %v5165 = vadd.f32 0.0, %v5164
  %v5166 = vpop.f32.mrb[0].mxu0
  %5167 = vmatprep.mubr.f32.mxu0 0.0
  %5168 = vmatmul.mubr.f32.gmra.mrb[0].mxu0 %v4831
  %v5169 = vpop.f32.mrb[0].mxu0
  %v5170 = vadd.f32 0.0, %v5169
  %v5171 = vpop.f32.mrb[0].mxu0
  %5172 = vmatprep.mubr.f32.mxu0 0.0
  %5173 = vmatmul.mubr.f32.gmra.mrb[0].mxu0 %v4834
  %v5174 = vpop.f32.mrb[0].mxu0
  %v5175 = vadd.f32 0.0, %v5174
  %v5176 = vpop.f32.mrb[0].mxu0
  %5177 = vmatprep.mubr.f32.mxu0 0.0
  %5178 = vmatmul.mubr.f32.gmra.mrb[0].mxu0 %v4837
  %v5179 = vpop.f32.mrb[0].mxu0
  %v5180 = vadd.f32 0.0, %v5179
  %v5181 = vpop.f32.mrb[0].mxu0
  %5182 = vmatprep.mubr.f32.mxu0 0.0
  %5183 = vmatmul.mubr.f32.gmra.mrb[0].mxu0 %v4840
  %v5184 = vpop.f32.mrb[0].mxu0
  %v5185 = vadd.f32 0.0, %v5184
  %v5186 = vpop.f32.mrb[0].mxu0
  %5187 = vmatprep.mubr.f32.mxu0 0.0
  %5188 = vmatmul.mubr.f32.gmra.mrb[0].mxu0 %v4843
  %v5189 = vpop.f32.mrb[0].mxu0
  %v5190 = vadd.f32 0.0, %v5189
  %v5191 = vpop.f32.mrb[0].mxu0
  %5192 = vmatprep.mubr.f32.mxu0 0.0
  %5193 = vmatmul.mubr.f32.gmra.mrb[0].mxu0 %v4846
  %v5194 = vpop.f32.mrb[0].mxu0
  %v5195 = vadd.f32 0.0, %v5194
  %v5196 = vpop.f32.mrb[0].mxu0
  %5197 = vmatprep.mubr.f32.mxu0 0.0
  %5198 = vmatmul.mubr.f32.gmra.mrb[0].mxu0 %v4849
  %v5199 = vpop.f32.mrb[0].mxu0
  %v5200 = vadd.f32 0.0, %v5199
  %v5201 = vpop.f32.mrb[0].mxu0
  %5202 = vmatprep.mubr.f32.mxu0 0.0
  %5203 = vmatmul.mubr.f32.gmra.mrb[0].mxu0 %v4852
  %v5204 = vpop.f32.mrb[0].mxu0
  %v5205 = vadd.f32 0.0, %v5204
  %v5206 = vpop.f32.mrb[0].mxu0
  %5207 = vmatprep.mubr.f32.mxu0 0.0
  %5208 = vmatmul.mubr.f32.gmra.mrb[0].mxu0 %v4855
  %v5209 = vpop.f32.mrb[0].mxu0
  %v5210 = vadd.f32 0.0, %v5209
  %v5211 = vpop.f32.mrb[0].mxu0
  %5212 = vmatprep.mubr.f32.mxu0 0.0
  %5213 = vmatmul.mubr.f32.gmra.mrb[0].mxu0 %v4858
  %v5214 = vpop.f32.mrb[0].mxu0
  %v5215 = vadd.f32 0.0, %v5214
  %v5216 = vpop.f32.mrb[0].mxu0
  %5217 = vmatprep.mubr.f32.mxu0 0.0
  %5218 = vmatmul.mubr.f32.gmra.mrb[0].mxu0 %v4861
  %v5219 = vpop.f32.mrb[0].mxu0
  %v5220 = vadd.f32 0.0, %v5219
  %v5221 = vpop.f32.mrb[0].mxu0
  %5222 = vmatprep.mubr.f32.mxu0 0.0
  %5223 = vmatmul.mubr.f32.gmra.mrb[0].mxu0 %v4864
  %v5224 = vpop.f32.mrb[0].mxu0
  %v5225 = vadd.f32 0.0, %v5224
  %v5226 = vpop.f32.mrb[0].mxu0
  %5227 = vmatprep.mubr.f32.mxu0 0.0
  %5228 = vmatmul.mubr.f32.gmra.mrb[0].mxu0 %v4867
  %v5229 = vpop.f32.mrb[0].mxu0
  %v5230 = vadd.f32 0.0, %v5229
  %v5231 = vpop.f32.mrb[0].mxu0
  %5232 = vmatprep.mubr.f32.mxu0 0.0
  %5233 = vmatmul.mubr.f32.gmra.mrb[0].mxu0 %v4870
  %v5234 = vpop.f32.mrb[0].mxu0
  %v5235 = vadd.f32 0.0, %v5234
  %v5236 = vpop.f32.mrb[0].mxu0
  %5237 = vmatprep.mubr.f32.mxu0 0.0
  %5238 = vmatmul.mubr.f32.gmra.mrb[0].mxu0 %v4873
  %v5239 = vpop.f32.mrb[0].mxu0
  %v5240 = vadd.f32 0.0, %v5239
  %v5241 = vpop.f32.mrb[0].mxu0
  %5242 = vmatprep.mubr.f32.mxu0 0.0
  %5243 = vmatmul.mubr.f32.gmra.mrb[0].mxu0 %v4876
  %v5244 = vpop.f32.mrb[0].mxu0
  %v5245 = vadd.f32 0.0, %v5244
  %v5246 = vpop.f32.mrb[0].mxu0
  %5247 = vmatprep.mubr.f32.mxu0 0.0
  %5248 = vmatmul.mubr.f32.gmra.mrb[0].mxu0 %v4879
  %v5249 = vpop.f32.mrb[0].mxu0
  %v5250 = vadd.f32 0.0, %v5249
  %v5251 = vpop.f32.mrb[0].mxu0
  %5252 = vmatprep.mubr.f32.mxu0 0.0
  %5253 = vmatmul.mubr.f32.gmra.mrb[0].mxu0 %v4882
  %v5254 = vpop.f32.mrb[0].mxu0
  %v5255 = vadd.f32 0.0, %v5254
  %v5256 = vpop.f32.mrb[0].mxu0
  %5257 = vmatprep.mubr.f32.mxu0 0.0
  %5258 = vmatmul.mubr.f32.gmra.mrb[0].mxu0 %v4885
  %v5259 = vpop.f32.mrb[0].mxu0
  %v5260 = vadd.f32 0.0, %v5259
  %v5261 = vpop.f32.mrb[0].mxu0
  %5262 = vmatprep.mubr.f32.mxu0 0.0
  %5263 = vmatmul.mubr.f32.gmra.mrb[0].mxu0 %v4888
  %v5264 = vpop.f32.mrb[0].mxu0
  %v5265 = vadd.f32 0.0, %v5264
  %v5266 = vpop.f32.mrb[0].mxu0
  %5267 = vmatprep.mubr.f32.mxu0 0.0
  %5268 = vmatmul.mubr.f32.gmra.mrb[0].mxu0 %v4891
  %v5269 = vpop.f32.mrb[0].mxu0
  %v5270 = vadd.f32 0.0, %v5269
  %v5271 = vpop.f32.mrb[0].mxu0
  %5272 = vmatprep.mubr.f32.mxu0 0.0
  %5273 = vmatmul.mubr.f32.gmra.mrb[0].mxu0 %v4894
  %v5274 = vpop.f32.mrb[0].mxu0
  %v5275 = vadd.f32 0.0, %v5274
  %v5276 = vpop.f32.mrb[0].mxu0
  %5277 = vmatprep.mubr.f32.mxu0 0.0
  %5278 = vmatmul.mubr.f32.gmra.mrb[0].mxu0 %v4897
  %v5279 = vpop.f32.mrb[0].mxu0
  %v5280 = vadd.f32 0.0, %v5279
  %v5281 = vpop.f32.mrb[0].mxu0
  %5282 = vmatprep.mubr.f32.mxu0 0.0
  %5283 = vmatmul.mubr.f32.gmra.mrb[0].mxu0 %v4900
  %v5284 = vpop.f32.mrb[0].mxu0
  %v5285 = vadd.f32 0.0, %v5284
  %v5286 = vpop.f32.mrb[0].mxu0
  %5287 = vmatprep.mubr.f32.mxu0 0.0
  %5288 = vmatmul.mubr.f32.gmra.mrb[0].mxu0 %v4903
  %v5289 = vpop.f32.mrb[0].mxu0
  %v5290 = vadd.f32 0.0, %v5289
  %v5291 = vpop.f32.mrb[0].mxu0
  %5292 = vdwg.mxu0
  %v5293 = vadd.f32 %v4583, %v4975
  %v5294 = vadd.f32 %v4584, %v4980
  %v5295 = vadd.f32 %v4585, %v4985
  %v5296 = vadd.f32 %v4586, %v4990
  %v5297 = vadd.f32 %v4587, %v4995
  %v5298 = vadd.f32 %v4588, %v5000
  %v5299 = vadd.f32 %v4589, %v5005
  %v5300 = vadd.f32 %v4590, %v5010
  %v5301 = vadd.f32 %v4591, %v5015
  %v5302 = vadd.f32 %v4592, %v5020
  %v5303 = vadd.f32 %v4593, %v5025
  %v5304 = vadd.f32 %v4594, %v5030
  %v5305 = vadd.f32 %v4595, %v5035
  %v5306 = vadd.f32 %v4596, %v5040
  %v5307 = vadd.f32 %v4597, %v5045
  %v5308 = vadd.f32 %v4598, %v5050
  %v5309 = vadd.f32 %v4599, %v5055
  %v5310 = vadd.f32 %v4600, %v5060
  %v5311 = vadd.f32 %v4601, %v5065
  %v5312 = vadd.f32 %v4602, %v5070
  %v5313 = vadd.f32 %v4603, %v5075
  %v5314 = vadd.f32 %v4604, %v5080
  %v5315 = vadd.f32 %v4605, %v5085
  %v5316 = vadd.f32 %v4606, %v5090
  %v5317 = vadd.f32 %v4607, %v5095
  %v5318 = vadd.f32 %v4608, %v5100
  %v5319 = vadd.f32 %v4609, %v5105
  %v5320 = vadd.f32 %v4610, %v5110
  %v5321 = vadd.f32 %v4611, %v5115
  %v5322 = vadd.f32 %v4612, %v5120
  %v5323 = vadd.f32 %v4613, %v5125
  %v5324 = vadd.f32 %v4614, %v5130
  %v5325 = vadd.f32 %v4615, %v5135
  %v5326 = vadd.f32 %v4616, %v5140
  %v5327 = vadd.f32 %v4617, %v5145
  %v5328 = vadd.f32 %v4618, %v5150
  %v5329 = vadd.f32 %v4619, %v5155
  %v5330 = vadd.f32 %v4620, %v5160
  %v5331 = vadd.f32 %v4621, %v5165
  %v5332 = vadd.f32 %v4622, %v5170
  %v5333 = vadd.f32 %v4623, %v5175
  %v5334 = vadd.f32 %v4624, %v5180
  %v5335 = vadd.f32 %v4625, %v5185
  %v5336 = vadd.f32 %v4626, %v5190
  %v5337 = vadd.f32 %v4627, %v5195
  %v5338 = vadd.f32 %v4628, %v5200
  %v5339 = vadd.f32 %v4629, %v5205
  %v5340 = vadd.f32 %v4630, %v5210
  %v5341 = vadd.f32 %v4631, %v5215
  %v5342 = vadd.f32 %v4632, %v5220
  %v5343 = vadd.f32 %v4633, %v5225
  %v5344 = vadd.f32 %v4634, %v5230
  %v5345 = vadd.f32 %v4635, %v5235
  %v5346 = vadd.f32 %v4636, %v5240
  %v5347 = vadd.f32 %v4637, %v5245
  %v5348 = vadd.f32 %v4638, %v5250
  %v5349 = vadd.f32 %v4639, %v5255
  %v5350 = vadd.f32 %v4640, %v5260
  %v5351 = vadd.f32 %v4641, %v5265
  %v5352 = vadd.f32 %v4642, %v5270
  %v5353 = vadd.f32 %v4643, %v5275
  %v5354 = vadd.f32 %v4644, %v5280
  %v5355 = vadd.f32 %v4645, %v5285
  %v5356 = vadd.f32 %v4646, %v5290
  %s5357 = scalar_lea.vmem [#allocation2], 64
  %v5358 = vld [vmem:[%s5357 + $0x7] sm:$0xff]
  %v5359 = vld [vmem:[%s5357 + $0xf] sm:$0xff]
  %v5360 = vld [vmem:[%s5357 + $0x27] sm:$0xff]
  %v5361 = vld [vmem:[%s5357 + $0x2f] sm:$0xff]
  %v5362 = vld [vmem:[%s5357 + $0x47] sm:$0xff]
  %v5363 = vld [vmem:[%s5357 + $0x4f] sm:$0xff]
  %v5364 = vld [vmem:[%s5357 + $0x67] sm:$0xff]
  %v5365 = vld [vmem:[%s5357 + $0x6f] sm:$0xff]
  %v5366 = vld [vmem:[%s5357 + $0x87] sm:$0xff]
  %v5367 = vld [vmem:[%s5357 + $0x8f] sm:$0xff]
  %v5368 = vld [vmem:[%s5357 + $0xa7] sm:$0xff]
  %v5369 = vld [vmem:[%s5357 + $0xaf] sm:$0xff]
  %v5370 = vld [vmem:[%s5357 + $0xc7] sm:$0xff]
  %v5371 = vld [vmem:[%s5357 + $0xcf] sm:$0xff]
  %v5372 = vld [vmem:[%s5357 + $0xe7] sm:$0xff]
  %v5373 = vld [vmem:[%s5357 + $0xef] sm:$0xff]
  %v5374 = vld [vmem:[%s5357 + $0x107] sm:$0xff]
  %v5375 = vld [vmem:[%s5357 + $0x10f] sm:$0xff]
  %v5376 = vld [vmem:[%s5357 + $0x127] sm:$0xff]
  %v5377 = vld [vmem:[%s5357 + $0x12f] sm:$0xff]
  %v5378 = vld [vmem:[%s5357 + $0x147] sm:$0xff]
  %v5379 = vld [vmem:[%s5357 + $0x14f] sm:$0xff]
  %v5380 = vld [vmem:[%s5357 + $0x167] sm:$0xff]
  %v5381 = vld [vmem:[%s5357 + $0x16f] sm:$0xff]
  %v5382 = vld [vmem:[%s5357 + $0x187] sm:$0xff]
  %v5383 = vld [vmem:[%s5357 + $0x18f] sm:$0xff]
  %v5384 = vld [vmem:[%s5357 + $0x1a7] sm:$0xff]
  %v5385 = vld [vmem:[%s5357 + $0x1af] sm:$0xff]
  %v5386 = vld [vmem:[%s5357 + $0x1c7] sm:$0xff]
  %v5387 = vld [vmem:[%s5357 + $0x1cf] sm:$0xff]
  %v5388 = vld [vmem:[%s5357 + $0x1e7] sm:$0xff]
  %v5389 = vld [vmem:[%s5357 + $0x1ef] sm:$0xff]
  %v5390 = vld [vmem:[%s5357 + $0x247] sm:$0xff]
  %v5391 = vld [vmem:[%s5357 + $0x24f] sm:$0xff]
  %v5392 = vld [vmem:[%s5357 + $0x267] sm:$0xff]
  %v5393 = vld [vmem:[%s5357 + $0x26f] sm:$0xff]
  %v5394 = vld [vmem:[%s5357 + $0x287] sm:$0xff]
  %v5395 = vld [vmem:[%s5357 + $0x28f] sm:$0xff]
  %v5396 = vld [vmem:[%s5357 + $0x2a7] sm:$0xff]
  %v5397 = vld [vmem:[%s5357 + $0x2af] sm:$0xff]
  %v5398 = vld [vmem:[%s5357 + $0x2c7] sm:$0xff]
  %v5399 = vld [vmem:[%s5357 + $0x2cf] sm:$0xff]
  %v5400 = vld [vmem:[%s5357 + $0x2e7] sm:$0xff]
  %v5401 = vld [vmem:[%s5357 + $0x2ef] sm:$0xff]
  %v5402 = vld [vmem:[%s5357 + $0x307] sm:$0xff]
  %v5403 = vld [vmem:[%s5357 + $0x30f] sm:$0xff]
  %v5404 = vld [vmem:[%s5357 + $0x327] sm:$0xff]
  %v5405 = vld [vmem:[%s5357 + $0x32f] sm:$0xff]
  %v5406 = vld [vmem:[%s5357 + $0x347] sm:$0xff]
  %v5407 = vld [vmem:[%s5357 + $0x34f] sm:$0xff]
  %v5408 = vld [vmem:[%s5357 + $0x367] sm:$0xff]
  %v5409 = vld [vmem:[%s5357 + $0x36f] sm:$0xff]
  %v5410 = vld [vmem:[%s5357 + $0x387] sm:$0xff]
  %v5411 = vld [vmem:[%s5357 + $0x38f] sm:$0xff]
  %v5412 = vld [vmem:[%s5357 + $0x3a7] sm:$0xff]
  %v5413 = vld [vmem:[%s5357 + $0x3af] sm:$0xff]
  %v5414 = vld [vmem:[%s5357 + $0x3c7] sm:$0xff]
  %v5415 = vld [vmem:[%s5357 + $0x3cf] sm:$0xff]
  %v5416 = vld [vmem:[%s5357 + $0x3e7] sm:$0xff]
  %v5417 = vld [vmem:[%s5357 + $0x3ef] sm:$0xff]
  %v5418 = vld [vmem:[%s5357 + $0x407] sm:$0xff]
  %v5419 = vld [vmem:[%s5357 + $0x40f] sm:$0xff]
  %v5420 = vld [vmem:[%s5357 + $0x427] sm:$0xff]
  %v5421 = vld [vmem:[%s5357 + $0x42f] sm:$0xff]
  %s5422 = scalar_lea.vmem %s5, 12
  %v5423 = vld [vmem:[%s5422] sm:$0x3]
  %v5425 = vsel %vm1069, %v5358, 0
  %v5428 = vsel %vm1069, %v5359, 0
  %v5431 = vsel %vm1069, %v5360, 0
  %v5434 = vsel %vm1069, %v5361, 0
  %v5437 = vsel %vm1069, %v5362, 0
  %v5440 = vsel %vm1069, %v5363, 0
  %v5443 = vsel %vm1069, %v5364, 0
  %v5446 = vsel %vm1069, %v5365, 0
  %v5449 = vsel %vm1069, %v5366, 0
  %v5452 = vsel %vm1069, %v5367, 0
  %v5455 = vsel %vm1069, %v5368, 0
  %v5458 = vsel %vm1069, %v5369, 0
  %v5461 = vsel %vm1069, %v5370, 0
  %v5464 = vsel %vm1069, %v5371, 0
  %v5467 = vsel %vm1069, %v5372, 0
  %v5470 = vsel %vm1069, %v5373, 0
  %v5473 = vsel %vm1069, %v5374, 0
  %v5476 = vsel %vm1069, %v5375, 0
  %v5479 = vsel %vm1069, %v5376, 0
  %v5482 = vsel %vm1069, %v5377, 0
  %v5485 = vsel %vm1069, %v5378, 0
  %v5488 = vsel %vm1069, %v5379, 0
  %v5491 = vsel %vm1069, %v5380, 0
  %v5494 = vsel %vm1069, %v5381, 0
  %v5497 = vsel %vm1069, %v5382, 0
  %v5500 = vsel %vm1069, %v5383, 0
  %v5503 = vsel %vm1069, %v5384, 0
  %v5506 = vsel %vm1069, %v5385, 0
  %v5509 = vsel %vm1069, %v5386, 0
  %v5512 = vsel %vm1069, %v5387, 0
  %v5515 = vsel %vm1069, %v5388, 0
  %v5518 = vsel %vm1069, %v5389, 0
  %v5521 = vsel %vm1069, %v5390, 0
  %v5524 = vsel %vm1069, %v5391, 0
  %v5527 = vsel %vm1069, %v5392, 0
  %v5530 = vsel %vm1069, %v5393, 0
  %v5533 = vsel %vm1069, %v5394, 0
  %v5536 = vsel %vm1069, %v5395, 0
  %v5539 = vsel %vm1069, %v5396, 0
  %v5542 = vsel %vm1069, %v5397, 0
  %v5545 = vsel %vm1069, %v5398, 0
  %v5548 = vsel %vm1069, %v5399, 0
  %v5551 = vsel %vm1069, %v5400, 0
  %v5554 = vsel %vm1069, %v5401, 0
  %v5557 = vsel %vm1069, %v5402, 0
  %v5560 = vsel %vm1069, %v5403, 0
  %v5563 = vsel %vm1069, %v5404, 0
  %v5566 = vsel %vm1069, %v5405, 0
  %v5569 = vsel %vm1069, %v5406, 0
  %v5572 = vsel %vm1069, %v5407, 0
  %v5575 = vsel %vm1069, %v5408, 0
  %v5578 = vsel %vm1069, %v5409, 0
  %v5581 = vsel %vm1069, %v5410, 0
  %v5584 = vsel %vm1069, %v5411, 0
  %v5587 = vsel %vm1069, %v5412, 0
  %v5590 = vsel %vm1069, %v5413, 0
  %v5593 = vsel %vm1069, %v5414, 0
  %v5596 = vsel %vm1069, %v5415, 0
  %v5599 = vsel %vm1069, %v5416, 0
  %v5602 = vsel %vm1069, %v5417, 0
  %v5605 = vsel %vm1069, %v5418, 0
  %v5608 = vsel %vm1069, %v5419, 0
  %v5611 = vsel %vm1069, %v5420, 0
  %v5614 = vsel %vm1069, %v5421, 0
  %v5617 = vsel %vm1548, %v5423, 0
  %5619 = vmatprep.subr.mxu0 0.0
  %5620 = vmatpush1.msra.mxu0 %v5617
  %5621 = vmatprep.subr.mxu0 0.0
  %5622 = vmatpush1.msra.mxu0 0.0
  %5623 = vmatprep.subr.mxu0 0.0
  %5624 = vmatpush1.msra.mxu0 0.0
  %5625 = vmatprep.subr.mxu0 0.0
  %5626 = vmatpush1.msra.mxu0 0.0
  %5627 = vmatprep.subr.mxu0 0.0
  %5628 = vmatpush1.msra.mxu0 0.0
  %5629 = vmatprep.subr.mxu0 0.0
  %5630 = vmatpush1.msra.mxu0 0.0
  %5631 = vmatprep.subr.mxu0 0.0
  %5632 = vmatpush1.msra.mxu0 0.0
  %5633 = vmatprep.subr.mxu0 0.0
  %5634 = vmatpush1.msra.mxu0 0.0
  %5635 = vmatprep.subr.mxu0 0.0
  %5636 = vmatpush1.msra.mxu0 0.0
  %5637 = vmatprep.subr.mxu0 0.0
  %5638 = vmatpush1.msra.mxu0 0.0
  %5639 = vmatprep.subr.mxu0 0.0
  %5640 = vmatpush1.msra.mxu0 0.0
  %5641 = vmatprep.subr.mxu0 0.0
  %5642 = vmatpush1.msra.mxu0 0.0
  %5643 = vmatprep.subr.mxu0 0.0
  %5644 = vmatpush1.msra.mxu0 0.0
  %5645 = vmatprep.subr.mxu0 0.0
  %5646 = vmatpush1.msra.mxu0 0.0
  %5647 = vmatprep.subr.mxu0 0.0
  %5648 = vmatpush1.msra.mxu0 0.0
  %5649 = vmatprep.subr.mxu0 0.0
  %5650 = vmatpush1.msra.mxu0 0.0
  %5651 = vmatprep.subr.mxu0 0.0
  %5652 = vmatpush1.msra.mxu0 0.0
  %5653 = vmatprep.subr.mxu0 0.0
  %5654 = vmatpush1.msra.mxu0 0.0
  %5655 = vmatprep.subr.mxu0 0.0
  %5656 = vmatpush1.msra.mxu0 0.0
  %5657 = vmatprep.subr.mxu0 0.0
  %5658 = vmatpush1.msra.mxu0 0.0
  %5659 = vmatprep.subr.mxu0 0.0
  %5660 = vmatpush1.msra.mxu0 0.0
  %5661 = vmatprep.subr.mxu0 0.0
  %5662 = vmatpush1.msra.mxu0 0.0
  %5663 = vmatprep.subr.mxu0 0.0
  %5664 = vmatpush1.msra.mxu0 0.0
  %5665 = vmatprep.subr.mxu0 0.0
  %5666 = vmatpush1.msra.mxu0 0.0
  %5667 = vmatprep.subr.mxu0 0.0
  %5668 = vmatpush1.msra.mxu0 0.0
  %5669 = vmatprep.subr.mxu0 0.0
  %5670 = vmatpush1.msra.mxu0 0.0
  %5671 = vmatprep.subr.mxu0 0.0
  %5672 = vmatpush1.msra.mxu0 0.0
  %5673 = vmatprep.subr.mxu0 0.0
  %5674 = vmatpush1.msra.mxu0 0.0
  %5675 = vmatprep.subr.mxu0 0.0
  %5676 = vmatpush1.msra.mxu0 0.0
  %5677 = vmatprep.subr.mxu0 0.0
  %5678 = vmatpush1.msra.mxu0 0.0
  %5679 = vmatprep.subr.mxu0 0.0
  %5680 = vmatpush1.msra.mxu0 0.0
  %5681 = vmatprep.subr.mxu0 0.0
  %5682 = vmatpush1.msra.mxu0 0.0
  %5683 = vmatprep.mubr.f32.mxu0 0.0
  %5684 = vmatmul.mubr.f32.gmra.mrb[0].mxu0 %v5425
  %v5685 = vpop.f32.mrb[0].mxu0
  %v5686 = vadd.f32 0.0, %v5685
  %v5687 = vpop.f32.mrb[0].mxu0
  %5688 = vmatprep.mubr.f32.mxu0 0.0
  %5689 = vmatmul.mubr.f32.gmra.mrb[0].mxu0 %v5428
  %v5690 = vpop.f32.mrb[0].mxu0
  %v5691 = vadd.f32 0.0, %v5690
  %v5692 = vpop.f32.mrb[0].mxu0
  %5693 = vmatprep.mubr.f32.mxu0 0.0
  %5694 = vmatmul.mubr.f32.gmra.mrb[0].mxu0 %v5431
  %v5695 = vpop.f32.mrb[0].mxu0
  %v5696 = vadd.f32 0.0, %v5695
  %v5697 = vpop.f32.mrb[0].mxu0
  %5698 = vmatprep.mubr.f32.mxu0 0.0
  %5699 = vmatmul.mubr.f32.gmra.mrb[0].mxu0 %v5434
  %v5700 = vpop.f32.mrb[0].mxu0
  %v5701 = vadd.f32 0.0, %v5700
  %v5702 = vpop.f32.mrb[0].mxu0
  %5703 = vmatprep.mubr.f32.mxu0 0.0
  %5704 = vmatmul.mubr.f32.gmra.mrb[0].mxu0 %v5437
  %v5705 = vpop.f32.mrb[0].mxu0
  %v5706 = vadd.f32 0.0, %v5705
  %v5707 = vpop.f32.mrb[0].mxu0
  %5708 = vmatprep.mubr.f32.mxu0 0.0
  %5709 = vmatmul.mubr.f32.gmra.mrb[0].mxu0 %v5440
  %v5710 = vpop.f32.mrb[0].mxu0
  %v5711 = vadd.f32 0.0, %v5710
  %v5712 = vpop.f32.mrb[0].mxu0
  %5713 = vmatprep.mubr.f32.mxu0 0.0
  %5714 = vmatmul.mubr.f32.gmra.mrb[0].mxu0 %v5443
  %v5715 = vpop.f32.mrb[0].mxu0
  %v5716 = vadd.f32 0.0, %v5715
  %v5717 = vpop.f32.mrb[0].mxu0
  %5718 = vmatprep.mubr.f32.mxu0 0.0
  %5719 = vmatmul.mubr.f32.gmra.mrb[0].mxu0 %v5446
  %v5720 = vpop.f32.mrb[0].mxu0
  %v5721 = vadd.f32 0.0, %v5720
  %v5722 = vpop.f32.mrb[0].mxu0
  %5723 = vmatprep.mubr.f32.mxu0 0.0
  %5724 = vmatmul.mubr.f32.gmra.mrb[0].mxu0 %v5449
  %v5725 = vpop.f32.mrb[0].mxu0
  %v5726 = vadd.f32 0.0, %v5725
  %v5727 = vpop.f32.mrb[0].mxu0
  %5728 = vmatprep.mubr.f32.mxu0 0.0
  %5729 = vmatmul.mubr.f32.gmra.mrb[0].mxu0 %v5452
  %v5730 = vpop.f32.mrb[0].mxu0
  %v5731 = vadd.f32 0.0, %v5730
  %v5732 = vpop.f32.mrb[0].mxu0
  %5733 = vmatprep.mubr.f32.mxu0 0.0
  %5734 = vmatmul.mubr.f32.gmra.mrb[0].mxu0 %v5455
  %v5735 = vpop.f32.mrb[0].mxu0
  %v5736 = vadd.f32 0.0, %v5735
  %v5737 = vpop.f32.mrb[0].mxu0
  %5738 = vmatprep.mubr.f32.mxu0 0.0
  %5739 = vmatmul.mubr.f32.gmra.mrb[0].mxu0 %v5458
  %v5740 = vpop.f32.mrb[0].mxu0
  %v5741 = vadd.f32 0.0, %v5740
  %v5742 = vpop.f32.mrb[0].mxu0
  %5743 = vmatprep.mubr.f32.mxu0 0.0
  %5744 = vmatmul.mubr.f32.gmra.mrb[0].mxu0 %v5461
  %v5745 = vpop.f32.mrb[0].mxu0
  %v5746 = vadd.f32 0.0, %v5745
  %v5747 = vpop.f32.mrb[0].mxu0
  %5748 = vmatprep.mubr.f32.mxu0 0.0
  %5749 = vmatmul.mubr.f32.gmra.mrb[0].mxu0 %v5464
  %v5750 = vpop.f32.mrb[0].mxu0
  %v5751 = vadd.f32 0.0, %v5750
  %v5752 = vpop.f32.mrb[0].mxu0
  %5753 = vmatprep.mubr.f32.mxu0 0.0
  %5754 = vmatmul.mubr.f32.gmra.mrb[0].mxu0 %v5467
  %v5755 = vpop.f32.mrb[0].mxu0
  %v5756 = vadd.f32 0.0, %v5755
  %v5757 = vpop.f32.mrb[0].mxu0
  %5758 = vmatprep.mubr.f32.mxu0 0.0
  %5759 = vmatmul.mubr.f32.gmra.mrb[0].mxu0 %v5470
  %v5760 = vpop.f32.mrb[0].mxu0
  %v5761 = vadd.f32 0.0, %v5760
  %v5762 = vpop.f32.mrb[0].mxu0
  %5763 = vmatprep.mubr.f32.mxu0 0.0
  %5764 = vmatmul.mubr.f32.gmra.mrb[0].mxu0 %v5473
  %v5765 = vpop.f32.mrb[0].mxu0
  %v5766 = vadd.f32 0.0, %v5765
  %v5767 = vpop.f32.mrb[0].mxu0
  %5768 = vmatprep.mubr.f32.mxu0 0.0
  %5769 = vmatmul.mubr.f32.gmra.mrb[0].mxu0 %v5476
  %v5770 = vpop.f32.mrb[0].mxu0
  %v5771 = vadd.f32 0.0, %v5770
  %v5772 = vpop.f32.mrb[0].mxu0
  %5773 = vmatprep.mubr.f32.mxu0 0.0
  %5774 = vmatmul.mubr.f32.gmra.mrb[0].mxu0 %v5479
  %v5775 = vpop.f32.mrb[0].mxu0
  %v5776 = vadd.f32 0.0, %v5775
  %v5777 = vpop.f32.mrb[0].mxu0
  %5778 = vmatprep.mubr.f32.mxu0 0.0
  %5779 = vmatmul.mubr.f32.gmra.mrb[0].mxu0 %v5482
  %v5780 = vpop.f32.mrb[0].mxu0
  %v5781 = vadd.f32 0.0, %v5780
  %v5782 = vpop.f32.mrb[0].mxu0
  %5783 = vmatprep.mubr.f32.mxu0 0.0
  %5784 = vmatmul.mubr.f32.gmra.mrb[0].mxu0 %v5485
  %v5785 = vpop.f32.mrb[0].mxu0
  %v5786 = vadd.f32 0.0, %v5785
  %v5787 = vpop.f32.mrb[0].mxu0
  %5788 = vmatprep.mubr.f32.mxu0 0.0
  %5789 = vmatmul.mubr.f32.gmra.mrb[0].mxu0 %v5488
  %v5790 = vpop.f32.mrb[0].mxu0
  %v5791 = vadd.f32 0.0, %v5790
  %v5792 = vpop.f32.mrb[0].mxu0
  %5793 = vmatprep.mubr.f32.mxu0 0.0
  %5794 = vmatmul.mubr.f32.gmra.mrb[0].mxu0 %v5491
  %v5795 = vpop.f32.mrb[0].mxu0
  %v5796 = vadd.f32 0.0, %v5795
  %v5797 = vpop.f32.mrb[0].mxu0
  %5798 = vmatprep.mubr.f32.mxu0 0.0
  %5799 = vmatmul.mubr.f32.gmra.mrb[0].mxu0 %v5494
  %v5800 = vpop.f32.mrb[0].mxu0
  %v5801 = vadd.f32 0.0, %v5800
  %v5802 = vpop.f32.mrb[0].mxu0
  %5803 = vmatprep.mubr.f32.mxu0 0.0
  %5804 = vmatmul.mubr.f32.gmra.mrb[0].mxu0 %v5497
  %v5805 = vpop.f32.mrb[0].mxu0
  %v5806 = vadd.f32 0.0, %v5805
  %v5807 = vpop.f32.mrb[0].mxu0
  %5808 = vmatprep.mubr.f32.mxu0 0.0
  %5809 = vmatmul.mubr.f32.gmra.mrb[0].mxu0 %v5500
  %v5810 = vpop.f32.mrb[0].mxu0
  %v5811 = vadd.f32 0.0, %v5810
  %v5812 = vpop.f32.mrb[0].mxu0
  %5813 = vmatprep.mubr.f32.mxu0 0.0
  %5814 = vmatmul.mubr.f32.gmra.mrb[0].mxu0 %v5503
  %v5815 = vpop.f32.mrb[0].mxu0
  %v5816 = vadd.f32 0.0, %v5815
  %v5817 = vpop.f32.mrb[0].mxu0
  %5818 = vmatprep.mubr.f32.mxu0 0.0
  %5819 = vmatmul.mubr.f32.gmra.mrb[0].mxu0 %v5506
  %v5820 = vpop.f32.mrb[0].mxu0
  %v5821 = vadd.f32 0.0, %v5820
  %v5822 = vpop.f32.mrb[0].mxu0
  %5823 = vmatprep.mubr.f32.mxu0 0.0
  %5824 = vmatmul.mubr.f32.gmra.mrb[0].mxu0 %v5509
  %v5825 = vpop.f32.mrb[0].mxu0
  %v5826 = vadd.f32 0.0, %v5825
  %v5827 = vpop.f32.mrb[0].mxu0
  %5828 = vmatprep.mubr.f32.mxu0 0.0
  %5829 = vmatmul.mubr.f32.gmra.mrb[0].mxu0 %v5512
  %v5830 = vpop.f32.mrb[0].mxu0
  %v5831 = vadd.f32 0.0, %v5830
  %v5832 = vpop.f32.mrb[0].mxu0
  %5833 = vmatprep.mubr.f32.mxu0 0.0
  %5834 = vmatmul.mubr.f32.gmra.mrb[0].mxu0 %v5515
  %v5835 = vpop.f32.mrb[0].mxu0
  %v5836 = vadd.f32 0.0, %v5835
  %v5837 = vpop.f32.mrb[0].mxu0
  %5838 = vmatprep.mubr.f32.mxu0 0.0
  %5839 = vmatmul.mubr.f32.gmra.mrb[0].mxu0 %v5518
  %v5840 = vpop.f32.mrb[0].mxu0
  %v5841 = vadd.f32 0.0, %v5840
  %v5842 = vpop.f32.mrb[0].mxu0
  %5843 = vmatprep.mubr.f32.mxu0 0.0
  %5844 = vmatmul.mubr.f32.gmra.mrb[0].mxu0 %v5521
  %v5845 = vpop.f32.mrb[0].mxu0
  %v5846 = vadd.f32 0.0, %v5845
  %v5847 = vpop.f32.mrb[0].mxu0
  %5848 = vmatprep.mubr.f32.mxu0 0.0
  %5849 = vmatmul.mubr.f32.gmra.mrb[0].mxu0 %v5524
  %v5850 = vpop.f32.mrb[0].mxu0
  %v5851 = vadd.f32 0.0, %v5850
  %v5852 = vpop.f32.mrb[0].mxu0
  %5853 = vmatprep.mubr.f32.mxu0 0.0
  %5854 = vmatmul.mubr.f32.gmra.mrb[0].mxu0 %v5527
  %v5855 = vpop.f32.mrb[0].mxu0
  %v5856 = vadd.f32 0.0, %v5855
  %v5857 = vpop.f32.mrb[0].mxu0
  %5858 = vmatprep.mubr.f32.mxu0 0.0
  %5859 = vmatmul.mubr.f32.gmra.mrb[0].mxu0 %v5530
  %v5860 = vpop.f32.mrb[0].mxu0
  %v5861 = vadd.f32 0.0, %v5860
  %v5862 = vpop.f32.mrb[0].mxu0
  %5863 = vmatprep.mubr.f32.mxu0 0.0
  %5864 = vmatmul.mubr.f32.gmra.mrb[0].mxu0 %v5533
  %v5865 = vpop.f32.mrb[0].mxu0
  %v5866 = vadd.f32 0.0, %v5865
  %v5867 = vpop.f32.mrb[0].mxu0
  %5868 = vmatprep.mubr.f32.mxu0 0.0
  %5869 = vmatmul.mubr.f32.gmra.mrb[0].mxu0 %v5536
  %v5870 = vpop.f32.mrb[0].mxu0
  %v5871 = vadd.f32 0.0, %v5870
  %v5872 = vpop.f32.mrb[0].mxu0
  %5873 = vmatprep.mubr.f32.mxu0 0.0
  %5874 = vmatmul.mubr.f32.gmra.mrb[0].mxu0 %v5539
  %v5875 = vpop.f32.mrb[0].mxu0
  %v5876 = vadd.f32 0.0, %v5875
  %v5877 = vpop.f32.mrb[0].mxu0
  %5878 = vmatprep.mubr.f32.mxu0 0.0
  %5879 = vmatmul.mubr.f32.gmra.mrb[0].mxu0 %v5542
  %v5880 = vpop.f32.mrb[0].mxu0
  %v5881 = vadd.f32 0.0, %v5880
  %v5882 = vpop.f32.mrb[0].mxu0
  %5883 = vmatprep.mubr.f32.mxu0 0.0
  %5884 = vmatmul.mubr.f32.gmra.mrb[0].mxu0 %v5545
  %v5885 = vpop.f32.mrb[0].mxu0
  %v5886 = vadd.f32 0.0, %v5885
  %v5887 = vpop.f32.mrb[0].mxu0
  %5888 = vmatprep.mubr.f32.mxu0 0.0
  %5889 = vmatmul.mubr.f32.gmra.mrb[0].mxu0 %v5548
  %v5890 = vpop.f32.mrb[0].mxu0
  %v5891 = vadd.f32 0.0, %v5890
  %v5892 = vpop.f32.mrb[0].mxu0
  %5893 = vmatprep.mubr.f32.mxu0 0.0
  %5894 = vmatmul.mubr.f32.gmra.mrb[0].mxu0 %v5551
  %v5895 = vpop.f32.mrb[0].mxu0
  %v5896 = vadd.f32 0.0, %v5895
  %v5897 = vpop.f32.mrb[0].mxu0
  %5898 = vmatprep.mubr.f32.mxu0 0.0
  %5899 = vmatmul.mubr.f32.gmra.mrb[0].mxu0 %v5554
  %v5900 = vpop.f32.mrb[0].mxu0
  %v5901 = vadd.f32 0.0, %v5900
  %v5902 = vpop.f32.mrb[0].mxu0
  %5903 = vmatprep.mubr.f32.mxu0 0.0
  %5904 = vmatmul.mubr.f32.gmra.mrb[0].mxu0 %v5557
  %v5905 = vpop.f32.mrb[0].mxu0
  %v5906 = vadd.f32 0.0, %v5905
  %v5907 = vpop.f32.mrb[0].mxu0
  %5908 = vmatprep.mubr.f32.mxu0 0.0
  %5909 = vmatmul.mubr.f32.gmra.mrb[0].mxu0 %v5560
  %v5910 = vpop.f32.mrb[0].mxu0
  %v5911 = vadd.f32 0.0, %v5910
  %v5912 = vpop.f32.mrb[0].mxu0
  %5913 = vmatprep.mubr.f32.mxu0 0.0
  %5914 = vmatmul.mubr.f32.gmra.mrb[0].mxu0 %v5563
  %v5915 = vpop.f32.mrb[0].mxu0
  %v5916 = vadd.f32 0.0, %v5915
  %v5917 = vpop.f32.mrb[0].mxu0
  %5918 = vmatprep.mubr.f32.mxu0 0.0
  %5919 = vmatmul.mubr.f32.gmra.mrb[0].mxu0 %v5566
  %v5920 = vpop.f32.mrb[0].mxu0
  %v5921 = vadd.f32 0.0, %v5920
  %v5922 = vpop.f32.mrb[0].mxu0
  %5923 = vmatprep.mubr.f32.mxu0 0.0
  %5924 = vmatmul.mubr.f32.gmra.mrb[0].mxu0 %v5569
  %v5925 = vpop.f32.mrb[0].mxu0
  %v5926 = vadd.f32 0.0, %v5925
  %v5927 = vpop.f32.mrb[0].mxu0
  %5928 = vmatprep.mubr.f32.mxu0 0.0
  %5929 = vmatmul.mubr.f32.gmra.mrb[0].mxu0 %v5572
  %v5930 = vpop.f32.mrb[0].mxu0
  %v5931 = vadd.f32 0.0, %v5930
  %v5932 = vpop.f32.mrb[0].mxu0
  %5933 = vmatprep.mubr.f32.mxu0 0.0
  %5934 = vmatmul.mubr.f32.gmra.mrb[0].mxu0 %v5575
  %v5935 = vpop.f32.mrb[0].mxu0
  %v5936 = vadd.f32 0.0, %v5935
  %v5937 = vpop.f32.mrb[0].mxu0
  %5938 = vmatprep.mubr.f32.mxu0 0.0
  %5939 = vmatmul.mubr.f32.gmra.mrb[0].mxu0 %v5578
  %v5940 = vpop.f32.mrb[0].mxu0
  %v5941 = vadd.f32 0.0, %v5940
  %v5942 = vpop.f32.mrb[0].mxu0
  %5943 = vmatprep.mubr.f32.mxu0 0.0
  %5944 = vmatmul.mubr.f32.gmra.mrb[0].mxu0 %v5581
  %v5945 = vpop.f32.mrb[0].mxu0
  %v5946 = vadd.f32 0.0, %v5945
  %v5947 = vpop.f32.mrb[0].mxu0
  %5948 = vmatprep.mubr.f32.mxu0 0.0
  %5949 = vmatmul.mubr.f32.gmra.mrb[0].mxu0 %v5584
  %v5950 = vpop.f32.mrb[0].mxu0
  %v5951 = vadd.f32 0.0, %v5950
  %v5952 = vpop.f32.mrb[0].mxu0
  %5953 = vmatprep.mubr.f32.mxu0 0.0
  %5954 = vmatmul.mubr.f32.gmra.mrb[0].mxu0 %v5587
  %v5955 = vpop.f32.mrb[0].mxu0
  %v5956 = vadd.f32 0.0, %v5955
  %v5957 = vpop.f32.mrb[0].mxu0
  %5958 = vmatprep.mubr.f32.mxu0 0.0
  %5959 = vmatmul.mubr.f32.gmra.mrb[0].mxu0 %v5590
  %v5960 = vpop.f32.mrb[0].mxu0
  %v5961 = vadd.f32 0.0, %v5960
  %v5962 = vpop.f32.mrb[0].mxu0
  %5963 = vmatprep.mubr.f32.mxu0 0.0
  %5964 = vmatmul.mubr.f32.gmra.mrb[0].mxu0 %v5593
  %v5965 = vpop.f32.mrb[0].mxu0
  %v5966 = vadd.f32 0.0, %v5965
  %v5967 = vpop.f32.mrb[0].mxu0
  %5968 = vmatprep.mubr.f32.mxu0 0.0
  %5969 = vmatmul.mubr.f32.gmra.mrb[0].mxu0 %v5596
  %v5970 = vpop.f32.mrb[0].mxu0
  %v5971 = vadd.f32 0.0, %v5970
  %v5972 = vpop.f32.mrb[0].mxu0
  %5973 = vmatprep.mubr.f32.mxu0 0.0
  %5974 = vmatmul.mubr.f32.gmra.mrb[0].mxu0 %v5599
  %v5975 = vpop.f32.mrb[0].mxu0
  %v5976 = vadd.f32 0.0, %v5975
  %v5977 = vpop.f32.mrb[0].mxu0
  %5978 = vmatprep.mubr.f32.mxu0 0.0
  %5979 = vmatmul.mubr.f32.gmra.mrb[0].mxu0 %v5602
  %v5980 = vpop.f32.mrb[0].mxu0
  %v5981 = vadd.f32 0.0, %v5980
  %v5982 = vpop.f32.mrb[0].mxu0
  %5983 = vmatprep.mubr.f32.mxu0 0.0
  %5984 = vmatmul.mubr.f32.gmra.mrb[0].mxu0 %v5605
  %v5985 = vpop.f32.mrb[0].mxu0
  %v5986 = vadd.f32 0.0, %v5985
  %v5987 = vpop.f32.mrb[0].mxu0
  %5988 = vmatprep.mubr.f32.mxu0 0.0
  %5989 = vmatmul.mubr.f32.gmra.mrb[0].mxu0 %v5608
  %v5990 = vpop.f32.mrb[0].mxu0
  %v5991 = vadd.f32 0.0, %v5990
  %v5992 = vpop.f32.mrb[0].mxu0
  %5993 = vmatprep.mubr.f32.mxu0 0.0
  %5994 = vmatmul.mubr.f32.gmra.mrb[0].mxu0 %v5611
  %v5995 = vpop.f32.mrb[0].mxu0
  %v5996 = vadd.f32 0.0, %v5995
  %v5997 = vpop.f32.mrb[0].mxu0
  %5998 = vmatprep.mubr.f32.mxu0 0.0
  %5999 = vmatmul.mubr.f32.gmra.mrb[0].mxu0 %v5614
  %v6000 = vpop.f32.mrb[0].mxu0
  %v6001 = vadd.f32 0.0, %v6000
  %v6002 = vpop.f32.mrb[0].mxu0
  %6003 = vdwg.mxu0
  %v6004 = vadd.f32 %v5293, %v5686
  %v6005 = vadd.f32 %v5294, %v5691
  %v6006 = vadd.f32 %v5295, %v5696
  %v6007 = vadd.f32 %v5296, %v5701
  %v6008 = vadd.f32 %v5297, %v5706
  %v6009 = vadd.f32 %v5298, %v5711
  %v6010 = vadd.f32 %v5299, %v5716
  %v6011 = vadd.f32 %v5300, %v5721
  %v6012 = vadd.f32 %v5301, %v5726
  %v6013 = vadd.f32 %v5302, %v5731
  %v6014 = vadd.f32 %v5303, %v5736
  %v6015 = vadd.f32 %v5304, %v5741
  %v6016 = vadd.f32 %v5305, %v5746
  %v6017 = vadd.f32 %v5306, %v5751
  %v6018 = vadd.f32 %v5307, %v5756
  %v6019 = vadd.f32 %v5308, %v5761
  %v6020 = vadd.f32 %v5309, %v5766
  %v6021 = vadd.f32 %v5310, %v5771
  %v6022 = vadd.f32 %v5311, %v5776
  %v6023 = vadd.f32 %v5312, %v5781
  %v6024 = vadd.f32 %v5313, %v5786
  %v6025 = vadd.f32 %v5314, %v5791
  %v6026 = vadd.f32 %v5315, %v5796
  %v6027 = vadd.f32 %v5316, %v5801
  %v6028 = vadd.f32 %v5317, %v5806
  %v6029 = vadd.f32 %v5318, %v5811
  %v6030 = vadd.f32 %v5319, %v5816
  %v6031 = vadd.f32 %v5320, %v5821
  %v6032 = vadd.f32 %v5321, %v5826
  %v6033 = vadd.f32 %v5322, %v5831
  %v6034 = vadd.f32 %v5323, %v5836
  %v6035 = vadd.f32 %v5324, %v5841
  %v6036 = vadd.f32 %v5325, %v5846
  %v6037 = vadd.f32 %v5326, %v5851
  %v6038 = vadd.f32 %v5327, %v5856
  %v6039 = vadd.f32 %v5328, %v5861
  %v6040 = vadd.f32 %v5329, %v5866
  %v6041 = vadd.f32 %v5330, %v5871
  %v6042 = vadd.f32 %v5331, %v5876
  %v6043 = vadd.f32 %v5332, %v5881
  %v6044 = vadd.f32 %v5333, %v5886
  %v6045 = vadd.f32 %v5334, %v5891
  %v6046 = vadd.f32 %v5335, %v5896
  %v6047 = vadd.f32 %v5336, %v5901
  %v6048 = vadd.f32 %v5337, %v5906
  %v6049 = vadd.f32 %v5338, %v5911
  %v6050 = vadd.f32 %v5339, %v5916
  %v6051 = vadd.f32 %v5340, %v5921
  %v6052 = vadd.f32 %v5341, %v5926
  %v6053 = vadd.f32 %v5342, %v5931
  %v6054 = vadd.f32 %v5343, %v5936
  %v6055 = vadd.f32 %v5344, %v5941
  %v6056 = vadd.f32 %v5345, %v5946
  %v6057 = vadd.f32 %v5346, %v5951
  %v6058 = vadd.f32 %v5347, %v5956
  %v6059 = vadd.f32 %v5348, %v5961
  %v6060 = vadd.f32 %v5349, %v5966
  %v6061 = vadd.f32 %v5350, %v5971
  %v6062 = vadd.f32 %v5351, %v5976
  %v6063 = vadd.f32 %v5352, %v5981
  %v6064 = vadd.f32 %v5353, %v5986
  %v6065 = vadd.f32 %v5354, %v5991
  %v6066 = vadd.f32 %v5355, %v5996
  %v6067 = vadd.f32 %v5356, %v6001
  %v6068 = vld [vmem:[%s5357 + $0x8] sm:$0xff]
  %v6069 = vld [vmem:[%s5357 + $0x10] sm:$0xff]
  %v6070 = vld [vmem:[%s5357 + $0x28] sm:$0xff]
  %v6071 = vld [vmem:[%s5357 + $0x30] sm:$0xff]
  %v6072 = vld [vmem:[%s5357 + $0x48] sm:$0xff]
  %v6073 = vld [vmem:[%s5357 + $0x50] sm:$0xff]
  %v6074 = vld [vmem:[%s5357 + $0x68] sm:$0xff]
  %v6075 = vld [vmem:[%s5357 + $0x70] sm:$0xff]
  %v6076 = vld [vmem:[%s5357 + $0x88] sm:$0xff]
  %v6077 = vld [vmem:[%s5357 + $0x90] sm:$0xff]
  %v6078 = vld [vmem:[%s5357 + $0xa8] sm:$0xff]
  %v6079 = vld [vmem:[%s5357 + $0xb0] sm:$0xff]
  %v6080 = vld [vmem:[%s5357 + $0xc8] sm:$0xff]
  %v6081 = vld [vmem:[%s5357 + $0xd0] sm:$0xff]
  %v6082 = vld [vmem:[%s5357 + $0xe8] sm:$0xff]
  %v6083 = vld [vmem:[%s5357 + $0xf0] sm:$0xff]
  %v6084 = vld [vmem:[%s5357 + $0x108] sm:$0xff]
  %v6085 = vld [vmem:[%s5357 + $0x110] sm:$0xff]
  %v6086 = vld [vmem:[%s5357 + $0x128] sm:$0xff]
  %v6087 = vld [vmem:[%s5357 + $0x130] sm:$0xff]
  %v6088 = vld [vmem:[%s5357 + $0x148] sm:$0xff]
  %v6089 = vld [vmem:[%s5357 + $0x150] sm:$0xff]
  %v6090 = vld [vmem:[%s5357 + $0x168] sm:$0xff]
  %v6091 = vld [vmem:[%s5357 + $0x170] sm:$0xff]
  %v6092 = vld [vmem:[%s5357 + $0x188] sm:$0xff]
  %v6093 = vld [vmem:[%s5357 + $0x190] sm:$0xff]
  %v6094 = vld [vmem:[%s5357 + $0x1a8] sm:$0xff]
  %v6095 = vld [vmem:[%s5357 + $0x1b0] sm:$0xff]
  %v6096 = vld [vmem:[%s5357 + $0x1c8] sm:$0xff]
  %v6097 = vld [vmem:[%s5357 + $0x1d0] sm:$0xff]
  %v6098 = vld [vmem:[%s5357 + $0x1e8] sm:$0xff]
  %v6099 = vld [vmem:[%s5357 + $0x1f0] sm:$0xff]
  %v6100 = vld [vmem:[%s5357 + $0x248] sm:$0xff]
  %v6101 = vld [vmem:[%s5357 + $0x250] sm:$0xff]
  %v6102 = vld [vmem:[%s5357 + $0x268] sm:$0xff]
  %v6103 = vld [vmem:[%s5357 + $0x270] sm:$0xff]
  %v6104 = vld [vmem:[%s5357 + $0x288] sm:$0xff]
  %v6105 = vld [vmem:[%s5357 + $0x290] sm:$0xff]
  %v6106 = vld [vmem:[%s5357 + $0x2a8] sm:$0xff]
  %v6107 = vld [vmem:[%s5357 + $0x2b0] sm:$0xff]
  %v6108 = vld [vmem:[%s5357 + $0x2c8] sm:$0xff]
  %v6109 = vld [vmem:[%s5357 + $0x2d0] sm:$0xff]
  %v6110 = vld [vmem:[%s5357 + $0x2e8] sm:$0xff]
  %v6111 = vld [vmem:[%s5357 + $0x2f0] sm:$0xff]
  %v6112 = vld [vmem:[%s5357 + $0x308] sm:$0xff]
  %v6113 = vld [vmem:[%s5357 + $0x310] sm:$0xff]
  %v6114 = vld [vmem:[%s5357 + $0x328] sm:$0xff]
  %v6115 = vld [vmem:[%s5357 + $0x330] sm:$0xff]
  %v6116 = vld [vmem:[%s5357 + $0x348] sm:$0xff]
  %v6117 = vld [vmem:[%s5357 + $0x350] sm:$0xff]
  %v6118 = vld [vmem:[%s5357 + $0x368] sm:$0xff]
  %v6119 = vld [vmem:[%s5357 + $0x370] sm:$0xff]
  %v6120 = vld [vmem:[%s5357 + $0x388] sm:$0xff]
  %v6121 = vld [vmem:[%s5357 + $0x390] sm:$0xff]
  %v6122 = vld [vmem:[%s5357 + $0x3a8] sm:$0xff]
  %v6123 = vld [vmem:[%s5357 + $0x3b0] sm:$0xff]
  %v6124 = vld [vmem:[%s5357 + $0x3c8] sm:$0xff]
  %v6125 = vld [vmem:[%s5357 + $0x3d0] sm:$0xff]
  %v6126 = vld [vmem:[%s5357 + $0x3e8] sm:$0xff]
  %v6127 = vld [vmem:[%s5357 + $0x3f0] sm:$0xff]
  %v6128 = vld [vmem:[%s5357 + $0x408] sm:$0xff]
  %v6129 = vld [vmem:[%s5357 + $0x410] sm:$0xff]
  %v6130 = vld [vmem:[%s5357 + $0x428] sm:$0xff]
  %v6131 = vld [vmem:[%s5357 + $0x430] sm:$0xff]
  %s6132 = scalar_lea.vmem %s5, 14
  %v6133 = vld [vmem:[%s6132] sm:$0x3]
  %v6135 = vsel %vm1069, %v6068, 0
  %v6138 = vsel %vm1069, %v6069, 0
  %v6141 = vsel %vm1069, %v6070, 0
  %v6144 = vsel %vm1069, %v6071, 0
  %v6147 = vsel %vm1069, %v6072, 0
  %v6150 = vsel %vm1069, %v6073, 0
  %v6153 = vsel %vm1069, %v6074, 0
  %v6156 = vsel %vm1069, %v6075, 0
  %v6159 = vsel %vm1069, %v6076, 0
  %v6162 = vsel %vm1069, %v6077, 0
  %v6165 = vsel %vm1069, %v6078, 0
  %v6168 = vsel %vm1069, %v6079, 0
  %v6171 = vsel %vm1069, %v6080, 0
  %v6174 = vsel %vm1069, %v6081, 0
  %v6177 = vsel %vm1069, %v6082, 0
  %v6180 = vsel %vm1069, %v6083, 0
  %v6183 = vsel %vm1069, %v6084, 0
  %v6186 = vsel %vm1069, %v6085, 0
  %v6189 = vsel %vm1069, %v6086, 0
  %v6192 = vsel %vm1069, %v6087, 0
  %v6195 = vsel %vm1069, %v6088, 0
  %v6198 = vsel %vm1069, %v6089, 0
  %v6201 = vsel %vm1069, %v6090, 0
  %v6204 = vsel %vm1069, %v6091, 0
  %v6207 = vsel %vm1069, %v6092, 0
  %v6210 = vsel %vm1069, %v6093, 0
  %v6213 = vsel %vm1069, %v6094, 0
  %v6216 = vsel %vm1069, %v6095, 0
  %v6219 = vsel %vm1069, %v6096, 0
  %v6222 = vsel %vm1069, %v6097, 0
  %v6225 = vsel %vm1069, %v6098, 0
  %v6228 = vsel %vm1069, %v6099, 0
  %v6231 = vsel %vm1069, %v6100, 0
  %v6234 = vsel %vm1069, %v6101, 0
  %v6237 = vsel %vm1069, %v6102, 0
  %v6240 = vsel %vm1069, %v6103, 0
  %v6243 = vsel %vm1069, %v6104, 0
  %v6246 = vsel %vm1069, %v6105, 0
  %v6249 = vsel %vm1069, %v6106, 0
  %v6252 = vsel %vm1069, %v6107, 0
  %v6255 = vsel %vm1069, %v6108, 0
  %v6258 = vsel %vm1069, %v6109, 0
  %v6261 = vsel %vm1069, %v6110, 0
  %v6264 = vsel %vm1069, %v6111, 0
  %v6267 = vsel %vm1069, %v6112, 0
  %v6270 = vsel %vm1069, %v6113, 0
  %v6273 = vsel %vm1069, %v6114, 0
  %v6276 = vsel %vm1069, %v6115, 0
  %v6279 = vsel %vm1069, %v6116, 0
  %v6282 = vsel %vm1069, %v6117, 0
  %v6285 = vsel %vm1069, %v6118, 0
  %v6288 = vsel %vm1069, %v6119, 0
  %v6291 = vsel %vm1069, %v6120, 0
  %v6294 = vsel %vm1069, %v6121, 0
  %v6297 = vsel %vm1069, %v6122, 0
  %v6300 = vsel %vm1069, %v6123, 0
  %v6303 = vsel %vm1069, %v6124, 0
  %v6306 = vsel %vm1069, %v6125, 0
  %v6309 = vsel %vm1069, %v6126, 0
  %v6312 = vsel %vm1069, %v6127, 0
  %v6315 = vsel %vm1069, %v6128, 0
  %v6318 = vsel %vm1069, %v6129, 0
  %v6321 = vsel %vm1069, %v6130, 0
  %v6324 = vsel %vm1069, %v6131, 0
  %v6327 = vsel %vm1548, %v6133, 0
  %6329 = vmatprep.subr.mxu0 0.0
  %6330 = vmatpush1.msra.mxu0 %v6327
  %6331 = vmatprep.subr.mxu0 0.0
  %6332 = vmatpush1.msra.mxu0 0.0
  %6333 = vmatprep.subr.mxu0 0.0
  %6334 = vmatpush1.msra.mxu0 0.0
  %6335 = vmatprep.subr.mxu0 0.0
  %6336 = vmatpush1.msra.mxu0 0.0
  %6337 = vmatprep.subr.mxu0 0.0
  %6338 = vmatpush1.msra.mxu0 0.0
  %6339 = vmatprep.subr.mxu0 0.0
  %6340 = vmatpush1.msra.mxu0 0.0
  %6341 = vmatprep.subr.mxu0 0.0
  %6342 = vmatpush1.msra.mxu0 0.0
  %6343 = vmatprep.subr.mxu0 0.0
  %6344 = vmatpush1.msra.mxu0 0.0
  %6345 = vmatprep.subr.mxu0 0.0
  %6346 = vmatpush1.msra.mxu0 0.0
  %6347 = vmatprep.subr.mxu0 0.0
  %6348 = vmatpush1.msra.mxu0 0.0
  %6349 = vmatprep.subr.mxu0 0.0
  %6350 = vmatpush1.msra.mxu0 0.0
  %6351 = vmatprep.subr.mxu0 0.0
  %6352 = vmatpush1.msra.mxu0 0.0
  %6353 = vmatprep.subr.mxu0 0.0
  %6354 = vmatpush1.msra.mxu0 0.0
  %6355 = vmatprep.subr.mxu0 0.0
  %6356 = vmatpush1.msra.mxu0 0.0
  %6357 = vmatprep.subr.mxu0 0.0
  %6358 = vmatpush1.msra.mxu0 0.0
  %6359 = vmatprep.subr.mxu0 0.0
  %6360 = vmatpush1.msra.mxu0 0.0
  %6361 = vmatprep.subr.mxu0 0.0
  %6362 = vmatpush1.msra.mxu0 0.0
  %6363 = vmatprep.subr.mxu0 0.0
  %6364 = vmatpush1.msra.mxu0 0.0
  %6365 = vmatprep.subr.mxu0 0.0
  %6366 = vmatpush1.msra.mxu0 0.0
  %6367 = vmatprep.subr.mxu0 0.0
  %6368 = vmatpush1.msra.mxu0 0.0
  %6369 = vmatprep.subr.mxu0 0.0
  %6370 = vmatpush1.msra.mxu0 0.0
  %6371 = vmatprep.subr.mxu0 0.0
  %6372 = vmatpush1.msra.mxu0 0.0
  %6373 = vmatprep.subr.mxu0 0.0
  %6374 = vmatpush1.msra.mxu0 0.0
  %6375 = vmatprep.subr.mxu0 0.0
  %6376 = vmatpush1.msra.mxu0 0.0
  %6377 = vmatprep.subr.mxu0 0.0
  %6378 = vmatpush1.msra.mxu0 0.0
  %6379 = vmatprep.subr.mxu0 0.0
  %6380 = vmatpush1.msra.mxu0 0.0
  %6381 = vmatprep.subr.mxu0 0.0
  %6382 = vmatpush1.msra.mxu0 0.0
  %6383 = vmatprep.subr.mxu0 0.0
  %6384 = vmatpush1.msra.mxu0 0.0
  %6385 = vmatprep.subr.mxu0 0.0
  %6386 = vmatpush1.msra.mxu0 0.0
  %6387 = vmatprep.subr.mxu0 0.0
  %6388 = vmatpush1.msra.mxu0 0.0
  %6389 = vmatprep.subr.mxu0 0.0
  %6390 = vmatpush1.msra.mxu0 0.0
  %6391 = vmatprep.subr.mxu0 0.0
  %6392 = vmatpush1.msra.mxu0 0.0
  %6393 = vmatprep.mubr.f32.mxu0 0.0
  %6394 = vmatmul.mubr.f32.gmra.mrb[0].mxu0 %v6135
  %v6395 = vpop.f32.mrb[0].mxu0
  %v6396 = vadd.f32 0.0, %v6395
  %v6397 = vpop.f32.mrb[0].mxu0
  %6398 = vmatprep.mubr.f32.mxu0 0.0
  %6399 = vmatmul.mubr.f32.gmra.mrb[0].mxu0 %v6138
  %v6400 = vpop.f32.mrb[0].mxu0
  %v6401 = vadd.f32 0.0, %v6400
  %v6402 = vpop.f32.mrb[0].mxu0
  %6403 = vmatprep.mubr.f32.mxu0 0.0
  %6404 = vmatmul.mubr.f32.gmra.mrb[0].mxu0 %v6141
  %v6405 = vpop.f32.mrb[0].mxu0
  %v6406 = vadd.f32 0.0, %v6405
  %v6407 = vpop.f32.mrb[0].mxu0
  %6408 = vmatprep.mubr.f32.mxu0 0.0
  %6409 = vmatmul.mubr.f32.gmra.mrb[0].mxu0 %v6144
  %v6410 = vpop.f32.mrb[0].mxu0
  %v6411 = vadd.f32 0.0, %v6410
  %v6412 = vpop.f32.mrb[0].mxu0
  %6413 = vmatprep.mubr.f32.mxu0 0.0
  %6414 = vmatmul.mubr.f32.gmra.mrb[0].mxu0 %v6147
  %v6415 = vpop.f32.mrb[0].mxu0
  %v6416 = vadd.f32 0.0, %v6415
  %v6417 = vpop.f32.mrb[0].mxu0
  %6418 = vmatprep.mubr.f32.mxu0 0.0
  %6419 = vmatmul.mubr.f32.gmra.mrb[0].mxu0 %v6150
  %v6420 = vpop.f32.mrb[0].mxu0
  %v6421 = vadd.f32 0.0, %v6420
  %v6422 = vpop.f32.mrb[0].mxu0
  %6423 = vmatprep.mubr.f32.mxu0 0.0
  %6424 = vmatmul.mubr.f32.gmra.mrb[0].mxu0 %v6153
  %v6425 = vpop.f32.mrb[0].mxu0
  %v6426 = vadd.f32 0.0, %v6425
  %v6427 = vpop.f32.mrb[0].mxu0
  %6428 = vmatprep.mubr.f32.mxu0 0.0
  %6429 = vmatmul.mubr.f32.gmra.mrb[0].mxu0 %v6156
  %v6430 = vpop.f32.mrb[0].mxu0
  %v6431 = vadd.f32 0.0, %v6430
  %v6432 = vpop.f32.mrb[0].mxu0
  %6433 = vmatprep.mubr.f32.mxu0 0.0
  %6434 = vmatmul.mubr.f32.gmra.mrb[0].mxu0 %v6159
  %v6435 = vpop.f32.mrb[0].mxu0
  %v6436 = vadd.f32 0.0, %v6435
  %v6437 = vpop.f32.mrb[0].mxu0
  %6438 = vmatprep.mubr.f32.mxu0 0.0
  %6439 = vmatmul.mubr.f32.gmra.mrb[0].mxu0 %v6162
  %v6440 = vpop.f32.mrb[0].mxu0
  %v6441 = vadd.f32 0.0, %v6440
  %v6442 = vpop.f32.mrb[0].mxu0
  %6443 = vmatprep.mubr.f32.mxu0 0.0
  %6444 = vmatmul.mubr.f32.gmra.mrb[0].mxu0 %v6165
  %v6445 = vpop.f32.mrb[0].mxu0
  %v6446 = vadd.f32 0.0, %v6445
  %v6447 = vpop.f32.mrb[0].mxu0
  %6448 = vmatprep.mubr.f32.mxu0 0.0
  %6449 = vmatmul.mubr.f32.gmra.mrb[0].mxu0 %v6168
  %v6450 = vpop.f32.mrb[0].mxu0
  %v6451 = vadd.f32 0.0, %v6450
  %v6452 = vpop.f32.mrb[0].mxu0
  %6453 = vmatprep.mubr.f32.mxu0 0.0
  %6454 = vmatmul.mubr.f32.gmra.mrb[0].mxu0 %v6171
  %v6455 = vpop.f32.mrb[0].mxu0
  %v6456 = vadd.f32 0.0, %v6455
  %v6457 = vpop.f32.mrb[0].mxu0
  %6458 = vmatprep.mubr.f32.mxu0 0.0
  %6459 = vmatmul.mubr.f32.gmra.mrb[0].mxu0 %v6174
  %v6460 = vpop.f32.mrb[0].mxu0
  %v6461 = vadd.f32 0.0, %v6460
  %v6462 = vpop.f32.mrb[0].mxu0
  %6463 = vmatprep.mubr.f32.mxu0 0.0
  %6464 = vmatmul.mubr.f32.gmra.mrb[0].mxu0 %v6177
  %v6465 = vpop.f32.mrb[0].mxu0
  %v6466 = vadd.f32 0.0, %v6465
  %v6467 = vpop.f32.mrb[0].mxu0
  %6468 = vmatprep.mubr.f32.mxu0 0.0
  %6469 = vmatmul.mubr.f32.gmra.mrb[0].mxu0 %v6180
  %v6470 = vpop.f32.mrb[0].mxu0
  %v6471 = vadd.f32 0.0, %v6470
  %v6472 = vpop.f32.mrb[0].mxu0
  %6473 = vmatprep.mubr.f32.mxu0 0.0
  %6474 = vmatmul.mubr.f32.gmra.mrb[0].mxu0 %v6183
  %v6475 = vpop.f32.mrb[0].mxu0
  %v6476 = vadd.f32 0.0, %v6475
  %v6477 = vpop.f32.mrb[0].mxu0
  %6478 = vmatprep.mubr.f32.mxu0 0.0
  %6479 = vmatmul.mubr.f32.gmra.mrb[0].mxu0 %v6186
  %v6480 = vpop.f32.mrb[0].mxu0
  %v6481 = vadd.f32 0.0, %v6480
  %v6482 = vpop.f32.mrb[0].mxu0
  %6483 = vmatprep.mubr.f32.mxu0 0.0
  %6484 = vmatmul.mubr.f32.gmra.mrb[0].mxu0 %v6189
  %v6485 = vpop.f32.mrb[0].mxu0
  %v6486 = vadd.f32 0.0, %v6485
  %v6487 = vpop.f32.mrb[0].mxu0
  %6488 = vmatprep.mubr.f32.mxu0 0.0
  %6489 = vmatmul.mubr.f32.gmra.mrb[0].mxu0 %v6192
  %v6490 = vpop.f32.mrb[0].mxu0
  %v6491 = vadd.f32 0.0, %v6490
  %v6492 = vpop.f32.mrb[0].mxu0
  %6493 = vmatprep.mubr.f32.mxu0 0.0
  %6494 = vmatmul.mubr.f32.gmra.mrb[0].mxu0 %v6195
  %v6495 = vpop.f32.mrb[0].mxu0
  %v6496 = vadd.f32 0.0, %v6495
  %v6497 = vpop.f32.mrb[0].mxu0
  %6498 = vmatprep.mubr.f32.mxu0 0.0
  %6499 = vmatmul.mubr.f32.gmra.mrb[0].mxu0 %v6198
  %v6500 = vpop.f32.mrb[0].mxu0
  %v6501 = vadd.f32 0.0, %v6500
  %v6502 = vpop.f32.mrb[0].mxu0
  %6503 = vmatprep.mubr.f32.mxu0 0.0
  %6504 = vmatmul.mubr.f32.gmra.mrb[0].mxu0 %v6201
  %v6505 = vpop.f32.mrb[0].mxu0
  %v6506 = vadd.f32 0.0, %v6505
  %v6507 = vpop.f32.mrb[0].mxu0
  %6508 = vmatprep.mubr.f32.mxu0 0.0
  %6509 = vmatmul.mubr.f32.gmra.mrb[0].mxu0 %v6204
  %v6510 = vpop.f32.mrb[0].mxu0
  %v6511 = vadd.f32 0.0, %v6510
  %v6512 = vpop.f32.mrb[0].mxu0
  %6513 = vmatprep.mubr.f32.mxu0 0.0
  %6514 = vmatmul.mubr.f32.gmra.mrb[0].mxu0 %v6207
  %v6515 = vpop.f32.mrb[0].mxu0
  %v6516 = vadd.f32 0.0, %v6515
  %v6517 = vpop.f32.mrb[0].mxu0
  %6518 = vmatprep.mubr.f32.mxu0 0.0
  %6519 = vmatmul.mubr.f32.gmra.mrb[0].mxu0 %v6210
  %v6520 = vpop.f32.mrb[0].mxu0
  %v6521 = vadd.f32 0.0, %v6520
  %v6522 = vpop.f32.mrb[0].mxu0
  %6523 = vmatprep.mubr.f32.mxu0 0.0
  %6524 = vmatmul.mubr.f32.gmra.mrb[0].mxu0 %v6213
  %v6525 = vpop.f32.mrb[0].mxu0
  %v6526 = vadd.f32 0.0, %v6525
  %v6527 = vpop.f32.mrb[0].mxu0
  %6528 = vmatprep.mubr.f32.mxu0 0.0
  %6529 = vmatmul.mubr.f32.gmra.mrb[0].mxu0 %v6216
  %v6530 = vpop.f32.mrb[0].mxu0
  %v6531 = vadd.f32 0.0, %v6530
  %v6532 = vpop.f32.mrb[0].mxu0
  %6533 = vmatprep.mubr.f32.mxu0 0.0
  %6534 = vmatmul.mubr.f32.gmra.mrb[0].mxu0 %v6219
  %v6535 = vpop.f32.mrb[0].mxu0
  %v6536 = vadd.f32 0.0, %v6535
  %v6537 = vpop.f32.mrb[0].mxu0
  %6538 = vmatprep.mubr.f32.mxu0 0.0
  %6539 = vmatmul.mubr.f32.gmra.mrb[0].mxu0 %v6222
  %v6540 = vpop.f32.mrb[0].mxu0
  %v6541 = vadd.f32 0.0, %v6540
  %v6542 = vpop.f32.mrb[0].mxu0
  %6543 = vmatprep.mubr.f32.mxu0 0.0
  %6544 = vmatmul.mubr.f32.gmra.mrb[0].mxu0 %v6225
  %v6545 = vpop.f32.mrb[0].mxu0
  %v6546 = vadd.f32 0.0, %v6545
  %v6547 = vpop.f32.mrb[0].mxu0
  %6548 = vmatprep.mubr.f32.mxu0 0.0
  %6549 = vmatmul.mubr.f32.gmra.mrb[0].mxu0 %v6228
  %v6550 = vpop.f32.mrb[0].mxu0
  %v6551 = vadd.f32 0.0, %v6550
  %v6552 = vpop.f32.mrb[0].mxu0
  %6553 = vmatprep.mubr.f32.mxu0 0.0
  %6554 = vmatmul.mubr.f32.gmra.mrb[0].mxu0 %v6231
  %v6555 = vpop.f32.mrb[0].mxu0
  %v6556 = vadd.f32 0.0, %v6555
  %v6557 = vpop.f32.mrb[0].mxu0
  %6558 = vmatprep.mubr.f32.mxu0 0.0
  %6559 = vmatmul.mubr.f32.gmra.mrb[0].mxu0 %v6234
  %v6560 = vpop.f32.mrb[0].mxu0
  %v6561 = vadd.f32 0.0, %v6560
  %v6562 = vpop.f32.mrb[0].mxu0
  %6563 = vmatprep.mubr.f32.mxu0 0.0
  %6564 = vmatmul.mubr.f32.gmra.mrb[0].mxu0 %v6237
  %v6565 = vpop.f32.mrb[0].mxu0
  %v6566 = vadd.f32 0.0, %v6565
  %v6567 = vpop.f32.mrb[0].mxu0
  %6568 = vmatprep.mubr.f32.mxu0 0.0
  %6569 = vmatmul.mubr.f32.gmra.mrb[0].mxu0 %v6240
  %v6570 = vpop.f32.mrb[0].mxu0
  %v6571 = vadd.f32 0.0, %v6570
  %v6572 = vpop.f32.mrb[0].mxu0
  %6573 = vmatprep.mubr.f32.mxu0 0.0
  %6574 = vmatmul.mubr.f32.gmra.mrb[0].mxu0 %v6243
  %v6575 = vpop.f32.mrb[0].mxu0
  %v6576 = vadd.f32 0.0, %v6575
  %v6577 = vpop.f32.mrb[0].mxu0
  %6578 = vmatprep.mubr.f32.mxu0 0.0
  %6579 = vmatmul.mubr.f32.gmra.mrb[0].mxu0 %v6246
  %v6580 = vpop.f32.mrb[0].mxu0
  %v6581 = vadd.f32 0.0, %v6580
  %v6582 = vpop.f32.mrb[0].mxu0
  %6583 = vmatprep.mubr.f32.mxu0 0.0
  %6584 = vmatmul.mubr.f32.gmra.mrb[0].mxu0 %v6249
  %v6585 = vpop.f32.mrb[0].mxu0
  %v6586 = vadd.f32 0.0, %v6585
  %v6587 = vpop.f32.mrb[0].mxu0
  %6588 = vmatprep.mubr.f32.mxu0 0.0
  %6589 = vmatmul.mubr.f32.gmra.mrb[0].mxu0 %v6252
  %v6590 = vpop.f32.mrb[0].mxu0
  %v6591 = vadd.f32 0.0, %v6590
  %v6592 = vpop.f32.mrb[0].mxu0
  %6593 = vmatprep.mubr.f32.mxu0 0.0
  %6594 = vmatmul.mubr.f32.gmra.mrb[0].mxu0 %v6255
  %v6595 = vpop.f32.mrb[0].mxu0
  %v6596 = vadd.f32 0.0, %v6595
  %v6597 = vpop.f32.mrb[0].mxu0
  %6598 = vmatprep.mubr.f32.mxu0 0.0
  %6599 = vmatmul.mubr.f32.gmra.mrb[0].mxu0 %v6258
  %v6600 = vpop.f32.mrb[0].mxu0
  %v6601 = vadd.f32 0.0, %v6600
  %v6602 = vpop.f32.mrb[0].mxu0
  %6603 = vmatprep.mubr.f32.mxu0 0.0
  %6604 = vmatmul.mubr.f32.gmra.mrb[0].mxu0 %v6261
  %v6605 = vpop.f32.mrb[0].mxu0
  %v6606 = vadd.f32 0.0, %v6605
  %v6607 = vpop.f32.mrb[0].mxu0
  %6608 = vmatprep.mubr.f32.mxu0 0.0
  %6609 = vmatmul.mubr.f32.gmra.mrb[0].mxu0 %v6264
  %v6610 = vpop.f32.mrb[0].mxu0
  %v6611 = vadd.f32 0.0, %v6610
  %v6612 = vpop.f32.mrb[0].mxu0
  %6613 = vmatprep.mubr.f32.mxu0 0.0
  %6614 = vmatmul.mubr.f32.gmra.mrb[0].mxu0 %v6267
  %v6615 = vpop.f32.mrb[0].mxu0
  %v6616 = vadd.f32 0.0, %v6615
  %v6617 = vpop.f32.mrb[0].mxu0
  %6618 = vmatprep.mubr.f32.mxu0 0.0
  %6619 = vmatmul.mubr.f32.gmra.mrb[0].mxu0 %v6270
  %v6620 = vpop.f32.mrb[0].mxu0
  %v6621 = vadd.f32 0.0, %v6620
  %v6622 = vpop.f32.mrb[0].mxu0
  %6623 = vmatprep.mubr.f32.mxu0 0.0
  %6624 = vmatmul.mubr.f32.gmra.mrb[0].mxu0 %v6273
  %v6625 = vpop.f32.mrb[0].mxu0
  %v6626 = vadd.f32 0.0, %v6625
  %v6627 = vpop.f32.mrb[0].mxu0
  %6628 = vmatprep.mubr.f32.mxu0 0.0
  %6629 = vmatmul.mubr.f32.gmra.mrb[0].mxu0 %v6276
  %v6630 = vpop.f32.mrb[0].mxu0
  %v6631 = vadd.f32 0.0, %v6630
  %v6632 = vpop.f32.mrb[0].mxu0
  %6633 = vmatprep.mubr.f32.mxu0 0.0
  %6634 = vmatmul.mubr.f32.gmra.mrb[0].mxu0 %v6279
  %v6635 = vpop.f32.mrb[0].mxu0
  %v6636 = vadd.f32 0.0, %v6635
  %v6637 = vpop.f32.mrb[0].mxu0
  %6638 = vmatprep.mubr.f32.mxu0 0.0
  %6639 = vmatmul.mubr.f32.gmra.mrb[0].mxu0 %v6282
  %v6640 = vpop.f32.mrb[0].mxu0
  %v6641 = vadd.f32 0.0, %v6640
  %v6642 = vpop.f32.mrb[0].mxu0
  %6643 = vmatprep.mubr.f32.mxu0 0.0
  %6644 = vmatmul.mubr.f32.gmra.mrb[0].mxu0 %v6285
  %v6645 = vpop.f32.mrb[0].mxu0
  %v6646 = vadd.f32 0.0, %v6645
  %v6647 = vpop.f32.mrb[0].mxu0
  %6648 = vmatprep.mubr.f32.mxu0 0.0
  %6649 = vmatmul.mubr.f32.gmra.mrb[0].mxu0 %v6288
  %v6650 = vpop.f32.mrb[0].mxu0
  %v6651 = vadd.f32 0.0, %v6650
  %v6652 = vpop.f32.mrb[0].mxu0
  %6653 = vmatprep.mubr.f32.mxu0 0.0
  %6654 = vmatmul.mubr.f32.gmra.mrb[0].mxu0 %v6291
  %v6655 = vpop.f32.mrb[0].mxu0
  %v6656 = vadd.f32 0.0, %v6655
  %v6657 = vpop.f32.mrb[0].mxu0
  %6658 = vmatprep.mubr.f32.mxu0 0.0
  %6659 = vmatmul.mubr.f32.gmra.mrb[0].mxu0 %v6294
  %v6660 = vpop.f32.mrb[0].mxu0
  %v6661 = vadd.f32 0.0, %v6660
  %v6662 = vpop.f32.mrb[0].mxu0
  %6663 = vmatprep.mubr.f32.mxu0 0.0
  %6664 = vmatmul.mubr.f32.gmra.mrb[0].mxu0 %v6297
  %v6665 = vpop.f32.mrb[0].mxu0
  %v6666 = vadd.f32 0.0, %v6665
  %v6667 = vpop.f32.mrb[0].mxu0
  %6668 = vmatprep.mubr.f32.mxu0 0.0
  %6669 = vmatmul.mubr.f32.gmra.mrb[0].mxu0 %v6300
  %v6670 = vpop.f32.mrb[0].mxu0
  %v6671 = vadd.f32 0.0, %v6670
  %v6672 = vpop.f32.mrb[0].mxu0
  %6673 = vmatprep.mubr.f32.mxu0 0.0
  %6674 = vmatmul.mubr.f32.gmra.mrb[0].mxu0 %v6303
  %v6675 = vpop.f32.mrb[0].mxu0
  %v6676 = vadd.f32 0.0, %v6675
  %v6677 = vpop.f32.mrb[0].mxu0
  %6678 = vmatprep.mubr.f32.mxu0 0.0
  %6679 = vmatmul.mubr.f32.gmra.mrb[0].mxu0 %v6306
  %v6680 = vpop.f32.mrb[0].mxu0
  %v6681 = vadd.f32 0.0, %v6680
  %v6682 = vpop.f32.mrb[0].mxu0
  %6683 = vmatprep.mubr.f32.mxu0 0.0
  %6684 = vmatmul.mubr.f32.gmra.mrb[0].mxu0 %v6309
  %v6685 = vpop.f32.mrb[0].mxu0
  %v6686 = vadd.f32 0.0, %v6685
  %v6687 = vpop.f32.mrb[0].mxu0
  %6688 = vmatprep.mubr.f32.mxu0 0.0
  %6689 = vmatmul.mubr.f32.gmra.mrb[0].mxu0 %v6312
  %v6690 = vpop.f32.mrb[0].mxu0
  %v6691 = vadd.f32 0.0, %v6690
  %v6692 = vpop.f32.mrb[0].mxu0
  %6693 = vmatprep.mubr.f32.mxu0 0.0
  %6694 = vmatmul.mubr.f32.gmra.mrb[0].mxu0 %v6315
  %v6695 = vpop.f32.mrb[0].mxu0
  %v6696 = vadd.f32 0.0, %v6695
  %v6697 = vpop.f32.mrb[0].mxu0
  %6698 = vmatprep.mubr.f32.mxu0 0.0
  %6699 = vmatmul.mubr.f32.gmra.mrb[0].mxu0 %v6318
  %v6700 = vpop.f32.mrb[0].mxu0
  %v6701 = vadd.f32 0.0, %v6700
  %v6702 = vpop.f32.mrb[0].mxu0
  %6703 = vmatprep.mubr.f32.mxu0 0.0
  %6704 = vmatmul.mubr.f32.gmra.mrb[0].mxu0 %v6321
  %v6705 = vpop.f32.mrb[0].mxu0
  %v6706 = vadd.f32 0.0, %v6705
  %v6707 = vpop.f32.mrb[0].mxu0
  %6708 = vmatprep.mubr.f32.mxu0 0.0
  %6709 = vmatmul.mubr.f32.gmra.mrb[0].mxu0 %v6324
  %v6710 = vpop.f32.mrb[0].mxu0
  %v6711 = vadd.f32 0.0, %v6710
  %v6712 = vpop.f32.mrb[0].mxu0
  %6713 = vdwg.mxu0
  %v6714 = vadd.f32 %v6004, %v6396
  %v6715 = vadd.f32 %v6005, %v6401
  %v6716 = vadd.f32 %v6006, %v6406
  %v6717 = vadd.f32 %v6007, %v6411
  %v6718 = vadd.f32 %v6008, %v6416
  %v6719 = vadd.f32 %v6009, %v6421
  %v6720 = vadd.f32 %v6010, %v6426
  %v6721 = vadd.f32 %v6011, %v6431
  %v6722 = vadd.f32 %v6012, %v6436
  %v6723 = vadd.f32 %v6013, %v6441
  %v6724 = vadd.f32 %v6014, %v6446
  %v6725 = vadd.f32 %v6015, %v6451
  %v6726 = vadd.f32 %v6016, %v6456
  %v6727 = vadd.f32 %v6017, %v6461
  %v6728 = vadd.f32 %v6018, %v6466
  %v6729 = vadd.f32 %v6019, %v6471
  %v6730 = vadd.f32 %v6020, %v6476
  %v6731 = vadd.f32 %v6021, %v6481
  %v6732 = vadd.f32 %v6022, %v6486
  %v6733 = vadd.f32 %v6023, %v6491
  %v6734 = vadd.f32 %v6024, %v6496
  %v6735 = vadd.f32 %v6025, %v6501
  %v6736 = vadd.f32 %v6026, %v6506
  %v6737 = vadd.f32 %v6027, %v6511
  %v6738 = vadd.f32 %v6028, %v6516
  %v6739 = vadd.f32 %v6029, %v6521
  %v6740 = vadd.f32 %v6030, %v6526
  %v6741 = vadd.f32 %v6031, %v6531
  %v6742 = vadd.f32 %v6032, %v6536
  %v6743 = vadd.f32 %v6033, %v6541
  %v6744 = vadd.f32 %v6034, %v6546
  %v6745 = vadd.f32 %v6035, %v6551
  %v6746 = vadd.f32 %v6036, %v6556
  %v6747 = vadd.f32 %v6037, %v6561
  %v6748 = vadd.f32 %v6038, %v6566
  %v6749 = vadd.f32 %v6039, %v6571
  %v6750 = vadd.f32 %v6040, %v6576
  %v6751 = vadd.f32 %v6041, %v6581
  %v6752 = vadd.f32 %v6042, %v6586
  %v6753 = vadd.f32 %v6043, %v6591
  %v6754 = vadd.f32 %v6044, %v6596
  %v6755 = vadd.f32 %v6045, %v6601
  %v6756 = vadd.f32 %v6046, %v6606
  %v6757 = vadd.f32 %v6047, %v6611
  %v6758 = vadd.f32 %v6048, %v6616
  %v6759 = vadd.f32 %v6049, %v6621
  %v6760 = vadd.f32 %v6050, %v6626
  %v6761 = vadd.f32 %v6051, %v6631
  %v6762 = vadd.f32 %v6052, %v6636
  %v6763 = vadd.f32 %v6053, %v6641
  %v6764 = vadd.f32 %v6054, %v6646
  %v6765 = vadd.f32 %v6055, %v6651
  %v6766 = vadd.f32 %v6056, %v6656
  %v6767 = vadd.f32 %v6057, %v6661
  %v6768 = vadd.f32 %v6058, %v6666
  %v6769 = vadd.f32 %v6059, %v6671
  %v6770 = vadd.f32 %v6060, %v6676
  %v6771 = vadd.f32 %v6061, %v6681
  %v6772 = vadd.f32 %v6062, %v6686
  %v6773 = vadd.f32 %v6063, %v6691
  %v6774 = vadd.f32 %v6064, %v6696
  %v6775 = vadd.f32 %v6065, %v6701
  %v6776 = vadd.f32 %v6066, %v6706
  %v6777 = vadd.f32 %v6067, %v6711
  %v6778 = vld [vmem:[%s5357 + $0x9] sm:$0xff]
  %v6779 = vld [vmem:[%s5357 + $0x11] sm:$0xff]
  %v6780 = vld [vmem:[%s5357 + $0x29] sm:$0xff]
  %v6781 = vld [vmem:[%s5357 + $0x31] sm:$0xff]
  %v6782 = vld [vmem:[%s5357 + $0x49] sm:$0xff]
  %v6783 = vld [vmem:[%s5357 + $0x51] sm:$0xff]
  %v6784 = vld [vmem:[%s5357 + $0x69] sm:$0xff]
  %v6785 = vld [vmem:[%s5357 + $0x71] sm:$0xff]
  %v6786 = vld [vmem:[%s5357 + $0x89] sm:$0xff]
  %v6787 = vld [vmem:[%s5357 + $0x91] sm:$0xff]
  %v6788 = vld [vmem:[%s5357 + $0xa9] sm:$0xff]
  %v6789 = vld [vmem:[%s5357 + $0xb1] sm:$0xff]
  %v6790 = vld [vmem:[%s5357 + $0xc9] sm:$0xff]
  %v6791 = vld [vmem:[%s5357 + $0xd1] sm:$0xff]
  %v6792 = vld [vmem:[%s5357 + $0xe9] sm:$0xff]
  %v6793 = vld [vmem:[%s5357 + $0xf1] sm:$0xff]
  %v6794 = vld [vmem:[%s5357 + $0x109] sm:$0xff]
  %v6795 = vld [vmem:[%s5357 + $0x111] sm:$0xff]
  %v6796 = vld [vmem:[%s5357 + $0x129] sm:$0xff]
  %v6797 = vld [vmem:[%s5357 + $0x131] sm:$0xff]
  %v6798 = vld [vmem:[%s5357 + $0x149] sm:$0xff]
  %v6799 = vld [vmem:[%s5357 + $0x151] sm:$0xff]
  %v6800 = vld [vmem:[%s5357 + $0x169] sm:$0xff]
  %v6801 = vld [vmem:[%s5357 + $0x171] sm:$0xff]
  %v6802 = vld [vmem:[%s5357 + $0x189] sm:$0xff]
  %v6803 = vld [vmem:[%s5357 + $0x191] sm:$0xff]
  %v6804 = vld [vmem:[%s5357 + $0x1a9] sm:$0xff]
  %v6805 = vld [vmem:[%s5357 + $0x1b1] sm:$0xff]
  %v6806 = vld [vmem:[%s5357 + $0x1c9] sm:$0xff]
  %v6807 = vld [vmem:[%s5357 + $0x1d1] sm:$0xff]
  %v6808 = vld [vmem:[%s5357 + $0x1e9] sm:$0xff]
  %v6809 = vld [vmem:[%s5357 + $0x1f1] sm:$0xff]
  %v6810 = vld [vmem:[%s5357 + $0x249] sm:$0xff]
  %v6811 = vld [vmem:[%s5357 + $0x251] sm:$0xff]
  %v6812 = vld [vmem:[%s5357 + $0x269] sm:$0xff]
  %v6813 = vld [vmem:[%s5357 + $0x271] sm:$0xff]
  %v6814 = vld [vmem:[%s5357 + $0x289] sm:$0xff]
  %v6815 = vld [vmem:[%s5357 + $0x291] sm:$0xff]
  %v6816 = vld [vmem:[%s5357 + $0x2a9] sm:$0xff]
  %v6817 = vld [vmem:[%s5357 + $0x2b1] sm:$0xff]
  %v6818 = vld [vmem:[%s5357 + $0x2c9] sm:$0xff]
  %v6819 = vld [vmem:[%s5357 + $0x2d1] sm:$0xff]
  %v6820 = vld [vmem:[%s5357 + $0x2e9] sm:$0xff]
  %v6821 = vld [vmem:[%s5357 + $0x2f1] sm:$0xff]
  %v6822 = vld [vmem:[%s5357 + $0x309] sm:$0xff]
  %v6823 = vld [vmem:[%s5357 + $0x311] sm:$0xff]
  %v6824 = vld [vmem:[%s5357 + $0x329] sm:$0xff]
  %v6825 = vld [vmem:[%s5357 + $0x331] sm:$0xff]
  %v6826 = vld [vmem:[%s5357 + $0x349] sm:$0xff]
  %v6827 = vld [vmem:[%s5357 + $0x351] sm:$0xff]
  %v6828 = vld [vmem:[%s5357 + $0x369] sm:$0xff]
  %v6829 = vld [vmem:[%s5357 + $0x371] sm:$0xff]
  %v6830 = vld [vmem:[%s5357 + $0x389] sm:$0xff]
  %v6831 = vld [vmem:[%s5357 + $0x391] sm:$0xff]
  %v6832 = vld [vmem:[%s5357 + $0x3a9] sm:$0xff]
  %v6833 = vld [vmem:[%s5357 + $0x3b1] sm:$0xff]
  %v6834 = vld [vmem:[%s5357 + $0x3c9] sm:$0xff]
  %v6835 = vld [vmem:[%s5357 + $0x3d1] sm:$0xff]
  %v6836 = vld [vmem:[%s5357 + $0x3e9] sm:$0xff]
  %v6837 = vld [vmem:[%s5357 + $0x3f1] sm:$0xff]
  %v6838 = vld [vmem:[%s5357 + $0x409] sm:$0xff]
  %v6839 = vld [vmem:[%s5357 + $0x411] sm:$0xff]
  %v6840 = vld [vmem:[%s5357 + $0x429] sm:$0xff]
  %v6841 = vld [vmem:[%s5357 + $0x431] sm:$0xff]
  %s6842 = scalar_lea.vmem %s5, 16
  %v6843 = vld [vmem:[%s6842] sm:$0x3]
  %v6845 = vsel %vm1069, %v6778, 0
  %v6848 = vsel %vm1069, %v6779, 0
  %v6851 = vsel %vm1069, %v6780, 0
  %v6854 = vsel %vm1069, %v6781, 0
  %v6857 = vsel %vm1069, %v6782, 0
  %v6860 = vsel %vm1069, %v6783, 0
  %v6863 = vsel %vm1069, %v6784, 0
  %v6866 = vsel %vm1069, %v6785, 0
  %v6869 = vsel %vm1069, %v6786, 0
  %v6872 = vsel %vm1069, %v6787, 0
  %v6875 = vsel %vm1069, %v6788, 0
  %v6878 = vsel %vm1069, %v6789, 0
  %v6881 = vsel %vm1069, %v6790, 0
  %v6884 = vsel %vm1069, %v6791, 0
  %v6887 = vsel %vm1069, %v6792, 0
  %v6890 = vsel %vm1069, %v6793, 0
  %v6893 = vsel %vm1069, %v6794, 0
  %v6896 = vsel %vm1069, %v6795, 0
  %v6899 = vsel %vm1069, %v6796, 0
  %v6902 = vsel %vm1069, %v6797, 0
  %v6905 = vsel %vm1069, %v6798, 0
  %v6908 = vsel %vm1069, %v6799, 0
  %v6911 = vsel %vm1069, %v6800, 0
  %v6914 = vsel %vm1069, %v6801, 0
  %v6917 = vsel %vm1069, %v6802, 0
  %v6920 = vsel %vm1069, %v6803, 0
  %v6923 = vsel %vm1069, %v6804, 0
  %v6926 = vsel %vm1069, %v6805, 0
  %v6929 = vsel %vm1069, %v6806, 0
  %v6932 = vsel %vm1069, %v6807, 0
  %v6935 = vsel %vm1069, %v6808, 0
  %v6938 = vsel %vm1069, %v6809, 0
  %v6941 = vsel %vm1069, %v6810, 0
  %v6944 = vsel %vm1069, %v6811, 0
  %v6947 = vsel %vm1069, %v6812, 0
  %v6950 = vsel %vm1069, %v6813, 0
  %v6953 = vsel %vm1069, %v6814, 0
  %v6956 = vsel %vm1069, %v6815, 0
  %v6959 = vsel %vm1069, %v6816, 0
  %v6962 = vsel %vm1069, %v6817, 0
  %v6965 = vsel %vm1069, %v6818, 0
  %v6968 = vsel %vm1069, %v6819, 0
  %v6971 = vsel %vm1069, %v6820, 0
  %v6974 = vsel %vm1069, %v6821, 0
  %v6977 = vsel %vm1069, %v6822, 0
  %v6980 = vsel %vm1069, %v6823, 0
  %v6983 = vsel %vm1069, %v6824, 0
  %v6986 = vsel %vm1069, %v6825, 0
  %v6989 = vsel %vm1069, %v6826, 0
  %v6992 = vsel %vm1069, %v6827, 0
  %v6995 = vsel %vm1069, %v6828, 0
  %v6998 = vsel %vm1069, %v6829, 0
  %v7001 = vsel %vm1069, %v6830, 0
  %v7004 = vsel %vm1069, %v6831, 0
  %v7007 = vsel %vm1069, %v6832, 0
  %v7010 = vsel %vm1069, %v6833, 0
  %v7013 = vsel %vm1069, %v6834, 0
  %v7016 = vsel %vm1069, %v6835, 0
  %v7019 = vsel %vm1069, %v6836, 0
  %v7022 = vsel %vm1069, %v6837, 0
  %v7025 = vsel %vm1069, %v6838, 0
  %v7028 = vsel %vm1069, %v6839, 0
  %v7031 = vsel %vm1069, %v6840, 0
  %v7034 = vsel %vm1069, %v6841, 0
  %v7037 = vsel %vm1548, %v6843, 0
  %7039 = vmatprep.subr.mxu0 0.0
  %7040 = vmatpush1.msra.mxu0 %v7037
  %7041 = vmatprep.subr.mxu0 0.0
  %7042 = vmatpush1.msra.mxu0 0.0
  %7043 = vmatprep.subr.mxu0 0.0
  %7044 = vmatpush1.msra.mxu0 0.0
  %7045 = vmatprep.subr.mxu0 0.0
  %7046 = vmatpush1.msra.mxu0 0.0
  %7047 = vmatprep.subr.mxu0 0.0
  %7048 = vmatpush1.msra.mxu0 0.0
  %7049 = vmatprep.subr.mxu0 0.0
  %7050 = vmatpush1.msra.mxu0 0.0
  %7051 = vmatprep.subr.mxu0 0.0
  %7052 = vmatpush1.msra.mxu0 0.0
  %7053 = vmatprep.subr.mxu0 0.0
  %7054 = vmatpush1.msra.mxu0 0.0
  %7055 = vmatprep.subr.mxu0 0.0
  %7056 = vmatpush1.msra.mxu0 0.0
  %7057 = vmatprep.subr.mxu0 0.0
  %7058 = vmatpush1.msra.mxu0 0.0
  %7059 = vmatprep.subr.mxu0 0.0
  %7060 = vmatpush1.msra.mxu0 0.0
  %7061 = vmatprep.subr.mxu0 0.0
  %7062 = vmatpush1.msra.mxu0 0.0
  %7063 = vmatprep.subr.mxu0 0.0
  %7064 = vmatpush1.msra.mxu0 0.0
  %7065 = vmatprep.subr.mxu0 0.0
  %7066 = vmatpush1.msra.mxu0 0.0
  %7067 = vmatprep.subr.mxu0 0.0
  %7068 = vmatpush1.msra.mxu0 0.0
  %7069 = vmatprep.subr.mxu0 0.0
  %7070 = vmatpush1.msra.mxu0 0.0
  %7071 = vmatprep.subr.mxu0 0.0
  %7072 = vmatpush1.msra.mxu0 0.0
  %7073 = vmatprep.subr.mxu0 0.0
  %7074 = vmatpush1.msra.mxu0 0.0
  %7075 = vmatprep.subr.mxu0 0.0
  %7076 = vmatpush1.msra.mxu0 0.0
  %7077 = vmatprep.subr.mxu0 0.0
  %7078 = vmatpush1.msra.mxu0 0.0
  %7079 = vmatprep.subr.mxu0 0.0
  %7080 = vmatpush1.msra.mxu0 0.0
  %7081 = vmatprep.subr.mxu0 0.0
  %7082 = vmatpush1.msra.mxu0 0.0
  %7083 = vmatprep.subr.mxu0 0.0
  %7084 = vmatpush1.msra.mxu0 0.0
  %7085 = vmatprep.subr.mxu0 0.0
  %7086 = vmatpush1.msra.mxu0 0.0
  %7087 = vmatprep.subr.mxu0 0.0
  %7088 = vmatpush1.msra.mxu0 0.0
  %7089 = vmatprep.subr.mxu0 0.0
  %7090 = vmatpush1.msra.mxu0 0.0
  %7091 = vmatprep.subr.mxu0 0.0
  %7092 = vmatpush1.msra.mxu0 0.0
  %7093 = vmatprep.subr.mxu0 0.0
  %7094 = vmatpush1.msra.mxu0 0.0
  %7095 = vmatprep.subr.mxu0 0.0
  %7096 = vmatpush1.msra.mxu0 0.0
  %7097 = vmatprep.subr.mxu0 0.0
  %7098 = vmatpush1.msra.mxu0 0.0
  %7099 = vmatprep.subr.mxu0 0.0
  %7100 = vmatpush1.msra.mxu0 0.0
  %7101 = vmatprep.subr.mxu0 0.0
  %7102 = vmatpush1.msra.mxu0 0.0
  %7103 = vmatprep.mubr.f32.mxu0 0.0
  %7104 = vmatmul.mubr.f32.gmra.mrb[0].mxu0 %v6845
  %v7105 = vpop.f32.mrb[0].mxu0
  %v7106 = vadd.f32 0.0, %v7105
  %v7107 = vpop.f32.mrb[0].mxu0
  %7108 = vmatprep.mubr.f32.mxu0 0.0
  %7109 = vmatmul.mubr.f32.gmra.mrb[0].mxu0 %v6848
  %v7110 = vpop.f32.mrb[0].mxu0
  %v7111 = vadd.f32 0.0, %v7110
  %v7112 = vpop.f32.mrb[0].mxu0
  %7113 = vmatprep.mubr.f32.mxu0 0.0
  %7114 = vmatmul.mubr.f32.gmra.mrb[0].mxu0 %v6851
  %v7115 = vpop.f32.mrb[0].mxu0
  %v7116 = vadd.f32 0.0, %v7115
  %v7117 = vpop.f32.mrb[0].mxu0
  %7118 = vmatprep.mubr.f32.mxu0 0.0
  %7119 = vmatmul.mubr.f32.gmra.mrb[0].mxu0 %v6854
  %v7120 = vpop.f32.mrb[0].mxu0
  %v7121 = vadd.f32 0.0, %v7120
  %v7122 = vpop.f32.mrb[0].mxu0
  %7123 = vmatprep.mubr.f32.mxu0 0.0
  %7124 = vmatmul.mubr.f32.gmra.mrb[0].mxu0 %v6857
  %v7125 = vpop.f32.mrb[0].mxu0
  %v7126 = vadd.f32 0.0, %v7125
  %v7127 = vpop.f32.mrb[0].mxu0
  %7128 = vmatprep.mubr.f32.mxu0 0.0
  %7129 = vmatmul.mubr.f32.gmra.mrb[0].mxu0 %v6860
  %v7130 = vpop.f32.mrb[0].mxu0
  %v7131 = vadd.f32 0.0, %v7130
  %v7132 = vpop.f32.mrb[0].mxu0
  %7133 = vmatprep.mubr.f32.mxu0 0.0
  %7134 = vmatmul.mubr.f32.gmra.mrb[0].mxu0 %v6863
  %v7135 = vpop.f32.mrb[0].mxu0
  %v7136 = vadd.f32 0.0, %v7135
  %v7137 = vpop.f32.mrb[0].mxu0
  %7138 = vmatprep.mubr.f32.mxu0 0.0
  %7139 = vmatmul.mubr.f32.gmra.mrb[0].mxu0 %v6866
  %v7140 = vpop.f32.mrb[0].mxu0
  %v7141 = vadd.f32 0.0, %v7140
  %v7142 = vpop.f32.mrb[0].mxu0
  %7143 = vmatprep.mubr.f32.mxu0 0.0
  %7144 = vmatmul.mubr.f32.gmra.mrb[0].mxu0 %v6869
  %v7145 = vpop.f32.mrb[0].mxu0
  %v7146 = vadd.f32 0.0, %v7145
  %v7147 = vpop.f32.mrb[0].mxu0
  %7148 = vmatprep.mubr.f32.mxu0 0.0
  %7149 = vmatmul.mubr.f32.gmra.mrb[0].mxu0 %v6872
  %v7150 = vpop.f32.mrb[0].mxu0
  %v7151 = vadd.f32 0.0, %v7150
  %v7152 = vpop.f32.mrb[0].mxu0
  %7153 = vmatprep.mubr.f32.mxu0 0.0
  %7154 = vmatmul.mubr.f32.gmra.mrb[0].mxu0 %v6875
  %v7155 = vpop.f32.mrb[0].mxu0
  %v7156 = vadd.f32 0.0, %v7155
  %v7157 = vpop.f32.mrb[0].mxu0
  %7158 = vmatprep.mubr.f32.mxu0 0.0
  %7159 = vmatmul.mubr.f32.gmra.mrb[0].mxu0 %v6878
  %v7160 = vpop.f32.mrb[0].mxu0
  %v7161 = vadd.f32 0.0, %v7160
  %v7162 = vpop.f32.mrb[0].mxu0
  %7163 = vmatprep.mubr.f32.mxu0 0.0
  %7164 = vmatmul.mubr.f32.gmra.mrb[0].mxu0 %v6881
  %v7165 = vpop.f32.mrb[0].mxu0
  %v7166 = vadd.f32 0.0, %v7165
  %v7167 = vpop.f32.mrb[0].mxu0
  %7168 = vmatprep.mubr.f32.mxu0 0.0
  %7169 = vmatmul.mubr.f32.gmra.mrb[0].mxu0 %v6884
  %v7170 = vpop.f32.mrb[0].mxu0
  %v7171 = vadd.f32 0.0, %v7170
  %v7172 = vpop.f32.mrb[0].mxu0
  %7173 = vmatprep.mubr.f32.mxu0 0.0
  %7174 = vmatmul.mubr.f32.gmra.mrb[0].mxu0 %v6887
  %v7175 = vpop.f32.mrb[0].mxu0
  %v7176 = vadd.f32 0.0, %v7175
  %v7177 = vpop.f32.mrb[0].mxu0
  %7178 = vmatprep.mubr.f32.mxu0 0.0
  %7179 = vmatmul.mubr.f32.gmra.mrb[0].mxu0 %v6890
  %v7180 = vpop.f32.mrb[0].mxu0
  %v7181 = vadd.f32 0.0, %v7180
  %v7182 = vpop.f32.mrb[0].mxu0
  %7183 = vmatprep.mubr.f32.mxu0 0.0
  %7184 = vmatmul.mubr.f32.gmra.mrb[0].mxu0 %v6893
  %v7185 = vpop.f32.mrb[0].mxu0
  %v7186 = vadd.f32 0.0, %v7185
  %v7187 = vpop.f32.mrb[0].mxu0
  %7188 = vmatprep.mubr.f32.mxu0 0.0
  %7189 = vmatmul.mubr.f32.gmra.mrb[0].mxu0 %v6896
  %v7190 = vpop.f32.mrb[0].mxu0
  %v7191 = vadd.f32 0.0, %v7190
  %v7192 = vpop.f32.mrb[0].mxu0
  %7193 = vmatprep.mubr.f32.mxu0 0.0
  %7194 = vmatmul.mubr.f32.gmra.mrb[0].mxu0 %v6899
  %v7195 = vpop.f32.mrb[0].mxu0
  %v7196 = vadd.f32 0.0, %v7195
  %v7197 = vpop.f32.mrb[0].mxu0
  %7198 = vmatprep.mubr.f32.mxu0 0.0
  %7199 = vmatmul.mubr.f32.gmra.mrb[0].mxu0 %v6902
  %v7200 = vpop.f32.mrb[0].mxu0
  %v7201 = vadd.f32 0.0, %v7200
  %v7202 = vpop.f32.mrb[0].mxu0
  %7203 = vmatprep.mubr.f32.mxu0 0.0
  %7204 = vmatmul.mubr.f32.gmra.mrb[0].mxu0 %v6905
  %v7205 = vpop.f32.mrb[0].mxu0
  %v7206 = vadd.f32 0.0, %v7205
  %v7207 = vpop.f32.mrb[0].mxu0
  %7208 = vmatprep.mubr.f32.mxu0 0.0
  %7209 = vmatmul.mubr.f32.gmra.mrb[0].mxu0 %v6908
  %v7210 = vpop.f32.mrb[0].mxu0
  %v7211 = vadd.f32 0.0, %v7210
  %v7212 = vpop.f32.mrb[0].mxu0
  %7213 = vmatprep.mubr.f32.mxu0 0.0
  %7214 = vmatmul.mubr.f32.gmra.mrb[0].mxu0 %v6911
  %v7215 = vpop.f32.mrb[0].mxu0
  %v7216 = vadd.f32 0.0, %v7215
  %v7217 = vpop.f32.mrb[0].mxu0
  %7218 = vmatprep.mubr.f32.mxu0 0.0
  %7219 = vmatmul.mubr.f32.gmra.mrb[0].mxu0 %v6914
  %v7220 = vpop.f32.mrb[0].mxu0
  %v7221 = vadd.f32 0.0, %v7220
  %v7222 = vpop.f32.mrb[0].mxu0
  %7223 = vmatprep.mubr.f32.mxu0 0.0
  %7224 = vmatmul.mubr.f32.gmra.mrb[0].mxu0 %v6917
  %v7225 = vpop.f32.mrb[0].mxu0
  %v7226 = vadd.f32 0.0, %v7225
  %v7227 = vpop.f32.mrb[0].mxu0
  %7228 = vmatprep.mubr.f32.mxu0 0.0
  %7229 = vmatmul.mubr.f32.gmra.mrb[0].mxu0 %v6920
  %v7230 = vpop.f32.mrb[0].mxu0
  %v7231 = vadd.f32 0.0, %v7230
  %v7232 = vpop.f32.mrb[0].mxu0
  %7233 = vmatprep.mubr.f32.mxu0 0.0
  %7234 = vmatmul.mubr.f32.gmra.mrb[0].mxu0 %v6923
  %v7235 = vpop.f32.mrb[0].mxu0
  %v7236 = vadd.f32 0.0, %v7235
  %v7237 = vpop.f32.mrb[0].mxu0
  %7238 = vmatprep.mubr.f32.mxu0 0.0
  %7239 = vmatmul.mubr.f32.gmra.mrb[0].mxu0 %v6926
  %v7240 = vpop.f32.mrb[0].mxu0
  %v7241 = vadd.f32 0.0, %v7240
  %v7242 = vpop.f32.mrb[0].mxu0
  %7243 = vmatprep.mubr.f32.mxu0 0.0
  %7244 = vmatmul.mubr.f32.gmra.mrb[0].mxu0 %v6929
  %v7245 = vpop.f32.mrb[0].mxu0
  %v7246 = vadd.f32 0.0, %v7245
  %v7247 = vpop.f32.mrb[0].mxu0
  %7248 = vmatprep.mubr.f32.mxu0 0.0
  %7249 = vmatmul.mubr.f32.gmra.mrb[0].mxu0 %v6932
  %v7250 = vpop.f32.mrb[0].mxu0
  %v7251 = vadd.f32 0.0, %v7250
  %v7252 = vpop.f32.mrb[0].mxu0
  %7253 = vmatprep.mubr.f32.mxu0 0.0
  %7254 = vmatmul.mubr.f32.gmra.mrb[0].mxu0 %v6935
  %v7255 = vpop.f32.mrb[0].mxu0
  %v7256 = vadd.f32 0.0, %v7255
  %v7257 = vpop.f32.mrb[0].mxu0
  %7258 = vmatprep.mubr.f32.mxu0 0.0
  %7259 = vmatmul.mubr.f32.gmra.mrb[0].mxu0 %v6938
  %v7260 = vpop.f32.mrb[0].mxu0
  %v7261 = vadd.f32 0.0, %v7260
  %v7262 = vpop.f32.mrb[0].mxu0
  %7263 = vmatprep.mubr.f32.mxu0 0.0
  %7264 = vmatmul.mubr.f32.gmra.mrb[0].mxu0 %v6941
  %v7265 = vpop.f32.mrb[0].mxu0
  %v7266 = vadd.f32 0.0, %v7265
  %v7267 = vpop.f32.mrb[0].mxu0
  %7268 = vmatprep.mubr.f32.mxu0 0.0
  %7269 = vmatmul.mubr.f32.gmra.mrb[0].mxu0 %v6944
  %v7270 = vpop.f32.mrb[0].mxu0
  %v7271 = vadd.f32 0.0, %v7270
  %v7272 = vpop.f32.mrb[0].mxu0
  %7273 = vmatprep.mubr.f32.mxu0 0.0
  %7274 = vmatmul.mubr.f32.gmra.mrb[0].mxu0 %v6947
  %v7275 = vpop.f32.mrb[0].mxu0
  %v7276 = vadd.f32 0.0, %v7275
  %v7277 = vpop.f32.mrb[0].mxu0
  %7278 = vmatprep.mubr.f32.mxu0 0.0
  %7279 = vmatmul.mubr.f32.gmra.mrb[0].mxu0 %v6950
  %v7280 = vpop.f32.mrb[0].mxu0
  %v7281 = vadd.f32 0.0, %v7280
  %v7282 = vpop.f32.mrb[0].mxu0
  %7283 = vmatprep.mubr.f32.mxu0 0.0
  %7284 = vmatmul.mubr.f32.gmra.mrb[0].mxu0 %v6953
  %v7285 = vpop.f32.mrb[0].mxu0
  %v7286 = vadd.f32 0.0, %v7285
  %v7287 = vpop.f32.mrb[0].mxu0
  %7288 = vmatprep.mubr.f32.mxu0 0.0
  %7289 = vmatmul.mubr.f32.gmra.mrb[0].mxu0 %v6956
  %v7290 = vpop.f32.mrb[0].mxu0
  %v7291 = vadd.f32 0.0, %v7290
  %v7292 = vpop.f32.mrb[0].mxu0
  %7293 = vmatprep.mubr.f32.mxu0 0.0
  %7294 = vmatmul.mubr.f32.gmra.mrb[0].mxu0 %v6959
  %v7295 = vpop.f32.mrb[0].mxu0
  %v7296 = vadd.f32 0.0, %v7295
  %v7297 = vpop.f32.mrb[0].mxu0
  %7298 = vmatprep.mubr.f32.mxu0 0.0
  %7299 = vmatmul.mubr.f32.gmra.mrb[0].mxu0 %v6962
  %v7300 = vpop.f32.mrb[0].mxu0
  %v7301 = vadd.f32 0.0, %v7300
  %v7302 = vpop.f32.mrb[0].mxu0
  %7303 = vmatprep.mubr.f32.mxu0 0.0
  %7304 = vmatmul.mubr.f32.gmra.mrb[0].mxu0 %v6965
  %v7305 = vpop.f32.mrb[0].mxu0
  %v7306 = vadd.f32 0.0, %v7305
  %v7307 = vpop.f32.mrb[0].mxu0
  %7308 = vmatprep.mubr.f32.mxu0 0.0
  %7309 = vmatmul.mubr.f32.gmra.mrb[0].mxu0 %v6968
  %v7310 = vpop.f32.mrb[0].mxu0
  %v7311 = vadd.f32 0.0, %v7310
  %v7312 = vpop.f32.mrb[0].mxu0
  %7313 = vmatprep.mubr.f32.mxu0 0.0
  %7314 = vmatmul.mubr.f32.gmra.mrb[0].mxu0 %v6971
  %v7315 = vpop.f32.mrb[0].mxu0
  %v7316 = vadd.f32 0.0, %v7315
  %v7317 = vpop.f32.mrb[0].mxu0
  %7318 = vmatprep.mubr.f32.mxu0 0.0
  %7319 = vmatmul.mubr.f32.gmra.mrb[0].mxu0 %v6974
  %v7320 = vpop.f32.mrb[0].mxu0
  %v7321 = vadd.f32 0.0, %v7320
  %v7322 = vpop.f32.mrb[0].mxu0
  %7323 = vmatprep.mubr.f32.mxu0 0.0
  %7324 = vmatmul.mubr.f32.gmra.mrb[0].mxu0 %v6977
  %v7325 = vpop.f32.mrb[0].mxu0
  %v7326 = vadd.f32 0.0, %v7325
  %v7327 = vpop.f32.mrb[0].mxu0
  %7328 = vmatprep.mubr.f32.mxu0 0.0
  %7329 = vmatmul.mubr.f32.gmra.mrb[0].mxu0 %v6980
  %v7330 = vpop.f32.mrb[0].mxu0
  %v7331 = vadd.f32 0.0, %v7330
  %v7332 = vpop.f32.mrb[0].mxu0
  %7333 = vmatprep.mubr.f32.mxu0 0.0
  %7334 = vmatmul.mubr.f32.gmra.mrb[0].mxu0 %v6983
  %v7335 = vpop.f32.mrb[0].mxu0
  %v7336 = vadd.f32 0.0, %v7335
  %v7337 = vpop.f32.mrb[0].mxu0
  %7338 = vmatprep.mubr.f32.mxu0 0.0
  %7339 = vmatmul.mubr.f32.gmra.mrb[0].mxu0 %v6986
  %v7340 = vpop.f32.mrb[0].mxu0
  %v7341 = vadd.f32 0.0, %v7340
  %v7342 = vpop.f32.mrb[0].mxu0
  %7343 = vmatprep.mubr.f32.mxu0 0.0
  %7344 = vmatmul.mubr.f32.gmra.mrb[0].mxu0 %v6989
  %v7345 = vpop.f32.mrb[0].mxu0
  %v7346 = vadd.f32 0.0, %v7345
  %v7347 = vpop.f32.mrb[0].mxu0
  %7348 = vmatprep.mubr.f32.mxu0 0.0
  %7349 = vmatmul.mubr.f32.gmra.mrb[0].mxu0 %v6992
  %v7350 = vpop.f32.mrb[0].mxu0
  %v7351 = vadd.f32 0.0, %v7350
  %v7352 = vpop.f32.mrb[0].mxu0
  %7353 = vmatprep.mubr.f32.mxu0 0.0
  %7354 = vmatmul.mubr.f32.gmra.mrb[0].mxu0 %v6995
  %v7355 = vpop.f32.mrb[0].mxu0
  %v7356 = vadd.f32 0.0, %v7355
  %v7357 = vpop.f32.mrb[0].mxu0
  %7358 = vmatprep.mubr.f32.mxu0 0.0
  %7359 = vmatmul.mubr.f32.gmra.mrb[0].mxu0 %v6998
  %v7360 = vpop.f32.mrb[0].mxu0
  %v7361 = vadd.f32 0.0, %v7360
  %v7362 = vpop.f32.mrb[0].mxu0
  %7363 = vmatprep.mubr.f32.mxu0 0.0
  %7364 = vmatmul.mubr.f32.gmra.mrb[0].mxu0 %v7001
  %v7365 = vpop.f32.mrb[0].mxu0
  %v7366 = vadd.f32 0.0, %v7365
  %v7367 = vpop.f32.mrb[0].mxu0
  %7368 = vmatprep.mubr.f32.mxu0 0.0
  %7369 = vmatmul.mubr.f32.gmra.mrb[0].mxu0 %v7004
  %v7370 = vpop.f32.mrb[0].mxu0
  %v7371 = vadd.f32 0.0, %v7370
  %v7372 = vpop.f32.mrb[0].mxu0
  %7373 = vmatprep.mubr.f32.mxu0 0.0
  %7374 = vmatmul.mubr.f32.gmra.mrb[0].mxu0 %v7007
  %v7375 = vpop.f32.mrb[0].mxu0
  %v7376 = vadd.f32 0.0, %v7375
  %v7377 = vpop.f32.mrb[0].mxu0
  %7378 = vmatprep.mubr.f32.mxu0 0.0
  %7379 = vmatmul.mubr.f32.gmra.mrb[0].mxu0 %v7010
  %v7380 = vpop.f32.mrb[0].mxu0
  %v7381 = vadd.f32 0.0, %v7380
  %v7382 = vpop.f32.mrb[0].mxu0
  %7383 = vmatprep.mubr.f32.mxu0 0.0
  %7384 = vmatmul.mubr.f32.gmra.mrb[0].mxu0 %v7013
  %v7385 = vpop.f32.mrb[0].mxu0
  %v7386 = vadd.f32 0.0, %v7385
  %v7387 = vpop.f32.mrb[0].mxu0
  %7388 = vmatprep.mubr.f32.mxu0 0.0
  %7389 = vmatmul.mubr.f32.gmra.mrb[0].mxu0 %v7016
  %v7390 = vpop.f32.mrb[0].mxu0
  %v7391 = vadd.f32 0.0, %v7390
  %v7392 = vpop.f32.mrb[0].mxu0
  %7393 = vmatprep.mubr.f32.mxu0 0.0
  %7394 = vmatmul.mubr.f32.gmra.mrb[0].mxu0 %v7019
  %v7395 = vpop.f32.mrb[0].mxu0
  %v7396 = vadd.f32 0.0, %v7395
  %v7397 = vpop.f32.mrb[0].mxu0
  %7398 = vmatprep.mubr.f32.mxu0 0.0
  %7399 = vmatmul.mubr.f32.gmra.mrb[0].mxu0 %v7022
  %v7400 = vpop.f32.mrb[0].mxu0
  %v7401 = vadd.f32 0.0, %v7400
  %v7402 = vpop.f32.mrb[0].mxu0
  %7403 = vmatprep.mubr.f32.mxu0 0.0
  %7404 = vmatmul.mubr.f32.gmra.mrb[0].mxu0 %v7025
  %v7405 = vpop.f32.mrb[0].mxu0
  %v7406 = vadd.f32 0.0, %v7405
  %v7407 = vpop.f32.mrb[0].mxu0
  %7408 = vmatprep.mubr.f32.mxu0 0.0
  %7409 = vmatmul.mubr.f32.gmra.mrb[0].mxu0 %v7028
  %v7410 = vpop.f32.mrb[0].mxu0
  %v7411 = vadd.f32 0.0, %v7410
  %v7412 = vpop.f32.mrb[0].mxu0
  %7413 = vmatprep.mubr.f32.mxu0 0.0
  %7414 = vmatmul.mubr.f32.gmra.mrb[0].mxu0 %v7031
  %v7415 = vpop.f32.mrb[0].mxu0
  %v7416 = vadd.f32 0.0, %v7415
  %v7417 = vpop.f32.mrb[0].mxu0
  %7418 = vmatprep.mubr.f32.mxu0 0.0
  %7419 = vmatmul.mubr.f32.gmra.mrb[0].mxu0 %v7034
  %v7420 = vpop.f32.mrb[0].mxu0
  %v7421 = vadd.f32 0.0, %v7420
  %v7422 = vpop.f32.mrb[0].mxu0
  %7423 = vdwg.mxu0
  %v7424 = vadd.f32 %v6714, %v7106
  %v7425 = vadd.f32 %v6715, %v7111
  %v7426 = vadd.f32 %v6716, %v7116
  %v7427 = vadd.f32 %v6717, %v7121
  %v7428 = vadd.f32 %v6718, %v7126
  %v7429 = vadd.f32 %v6719, %v7131
  %v7430 = vadd.f32 %v6720, %v7136
  %v7431 = vadd.f32 %v6721, %v7141
  %v7432 = vadd.f32 %v6722, %v7146
  %v7433 = vadd.f32 %v6723, %v7151
  %v7434 = vadd.f32 %v6724, %v7156
  %v7435 = vadd.f32 %v6725, %v7161
  %v7436 = vadd.f32 %v6726, %v7166
  %v7437 = vadd.f32 %v6727, %v7171
  %v7438 = vadd.f32 %v6728, %v7176
  %v7439 = vadd.f32 %v6729, %v7181
  %v7440 = vadd.f32 %v6730, %v7186
  %v7441 = vadd.f32 %v6731, %v7191
  %v7442 = vadd.f32 %v6732, %v7196
  %v7443 = vadd.f32 %v6733, %v7201
  %v7444 = vadd.f32 %v6734, %v7206
  %v7445 = vadd.f32 %v6735, %v7211
  %v7446 = vadd.f32 %v6736, %v7216
  %v7447 = vadd.f32 %v6737, %v7221
  %v7448 = vadd.f32 %v6738, %v7226
  %v7449 = vadd.f32 %v6739, %v7231
  %v7450 = vadd.f32 %v6740, %v7236
  %v7451 = vadd.f32 %v6741, %v7241
  %v7452 = vadd.f32 %v6742, %v7246
  %v7453 = vadd.f32 %v6743, %v7251
  %v7454 = vadd.f32 %v6744, %v7256
  %v7455 = vadd.f32 %v6745, %v7261
  %v7456 = vadd.f32 %v6746, %v7266
  %v7457 = vadd.f32 %v6747, %v7271
  %v7458 = vadd.f32 %v6748, %v7276
  %v7459 = vadd.f32 %v6749, %v7281
  %v7460 = vadd.f32 %v6750, %v7286
  %v7461 = vadd.f32 %v6751, %v7291
  %v7462 = vadd.f32 %v6752, %v7296
  %v7463 = vadd.f32 %v6753, %v7301
  %v7464 = vadd.f32 %v6754, %v7306
  %v7465 = vadd.f32 %v6755, %v7311
  %v7466 = vadd.f32 %v6756, %v7316
  %v7467 = vadd.f32 %v6757, %v7321
  %v7468 = vadd.f32 %v6758, %v7326
  %v7469 = vadd.f32 %v6759, %v7331
  %v7470 = vadd.f32 %v6760, %v7336
  %v7471 = vadd.f32 %v6761, %v7341
  %v7472 = vadd.f32 %v6762, %v7346
  %v7473 = vadd.f32 %v6763, %v7351
  %v7474 = vadd.f32 %v6764, %v7356
  %v7475 = vadd.f32 %v6765, %v7361
  %v7476 = vadd.f32 %v6766, %v7366
  %v7477 = vadd.f32 %v6767, %v7371
  %v7478 = vadd.f32 %v6768, %v7376
  %v7479 = vadd.f32 %v6769, %v7381
  %v7480 = vadd.f32 %v6770, %v7386
  %v7481 = vadd.f32 %v6771, %v7391
  %v7482 = vadd.f32 %v6772, %v7396
  %v7483 = vadd.f32 %v6773, %v7401
  %v7484 = vadd.f32 %v6774, %v7406
  %v7485 = vadd.f32 %v6775, %v7411
  %v7486 = vadd.f32 %v6776, %v7416
  %v7487 = vadd.f32 %v6777, %v7421
  %v7488 = vld [vmem:[%s6] sm:$0x1]
  %v7490 = vlaneseq
  %v7491 = vshrl.u32 %v7490, 7
  %v7492 = vsub.s32 0, %v7491
  %v7493 = vrot.slane %v7488, %v7492
  %v7495 = vadd.f32 %v7424, %v7493
  %v7496 = vadd.f32 %v7425, %v7493
  %v7497 = vadd.f32 %v7426, %v7493
  %v7498 = vadd.f32 %v7427, %v7493
  %v7499 = vadd.f32 %v7428, %v7493
  %v7500 = vadd.f32 %v7429, %v7493
  %v7501 = vadd.f32 %v7430, %v7493
  %v7502 = vadd.f32 %v7431, %v7493
  %v7503 = vadd.f32 %v7432, %v7493
  %v7504 = vadd.f32 %v7433, %v7493
  %v7505 = vadd.f32 %v7434, %v7493
  %v7506 = vadd.f32 %v7435, %v7493
  %v7507 = vadd.f32 %v7436, %v7493
  %v7508 = vadd.f32 %v7437, %v7493
  %v7509 = vadd.f32 %v7438, %v7493
  %v7510 = vadd.f32 %v7439, %v7493
  %v7511 = vadd.f32 %v7440, %v7493
  %v7512 = vadd.f32 %v7441, %v7493
  %v7513 = vadd.f32 %v7442, %v7493
  %v7514 = vadd.f32 %v7443, %v7493
  %v7515 = vadd.f32 %v7444, %v7493
  %v7516 = vadd.f32 %v7445, %v7493
  %v7517 = vadd.f32 %v7446, %v7493
  %v7518 = vadd.f32 %v7447, %v7493
  %v7519 = vadd.f32 %v7448, %v7493
  %v7520 = vadd.f32 %v7449, %v7493
  %v7521 = vadd.f32 %v7450, %v7493
  %v7522 = vadd.f32 %v7451, %v7493
  %v7523 = vadd.f32 %v7452, %v7493
  %v7524 = vadd.f32 %v7453, %v7493
  %v7525 = vadd.f32 %v7454, %v7493
  %v7526 = vadd.f32 %v7455, %v7493
  %v7527 = vadd.f32 %v7456, %v7493
  %v7528 = vadd.f32 %v7457, %v7493
  %v7529 = vadd.f32 %v7458, %v7493
  %v7530 = vadd.f32 %v7459, %v7493
  %v7531 = vadd.f32 %v7460, %v7493
  %v7532 = vadd.f32 %v7461, %v7493
  %v7533 = vadd.f32 %v7462, %v7493
  %v7534 = vadd.f32 %v7463, %v7493
  %v7535 = vadd.f32 %v7464, %v7493
  %v7536 = vadd.f32 %v7465, %v7493
  %v7537 = vadd.f32 %v7466, %v7493
  %v7538 = vadd.f32 %v7467, %v7493
  %v7539 = vadd.f32 %v7468, %v7493
  %v7540 = vadd.f32 %v7469, %v7493
  %v7541 = vadd.f32 %v7470, %v7493
  %v7542 = vadd.f32 %v7471, %v7493
  %v7543 = vadd.f32 %v7472, %v7493
  %v7544 = vadd.f32 %v7473, %v7493
  %v7545 = vadd.f32 %v7474, %v7493
  %v7546 = vadd.f32 %v7475, %v7493
  %v7547 = vadd.f32 %v7476, %v7493
  %v7548 = vadd.f32 %v7477, %v7493
  %v7549 = vadd.f32 %v7478, %v7493
  %v7550 = vadd.f32 %v7479, %v7493
  %v7551 = vadd.f32 %v7480, %v7493
  %v7552 = vadd.f32 %v7481, %v7493
  %v7553 = vadd.f32 %v7482, %v7493
  %v7554 = vadd.f32 %v7483, %v7493
  %v7555 = vadd.f32 %v7484, %v7493
  %v7556 = vadd.f32 %v7485, %v7493
  %v7557 = vadd.f32 %v7486, %v7493
  %v7558 = vadd.f32 %v7487, %v7493
  %7623 = vrot.lane.b32.xlu0 %v7495, 2
  %v7624 = vpop.permute.xlu0 %7623
  %7625 = vrot.lane.b32.xlu0 %v7496, 2
  %v7626 = vpop.permute.xlu0 %7625
  %7627 = vrot.lane.b32.xlu0 %v7497, 2
  %v7628 = vpop.permute.xlu0 %7627
  %7629 = vrot.lane.b32.xlu0 %v7498, 2
  %v7630 = vpop.permute.xlu0 %7629
  %7631 = vrot.lane.b32.xlu0 %v7499, 2
  %v7632 = vpop.permute.xlu0 %7631
  %7633 = vrot.lane.b32.xlu0 %v7500, 2
  %v7634 = vpop.permute.xlu0 %7633
  %7635 = vrot.lane.b32.xlu0 %v7501, 2
  %v7636 = vpop.permute.xlu0 %7635
  %7637 = vrot.lane.b32.xlu0 %v7502, 2
  %v7638 = vpop.permute.xlu0 %7637
  %7639 = vrot.lane.b32.xlu0 %v7503, 2
  %v7640 = vpop.permute.xlu0 %7639
  %7641 = vrot.lane.b32.xlu0 %v7504, 2
  %v7642 = vpop.permute.xlu0 %7641
  %7643 = vrot.lane.b32.xlu0 %v7505, 2
  %v7644 = vpop.permute.xlu0 %7643
  %7645 = vrot.lane.b32.xlu0 %v7506, 2
  %v7646 = vpop.permute.xlu0 %7645
  %7647 = vrot.lane.b32.xlu0 %v7507, 2
  %v7648 = vpop.permute.xlu0 %7647
  %7649 = vrot.lane.b32.xlu0 %v7508, 2
  %v7650 = vpop.permute.xlu0 %7649
  %7651 = vrot.lane.b32.xlu0 %v7509, 2
  %v7652 = vpop.permute.xlu0 %7651
  %7653 = vrot.lane.b32.xlu0 %v7510, 2
  %v7654 = vpop.permute.xlu0 %7653
  %7655 = vrot.lane.b32.xlu0 %v7511, 2
  %v7656 = vpop.permute.xlu0 %7655
  %7657 = vrot.lane.b32.xlu0 %v7512, 2
  %v7658 = vpop.permute.xlu0 %7657
  %7659 = vrot.lane.b32.xlu0 %v7513, 2
  %v7660 = vpop.permute.xlu0 %7659
  %7661 = vrot.lane.b32.xlu0 %v7514, 2
  %v7662 = vpop.permute.xlu0 %7661
  %7663 = vrot.lane.b32.xlu0 %v7515, 2
  %v7664 = vpop.permute.xlu0 %7663
  %7665 = vrot.lane.b32.xlu0 %v7516, 2
  %v7666 = vpop.permute.xlu0 %7665
  %7667 = vrot.lane.b32.xlu0 %v7517, 2
  %v7668 = vpop.permute.xlu0 %7667
  %7669 = vrot.lane.b32.xlu0 %v7518, 2
  %v7670 = vpop.permute.xlu0 %7669
  %7671 = vrot.lane.b32.xlu0 %v7519, 2
  %v7672 = vpop.permute.xlu0 %7671
  %7673 = vrot.lane.b32.xlu0 %v7520, 2
  %v7674 = vpop.permute.xlu0 %7673
  %7675 = vrot.lane.b32.xlu0 %v7521, 2
  %v7676 = vpop.permute.xlu0 %7675
  %7677 = vrot.lane.b32.xlu0 %v7522, 2
  %v7678 = vpop.permute.xlu0 %7677
  %7679 = vrot.lane.b32.xlu0 %v7523, 2
  %v7680 = vpop.permute.xlu0 %7679
  %7681 = vrot.lane.b32.xlu0 %v7524, 2
  %v7682 = vpop.permute.xlu0 %7681
  %7683 = vrot.lane.b32.xlu0 %v7525, 2
  %v7684 = vpop.permute.xlu0 %7683
  %7685 = vrot.lane.b32.xlu0 %v7526, 2
  %v7686 = vpop.permute.xlu0 %7685
  %7687 = vrot.lane.b32.xlu0 %v7527, 2
  %v7688 = vpop.permute.xlu0 %7687
  %7689 = vrot.lane.b32.xlu0 %v7528, 2
  %v7690 = vpop.permute.xlu0 %7689
  %7691 = vrot.lane.b32.xlu0 %v7529, 2
  %v7692 = vpop.permute.xlu0 %7691
  %7693 = vrot.lane.b32.xlu0 %v7530, 2
  %v7694 = vpop.permute.xlu0 %7693
  %7695 = vrot.lane.b32.xlu0 %v7531, 2
  %v7696 = vpop.permute.xlu0 %7695
  %7697 = vrot.lane.b32.xlu0 %v7532, 2
  %v7698 = vpop.permute.xlu0 %7697
  %7699 = vrot.lane.b32.xlu0 %v7533, 2
  %v7700 = vpop.permute.xlu0 %7699
  %7701 = vrot.lane.b32.xlu0 %v7534, 2
  %v7702 = vpop.permute.xlu0 %7701
  %7703 = vrot.lane.b32.xlu0 %v7535, 2
  %v7704 = vpop.permute.xlu0 %7703
  %7705 = vrot.lane.b32.xlu0 %v7536, 2
  %v7706 = vpop.permute.xlu0 %7705
  %7707 = vrot.lane.b32.xlu0 %v7537, 2
  %v7708 = vpop.permute.xlu0 %7707
  %7709 = vrot.lane.b32.xlu0 %v7538, 2
  %v7710 = vpop.permute.xlu0 %7709
  %7711 = vrot.lane.b32.xlu0 %v7539, 2
  %v7712 = vpop.permute.xlu0 %7711
  %7713 = vrot.lane.b32.xlu0 %v7540, 2
  %v7714 = vpop.permute.xlu0 %7713
  %7715 = vrot.lane.b32.xlu0 %v7541, 2
  %v7716 = vpop.permute.xlu0 %7715
  %7717 = vrot.lane.b32.xlu0 %v7542, 2
  %v7718 = vpop.permute.xlu0 %7717
  %7719 = vrot.lane.b32.xlu0 %v7543, 2
  %v7720 = vpop.permute.xlu0 %7719
  %7721 = vrot.lane.b32.xlu0 %v7544, 2
  %v7722 = vpop.permute.xlu0 %7721
  %7723 = vrot.lane.b32.xlu0 %v7545, 2
  %v7724 = vpop.permute.xlu0 %7723
  %7725 = vrot.lane.b32.xlu0 %v7546, 2
  %v7726 = vpop.permute.xlu0 %7725
  %7727 = vrot.lane.b32.xlu0 %v7547, 2
  %v7728 = vpop.permute.xlu0 %7727
  %7729 = vrot.lane.b32.xlu0 %v7548, 2
  %v7730 = vpop.permute.xlu0 %7729
  %7731 = vrot.lane.b32.xlu0 %v7549, 2
  %v7732 = vpop.permute.xlu0 %7731
  %7733 = vrot.lane.b32.xlu0 %v7550, 2
  %v7734 = vpop.permute.xlu0 %7733
  %7735 = vrot.lane.b32.xlu0 %v7551, 2
  %v7736 = vpop.permute.xlu0 %7735
  %7737 = vrot.lane.b32.xlu0 %v7552, 2
  %v7738 = vpop.permute.xlu0 %7737
  %7739 = vrot.lane.b32.xlu0 %v7553, 2
  %v7740 = vpop.permute.xlu0 %7739
  %7741 = vrot.lane.b32.xlu0 %v7554, 2
  %v7742 = vpop.permute.xlu0 %7741
  %7743 = vrot.lane.b32.xlu0 %v7555, 2
  %v7744 = vpop.permute.xlu0 %7743
  %7745 = vrot.lane.b32.xlu0 %v7556, 2
  %v7746 = vpop.permute.xlu0 %7745
  %7747 = vrot.lane.b32.xlu0 %v7557, 2
  %v7748 = vpop.permute.xlu0 %7747
  %7749 = vrot.lane.b32.xlu0 %v7558, 2
  %v7750 = vpop.permute.xlu0 %7749
  %v7815 = vsel %vm1069, %v751, %v7624
  %v7816 = vsel %vm1069, %v756, %v7626
  %v7817 = vsel %vm1069, %v761, %v7628
  %v7818 = vsel %vm1069, %v766, %v7630
  %v7819 = vsel %vm1069, %v771, %v7632
  %v7820 = vsel %vm1069, %v776, %v7634
  %v7821 = vsel %vm1069, %v781, %v7636
  %v7822 = vsel %vm1069, %v786, %v7638
  %v7823 = vsel %vm1069, %v791, %v7640
  %v7824 = vsel %vm1069, %v796, %v7642
  %v7825 = vsel %vm1069, %v801, %v7644
  %v7826 = vsel %vm1069, %v806, %v7646
  %v7827 = vsel %vm1069, %v811, %v7648
  %v7828 = vsel %vm1069, %v816, %v7650
  %v7829 = vsel %vm1069, %v821, %v7652
  %v7830 = vsel %vm1069, %v826, %v7654
  %v7831 = vsel %vm1069, %v831, %v7656
  %v7832 = vsel %vm1069, %v836, %v7658
  %v7833 = vsel %vm1069, %v841, %v7660
  %v7834 = vsel %vm1069, %v846, %v7662
  %v7835 = vsel %vm1069, %v851, %v7664
  %v7836 = vsel %vm1069, %v856, %v7666
  %v7837 = vsel %vm1069, %v861, %v7668
  %v7838 = vsel %vm1069, %v866, %v7670
  %v7839 = vsel %vm1069, %v871, %v7672
  %v7840 = vsel %vm1069, %v876, %v7674
  %v7841 = vsel %vm1069, %v881, %v7676
  %v7842 = vsel %vm1069, %v886, %v7678
  %v7843 = vsel %vm1069, %v891, %v7680
  %v7844 = vsel %vm1069, %v896, %v7682
  %v7845 = vsel %vm1069, %v901, %v7684
  %v7846 = vsel %vm1069, %v906, %v7686
  %v7847 = vsel %vm1069, %v911, %v7688
  %v7848 = vsel %vm1069, %v916, %v7690
  %v7849 = vsel %vm1069, %v921, %v7692
  %v7850 = vsel %vm1069, %v926, %v7694
  %v7851 = vsel %vm1069, %v931, %v7696
  %v7852 = vsel %vm1069, %v936, %v7698
  %v7853 = vsel %vm1069, %v941, %v7700
  %v7854 = vsel %vm1069, %v946, %v7702
  %v7855 = vsel %vm1069, %v951, %v7704
  %v7856 = vsel %vm1069, %v956, %v7706
  %v7857 = vsel %vm1069, %v961, %v7708
  %v7858 = vsel %vm1069, %v966, %v7710
  %v7859 = vsel %vm1069, %v971, %v7712
  %v7860 = vsel %vm1069, %v976, %v7714
  %v7861 = vsel %vm1069, %v981, %v7716
  %v7862 = vsel %vm1069, %v986, %v7718
  %v7863 = vsel %vm1069, %v991, %v7720
  %v7864 = vsel %vm1069, %v996, %v7722
  %v7865 = vsel %vm1069, %v1001, %v7724
  %v7866 = vsel %vm1069, %v1006, %v7726
  %v7867 = vsel %vm1069, %v1011, %v7728
  %v7868 = vsel %vm1069, %v1016, %v7730
  %v7869 = vsel %vm1069, %v1021, %v7732
  %v7870 = vsel %vm1069, %v1026, %v7734
  %v7871 = vsel %vm1069, %v1031, %v7736
  %v7872 = vsel %vm1069, %v1036, %v7738
  %v7873 = vsel %vm1069, %v1041, %v7740
  %v7874 = vsel %vm1069, %v1046, %v7742
  %v7875 = vsel %vm1069, %v1051, %v7744
  %v7876 = vsel %vm1069, %v1056, %v7746
  %v7877 = vsel %vm1069, %v1061, %v7748
  %v7878 = vsel %vm1069, %v1066, %v7750
  %v7879 = vadd.f32 %v358, %v7815
  %v7880 = vadd.f32 %v363, %v7816
  %v7881 = vadd.f32 %v368, %v7817
  %v7882 = vadd.f32 %v373, %v7818
  %v7883 = vadd.f32 %v378, %v7819
  %v7884 = vadd.f32 %v383, %v7820
  %v7885 = vadd.f32 %v388, %v7821
  %v7886 = vadd.f32 %v393, %v7822
  %v7887 = vadd.f32 %v398, %v7823
  %v7888 = vadd.f32 %v403, %v7824
  %v7889 = vadd.f32 %v408, %v7825
  %v7890 = vadd.f32 %v413, %v7826
  %v7891 = vadd.f32 %v418, %v7827
  %v7892 = vadd.f32 %v423, %v7828
  %v7893 = vadd.f32 %v428, %v7829
  %v7894 = vadd.f32 %v433, %v7830
  %v7895 = vadd.f32 %v438, %v7831
  %v7896 = vadd.f32 %v443, %v7832
  %v7897 = vadd.f32 %v448, %v7833
  %v7898 = vadd.f32 %v453, %v7834
  %v7899 = vadd.f32 %v458, %v7835
  %v7900 = vadd.f32 %v463, %v7836
  %v7901 = vadd.f32 %v468, %v7837
  %v7902 = vadd.f32 %v473, %v7838
  %v7903 = vadd.f32 %v478, %v7839
  %v7904 = vadd.f32 %v483, %v7840
  %v7905 = vadd.f32 %v488, %v7841
  %v7906 = vadd.f32 %v493, %v7842
  %v7907 = vadd.f32 %v498, %v7843
  %v7908 = vadd.f32 %v503, %v7844
  %v7909 = vadd.f32 %v508, %v7845
  %v7910 = vadd.f32 %v513, %v7846
  %v7911 = vadd.f32 %v518, %v7847
  %v7912 = vadd.f32 %v523, %v7848
  %v7913 = vadd.f32 %v528, %v7849
  %v7914 = vadd.f32 %v533, %v7850
  %v7915 = vadd.f32 %v538, %v7851
  %v7916 = vadd.f32 %v543, %v7852
  %v7917 = vadd.f32 %v548, %v7853
  %v7918 = vadd.f32 %v553, %v7854
  %v7919 = vadd.f32 %v558, %v7855
  %v7920 = vadd.f32 %v563, %v7856
  %v7921 = vadd.f32 %v568, %v7857
  %v7922 = vadd.f32 %v573, %v7858
  %v7923 = vadd.f32 %v578, %v7859
  %v7924 = vadd.f32 %v583, %v7860
  %v7925 = vadd.f32 %v588, %v7861
  %v7926 = vadd.f32 %v593, %v7862
  %v7927 = vadd.f32 %v598, %v7863
  %v7928 = vadd.f32 %v603, %v7864
  %v7929 = vadd.f32 %v608, %v7865
  %v7930 = vadd.f32 %v613, %v7866
  %v7931 = vadd.f32 %v618, %v7867
  %v7932 = vadd.f32 %v623, %v7868
  %v7933 = vadd.f32 %v628, %v7869
  %v7934 = vadd.f32 %v633, %v7870
  %v7935 = vadd.f32 %v638, %v7871
  %v7936 = vadd.f32 %v643, %v7872
  %v7937 = vadd.f32 %v648, %v7873
  %v7938 = vadd.f32 %v653, %v7874
  %v7939 = vadd.f32 %v658, %v7875
  %v7940 = vadd.f32 %v663, %v7876
  %v7941 = vadd.f32 %v668, %v7877
  %v7942 = vadd.f32 %v673, %v7878
  %vm7943 = vcmask 31744
  %7944 = vst.msk [vmem:[%s7] sm:$0xff] %vm7943, %v7879
  %7945 = vst.msk [vmem:[%s7 + $0x8] sm:$0xff] %vm7943, %v7880
  %7946 = vst.msk [vmem:[%s7 + $0x10] sm:$0xff] %vm7943, %v7881
  %7947 = vst.msk [vmem:[%s7 + $0x18] sm:$0xff] %vm7943, %v7882
  %7948 = vst.msk [vmem:[%s7 + $0x20] sm:$0xff] %vm7943, %v7883
  %7949 = vst.msk [vmem:[%s7 + $0x28] sm:$0xff] %vm7943, %v7884
  %7950 = vst.msk [vmem:[%s7 + $0x30] sm:$0xff] %vm7943, %v7885
  %7951 = vst.msk [vmem:[%s7 + $0x38] sm:$0xff] %vm7943, %v7886
  %7952 = vst.msk [vmem:[%s7 + $0x40] sm:$0xff] %vm7943, %v7887
  %7953 = vst.msk [vmem:[%s7 + $0x48] sm:$0xff] %vm7943, %v7888
  %7954 = vst.msk [vmem:[%s7 + $0x50] sm:$0xff] %vm7943, %v7889
  %7955 = vst.msk [vmem:[%s7 + $0x58] sm:$0xff] %vm7943, %v7890
  %7956 = vst.msk [vmem:[%s7 + $0x60] sm:$0xff] %vm7943, %v7891
  %7957 = vst.msk [vmem:[%s7 + $0x68] sm:$0xff] %vm7943, %v7892
  %7958 = vst.msk [vmem:[%s7 + $0x70] sm:$0xff] %vm7943, %v7893
  %7959 = vst.msk [vmem:[%s7 + $0x78] sm:$0xff] %vm7943, %v7894
  %7960 = vst.msk [vmem:[%s7 + $0x80] sm:$0xff] %vm7943, %v7895
  %7961 = vst.msk [vmem:[%s7 + $0x88] sm:$0xff] %vm7943, %v7896
  %7962 = vst.msk [vmem:[%s7 + $0x90] sm:$0xff] %vm7943, %v7897
  %7963 = vst.msk [vmem:[%s7 + $0x98] sm:$0xff] %vm7943, %v7898
  %7964 = vst.msk [vmem:[%s7 + $0xa0] sm:$0xff] %vm7943, %v7899
  %7965 = vst.msk [vmem:[%s7 + $0xa8] sm:$0xff] %vm7943, %v7900
  %7966 = vst.msk [vmem:[%s7 + $0xb0] sm:$0xff] %vm7943, %v7901
  %7967 = vst.msk [vmem:[%s7 + $0xb8] sm:$0xff] %vm7943, %v7902
  %7968 = vst.msk [vmem:[%s7 + $0xc0] sm:$0xff] %vm7943, %v7903
  %7969 = vst.msk [vmem:[%s7 + $0xc8] sm:$0xff] %vm7943, %v7904
  %7970 = vst.msk [vmem:[%s7 + $0xd0] sm:$0xff] %vm7943, %v7905
  %7971 = vst.msk [vmem:[%s7 + $0xd8] sm:$0xff] %vm7943, %v7906
  %7972 = vst.msk [vmem:[%s7 + $0xe0] sm:$0xff] %vm7943, %v7907
  %7973 = vst.msk [vmem:[%s7 + $0xe8] sm:$0xff] %vm7943, %v7908
  %7974 = vst.msk [vmem:[%s7 + $0xf0] sm:$0xff] %vm7943, %v7909
  %7975 = vst.msk [vmem:[%s7 + $0xf8] sm:$0xff] %vm7943, %v7910
  %7976 = vst.msk [vmem:[%s7 + $0x100] sm:$0xff] %vm7943, %v7911
  %7977 = vst.msk [vmem:[%s7 + $0x108] sm:$0xff] %vm7943, %v7912
  %7978 = vst.msk [vmem:[%s7 + $0x110] sm:$0xff] %vm7943, %v7913
  %7979 = vst.msk [vmem:[%s7 + $0x118] sm:$0xff] %vm7943, %v7914
  %7980 = vst.msk [vmem:[%s7 + $0x120] sm:$0xff] %vm7943, %v7915
  %7981 = vst.msk [vmem:[%s7 + $0x128] sm:$0xff] %vm7943, %v7916
  %7982 = vst.msk [vmem:[%s7 + $0x130] sm:$0xff] %vm7943, %v7917
  %7983 = vst.msk [vmem:[%s7 + $0x138] sm:$0xff] %vm7943, %v7918
  %7984 = vst.msk [vmem:[%s7 + $0x140] sm:$0xff] %vm7943, %v7919
  %7985 = vst.msk [vmem:[%s7 + $0x148] sm:$0xff] %vm7943, %v7920
  %7986 = vst.msk [vmem:[%s7 + $0x150] sm:$0xff] %vm7943, %v7921
  %7987 = vst.msk [vmem:[%s7 + $0x158] sm:$0xff] %vm7943, %v7922
  %7988 = vst.msk [vmem:[%s7 + $0x160] sm:$0xff] %vm7943, %v7923
  %7989 = vst.msk [vmem:[%s7 + $0x168] sm:$0xff] %vm7943, %v7924
  %7990 = vst.msk [vmem:[%s7 + $0x170] sm:$0xff] %vm7943, %v7925
  %7991 = vst.msk [vmem:[%s7 + $0x178] sm:$0xff] %vm7943, %v7926
  %7992 = vst.msk [vmem:[%s7 + $0x180] sm:$0xff] %vm7943, %v7927
  %7993 = vst.msk [vmem:[%s7 + $0x188] sm:$0xff] %vm7943, %v7928
  %7994 = vst.msk [vmem:[%s7 + $0x190] sm:$0xff] %vm7943, %v7929
  %7995 = vst.msk [vmem:[%s7 + $0x198] sm:$0xff] %vm7943, %v7930
  %7996 = vst.msk [vmem:[%s7 + $0x1a0] sm:$0xff] %vm7943, %v7931
  %7997 = vst.msk [vmem:[%s7 + $0x1a8] sm:$0xff] %vm7943, %v7932
  %7998 = vst.msk [vmem:[%s7 + $0x1b0] sm:$0xff] %vm7943, %v7933
  %7999 = vst.msk [vmem:[%s7 + $0x1b8] sm:$0xff] %vm7943, %v7934
  %8000 = vst.msk [vmem:[%s7 + $0x1c0] sm:$0xff] %vm7943, %v7935
  %8001 = vst.msk [vmem:[%s7 + $0x1c8] sm:$0xff] %vm7943, %v7936
  %8002 = vst.msk [vmem:[%s7 + $0x1d0] sm:$0xff] %vm7943, %v7937
  %8003 = vst.msk [vmem:[%s7 + $0x1d8] sm:$0xff] %vm7943, %v7938
  %8004 = vst.msk [vmem:[%s7 + $0x1e0] sm:$0xff] %vm7943, %v7939
  %8005 = vst.msk [vmem:[%s7 + $0x1e8] sm:$0xff] %vm7943, %v7940
  %8006 = vst.msk [vmem:[%s7 + $0x1f0] sm:$0xff] %vm7943, %v7941
  %8007 = vst.msk [vmem:[%s7 + $0x1f8] sm:$0xff] %vm7943, %v7942
  // Predicated region
  $region30: #{tpu_custom_call.1} parent=0 // pred_check
    _
  $region31: #{tpu_custom_call.1} parent=0 // pred_check_branch
    %8009 = sbr.rel (0) target = $region33
  $region32: #{tpu_custom_call.1} parent=0 // pred_region
    _
  $region33: #{tpu_custom_call.1} parent=0 // pred_fallthru
    _
  // Predicated region
  $region34: #{tpu_custom_call.1} parent=0 // pred_check
    _
  $region35: #{tpu_custom_call.1} parent=0 // pred_check_branch
    %8011 = sbr.rel (0) target = $region37
  $region36: #{tpu_custom_call.1} parent=0 // pred_region
    _
  $region37: #{tpu_custom_call.1} parent=0 // pred_fallthru
    _

</llo_original>
